<compile_context>
chip_gen: v7x
topology: tpu7x:2x2x1
jax: 0.10.0
libtpu: 0.0.40
codegen_flags: <defaults>
</compile_context>

<pallas_src>
import math
import numpy as np
import jax
import jax.numpy as jnp
from jax.experimental import pallas as pl
from jax.experimental.pallas import tpu as pltpu

# --------------------------- static config (small synthetic WavLM) ----------
MODEL_SR, SLM_SR = 24000, 16000
T_IN = 240                                    # waveform length used in __main__
BATCH = 2                                     # B
HIDDEN, NH, HD = 32, 4, 8                     # hidden size, heads, head dim
FFN = 4 * HIDDEN
NLAYERS = 2                                   # -> NLAYERS + 1 hidden states
K0, S0 = 10, 5                                # feature-extractor conv kernel / stride

T16 = int(math.ceil(T_IN * SLM_SR / MODEL_SR))         # resampled length (160)
F_REAL = (T16 - K0) // S0 + 1                          # real frame count (31)
FP = ((F_REAL + 7) // 8) * 8                           # frames padded to sublanes (32)
NB = 2 * BATCH                                         # sequences per pass (4)
R_ROWS = NB * FP                                       # rows per program (128)
FP_LOG2 = FP.bit_length() - 1
assert NH * HD == HIDDEN and (1 << FP_LOG2) == FP
IDX = np.arange(F_REAL)[:, None] * S0 + np.arange(K0)[None, :]   # reference-only im2col


# --------------------------- packed-slab row offsets -------------------------
def _weight_offsets():                         # bf16 MXU-weight slab, 128 lanes wide
    off, r = {}, 0
    off["proj_w"] = r; r += HIDDEN
    for l in range(NLAYERS):
        off[f"wqkv{l}"] = r; r += HIDDEN
        off[f"wo{l}"] = r; r += HIDDEN
        off[f"w1{l}"] = r; r += HIDDEN
        off[f"w2{l}"] = r; r += FFN
    return off, ((r + 15) // 16) * 16          # pad rows to bf16 (16,128) tiles


def _param_offsets():                          # f32 bias / LN / feature-conv slab
    off, r = {}, 0
    off["fe_w"] = r; r += K0
    for name in ("fe_b", "proj_b", "ln0_g", "ln0_b"):
        off[name] = r; r += 1
    for l in range(NLAYERS):
        for name in ("bqkv", "bo", "ln1_g", "ln1_b", "b1", "b2", "ln2_g", "ln2_b"):
            off[f"{name}{l}"] = r; r += 1
    return off, ((r + 7) // 8) * 8


W_OFF, W_ROWS = _weight_offsets()
P_OFF, P_ROWS = _param_offsets()


# --------------------------- the fused kernel --------------------------------
def _fused_wavlm_l1_kernel(wav_ref, rstack_ref, wslab_ref, pslab_ref, out_ref):
    f32, bf16 = jnp.float32, jnp.bfloat16

    def wmat(name, nrows, ncols):              # bf16 weight view from the slab
        r0 = W_OFF[name]
        return wslab_ref[r0:r0 + nrows, :ncols]

    def pvec(name, width):                     # (1, width) f32 bias/LN row
        r0 = P_OFF[name]
        return pslab_ref[r0:r0 + 1, :width]

    def dot16(a, w):                           # MXU: bf16 inputs, f32 accumulation
        return jnp.dot(a.astype(bf16), w, preferred_element_type=f32)

    def layer_norm(x, g, b):
        mu = jnp.mean(x, axis=-1, keepdims=True)
        xc = x - mu
        var = jnp.mean(xc * xc, axis=-1, keepdims=True)
        return xc * jax.lax.rsqrt(var + 1e-5) * g + b

    # ---- resample + im2col fused into one composed MXU matmul ---------------
    # V[s, k*FP + f] == wav16[s, f*S0 + k]   (zero for padded frames f >= F_REAL)
    V = jnp.dot(wav_ref[...].astype(bf16), rstack_ref[...],
                preferred_element_type=f32)                       # (NB, K0*FP)

    # ---- feature conv: K0 broadcast-FMAs on the VPU, frames -> sublanes -----
    fe_w = pslab_ref[P_OFF["fe_w"]:P_OFF["fe_w"] + K0, :HIDDEN]   # (K0, H) f32
    feat3 = jnp.zeros((NB, FP, HIDDEN), f32)
    for k in range(K0):
        vk = V[:, k * FP:(k + 1) * FP]                            # (NB, FP)
        feat3 = feat3 + vk[:, :, None] * fe_w[k:k + 1, :][None, :, :]
    feat = feat3.reshape(R_ROWS, HIDDEN)                          # leading-dim merge
    feat = jax.nn.gelu(feat + pvec("fe_b", HIDDEN))

    x = dot16(feat, wmat("proj_w", HIDDEN, HIDDEN)) + pvec("proj_b", HIDDEN)
    x = layer_norm(x, pvec("ln0_g", HIDDEN), pvec("ln0_b", HIDDEN))   # hidden state 0

    # ---- masks (built once); rows r = s*FP + f, order [wav_0..wav_B, rec_0..rec_B]
    hr = jax.lax.broadcasted_iota(jnp.int32, (BATCH * FP, 1), 0)
    l1_mask = ((hr & (FP - 1)) < F_REAL).astype(f32)              # real frames only
    qi = jax.lax.broadcasted_iota(jnp.int32, (R_ROWS, R_ROWS), 0)
    ki = jax.lax.broadcasted_iota(jnp.int32, (R_ROWS, R_ROWS), 1)
    allowed = jnp.logical_and((qi >> FP_LOG2) == (ki >> FP_LOG2),  # same sequence
                              (ki & (FP - 1)) < F_REAL)            # real key frame
    attn_bias = jnp.where(allowed, 0.0, -1e30).astype(f32)        # additive mask

    def l1_partial(h):                          # wav rows vs rec rows, pad masked
        d = h[:BATCH * FP, :] - h[BATCH * FP:, :]
        return jnp.sum(jnp.abs(d) * l1_mask)

    total = l1_partial(x)
    scale = 1.0 / math.sqrt(HD)

    # ---- transformer layers: block-diagonal attention over all 4 sequences --
    for l in range(NLAYERS):
        qkv = dot16(x, wmat(f"wqkv{l}", HIDDEN, 3 * HIDDEN)) + pvec(f"bqkv{l}", 3 * HIDDEN)
        ctx_heads = []
        for h in range(NH):
            qh = qkv[:, h * HD:(h + 1) * HD]
            kh = qkv[:, HIDDEN + h * HD:HIDDEN + (h + 1) * HD]
            vh = qkv[:, 2 * HIDDEN + h * HD:2 * HIDDEN + (h + 1) * HD]
            s = jax.lax.dot_general(qh.astype(bf16), kh.astype(bf16),
                                    (((1,), (1,)), ((), ())),
                                    preferred_element_type=f32) * scale + attn_bias
            m = jnp.max(s, axis=-1, keepdims=True)
            e = jnp.exp(s - m)
            p = e * pl.reciprocal(jnp.sum(e, axis=-1, keepdims=True), approx=True)
            ctx_heads.append(jnp.dot(p.astype(bf16), vh.astype(bf16),
                                     preferred_element_type=f32))   # (R, HD)
        ctx = jnp.concatenate(ctx_heads, axis=-1)                   # one wo matmul/layer
        attn_out = dot16(ctx, wmat(f"wo{l}", HIDDEN, HIDDEN)) + pvec(f"bo{l}", HIDDEN)
        x = layer_norm(x + attn_out, pvec(f"ln1_g{l}", HIDDEN), pvec(f"ln1_b{l}", HIDDEN))
        h1 = jax.nn.gelu(dot16(x, wmat(f"w1{l}", HIDDEN, FFN)) + pvec(f"b1{l}", FFN))
        x = layer_norm(x + dot16(h1, wmat(f"w2{l}", FFN, HIDDEN)) + pvec(f"b2{l}", HIDDEN),
                       pvec(f"ln2_g{l}", HIDDEN), pvec(f"ln2_b{l}", HIDDEN))
        total = total + l1_partial(x)

    denom = float((NLAYERS + 1) * BATCH * F_REAL * HIDDEN)
    out_ref[...] = jnp.zeros((8, 128), f32) + total / denom         # lane-dense tile


# --------------------------- parameter setup (glue) --------------------------
def make_resample_matrix(t_in, orig_sr, new_sr, width=6):
    """Dense windowed-sinc resampling matrix (t_in, t_out); applied as a matmul."""
    ratio = new_sr / orig_sr
    t_out = int(math.ceil(t_in * new_sr / orig_sr))
    R = np.zeros((t_in, t_out), dtype=np.float32)
    support = width / ratio
    for i in range(t_out):
        center = i / ratio
        lo = max(int(math.floor(center - support)), 0)
        hi = min(int(math.ceil(center + support)) + 1, t_in)
        j = np.arange(lo, hi)
        x = (j - center) * ratio
        window = np.where(np.abs(x) < width,
                          0.5 * (1.0 + np.cos(np.pi * x / width)), 0.0)
        R[j, i] = (ratio * np.sinc(x) * window).astype(np.float32)
    return R


def init_params(key):
    """Deterministic synthetic mini-WavLM parameters (logical f32 masters)."""
    f32 = jnp.float32
    keys = iter(jax.random.split(key, 64))

    def nrm(shape, scale):
        return scale * jax.random.normal(next(keys), shape, f32)

    s = 1.0 / math.sqrt(HIDDEN)
    p = {
        "resample": jnp.asarray(make_resample_matrix(T_IN, MODEL_SR, SLM_SR)),
        "fe_w": nrm((K0, HIDDEN), 1.0 / math.sqrt(K0)),
        "fe_b": nrm((1, HIDDEN), 0.02),
        "proj_w": nrm((HIDDEN, HIDDEN), s),
        "proj_b": nrm((1, HIDDEN), 0.02),
        "ln0_g": 1.0 + nrm((1, HIDDEN), 0.05),
        "ln0_b": nrm((1, HIDDEN), 0.02),
    }
    for l in range(NLAYERS):
        p[f"wqkv{l}"] = nrm((HIDDEN, 3 * HIDDEN), s)
        p[f"bqkv{l}"] = nrm((1, 3 * HIDDEN), 0.02)
        p[f"wo{l}"] = nrm((HIDDEN, HIDDEN), s)
        p[f"bo{l}"] = nrm((1, HIDDEN), 0.02)
        p[f"ln1_g{l}"] = 1.0 + nrm((1, HIDDEN), 0.05)
        p[f"ln1_b{l}"] = nrm((1, HIDDEN), 0.02)
        p[f"w1{l}"] = nrm((HIDDEN, FFN), s)
        p[f"b1{l}"] = nrm((1, FFN), 0.02)
        p[f"w2{l}"] = nrm((FFN, HIDDEN), 1.0 / math.sqrt(FFN))
        p[f"b2{l}"] = nrm((1, HIDDEN), 0.02)
        p[f"ln2_g{l}"] = 1.0 + nrm((1, HIDDEN), 0.05)
        p[f"ln2_b{l}"] = nrm((1, HIDDEN), 0.02)
    return p


def pack_params(p):
    """Pack logical params into the kernel's composed / slab inputs."""
    bf16 = jnp.bfloat16
    # composed resample (x) im2col weight, columns ordered (k, f):
    #   rstack[t, k*FP + f] = R[t, f*S0 + k]   (zero for padded frames)
    R = np.asarray(p["resample"], np.float32)
    rst = np.zeros((T_IN, K0, FP), np.float32)
    frame_base = np.arange(F_REAL) * S0
    for k in range(K0):
        rst[:, k, :F_REAL] = R[:, frame_base + k]
    rstack = jnp.asarray(rst.reshape(T_IN, K0 * FP)).astype(bf16)

    wslab = np.zeros((W_ROWS, 128), np.float32)
    def put_w(name, arr):
        a = np.asarray(arr, np.float32)
        wslab[W_OFF[name]:W_OFF[name] + a.shape[0], :a.shape[1]] = a
    put_w("proj_w", p["proj_w"])
    for l in range(NLAYERS):
        for name in ("wqkv", "wo", "w1", "w2"):
            put_w(f"{name}{l}", p[f"{name}{l}"])

    pslab = np.zeros((P_ROWS, 128), np.float32)
    def put_p(name, arr):
        a = np.asarray(arr, np.float32)
        pslab[P_OFF[name]:P_OFF[name] + a.shape[0], :a.shape[1]] = a
    put_p("fe_w", p["fe_w"])
    for name in ("fe_b", "proj_b", "ln0_g", "ln0_b"):
        put_p(name, p[name])
    for l in range(NLAYERS):
        for name in ("bqkv", "bo", "ln1_g", "ln1_b", "b1", "b2", "ln2_g", "ln2_b"):
            put_p(f"{name}{l}", p[f"{name}{l}"])

    return {"rstack": rstack,
            "wslab": jnp.asarray(wslab).astype(bf16),
            "pslab": jnp.asarray(pslab)}


# --------------------------- WavLMLoss.forward -------------------------------
def wavlm_loss_forward(wav, y_rec, packed):
    """wav: (B, T_IN); y_rec: (B, 1, T_IN). Returns scalar f32 L1 loss."""
    assert wav.shape == (BATCH, T_IN) and y_rec.shape == (BATCH, 1, T_IN)
    # Sequence order [wav_0..wav_{B-1}, rec_0..rec_{B-1}]: one pass for both streams.
    wav_pair = jnp.concatenate([wav, y_rec[:, 0, :]], axis=0).astype(jnp.float32)
    # One fat program (best for v5e/v6e's single TC; fine on v7x at B=2 — split
    # into 2 CORE_PARALLEL programs only for large batches).
    tile = pl.pallas_call(
        _fused_wavlm_l1_kernel,
        out_shape=jax.ShapeDtypeStruct((8, 128), jnp.float32),
        in_specs=[pl.BlockSpec(memory_space=pltpu.MemorySpace.VMEM),
                  pl.BlockSpec(memory_space=pltpu.MemorySpace.VMEM),
                  pl.BlockSpec(memory_space=pltpu.MemorySpace.VMEM),
                  pl.BlockSpec(memory_space=pltpu.MemorySpace.VMEM)],
        out_specs=pl.BlockSpec(memory_space=pltpu.MemorySpace.VMEM),
    )(wav_pair, packed["rstack"], packed["wslab"], packed["pslab"])
    return tile[0, 0]


# --------------------------- pure-JAX reference (for the check) --------------
def reference_loss(wav, y_rec, p):
    """Mirror of the fused pipeline (bf16 MXU inputs, f32 elementwise)."""
    f32, bf16 = jnp.float32, jnp.bfloat16
    N = 2 * BATCH
    hi = jax.lax.Precision.HIGHEST

    def rdot(a, w):
        return jnp.dot(a.astype(bf16), w.astype(bf16), preferred_element_type=f32)

    def ln(x, g, b):
        mu = jnp.mean(x, axis=-1, keepdims=True)
        xc = x - mu
        var = jnp.mean(xc * xc, axis=-1, keepdims=True)
        return xc * jax.lax.rsqrt(var + 1e-5) * g + b

    wav_pair = jnp.concatenate([wav, y_rec[:, 0, :]], axis=0)
    wav16 = rdot(wav_pair, p["resample"])                          # (N, T16)
    patches = wav16[:, IDX]                                        # (N, F, K0)
    feat = jax.nn.gelu(
        jnp.einsum("nfk,kh->nfh", patches, p["fe_w"], precision=hi) + p["fe_b"])
    x = rdot(feat.reshape(N * F_REAL, HIDDEN), p["proj_w"]) + p["proj_b"]
    x = ln(x, p["ln0_g"], p["ln0_b"])
    hs = [x.reshape(N, F_REAL, HIDDEN)]
    for l in range(NLAYERS):
        qkv = rdot(x, p[f"wqkv{l}"]) + p[f"bqkv{l}"]

        def heads(t):
            return t.reshape(N, F_REAL, NH, HD).transpose(0, 2, 1, 3)

        qh, kh, vh = (heads(qkv[:, :HIDDEN]), heads(qkv[:, HIDDEN:2 * HIDDEN]),
                      heads(qkv[:, 2 * HIDDEN:]))
        s = jnp.einsum("nhqd,nhkd->nhqk", qh.astype(bf16), kh.astype(bf16),
                       preferred_element_type=f32) / math.sqrt(HD)
        pr = jax.nn.softmax(s, axis=-1)
        ctx = jnp.einsum("nhqk,nhkd->nhqd", pr.astype(bf16), vh.astype(bf16),
                         preferred_element_type=f32)
        ctx = ctx.transpose(0, 2, 1, 3).reshape(N * F_REAL, HIDDEN)
        x = ln(x + rdot(ctx, p[f"wo{l}"]) + p[f"bo{l}"], p[f"ln1_g{l}"], p[f"ln1_b{l}"])
        h1 = jax.nn.gelu(rdot(x, p[f"w1{l}"]) + p[f"b1{l}"])
        x = ln(x + rdot(h1, p[f"w2{l}"]) + p[f"b2{l}"], p[f"ln2_g{l}"], p[f"ln2_b{l}"])
        hs.append(x.reshape(N, F_REAL, HIDDEN))
    emb = jnp.stack(hs)                                            # (L+1, N, F, H)
    return jnp.mean(jnp.abs(emb[:, :BATCH] - emb[:, BATCH:]))


if __name__ == "__main__":
    key = jax.random.PRNGKey(0)
    k_wav, k_rec, k_par = jax.random.split(key, 3)

    wav = jax.random.normal(k_wav, (BATCH, T_IN), jnp.float32)
    y_rec = jax.random.normal(k_rec, (BATCH, 1, T_IN), jnp.float32)
    params = init_params(k_par)
    packed = pack_params(params)

    loss_fn = jax.jit(wavlm_loss_forward)
    loss = jax.block_until_ready(loss_fn(wav, y_rec, packed))

    ref = jax.block_until_ready(jax.jit(reference_loss)(wav, y_rec, params))
    rel = abs(float(loss) - float(ref)) / max(abs(float(ref)), 1e-6)
    assert np.isfinite(float(loss)) and rel < 2e-2, (float(loss), float(ref), rel)

    print("KERNEL_OK")
</pallas_src>

<mosaic_0001>
module attributes {stable_mosaic.version = 11 : i64} {
  func.func @_fused_wavlm_l1_kernel(%arg0: memref<4x240xf32, #tpu.memory_space<vmem>>, %arg1: memref<240x320xbf16, #tpu.memory_space<vmem>>, %arg2: memref<480x128xbf16, #tpu.memory_space<vmem>>, %arg3: memref<32x128xf32, #tpu.memory_space<vmem>>, %arg4: memref<8x128xf32, #tpu.memory_space<vmem>>) attributes {dimension_semantics = [], scalar_prefetch = 0 : i64, scratch_operands = 0 : i64, tpu.core_type = #tpu.core_type<tc>} {
    %c0 = arith.constant 0 : index
    %c0_0 = arith.constant 0 : index
    %0 = vector.load %arg0[%c0, %c0_0] : memref<4x240xf32, #tpu.memory_space<vmem>>, vector<4x240xf32>
    %1 = arith.truncf %0 : vector<4x240xf32> to vector<4x240xbf16>
    %c0_1 = arith.constant 0 : index
    %c0_2 = arith.constant 0 : index
    %2 = vector.load %arg1[%c0_1, %c0_2] : memref<240x320xbf16, #tpu.memory_space<vmem>>, vector<240x320xbf16>
    %cst = arith.constant dense<0.000000e+00> : vector<4x320xf32>
    %3 = tpu.matmul %1, %2, %cst {dimension_numbers = #tpu.dot_dimension_numbers<[1], [0], [0], [1], [0, 0, 1, 1], [], []>} : vector<4x240xbf16>, vector<240x320xbf16>, vector<4x320xf32> -> vector<4x320xf32>
    %c0_3 = arith.constant 0 : index
    %c0_4 = arith.constant 0 : index
    %4 = vector.load %arg3[%c0_3, %c0_4] : memref<32x128xf32, #tpu.memory_space<vmem>>, vector<10x32xf32>
    %cst_5 = arith.constant 0.000000e+00 : f32
    %5 = vector.broadcast %cst_5 : f32 to vector<4x32x32xf32>
    %6 = vector.extract_strided_slice %3 {offsets = [0, 0], sizes = [4, 32], strides = [1, 1]} : vector<4x320xf32> to vector<4x32xf32>
    %7 = vector.shape_cast %6 : vector<4x32xf32> to vector<4x32x1xf32>
    %8 = vector.extract_strided_slice %4 {offsets = [0, 0], sizes = [1, 32], strides = [1, 1]} : vector<10x32xf32> to vector<1x32xf32>
    %9 = vector.shape_cast %8 : vector<1x32xf32> to vector<1x1x32xf32>
    %10 = vector.broadcast %7 : vector<4x32x1xf32> to vector<4x32x32xf32>
    %11 = vector.broadcast %9 : vector<1x1x32xf32> to vector<4x32x32xf32>
    %12 = arith.mulf %10, %11 : vector<4x32x32xf32>
    %13 = arith.addf %5, %12 : vector<4x32x32xf32>
    %14 = vector.extract_strided_slice %3 {offsets = [0, 32], sizes = [4, 32], strides = [1, 1]} : vector<4x320xf32> to vector<4x32xf32>
    %15 = vector.shape_cast %14 : vector<4x32xf32> to vector<4x32x1xf32>
    %16 = vector.extract_strided_slice %4 {offsets = [1, 0], sizes = [1, 32], strides = [1, 1]} : vector<10x32xf32> to vector<1x32xf32>
    %17 = vector.shape_cast %16 : vector<1x32xf32> to vector<1x1x32xf32>
    %18 = vector.broadcast %15 : vector<4x32x1xf32> to vector<4x32x32xf32>
    %19 = vector.broadcast %17 : vector<1x1x32xf32> to vector<4x32x32xf32>
    %20 = arith.mulf %18, %19 : vector<4x32x32xf32>
    %21 = arith.addf %13, %20 : vector<4x32x32xf32>
    %22 = vector.extract_strided_slice %3 {offsets = [0, 64], sizes = [4, 32], strides = [1, 1]} : vector<4x320xf32> to vector<4x32xf32>
    %23 = vector.shape_cast %22 : vector<4x32xf32> to vector<4x32x1xf32>
    %24 = vector.extract_strided_slice %4 {offsets = [2, 0], sizes = [1, 32], strides = [1, 1]} : vector<10x32xf32> to vector<1x32xf32>
    %25 = vector.shape_cast %24 : vector<1x32xf32> to vector<1x1x32xf32>
    %26 = vector.broadcast %23 : vector<4x32x1xf32> to vector<4x32x32xf32>
    %27 = vector.broadcast %25 : vector<1x1x32xf32> to vector<4x32x32xf32>
    %28 = arith.mulf %26, %27 : vector<4x32x32xf32>
    %29 = arith.addf %21, %28 : vector<4x32x32xf32>
    %30 = vector.extract_strided_slice %3 {offsets = [0, 96], sizes = [4, 32], strides = [1, 1]} : vector<4x320xf32> to vector<4x32xf32>
    %31 = vector.shape_cast %30 : vector<4x32xf32> to vector<4x32x1xf32>
    %32 = vector.extract_strided_slice %4 {offsets = [3, 0], sizes = [1, 32], strides = [1, 1]} : vector<10x32xf32> to vector<1x32xf32>
    %33 = vector.shape_cast %32 : vector<1x32xf32> to vector<1x1x32xf32>
    %34 = vector.broadcast %31 : vector<4x32x1xf32> to vector<4x32x32xf32>
    %35 = vector.broadcast %33 : vector<1x1x32xf32> to vector<4x32x32xf32>
    %36 = arith.mulf %34, %35 : vector<4x32x32xf32>
    %37 = arith.addf %29, %36 : vector<4x32x32xf32>
    %38 = vector.extract_strided_slice %3 {offsets = [0, 128], sizes = [4, 32], strides = [1, 1]} : vector<4x320xf32> to vector<4x32xf32>
    %39 = vector.shape_cast %38 : vector<4x32xf32> to vector<4x32x1xf32>
    %40 = vector.extract_strided_slice %4 {offsets = [4, 0], sizes = [1, 32], strides = [1, 1]} : vector<10x32xf32> to vector<1x32xf32>
    %41 = vector.shape_cast %40 : vector<1x32xf32> to vector<1x1x32xf32>
    %42 = vector.broadcast %39 : vector<4x32x1xf32> to vector<4x32x32xf32>
    %43 = vector.broadcast %41 : vector<1x1x32xf32> to vector<4x32x32xf32>
    %44 = arith.mulf %42, %43 : vector<4x32x32xf32>
    %45 = arith.addf %37, %44 : vector<4x32x32xf32>
    %46 = vector.extract_strided_slice %3 {offsets = [0, 160], sizes = [4, 32], strides = [1, 1]} : vector<4x320xf32> to vector<4x32xf32>
    %47 = vector.shape_cast %46 : vector<4x32xf32> to vector<4x32x1xf32>
    %48 = vector.extract_strided_slice %4 {offsets = [5, 0], sizes = [1, 32], strides = [1, 1]} : vector<10x32xf32> to vector<1x32xf32>
    %49 = vector.shape_cast %48 : vector<1x32xf32> to vector<1x1x32xf32>
    %50 = vector.broadcast %47 : vector<4x32x1xf32> to vector<4x32x32xf32>
    %51 = vector.broadcast %49 : vector<1x1x32xf32> to vector<4x32x32xf32>
    %52 = arith.mulf %50, %51 : vector<4x32x32xf32>
    %53 = arith.addf %45, %52 : vector<4x32x32xf32>
    %54 = vector.extract_strided_slice %3 {offsets = [0, 192], sizes = [4, 32], strides = [1, 1]} : vector<4x320xf32> to vector<4x32xf32>
    %55 = vector.shape_cast %54 : vector<4x32xf32> to vector<4x32x1xf32>
    %56 = vector.extract_strided_slice %4 {offsets = [6, 0], sizes = [1, 32], strides = [1, 1]} : vector<10x32xf32> to vector<1x32xf32>
    %57 = vector.shape_cast %56 : vector<1x32xf32> to vector<1x1x32xf32>
    %58 = vector.broadcast %55 : vector<4x32x1xf32> to vector<4x32x32xf32>
    %59 = vector.broadcast %57 : vector<1x1x32xf32> to vector<4x32x32xf32>
    %60 = arith.mulf %58, %59 : vector<4x32x32xf32>
    %61 = arith.addf %53, %60 : vector<4x32x32xf32>
    %62 = vector.extract_strided_slice %3 {offsets = [0, 224], sizes = [4, 32], strides = [1, 1]} : vector<4x320xf32> to vector<4x32xf32>
    %63 = vector.shape_cast %62 : vector<4x32xf32> to vector<4x32x1xf32>
    %64 = vector.extract_strided_slice %4 {offsets = [7, 0], sizes = [1, 32], strides = [1, 1]} : vector<10x32xf32> to vector<1x32xf32>
    %65 = vector.shape_cast %64 : vector<1x32xf32> to vector<1x1x32xf32>
    %66 = vector.broadcast %63 : vector<4x32x1xf32> to vector<4x32x32xf32>
    %67 = vector.broadcast %65 : vector<1x1x32xf32> to vector<4x32x32xf32>
    %68 = arith.mulf %66, %67 : vector<4x32x32xf32>
    %69 = arith.addf %61, %68 : vector<4x32x32xf32>
    %70 = vector.extract_strided_slice %3 {offsets = [0, 256], sizes = [4, 32], strides = [1, 1]} : vector<4x320xf32> to vector<4x32xf32>
    %71 = vector.shape_cast %70 : vector<4x32xf32> to vector<4x32x1xf32>
    %72 = vector.extract_strided_slice %4 {offsets = [8, 0], sizes = [1, 32], strides = [1, 1]} : vector<10x32xf32> to vector<1x32xf32>
    %73 = vector.shape_cast %72 : vector<1x32xf32> to vector<1x1x32xf32>
    %74 = vector.broadcast %71 : vector<4x32x1xf32> to vector<4x32x32xf32>
    %75 = vector.broadcast %73 : vector<1x1x32xf32> to vector<4x32x32xf32>
    %76 = arith.mulf %74, %75 : vector<4x32x32xf32>
    %77 = arith.addf %69, %76 : vector<4x32x32xf32>
    %78 = vector.extract_strided_slice %3 {offsets = [0, 288], sizes = [4, 32], strides = [1, 1]} : vector<4x320xf32> to vector<4x32xf32>
    %79 = vector.shape_cast %78 : vector<4x32xf32> to vector<4x32x1xf32>
    %80 = vector.extract_strided_slice %4 {offsets = [9, 0], sizes = [1, 32], strides = [1, 1]} : vector<10x32xf32> to vector<1x32xf32>
    %81 = vector.shape_cast %80 : vector<1x32xf32> to vector<1x1x32xf32>
    %82 = vector.broadcast %79 : vector<4x32x1xf32> to vector<4x32x32xf32>
    %83 = vector.broadcast %81 : vector<1x1x32xf32> to vector<4x32x32xf32>
    %84 = arith.mulf %82, %83 : vector<4x32x32xf32>
    %85 = arith.addf %77, %84 : vector<4x32x32xf32>
    %86 = vector.shape_cast %85 : vector<4x32x32xf32> to vector<128x32xf32>
    %c10 = arith.constant 10 : index
    %c0_6 = arith.constant 0 : index
    %87 = vector.load %arg3[%c10, %c0_6] : memref<32x128xf32, #tpu.memory_space<vmem>>, vector<1x32xf32>
    %88 = vector.broadcast %87 : vector<1x32xf32> to vector<128x32xf32>
    %89 = arith.addf %86, %88 : vector<128x32xf32>
    %90 = arith.mulf %89, %89 : vector<128x32xf32>
    %91 = arith.mulf %89, %90 : vector<128x32xf32>
    %cst_7 = arith.constant 4.471500e-02 : f32
    %92 = vector.broadcast %cst_7 : f32 to vector<128x32xf32>
    %93 = arith.mulf %92, %91 : vector<128x32xf32>
    %94 = arith.addf %89, %93 : vector<128x32xf32>
    %cst_8 = arith.constant 0.797884583 : f32
    %95 = vector.broadcast %cst_8 : f32 to vector<128x32xf32>
    %96 = arith.mulf %95, %94 : vector<128x32xf32>
    %97 = math.tanh %96 : vector<128x32xf32>
    %cst_9 = arith.constant 1.000000e+00 : f32
    %98 = vector.broadcast %cst_9 : f32 to vector<128x32xf32>
    %99 = arith.addf %98, %97 : vector<128x32xf32>
    %cst_10 = arith.constant 5.000000e-01 : f32
    %100 = vector.broadcast %cst_10 : f32 to vector<128x32xf32>
    %101 = arith.mulf %100, %99 : vector<128x32xf32>
    %102 = arith.mulf %89, %101 : vector<128x32xf32>
    %c0_11 = arith.constant 0 : index
    %c0_12 = arith.constant 0 : index
    %103 = vector.load %arg2[%c0_11, %c0_12] : memref<480x128xbf16, #tpu.memory_space<vmem>>, vector<32x32xbf16>
    %104 = arith.truncf %102 : vector<128x32xf32> to vector<128x32xbf16>
    %cst_13 = arith.constant dense<0.000000e+00> : vector<128x32xf32>
    %105 = tpu.matmul %104, %103, %cst_13 {dimension_numbers = #tpu.dot_dimension_numbers<[1], [0], [0], [1], [0, 0, 1, 1], [], []>} : vector<128x32xbf16>, vector<32x32xbf16>, vector<128x32xf32> -> vector<128x32xf32>
    %c11 = arith.constant 11 : index
    %c0_14 = arith.constant 0 : index
    %106 = vector.load %arg3[%c11, %c0_14] : memref<32x128xf32, #tpu.memory_space<vmem>>, vector<1x32xf32>
    %107 = vector.broadcast %106 : vector<1x32xf32> to vector<128x32xf32>
    %108 = arith.addf %105, %107 : vector<128x32xf32>
    %c12 = arith.constant 12 : index
    %c0_15 = arith.constant 0 : index
    %109 = vector.load %arg3[%c12, %c0_15] : memref<32x128xf32, #tpu.memory_space<vmem>>, vector<1x32xf32>
    %c13 = arith.constant 13 : index
    %c0_16 = arith.constant 0 : index
    %110 = vector.load %arg3[%c13, %c0_16] : memref<32x128xf32, #tpu.memory_space<vmem>>, vector<1x32xf32>
    %cst_17 = arith.constant dense<0.000000e+00> : vector<128xf32>
    %111 = vector.multi_reduction <add>, %108, %cst_17 [1] : vector<128x32xf32> to vector<128xf32>
    %112 = vector.shape_cast %111 : vector<128xf32> to vector<128x1xf32>
    %cst_18 = arith.constant 3.200000e+01 : f32
    %113 = vector.broadcast %cst_18 : f32 to vector<128x1xf32>
    %114 = arith.divf %112, %113 : vector<128x1xf32>
    %115 = vector.broadcast %114 : vector<128x1xf32> to vector<128x32xf32>
    %116 = arith.subf %108, %115 : vector<128x32xf32>
    %117 = arith.mulf %116, %116 : vector<128x32xf32>
    %cst_19 = arith.constant dense<0.000000e+00> : vector<128xf32>
    %118 = vector.multi_reduction <add>, %117, %cst_19 [1] : vector<128x32xf32> to vector<128xf32>
    %119 = vector.shape_cast %118 : vector<128xf32> to vector<128x1xf32>
    %cst_20 = arith.constant 3.200000e+01 : f32
    %120 = vector.broadcast %cst_20 : f32 to vector<128x1xf32>
    %121 = arith.divf %119, %120 : vector<128x1xf32>
    %cst_21 = arith.constant 9.99999974E-6 : f32
    %122 = vector.broadcast %cst_21 : f32 to vector<128x1xf32>
    %123 = arith.addf %121, %122 : vector<128x1xf32>
    %124 = math.rsqrt %123 : vector<128x1xf32>
    %125 = vector.broadcast %124 : vector<128x1xf32> to vector<128x32xf32>
    %126 = arith.mulf %116, %125 : vector<128x32xf32>
    %127 = vector.broadcast %109 : vector<1x32xf32> to vector<128x32xf32>
    %128 = arith.mulf %126, %127 : vector<128x32xf32>
    %129 = vector.broadcast %110 : vector<1x32xf32> to vector<128x32xf32>
    %130 = arith.addf %128, %129 : vector<128x32xf32>
    %131 = tpu.iota {dimensions = array<i32: 0>} : vector<64x1xi32>
    %c31_i32 = arith.constant 31 : i32
    %132 = vector.broadcast %c31_i32 : i32 to vector<64x1xi32>
    %133 = arith.andi %131, %132 : vector<64x1xi32>
    %c31_i32_22 = arith.constant 31 : i32
    %134 = vector.broadcast %c31_i32_22 : i32 to vector<64x1xi32>
    %135 = arith.cmpi slt, %133, %134 : vector<64x1xi32>
    %136 = arith.extui %135 : vector<64x1xi1> to vector<64x1xi32>
    %137 = arith.sitofp %136 : vector<64x1xi32> to vector<64x1xf32>
    %138 = tpu.iota {dimensions = array<i32: 0>} : vector<128x128xi32>
    %139 = tpu.iota {dimensions = array<i32: 1>} : vector<128x128xi32>
    %c5_i32 = arith.constant 5 : i32
    %140 = vector.broadcast %c5_i32 : i32 to vector<128x128xi32>
    %141 = arith.shrsi %138, %140 : vector<128x128xi32>
    %c5_i32_23 = arith.constant 5 : i32
    %142 = vector.broadcast %c5_i32_23 : i32 to vector<128x128xi32>
    %143 = arith.shrsi %139, %142 : vector<128x128xi32>
    %144 = arith.cmpi eq, %141, %143 : vector<128x128xi32>
    %c31_i32_24 = arith.constant 31 : i32
    %145 = vector.broadcast %c31_i32_24 : i32 to vector<128x128xi32>
    %146 = arith.andi %139, %145 : vector<128x128xi32>
    %c31_i32_25 = arith.constant 31 : i32
    %147 = vector.broadcast %c31_i32_25 : i32 to vector<128x128xi32>
    %148 = arith.cmpi slt, %146, %147 : vector<128x128xi32>
    %149 = arith.andi %144, %148 : vector<128x128xi1>
    %cst_26 = arith.constant 0.000000e+00 : f32
    %cst_27 = arith.constant -1.000000e+30 : f32
    %150 = vector.broadcast %cst_26 : f32 to vector<128x128xf32>
    %151 = vector.broadcast %cst_27 : f32 to vector<128x128xf32>
    %152 = arith.select %149, %150, %151 : vector<128x128xi1>, vector<128x128xf32>
    %153 = vector.extract_strided_slice %130 {offsets = [0, 0], sizes = [64, 32], strides = [1, 1]} : vector<128x32xf32> to vector<64x32xf32>
    %154 = vector.extract_strided_slice %130 {offsets = [64, 0], sizes = [64, 32], strides = [1, 1]} : vector<128x32xf32> to vector<64x32xf32>
    %155 = arith.subf %153, %154 : vector<64x32xf32>
    %156 = math.absf %155 : vector<64x32xf32>
    %157 = vector.broadcast %137 : vector<64x1xf32> to vector<64x32xf32>
    %158 = arith.mulf %156, %157 : vector<64x32xf32>
    %159 = vector.shape_cast %158 : vector<64x32xf32> to vector<1x64x32xf32>
    %cst_28 = arith.constant dense<0.000000e+00> : vector<1xf32>
    %160 = vector.multi_reduction <add>, %159, %cst_28 [1, 2] : vector<1x64x32xf32> to vector<1xf32>
    %161 = vector.shape_cast %160 : vector<1xf32> to vector<1x1x1xf32>
    %162 = vector.extract %161[0, 0, 0] : f32 from vector<1x1x1xf32>
    %c32 = arith.constant 32 : index
    %c0_29 = arith.constant 0 : index
    %163 = vector.load %arg2[%c32, %c0_29] : memref<480x128xbf16, #tpu.memory_space<vmem>>, vector<32x96xbf16>
    %164 = arith.truncf %130 : vector<128x32xf32> to vector<128x32xbf16>
    %cst_30 = arith.constant dense<0.000000e+00> : vector<128x96xf32>
    %165 = tpu.matmul %164, %163, %cst_30 {dimension_numbers = #tpu.dot_dimension_numbers<[1], [0], [0], [1], [0, 0, 1, 1], [], []>} : vector<128x32xbf16>, vector<32x96xbf16>, vector<128x96xf32> -> vector<128x96xf32>
    %c14 = arith.constant 14 : index
    %c0_31 = arith.constant 0 : index
    %166 = vector.load %arg3[%c14, %c0_31] : memref<32x128xf32, #tpu.memory_space<vmem>>, vector<1x96xf32>
    %167 = vector.broadcast %166 : vector<1x96xf32> to vector<128x96xf32>
    %168 = arith.addf %165, %167 : vector<128x96xf32>
    %169 = vector.extract_strided_slice %168 {offsets = [0, 0], sizes = [128, 8], strides = [1, 1]} : vector<128x96xf32> to vector<128x8xf32>
    %170 = vector.extract_strided_slice %168 {offsets = [0, 32], sizes = [128, 8], strides = [1, 1]} : vector<128x96xf32> to vector<128x8xf32>
    %171 = vector.extract_strided_slice %168 {offsets = [0, 64], sizes = [128, 8], strides = [1, 1]} : vector<128x96xf32> to vector<128x8xf32>
    %172 = arith.truncf %169 : vector<128x8xf32> to vector<128x8xbf16>
    %173 = arith.truncf %170 : vector<128x8xf32> to vector<128x8xbf16>
    %cst_32 = arith.constant dense<0.000000e+00> : vector<128x128xf32>
    %174 = tpu.matmul %172, %173, %cst_32 {dimension_numbers = #tpu.dot_dimension_numbers<[1], [1], [0], [0], [0, 0, 1, 0], [], []>} : vector<128x8xbf16>, vector<128x8xbf16>, vector<128x128xf32> -> vector<128x128xf32>
    %cst_33 = arith.constant 0.353553385 : f32
    %175 = vector.broadcast %cst_33 : f32 to vector<128x128xf32>
    %176 = arith.mulf %174, %175 : vector<128x128xf32>
    %177 = arith.addf %176, %152 : vector<128x128xf32>
    %cst_34 = arith.constant dense<0xFF800000> : vector<128xf32>
    %178 = vector.multi_reduction <maximumf>, %177, %cst_34 [1] : vector<128x128xf32> to vector<128xf32>
    %179 = vector.shape_cast %178 : vector<128xf32> to vector<128x1xf32>
    %180 = vector.broadcast %179 : vector<128x1xf32> to vector<128x128xf32>
    %181 = arith.subf %177, %180 : vector<128x128xf32>
    %182 = math.exp %181 : vector<128x128xf32>
    %cst_35 = arith.constant dense<0.000000e+00> : vector<128xf32>
    %183 = vector.multi_reduction <add>, %182, %cst_35 [1] : vector<128x128xf32> to vector<128xf32>
    %184 = vector.shape_cast %183 : vector<128xf32> to vector<128x1xf32>
    %185 = tpu.reciprocal %184 {approx = true} : vector<128x1xf32> -> vector<128x1xf32>
    %186 = vector.broadcast %185 : vector<128x1xf32> to vector<128x128xf32>
    %187 = arith.mulf %182, %186 : vector<128x128xf32>
    %188 = arith.truncf %187 : vector<128x128xf32> to vector<128x128xbf16>
    %189 = arith.truncf %171 : vector<128x8xf32> to vector<128x8xbf16>
    %cst_36 = arith.constant dense<0.000000e+00> : vector<128x8xf32>
    %190 = tpu.matmul %188, %189, %cst_36 {dimension_numbers = #tpu.dot_dimension_numbers<[1], [0], [0], [1], [0, 0, 1, 1], [], []>} : vector<128x128xbf16>, vector<128x8xbf16>, vector<128x8xf32> -> vector<128x8xf32>
    %191 = vector.extract_strided_slice %168 {offsets = [0, 8], sizes = [128, 8], strides = [1, 1]} : vector<128x96xf32> to vector<128x8xf32>
    %192 = vector.extract_strided_slice %168 {offsets = [0, 40], sizes = [128, 8], strides = [1, 1]} : vector<128x96xf32> to vector<128x8xf32>
    %193 = vector.extract_strided_slice %168 {offsets = [0, 72], sizes = [128, 8], strides = [1, 1]} : vector<128x96xf32> to vector<128x8xf32>
    %194 = arith.truncf %191 : vector<128x8xf32> to vector<128x8xbf16>
    %195 = arith.truncf %192 : vector<128x8xf32> to vector<128x8xbf16>
    %cst_37 = arith.constant dense<0.000000e+00> : vector<128x128xf32>
    %196 = tpu.matmul %194, %195, %cst_37 {dimension_numbers = #tpu.dot_dimension_numbers<[1], [1], [0], [0], [0, 0, 1, 0], [], []>} : vector<128x8xbf16>, vector<128x8xbf16>, vector<128x128xf32> -> vector<128x128xf32>
    %cst_38 = arith.constant 0.353553385 : f32
    %197 = vector.broadcast %cst_38 : f32 to vector<128x128xf32>
    %198 = arith.mulf %196, %197 : vector<128x128xf32>
    %199 = arith.addf %198, %152 : vector<128x128xf32>
    %cst_39 = arith.constant dense<0xFF800000> : vector<128xf32>
    %200 = vector.multi_reduction <maximumf>, %199, %cst_39 [1] : vector<128x128xf32> to vector<128xf32>
    %201 = vector.shape_cast %200 : vector<128xf32> to vector<128x1xf32>
    %202 = vector.broadcast %201 : vector<128x1xf32> to vector<128x128xf32>
    %203 = arith.subf %199, %202 : vector<128x128xf32>
    %204 = math.exp %203 : vector<128x128xf32>
    %cst_40 = arith.constant dense<0.000000e+00> : vector<128xf32>
    %205 = vector.multi_reduction <add>, %204, %cst_40 [1] : vector<128x128xf32> to vector<128xf32>
    %206 = vector.shape_cast %205 : vector<128xf32> to vector<128x1xf32>
    %207 = tpu.reciprocal %206 {approx = true} : vector<128x1xf32> -> vector<128x1xf32>
    %208 = vector.broadcast %207 : vector<128x1xf32> to vector<128x128xf32>
    %209 = arith.mulf %204, %208 : vector<128x128xf32>
    %210 = arith.truncf %209 : vector<128x128xf32> to vector<128x128xbf16>
    %211 = arith.truncf %193 : vector<128x8xf32> to vector<128x8xbf16>
    %cst_41 = arith.constant dense<0.000000e+00> : vector<128x8xf32>
    %212 = tpu.matmul %210, %211, %cst_41 {dimension_numbers = #tpu.dot_dimension_numbers<[1], [0], [0], [1], [0, 0, 1, 1], [], []>} : vector<128x128xbf16>, vector<128x8xbf16>, vector<128x8xf32> -> vector<128x8xf32>
    %213 = vector.extract_strided_slice %168 {offsets = [0, 16], sizes = [128, 8], strides = [1, 1]} : vector<128x96xf32> to vector<128x8xf32>
    %214 = vector.extract_strided_slice %168 {offsets = [0, 48], sizes = [128, 8], strides = [1, 1]} : vector<128x96xf32> to vector<128x8xf32>
    %215 = vector.extract_strided_slice %168 {offsets = [0, 80], sizes = [128, 8], strides = [1, 1]} : vector<128x96xf32> to vector<128x8xf32>
    %216 = arith.truncf %213 : vector<128x8xf32> to vector<128x8xbf16>
    %217 = arith.truncf %214 : vector<128x8xf32> to vector<128x8xbf16>
    %cst_42 = arith.constant dense<0.000000e+00> : vector<128x128xf32>
    %218 = tpu.matmul %216, %217, %cst_42 {dimension_numbers = #tpu.dot_dimension_numbers<[1], [1], [0], [0], [0, 0, 1, 0], [], []>} : vector<128x8xbf16>, vector<128x8xbf16>, vector<128x128xf32> -> vector<128x128xf32>
    %cst_43 = arith.constant 0.353553385 : f32
    %219 = vector.broadcast %cst_43 : f32 to vector<128x128xf32>
    %220 = arith.mulf %218, %219 : vector<128x128xf32>
    %221 = arith.addf %220, %152 : vector<128x128xf32>
    %cst_44 = arith.constant dense<0xFF800000> : vector<128xf32>
    %222 = vector.multi_reduction <maximumf>, %221, %cst_44 [1] : vector<128x128xf32> to vector<128xf32>
    %223 = vector.shape_cast %222 : vector<128xf32> to vector<128x1xf32>
    %224 = vector.broadcast %223 : vector<128x1xf32> to vector<128x128xf32>
    %225 = arith.subf %221, %224 : vector<128x128xf32>
    %226 = math.exp %225 : vector<128x128xf32>
    %cst_45 = arith.constant dense<0.000000e+00> : vector<128xf32>
    %227 = vector.multi_reduction <add>, %226, %cst_45 [1] : vector<128x128xf32> to vector<128xf32>
    %228 = vector.shape_cast %227 : vector<128xf32> to vector<128x1xf32>
    %229 = tpu.reciprocal %228 {approx = true} : vector<128x1xf32> -> vector<128x1xf32>
    %230 = vector.broadcast %229 : vector<128x1xf32> to vector<128x128xf32>
    %231 = arith.mulf %226, %230 : vector<128x128xf32>
    %232 = arith.truncf %231 : vector<128x128xf32> to vector<128x128xbf16>
    %233 = arith.truncf %215 : vector<128x8xf32> to vector<128x8xbf16>
    %cst_46 = arith.constant dense<0.000000e+00> : vector<128x8xf32>
    %234 = tpu.matmul %232, %233, %cst_46 {dimension_numbers = #tpu.dot_dimension_numbers<[1], [0], [0], [1], [0, 0, 1, 1], [], []>} : vector<128x128xbf16>, vector<128x8xbf16>, vector<128x8xf32> -> vector<128x8xf32>
    %235 = vector.extract_strided_slice %168 {offsets = [0, 24], sizes = [128, 8], strides = [1, 1]} : vector<128x96xf32> to vector<128x8xf32>
    %236 = vector.extract_strided_slice %168 {offsets = [0, 56], sizes = [128, 8], strides = [1, 1]} : vector<128x96xf32> to vector<128x8xf32>
    %237 = vector.extract_strided_slice %168 {offsets = [0, 88], sizes = [128, 8], strides = [1, 1]} : vector<128x96xf32> to vector<128x8xf32>
    %238 = arith.truncf %235 : vector<128x8xf32> to vector<128x8xbf16>
    %239 = arith.truncf %236 : vector<128x8xf32> to vector<128x8xbf16>
    %cst_47 = arith.constant dense<0.000000e+00> : vector<128x128xf32>
    %240 = tpu.matmul %238, %239, %cst_47 {dimension_numbers = #tpu.dot_dimension_numbers<[1], [1], [0], [0], [0, 0, 1, 0], [], []>} : vector<128x8xbf16>, vector<128x8xbf16>, vector<128x128xf32> -> vector<128x128xf32>
    %cst_48 = arith.constant 0.353553385 : f32
    %241 = vector.broadcast %cst_48 : f32 to vector<128x128xf32>
    %242 = arith.mulf %240, %241 : vector<128x128xf32>
    %243 = arith.addf %242, %152 : vector<128x128xf32>
    %cst_49 = arith.constant dense<0xFF800000> : vector<128xf32>
    %244 = vector.multi_reduction <maximumf>, %243, %cst_49 [1] : vector<128x128xf32> to vector<128xf32>
    %245 = vector.shape_cast %244 : vector<128xf32> to vector<128x1xf32>
    %246 = vector.broadcast %245 : vector<128x1xf32> to vector<128x128xf32>
    %247 = arith.subf %243, %246 : vector<128x128xf32>
    %248 = math.exp %247 : vector<128x128xf32>
    %cst_50 = arith.constant dense<0.000000e+00> : vector<128xf32>
    %249 = vector.multi_reduction <add>, %248, %cst_50 [1] : vector<128x128xf32> to vector<128xf32>
    %250 = vector.shape_cast %249 : vector<128xf32> to vector<128x1xf32>
    %251 = tpu.reciprocal %250 {approx = true} : vector<128x1xf32> -> vector<128x1xf32>
    %252 = vector.broadcast %251 : vector<128x1xf32> to vector<128x128xf32>
    %253 = arith.mulf %248, %252 : vector<128x128xf32>
    %254 = arith.truncf %253 : vector<128x128xf32> to vector<128x128xbf16>
    %255 = arith.truncf %237 : vector<128x8xf32> to vector<128x8xbf16>
    %cst_51 = arith.constant dense<0.000000e+00> : vector<128x8xf32>
    %256 = tpu.matmul %254, %255, %cst_51 {dimension_numbers = #tpu.dot_dimension_numbers<[1], [0], [0], [1], [0, 0, 1, 1], [], []>} : vector<128x128xbf16>, vector<128x8xbf16>, vector<128x8xf32> -> vector<128x8xf32>
    %257 = tpu.concatenate %190, %212, %234, %256 in 1 : vector<128x8xf32>, vector<128x8xf32>, vector<128x8xf32>, vector<128x8xf32> -> vector<128x32xf32>
    %c64 = arith.constant 64 : index
    %c0_52 = arith.constant 0 : index
    %258 = vector.load %arg2[%c64, %c0_52] : memref<480x128xbf16, #tpu.memory_space<vmem>>, vector<32x32xbf16>
    %259 = arith.truncf %257 : vector<128x32xf32> to vector<128x32xbf16>
    %cst_53 = arith.constant dense<0.000000e+00> : vector<128x32xf32>
    %260 = tpu.matmul %259, %258, %cst_53 {dimension_numbers = #tpu.dot_dimension_numbers<[1], [0], [0], [1], [0, 0, 1, 1], [], []>} : vector<128x32xbf16>, vector<32x32xbf16>, vector<128x32xf32> -> vector<128x32xf32>
    %c15 = arith.constant 15 : index
    %c0_54 = arith.constant 0 : index
    %261 = vector.load %arg3[%c15, %c0_54] : memref<32x128xf32, #tpu.memory_space<vmem>>, vector<1x32xf32>
    %262 = vector.broadcast %261 : vector<1x32xf32> to vector<128x32xf32>
    %263 = arith.addf %260, %262 : vector<128x32xf32>
    %264 = arith.addf %130, %263 : vector<128x32xf32>
    %c16 = arith.constant 16 : index
    %c0_55 = arith.constant 0 : index
    %265 = vector.load %arg3[%c16, %c0_55] : memref<32x128xf32, #tpu.memory_space<vmem>>, vector<1x32xf32>
    %c17 = arith.constant 17 : index
    %c0_56 = arith.constant 0 : index
    %266 = vector.load %arg3[%c17, %c0_56] : memref<32x128xf32, #tpu.memory_space<vmem>>, vector<1x32xf32>
    %cst_57 = arith.constant dense<0.000000e+00> : vector<128xf32>
    %267 = vector.multi_reduction <add>, %264, %cst_57 [1] : vector<128x32xf32> to vector<128xf32>
    %268 = vector.shape_cast %267 : vector<128xf32> to vector<128x1xf32>
    %cst_58 = arith.constant 3.200000e+01 : f32
    %269 = vector.broadcast %cst_58 : f32 to vector<128x1xf32>
    %270 = arith.divf %268, %269 : vector<128x1xf32>
    %271 = vector.broadcast %270 : vector<128x1xf32> to vector<128x32xf32>
    %272 = arith.subf %264, %271 : vector<128x32xf32>
    %273 = arith.mulf %272, %272 : vector<128x32xf32>
    %cst_59 = arith.constant dense<0.000000e+00> : vector<128xf32>
    %274 = vector.multi_reduction <add>, %273, %cst_59 [1] : vector<128x32xf32> to vector<128xf32>
    %275 = vector.shape_cast %274 : vector<128xf32> to vector<128x1xf32>
    %cst_60 = arith.constant 3.200000e+01 : f32
    %276 = vector.broadcast %cst_60 : f32 to vector<128x1xf32>
    %277 = arith.divf %275, %276 : vector<128x1xf32>
    %cst_61 = arith.constant 9.99999974E-6 : f32
    %278 = vector.broadcast %cst_61 : f32 to vector<128x1xf32>
    %279 = arith.addf %277, %278 : vector<128x1xf32>
    %280 = math.rsqrt %279 : vector<128x1xf32>
    %281 = vector.broadcast %280 : vector<128x1xf32> to vector<128x32xf32>
    %282 = arith.mulf %272, %281 : vector<128x32xf32>
    %283 = vector.broadcast %265 : vector<1x32xf32> to vector<128x32xf32>
    %284 = arith.mulf %282, %283 : vector<128x32xf32>
    %285 = vector.broadcast %266 : vector<1x32xf32> to vector<128x32xf32>
    %286 = arith.addf %284, %285 : vector<128x32xf32>
    %c96 = arith.constant 96 : index
    %c0_62 = arith.constant 0 : index
    %287 = vector.load %arg2[%c96, %c0_62] : memref<480x128xbf16, #tpu.memory_space<vmem>>, vector<32x128xbf16>
    %288 = arith.truncf %286 : vector<128x32xf32> to vector<128x32xbf16>
    %cst_63 = arith.constant dense<0.000000e+00> : vector<128x128xf32>
    %289 = tpu.matmul %288, %287, %cst_63 {dimension_numbers = #tpu.dot_dimension_numbers<[1], [0], [0], [1], [0, 0, 1, 1], [], []>} : vector<128x32xbf16>, vector<32x128xbf16>, vector<128x128xf32> -> vector<128x128xf32>
    %c18 = arith.constant 18 : index
    %c0_64 = arith.constant 0 : index
    %290 = vector.load %arg3[%c18, %c0_64] : memref<32x128xf32, #tpu.memory_space<vmem>>, vector<1x128xf32>
    %291 = vector.broadcast %290 : vector<1x128xf32> to vector<128x128xf32>
    %292 = arith.addf %289, %291 : vector<128x128xf32>
    %293 = arith.mulf %292, %292 : vector<128x128xf32>
    %294 = arith.mulf %292, %293 : vector<128x128xf32>
    %cst_65 = arith.constant 4.471500e-02 : f32
    %295 = vector.broadcast %cst_65 : f32 to vector<128x128xf32>
    %296 = arith.mulf %295, %294 : vector<128x128xf32>
    %297 = arith.addf %292, %296 : vector<128x128xf32>
    %cst_66 = arith.constant 0.797884583 : f32
    %298 = vector.broadcast %cst_66 : f32 to vector<128x128xf32>
    %299 = arith.mulf %298, %297 : vector<128x128xf32>
    %300 = math.tanh %299 : vector<128x128xf32>
    %cst_67 = arith.constant 1.000000e+00 : f32
    %301 = vector.broadcast %cst_67 : f32 to vector<128x128xf32>
    %302 = arith.addf %301, %300 : vector<128x128xf32>
    %cst_68 = arith.constant 5.000000e-01 : f32
    %303 = vector.broadcast %cst_68 : f32 to vector<128x128xf32>
    %304 = arith.mulf %303, %302 : vector<128x128xf32>
    %305 = arith.mulf %292, %304 : vector<128x128xf32>
    %c128 = arith.constant 128 : index
    %c0_69 = arith.constant 0 : index
    %306 = vector.load %arg2[%c128, %c0_69] : memref<480x128xbf16, #tpu.memory_space<vmem>>, vector<128x32xbf16>
    %307 = arith.truncf %305 : vector<128x128xf32> to vector<128x128xbf16>
    %cst_70 = arith.constant dense<0.000000e+00> : vector<128x32xf32>
    %308 = tpu.matmul %307, %306, %cst_70 {dimension_numbers = #tpu.dot_dimension_numbers<[1], [0], [0], [1], [0, 0, 1, 1], [], []>} : vector<128x128xbf16>, vector<128x32xbf16>, vector<128x32xf32> -> vector<128x32xf32>
    %309 = arith.addf %286, %308 : vector<128x32xf32>
    %c19 = arith.constant 19 : index
    %c0_71 = arith.constant 0 : index
    %310 = vector.load %arg3[%c19, %c0_71] : memref<32x128xf32, #tpu.memory_space<vmem>>, vector<1x32xf32>
    %311 = vector.broadcast %310 : vector<1x32xf32> to vector<128x32xf32>
    %312 = arith.addf %309, %311 : vector<128x32xf32>
    %c20 = arith.constant 20 : index
    %c0_72 = arith.constant 0 : index
    %313 = vector.load %arg3[%c20, %c0_72] : memref<32x128xf32, #tpu.memory_space<vmem>>, vector<1x32xf32>
    %c21 = arith.constant 21 : index
    %c0_73 = arith.constant 0 : index
    %314 = vector.load %arg3[%c21, %c0_73] : memref<32x128xf32, #tpu.memory_space<vmem>>, vector<1x32xf32>
    %cst_74 = arith.constant dense<0.000000e+00> : vector<128xf32>
    %315 = vector.multi_reduction <add>, %312, %cst_74 [1] : vector<128x32xf32> to vector<128xf32>
    %316 = vector.shape_cast %315 : vector<128xf32> to vector<128x1xf32>
    %cst_75 = arith.constant 3.200000e+01 : f32
    %317 = vector.broadcast %cst_75 : f32 to vector<128x1xf32>
    %318 = arith.divf %316, %317 : vector<128x1xf32>
    %319 = vector.broadcast %318 : vector<128x1xf32> to vector<128x32xf32>
    %320 = arith.subf %312, %319 : vector<128x32xf32>
    %321 = arith.mulf %320, %320 : vector<128x32xf32>
    %cst_76 = arith.constant dense<0.000000e+00> : vector<128xf32>
    %322 = vector.multi_reduction <add>, %321, %cst_76 [1] : vector<128x32xf32> to vector<128xf32>
    %323 = vector.shape_cast %322 : vector<128xf32> to vector<128x1xf32>
    %cst_77 = arith.constant 3.200000e+01 : f32
    %324 = vector.broadcast %cst_77 : f32 to vector<128x1xf32>
    %325 = arith.divf %323, %324 : vector<128x1xf32>
    %cst_78 = arith.constant 9.99999974E-6 : f32
    %326 = vector.broadcast %cst_78 : f32 to vector<128x1xf32>
    %327 = arith.addf %325, %326 : vector<128x1xf32>
    %328 = math.rsqrt %327 : vector<128x1xf32>
    %329 = vector.broadcast %328 : vector<128x1xf32> to vector<128x32xf32>
    %330 = arith.mulf %320, %329 : vector<128x32xf32>
    %331 = vector.broadcast %313 : vector<1x32xf32> to vector<128x32xf32>
    %332 = arith.mulf %330, %331 : vector<128x32xf32>
    %333 = vector.broadcast %314 : vector<1x32xf32> to vector<128x32xf32>
    %334 = arith.addf %332, %333 : vector<128x32xf32>
    %335 = vector.extract_strided_slice %334 {offsets = [0, 0], sizes = [64, 32], strides = [1, 1]} : vector<128x32xf32> to vector<64x32xf32>
    %336 = vector.extract_strided_slice %334 {offsets = [64, 0], sizes = [64, 32], strides = [1, 1]} : vector<128x32xf32> to vector<64x32xf32>
    %337 = arith.subf %335, %336 : vector<64x32xf32>
    %338 = math.absf %337 : vector<64x32xf32>
    %339 = vector.broadcast %137 : vector<64x1xf32> to vector<64x32xf32>
    %340 = arith.mulf %338, %339 : vector<64x32xf32>
    %341 = vector.shape_cast %340 : vector<64x32xf32> to vector<1x64x32xf32>
    %cst_79 = arith.constant dense<0.000000e+00> : vector<1xf32>
    %342 = vector.multi_reduction <add>, %341, %cst_79 [1, 2] : vector<1x64x32xf32> to vector<1xf32>
    %343 = vector.shape_cast %342 : vector<1xf32> to vector<1x1x1xf32>
    %344 = vector.extract %343[0, 0, 0] : f32 from vector<1x1x1xf32>
    %345 = arith.addf %162, %344 : f32
    %c256 = arith.constant 256 : index
    %c0_80 = arith.constant 0 : index
    %346 = vector.load %arg2[%c256, %c0_80] : memref<480x128xbf16, #tpu.memory_space<vmem>>, vector<32x96xbf16>
    %347 = arith.truncf %334 : vector<128x32xf32> to vector<128x32xbf16>
    %cst_81 = arith.constant dense<0.000000e+00> : vector<128x96xf32>
    %348 = tpu.matmul %347, %346, %cst_81 {dimension_numbers = #tpu.dot_dimension_numbers<[1], [0], [0], [1], [0, 0, 1, 1], [], []>} : vector<128x32xbf16>, vector<32x96xbf16>, vector<128x96xf32> -> vector<128x96xf32>
    %c22 = arith.constant 22 : index
    %c0_82 = arith.constant 0 : index
    %349 = vector.load %arg3[%c22, %c0_82] : memref<32x128xf32, #tpu.memory_space<vmem>>, vector<1x96xf32>
    %350 = vector.broadcast %349 : vector<1x96xf32> to vector<128x96xf32>
    %351 = arith.addf %348, %350 : vector<128x96xf32>
    %352 = vector.extract_strided_slice %351 {offsets = [0, 0], sizes = [128, 8], strides = [1, 1]} : vector<128x96xf32> to vector<128x8xf32>
    %353 = vector.extract_strided_slice %351 {offsets = [0, 32], sizes = [128, 8], strides = [1, 1]} : vector<128x96xf32> to vector<128x8xf32>
    %354 = vector.extract_strided_slice %351 {offsets = [0, 64], sizes = [128, 8], strides = [1, 1]} : vector<128x96xf32> to vector<128x8xf32>
    %355 = arith.truncf %352 : vector<128x8xf32> to vector<128x8xbf16>
    %356 = arith.truncf %353 : vector<128x8xf32> to vector<128x8xbf16>
    %cst_83 = arith.constant dense<0.000000e+00> : vector<128x128xf32>
    %357 = tpu.matmul %355, %356, %cst_83 {dimension_numbers = #tpu.dot_dimension_numbers<[1], [1], [0], [0], [0, 0, 1, 0], [], []>} : vector<128x8xbf16>, vector<128x8xbf16>, vector<128x128xf32> -> vector<128x128xf32>
    %cst_84 = arith.constant 0.353553385 : f32
    %358 = vector.broadcast %cst_84 : f32 to vector<128x128xf32>
    %359 = arith.mulf %357, %358 : vector<128x128xf32>
    %360 = arith.addf %359, %152 : vector<128x128xf32>
    %cst_85 = arith.constant dense<0xFF800000> : vector<128xf32>
    %361 = vector.multi_reduction <maximumf>, %360, %cst_85 [1] : vector<128x128xf32> to vector<128xf32>
    %362 = vector.shape_cast %361 : vector<128xf32> to vector<128x1xf32>
    %363 = vector.broadcast %362 : vector<128x1xf32> to vector<128x128xf32>
    %364 = arith.subf %360, %363 : vector<128x128xf32>
    %365 = math.exp %364 : vector<128x128xf32>
    %cst_86 = arith.constant dense<0.000000e+00> : vector<128xf32>
    %366 = vector.multi_reduction <add>, %365, %cst_86 [1] : vector<128x128xf32> to vector<128xf32>
    %367 = vector.shape_cast %366 : vector<128xf32> to vector<128x1xf32>
    %368 = tpu.reciprocal %367 {approx = true} : vector<128x1xf32> -> vector<128x1xf32>
    %369 = vector.broadcast %368 : vector<128x1xf32> to vector<128x128xf32>
    %370 = arith.mulf %365, %369 : vector<128x128xf32>
    %371 = arith.truncf %370 : vector<128x128xf32> to vector<128x128xbf16>
    %372 = arith.truncf %354 : vector<128x8xf32> to vector<128x8xbf16>
    %cst_87 = arith.constant dense<0.000000e+00> : vector<128x8xf32>
    %373 = tpu.matmul %371, %372, %cst_87 {dimension_numbers = #tpu.dot_dimension_numbers<[1], [0], [0], [1], [0, 0, 1, 1], [], []>} : vector<128x128xbf16>, vector<128x8xbf16>, vector<128x8xf32> -> vector<128x8xf32>
    %374 = vector.extract_strided_slice %351 {offsets = [0, 8], sizes = [128, 8], strides = [1, 1]} : vector<128x96xf32> to vector<128x8xf32>
    %375 = vector.extract_strided_slice %351 {offsets = [0, 40], sizes = [128, 8], strides = [1, 1]} : vector<128x96xf32> to vector<128x8xf32>
    %376 = vector.extract_strided_slice %351 {offsets = [0, 72], sizes = [128, 8], strides = [1, 1]} : vector<128x96xf32> to vector<128x8xf32>
    %377 = arith.truncf %374 : vector<128x8xf32> to vector<128x8xbf16>
    %378 = arith.truncf %375 : vector<128x8xf32> to vector<128x8xbf16>
    %cst_88 = arith.constant dense<0.000000e+00> : vector<128x128xf32>
    %379 = tpu.matmul %377, %378, %cst_88 {dimension_numbers = #tpu.dot_dimension_numbers<[1], [1], [0], [0], [0, 0, 1, 0], [], []>} : vector<128x8xbf16>, vector<128x8xbf16>, vector<128x128xf32> -> vector<128x128xf32>
    %cst_89 = arith.constant 0.353553385 : f32
    %380 = vector.broadcast %cst_89 : f32 to vector<128x128xf32>
    %381 = arith.mulf %379, %380 : vector<128x128xf32>
    %382 = arith.addf %381, %152 : vector<128x128xf32>
    %cst_90 = arith.constant dense<0xFF800000> : vector<128xf32>
    %383 = vector.multi_reduction <maximumf>, %382, %cst_90 [1] : vector<128x128xf32> to vector<128xf32>
    %384 = vector.shape_cast %383 : vector<128xf32> to vector<128x1xf32>
    %385 = vector.broadcast %384 : vector<128x1xf32> to vector<128x128xf32>
    %386 = arith.subf %382, %385 : vector<128x128xf32>
    %387 = math.exp %386 : vector<128x128xf32>
    %cst_91 = arith.constant dense<0.000000e+00> : vector<128xf32>
    %388 = vector.multi_reduction <add>, %387, %cst_91 [1] : vector<128x128xf32> to vector<128xf32>
    %389 = vector.shape_cast %388 : vector<128xf32> to vector<128x1xf32>
    %390 = tpu.reciprocal %389 {approx = true} : vector<128x1xf32> -> vector<128x1xf32>
    %391 = vector.broadcast %390 : vector<128x1xf32> to vector<128x128xf32>
    %392 = arith.mulf %387, %391 : vector<128x128xf32>
    %393 = arith.truncf %392 : vector<128x128xf32> to vector<128x128xbf16>
    %394 = arith.truncf %376 : vector<128x8xf32> to vector<128x8xbf16>
    %cst_92 = arith.constant dense<0.000000e+00> : vector<128x8xf32>
    %395 = tpu.matmul %393, %394, %cst_92 {dimension_numbers = #tpu.dot_dimension_numbers<[1], [0], [0], [1], [0, 0, 1, 1], [], []>} : vector<128x128xbf16>, vector<128x8xbf16>, vector<128x8xf32> -> vector<128x8xf32>
    %396 = vector.extract_strided_slice %351 {offsets = [0, 16], sizes = [128, 8], strides = [1, 1]} : vector<128x96xf32> to vector<128x8xf32>
    %397 = vector.extract_strided_slice %351 {offsets = [0, 48], sizes = [128, 8], strides = [1, 1]} : vector<128x96xf32> to vector<128x8xf32>
    %398 = vector.extract_strided_slice %351 {offsets = [0, 80], sizes = [128, 8], strides = [1, 1]} : vector<128x96xf32> to vector<128x8xf32>
    %399 = arith.truncf %396 : vector<128x8xf32> to vector<128x8xbf16>
    %400 = arith.truncf %397 : vector<128x8xf32> to vector<128x8xbf16>
    %cst_93 = arith.constant dense<0.000000e+00> : vector<128x128xf32>
    %401 = tpu.matmul %399, %400, %cst_93 {dimension_numbers = #tpu.dot_dimension_numbers<[1], [1], [0], [0], [0, 0, 1, 0], [], []>} : vector<128x8xbf16>, vector<128x8xbf16>, vector<128x128xf32> -> vector<128x128xf32>
    %cst_94 = arith.constant 0.353553385 : f32
    %402 = vector.broadcast %cst_94 : f32 to vector<128x128xf32>
    %403 = arith.mulf %401, %402 : vector<128x128xf32>
    %404 = arith.addf %403, %152 : vector<128x128xf32>
    %cst_95 = arith.constant dense<0xFF800000> : vector<128xf32>
    %405 = vector.multi_reduction <maximumf>, %404, %cst_95 [1] : vector<128x128xf32> to vector<128xf32>
    %406 = vector.shape_cast %405 : vector<128xf32> to vector<128x1xf32>
    %407 = vector.broadcast %406 : vector<128x1xf32> to vector<128x128xf32>
    %408 = arith.subf %404, %407 : vector<128x128xf32>
    %409 = math.exp %408 : vector<128x128xf32>
    %cst_96 = arith.constant dense<0.000000e+00> : vector<128xf32>
    %410 = vector.multi_reduction <add>, %409, %cst_96 [1] : vector<128x128xf32> to vector<128xf32>
    %411 = vector.shape_cast %410 : vector<128xf32> to vector<128x1xf32>
    %412 = tpu.reciprocal %411 {approx = true} : vector<128x1xf32> -> vector<128x1xf32>
    %413 = vector.broadcast %412 : vector<128x1xf32> to vector<128x128xf32>
    %414 = arith.mulf %409, %413 : vector<128x128xf32>
    %415 = arith.truncf %414 : vector<128x128xf32> to vector<128x128xbf16>
    %416 = arith.truncf %398 : vector<128x8xf32> to vector<128x8xbf16>
    %cst_97 = arith.constant dense<0.000000e+00> : vector<128x8xf32>
    %417 = tpu.matmul %415, %416, %cst_97 {dimension_numbers = #tpu.dot_dimension_numbers<[1], [0], [0], [1], [0, 0, 1, 1], [], []>} : vector<128x128xbf16>, vector<128x8xbf16>, vector<128x8xf32> -> vector<128x8xf32>
    %418 = vector.extract_strided_slice %351 {offsets = [0, 24], sizes = [128, 8], strides = [1, 1]} : vector<128x96xf32> to vector<128x8xf32>
    %419 = vector.extract_strided_slice %351 {offsets = [0, 56], sizes = [128, 8], strides = [1, 1]} : vector<128x96xf32> to vector<128x8xf32>
    %420 = vector.extract_strided_slice %351 {offsets = [0, 88], sizes = [128, 8], strides = [1, 1]} : vector<128x96xf32> to vector<128x8xf32>
    %421 = arith.truncf %418 : vector<128x8xf32> to vector<128x8xbf16>
    %422 = arith.truncf %419 : vector<128x8xf32> to vector<128x8xbf16>
    %cst_98 = arith.constant dense<0.000000e+00> : vector<128x128xf32>
    %423 = tpu.matmul %421, %422, %cst_98 {dimension_numbers = #tpu.dot_dimension_numbers<[1], [1], [0], [0], [0, 0, 1, 0], [], []>} : vector<128x8xbf16>, vector<128x8xbf16>, vector<128x128xf32> -> vector<128x128xf32>
    %cst_99 = arith.constant 0.353553385 : f32
    %424 = vector.broadcast %cst_99 : f32 to vector<128x128xf32>
    %425 = arith.mulf %423, %424 : vector<128x128xf32>
    %426 = arith.addf %425, %152 : vector<128x128xf32>
    %cst_100 = arith.constant dense<0xFF800000> : vector<128xf32>
    %427 = vector.multi_reduction <maximumf>, %426, %cst_100 [1] : vector<128x128xf32> to vector<128xf32>
    %428 = vector.shape_cast %427 : vector<128xf32> to vector<128x1xf32>
    %429 = vector.broadcast %428 : vector<128x1xf32> to vector<128x128xf32>
    %430 = arith.subf %426, %429 : vector<128x128xf32>
    %431 = math.exp %430 : vector<128x128xf32>
    %cst_101 = arith.constant dense<0.000000e+00> : vector<128xf32>
    %432 = vector.multi_reduction <add>, %431, %cst_101 [1] : vector<128x128xf32> to vector<128xf32>
    %433 = vector.shape_cast %432 : vector<128xf32> to vector<128x1xf32>
    %434 = tpu.reciprocal %433 {approx = true} : vector<128x1xf32> -> vector<128x1xf32>
    %435 = vector.broadcast %434 : vector<128x1xf32> to vector<128x128xf32>
    %436 = arith.mulf %431, %435 : vector<128x128xf32>
    %437 = arith.truncf %436 : vector<128x128xf32> to vector<128x128xbf16>
    %438 = arith.truncf %420 : vector<128x8xf32> to vector<128x8xbf16>
    %cst_102 = arith.constant dense<0.000000e+00> : vector<128x8xf32>
    %439 = tpu.matmul %437, %438, %cst_102 {dimension_numbers = #tpu.dot_dimension_numbers<[1], [0], [0], [1], [0, 0, 1, 1], [], []>} : vector<128x128xbf16>, vector<128x8xbf16>, vector<128x8xf32> -> vector<128x8xf32>
    %440 = tpu.concatenate %373, %395, %417, %439 in 1 : vector<128x8xf32>, vector<128x8xf32>, vector<128x8xf32>, vector<128x8xf32> -> vector<128x32xf32>
    %c288 = arith.constant 288 : index
    %c0_103 = arith.constant 0 : index
    %441 = vector.load %arg2[%c288, %c0_103] : memref<480x128xbf16, #tpu.memory_space<vmem>>, vector<32x32xbf16>
    %442 = arith.truncf %440 : vector<128x32xf32> to vector<128x32xbf16>
    %cst_104 = arith.constant dense<0.000000e+00> : vector<128x32xf32>
    %443 = tpu.matmul %442, %441, %cst_104 {dimension_numbers = #tpu.dot_dimension_numbers<[1], [0], [0], [1], [0, 0, 1, 1], [], []>} : vector<128x32xbf16>, vector<32x32xbf16>, vector<128x32xf32> -> vector<128x32xf32>
    %c23 = arith.constant 23 : index
    %c0_105 = arith.constant 0 : index
    %444 = vector.load %arg3[%c23, %c0_105] : memref<32x128xf32, #tpu.memory_space<vmem>>, vector<1x32xf32>
    %445 = vector.broadcast %444 : vector<1x32xf32> to vector<128x32xf32>
    %446 = arith.addf %443, %445 : vector<128x32xf32>
    %447 = arith.addf %334, %446 : vector<128x32xf32>
    %c24 = arith.constant 24 : index
    %c0_106 = arith.constant 0 : index
    %448 = vector.load %arg3[%c24, %c0_106] : memref<32x128xf32, #tpu.memory_space<vmem>>, vector<1x32xf32>
    %c25 = arith.constant 25 : index
    %c0_107 = arith.constant 0 : index
    %449 = vector.load %arg3[%c25, %c0_107] : memref<32x128xf32, #tpu.memory_space<vmem>>, vector<1x32xf32>
    %cst_108 = arith.constant dense<0.000000e+00> : vector<128xf32>
    %450 = vector.multi_reduction <add>, %447, %cst_108 [1] : vector<128x32xf32> to vector<128xf32>
    %451 = vector.shape_cast %450 : vector<128xf32> to vector<128x1xf32>
    %cst_109 = arith.constant 3.200000e+01 : f32
    %452 = vector.broadcast %cst_109 : f32 to vector<128x1xf32>
    %453 = arith.divf %451, %452 : vector<128x1xf32>
    %454 = vector.broadcast %453 : vector<128x1xf32> to vector<128x32xf32>
    %455 = arith.subf %447, %454 : vector<128x32xf32>
    %456 = arith.mulf %455, %455 : vector<128x32xf32>
    %cst_110 = arith.constant dense<0.000000e+00> : vector<128xf32>
    %457 = vector.multi_reduction <add>, %456, %cst_110 [1] : vector<128x32xf32> to vector<128xf32>
    %458 = vector.shape_cast %457 : vector<128xf32> to vector<128x1xf32>
    %cst_111 = arith.constant 3.200000e+01 : f32
    %459 = vector.broadcast %cst_111 : f32 to vector<128x1xf32>
    %460 = arith.divf %458, %459 : vector<128x1xf32>
    %cst_112 = arith.constant 9.99999974E-6 : f32
    %461 = vector.broadcast %cst_112 : f32 to vector<128x1xf32>
    %462 = arith.addf %460, %461 : vector<128x1xf32>
    %463 = math.rsqrt %462 : vector<128x1xf32>
    %464 = vector.broadcast %463 : vector<128x1xf32> to vector<128x32xf32>
    %465 = arith.mulf %455, %464 : vector<128x32xf32>
    %466 = vector.broadcast %448 : vector<1x32xf32> to vector<128x32xf32>
    %467 = arith.mulf %465, %466 : vector<128x32xf32>
    %468 = vector.broadcast %449 : vector<1x32xf32> to vector<128x32xf32>
    %469 = arith.addf %467, %468 : vector<128x32xf32>
    %c320 = arith.constant 320 : index
    %c0_113 = arith.constant 0 : index
    %470 = vector.load %arg2[%c320, %c0_113] : memref<480x128xbf16, #tpu.memory_space<vmem>>, vector<32x128xbf16>
    %471 = arith.truncf %469 : vector<128x32xf32> to vector<128x32xbf16>
    %cst_114 = arith.constant dense<0.000000e+00> : vector<128x128xf32>
    %472 = tpu.matmul %471, %470, %cst_114 {dimension_numbers = #tpu.dot_dimension_numbers<[1], [0], [0], [1], [0, 0, 1, 1], [], []>} : vector<128x32xbf16>, vector<32x128xbf16>, vector<128x128xf32> -> vector<128x128xf32>
    %c26 = arith.constant 26 : index
    %c0_115 = arith.constant 0 : index
    %473 = vector.load %arg3[%c26, %c0_115] : memref<32x128xf32, #tpu.memory_space<vmem>>, vector<1x128xf32>
    %474 = vector.broadcast %473 : vector<1x128xf32> to vector<128x128xf32>
    %475 = arith.addf %472, %474 : vector<128x128xf32>
    %476 = arith.mulf %475, %475 : vector<128x128xf32>
    %477 = arith.mulf %475, %476 : vector<128x128xf32>
    %cst_116 = arith.constant 4.471500e-02 : f32
    %478 = vector.broadcast %cst_116 : f32 to vector<128x128xf32>
    %479 = arith.mulf %478, %477 : vector<128x128xf32>
    %480 = arith.addf %475, %479 : vector<128x128xf32>
    %cst_117 = arith.constant 0.797884583 : f32
    %481 = vector.broadcast %cst_117 : f32 to vector<128x128xf32>
    %482 = arith.mulf %481, %480 : vector<128x128xf32>
    %483 = math.tanh %482 : vector<128x128xf32>
    %cst_118 = arith.constant 1.000000e+00 : f32
    %484 = vector.broadcast %cst_118 : f32 to vector<128x128xf32>
    %485 = arith.addf %484, %483 : vector<128x128xf32>
    %cst_119 = arith.constant 5.000000e-01 : f32
    %486 = vector.broadcast %cst_119 : f32 to vector<128x128xf32>
    %487 = arith.mulf %486, %485 : vector<128x128xf32>
    %488 = arith.mulf %475, %487 : vector<128x128xf32>
    %c352 = arith.constant 352 : index
    %c0_120 = arith.constant 0 : index
    %489 = vector.load %arg2[%c352, %c0_120] : memref<480x128xbf16, #tpu.memory_space<vmem>>, vector<128x32xbf16>
    %490 = arith.truncf %488 : vector<128x128xf32> to vector<128x128xbf16>
    %cst_121 = arith.constant dense<0.000000e+00> : vector<128x32xf32>
    %491 = tpu.matmul %490, %489, %cst_121 {dimension_numbers = #tpu.dot_dimension_numbers<[1], [0], [0], [1], [0, 0, 1, 1], [], []>} : vector<128x128xbf16>, vector<128x32xbf16>, vector<128x32xf32> -> vector<128x32xf32>
    %492 = arith.addf %469, %491 : vector<128x32xf32>
    %c27 = arith.constant 27 : index
    %c0_122 = arith.constant 0 : index
    %493 = vector.load %arg3[%c27, %c0_122] : memref<32x128xf32, #tpu.memory_space<vmem>>, vector<1x32xf32>
    %494 = vector.broadcast %493 : vector<1x32xf32> to vector<128x32xf32>
    %495 = arith.addf %492, %494 : vector<128x32xf32>
    %c28 = arith.constant 28 : index
    %c0_123 = arith.constant 0 : index
    %496 = vector.load %arg3[%c28, %c0_123] : memref<32x128xf32, #tpu.memory_space<vmem>>, vector<1x32xf32>
    %c29 = arith.constant 29 : index
    %c0_124 = arith.constant 0 : index
    %497 = vector.load %arg3[%c29, %c0_124] : memref<32x128xf32, #tpu.memory_space<vmem>>, vector<1x32xf32>
    %cst_125 = arith.constant dense<0.000000e+00> : vector<128xf32>
    %498 = vector.multi_reduction <add>, %495, %cst_125 [1] : vector<128x32xf32> to vector<128xf32>
    %499 = vector.shape_cast %498 : vector<128xf32> to vector<128x1xf32>
    %cst_126 = arith.constant 3.200000e+01 : f32
    %500 = vector.broadcast %cst_126 : f32 to vector<128x1xf32>
    %501 = arith.divf %499, %500 : vector<128x1xf32>
    %502 = vector.broadcast %501 : vector<128x1xf32> to vector<128x32xf32>
    %503 = arith.subf %495, %502 : vector<128x32xf32>
    %504 = arith.mulf %503, %503 : vector<128x32xf32>
    %cst_127 = arith.constant dense<0.000000e+00> : vector<128xf32>
    %505 = vector.multi_reduction <add>, %504, %cst_127 [1] : vector<128x32xf32> to vector<128xf32>
    %506 = vector.shape_cast %505 : vector<128xf32> to vector<128x1xf32>
    %cst_128 = arith.constant 3.200000e+01 : f32
    %507 = vector.broadcast %cst_128 : f32 to vector<128x1xf32>
    %508 = arith.divf %506, %507 : vector<128x1xf32>
    %cst_129 = arith.constant 9.99999974E-6 : f32
    %509 = vector.broadcast %cst_129 : f32 to vector<128x1xf32>
    %510 = arith.addf %508, %509 : vector<128x1xf32>
    %511 = math.rsqrt %510 : vector<128x1xf32>
    %512 = vector.broadcast %511 : vector<128x1xf32> to vector<128x32xf32>
    %513 = arith.mulf %503, %512 : vector<128x32xf32>
    %514 = vector.broadcast %496 : vector<1x32xf32> to vector<128x32xf32>
    %515 = arith.mulf %513, %514 : vector<128x32xf32>
    %516 = vector.broadcast %497 : vector<1x32xf32> to vector<128x32xf32>
    %517 = arith.addf %515, %516 : vector<128x32xf32>
    %518 = vector.extract_strided_slice %517 {offsets = [0, 0], sizes = [64, 32], strides = [1, 1]} : vector<128x32xf32> to vector<64x32xf32>
    %519 = vector.extract_strided_slice %517 {offsets = [64, 0], sizes = [64, 32], strides = [1, 1]} : vector<128x32xf32> to vector<64x32xf32>
    %520 = arith.subf %518, %519 : vector<64x32xf32>
    %521 = math.absf %520 : vector<64x32xf32>
    %522 = vector.broadcast %137 : vector<64x1xf32> to vector<64x32xf32>
    %523 = arith.mulf %521, %522 : vector<64x32xf32>
    %524 = vector.shape_cast %523 : vector<64x32xf32> to vector<1x64x32xf32>
    %cst_130 = arith.constant dense<0.000000e+00> : vector<1xf32>
    %525 = vector.multi_reduction <add>, %524, %cst_130 [1, 2] : vector<1x64x32xf32> to vector<1xf32>
    %526 = vector.shape_cast %525 : vector<1xf32> to vector<1x1x1xf32>
    %527 = vector.extract %526[0, 0, 0] : f32 from vector<1x1x1xf32>
    %528 = arith.addf %345, %527 : f32
    %cst_131 = arith.constant 0.000000e+00 : f32
    %529 = vector.broadcast %cst_131 : f32 to vector<8x128xf32>
    %cst_132 = arith.constant 5.952000e+03 : f32
    %530 = arith.divf %528, %cst_132 : f32
    %531 = vector.broadcast %530 : f32 to vector<8x128xf32>
    %532 = arith.addf %529, %531 : vector<8x128xf32>
    %c0_133 = arith.constant 0 : index
    %c0_134 = arith.constant 0 : index
    %533 = vector.load %arg4[%c0_133, %c0_134] : memref<8x128xf32, #tpu.memory_space<vmem>>, vector<8x128xf32>
    tpu.vector_store %arg4[%c0_133, %c0_134], %532 {strides = array<i32>} : memref<8x128xf32, #tpu.memory_space<vmem>>, vector<8x128xf32>,
    return
  }
}

</mosaic_0001>

<llo_original>
// kernel: wavlm_loss_forward.1
$region0: #{wavlm_loss_forward.1}
  #allocation0 [shape = 'u32[]', space=smem, size = 0x4, offset = 0x4, fixed_abs, tag = 'smem constant byte address 0x4 - core index']
  #allocation1 [shape = 'u32[144,128]{1,0:T(1,128)}', space=vmem, size = 0x12000, scoped, tag = 'internal scratch']
  %s0 = inlined_call_operand.vmem [shape: f32[4,240], index: 0, kind: input, shape index: {}]
  %s1 = inlined_call_operand.vmem [shape: bf16[240,320], index: 1, kind: input, shape index: {}]
  %s2 = inlined_call_operand.vmem [shape: bf16[480,128], index: 2, kind: input, shape index: {}]
  %s3 = inlined_call_operand.vmem [shape: f32[32,128], index: 3, kind: input, shape index: {}]
  %s4 = inlined_call_operand.vmem [shape: f32[8,128], index: 4, kind: output, shape index: {}]
  %s5 = sld [smem:[#allocation0]]
  $region26: #{wavlm_loss_forward.1} parent=0
    _
  %s7 = ssub.s32 1, %s5
  %s8 = scalar_select 0, %s7, %s5
  // Predicated region
  $region2: #{wavlm_loss_forward.1} parent=0 // pred_check
    _
  $region3: #{wavlm_loss_forward.1} parent=0 // pred_check_branch
    %10 = sbr.rel (0) target = $region5
  $region4: #{wavlm_loss_forward.1} parent=0 // pred_region
    _
  $region5: #{wavlm_loss_forward.1} parent=0 // pred_fallthru
    _
  // Predicated region
  $region6: #{wavlm_loss_forward.1} parent=0 // pred_check
    _
  $region7: #{wavlm_loss_forward.1} parent=0 // pred_check_branch
    %12 = sbr.rel (0) target = $region9
  $region8: #{wavlm_loss_forward.1} parent=0 // pred_region
    _
  $region9: #{wavlm_loss_forward.1} parent=0 // pred_fallthru
    _
  // Predicated region
  $region10: #{wavlm_loss_forward.1} parent=0 // pred_check
    _
  $region11: #{wavlm_loss_forward.1} parent=0 // pred_check_branch
    %14 = sbr.rel (0) target = $region13
  $region12: #{wavlm_loss_forward.1} parent=0 // pred_region
    _
  $region13: #{wavlm_loss_forward.1} parent=0 // pred_fallthru
    _
  // Predicated region
  $region14: #{wavlm_loss_forward.1} parent=0 // pred_check
    _
  $region15: #{wavlm_loss_forward.1} parent=0 // pred_check_branch
    %16 = sbr.rel (0) target = $region17
  $region16: #{wavlm_loss_forward.1} parent=0 // pred_region
    _
  $region17: #{wavlm_loss_forward.1} parent=0 // pred_fallthru
    _
  %v18 = vld [vmem:[%s0] sm:$0xff]
  %v20 = vcombine.high %v18, %v18
  %v22 = vpack.c.bf16 %v18, %v18
  %v23 = vpack.c.bf16 %v20, %v20
  %v24 = vld [vmem:[%s1] sm:$0xff]
  %v25 = vld [vmem:[%s1 + $0x8] sm:$0xf]
  %v26 = vld [vmem:[%s1 + $0xc] sm:$0xff]
  %v27 = vld [vmem:[%s1 + $0x14] sm:$0xf]
  %v28 = vld [vmem:[%s1 + $0x18] sm:$0xff]
  %v29 = vld [vmem:[%s1 + $0x20] sm:$0xf]
  %v30 = vld [vmem:[%s1 + $0x24] sm:$0xff]
  %v31 = vld [vmem:[%s1 + $0x2c] sm:$0xf]
  %v32 = vld [vmem:[%s1 + $0x30] sm:$0xff]
  %v33 = vld [vmem:[%s1 + $0x38] sm:$0xf]
  %v34 = vld [vmem:[%s1 + $0x3c] sm:$0xff]
  %v35 = vld [vmem:[%s1 + $0x44] sm:$0xf]
  %v36 = vld [vmem:[%s1 + $0x48] sm:$0xff]
  %v37 = vld [vmem:[%s1 + $0x50] sm:$0xf]
  %v38 = vld [vmem:[%s1 + $0x54] sm:$0xff]
  %v39 = vld [vmem:[%s1 + $0x5c] sm:$0xf]
  %v40 = vld [vmem:[%s1 + $0x60] sm:$0xff]
  %v41 = vld [vmem:[%s1 + $0x68] sm:$0xf]
  %v42 = vld [vmem:[%s1 + $0x6c] sm:$0xff]
  %v43 = vld [vmem:[%s1 + $0x74] sm:$0xf]
  %v44 = vld [vmem:[%s1 + $0x78] sm:$0xff]
  %v45 = vld [vmem:[%s1 + $0x80] sm:$0xf]
  %v46 = vld [vmem:[%s1 + $0x84] sm:$0xff]
  %v47 = vld [vmem:[%s1 + $0x8c] sm:$0xf]
  %v48 = vld [vmem:[%s1 + $0x90] sm:$0xff]
  %v49 = vld [vmem:[%s1 + $0x98] sm:$0xf]
  %v50 = vld [vmem:[%s1 + $0x9c] sm:$0xff]
  %v51 = vld [vmem:[%s1 + $0xa4] sm:$0xf]
  %v52 = vld [vmem:[%s1 + $0xa8] sm:$0xff]
  %v53 = vld [vmem:[%s1 + $0xb0] sm:$0xf]
  %v54 = vld [vmem:[%s1 + $0xb4] sm:$0xff]
  %v55 = vld [vmem:[%s1 + $0xbc] sm:$0xf]
  %v56 = vld [vmem:[%s1 + $0xc0] sm:$0xff]
  %v57 = vld [vmem:[%s1 + $0xc8] sm:$0xf]
  %v58 = vld [vmem:[%s1 + $0xcc] sm:$0xff]
  %v59 = vld [vmem:[%s1 + $0xd4] sm:$0xf]
  %v60 = vld [vmem:[%s1 + $0xd8] sm:$0xff]
  %v61 = vld [vmem:[%s1 + $0xe0] sm:$0xf]
  %v62 = vld [vmem:[%s1 + $0xe4] sm:$0xff]
  %v63 = vld [vmem:[%s1 + $0xec] sm:$0xf]
  %v64 = vld [vmem:[%s1 + $0xf0] sm:$0xff]
  %v65 = vld [vmem:[%s1 + $0xf8] sm:$0xf]
  %v66 = vld [vmem:[%s1 + $0xfc] sm:$0xff]
  %v67 = vld [vmem:[%s1 + $0x104] sm:$0xf]
  %v68 = vld [vmem:[%s1 + $0x108] sm:$0xff]
  %v69 = vld [vmem:[%s1 + $0x110] sm:$0xf]
  %v70 = vld [vmem:[%s1 + $0x114] sm:$0xff]
  %v71 = vld [vmem:[%s1 + $0x11c] sm:$0xf]
  %v72 = vld [vmem:[%s1 + $0x120] sm:$0xff]
  %v73 = vld [vmem:[%s1 + $0x128] sm:$0xf]
  %v74 = vld [vmem:[%s1 + $0x12c] sm:$0xff]
  %v75 = vld [vmem:[%s1 + $0x134] sm:$0xf]
  %v76 = vld [vmem:[%s1 + $0x138] sm:$0xff]
  %v77 = vld [vmem:[%s1 + $0x140] sm:$0xf]
  %v78 = vld [vmem:[%s1 + $0x144] sm:$0xff]
  %v79 = vld [vmem:[%s1 + $0x14c] sm:$0xf]
  %v80 = vld [vmem:[%s1 + $0x150] sm:$0xff]
  %v81 = vld [vmem:[%s1 + $0x158] sm:$0xf]
  %v82 = vld [vmem:[%s1 + $0x15c] sm:$0xff]
  %v83 = vld [vmem:[%s1 + $0x164] sm:$0xf]
  %v144 = vunpack.c.l.b16 %v24
  %v145 = vunpack.c.h.b16 %v24
  %v146 = vunpack.c.l.b16 %v25
  %v147 = vunpack.c.l.b16 %v26
  %v148 = vunpack.c.h.b16 %v26
  %v149 = vunpack.c.l.b16 %v27
  %v150 = vunpack.c.l.b16 %v28
  %v151 = vunpack.c.h.b16 %v28
  %v152 = vunpack.c.l.b16 %v29
  %v153 = vunpack.c.l.b16 %v30
  %v154 = vunpack.c.h.b16 %v30
  %v155 = vunpack.c.l.b16 %v31
  %v156 = vunpack.c.l.b16 %v32
  %v157 = vunpack.c.h.b16 %v32
  %v158 = vunpack.c.l.b16 %v33
  %v159 = vunpack.c.l.b16 %v34
  %v160 = vunpack.c.h.b16 %v34
  %v161 = vunpack.c.l.b16 %v35
  %v162 = vunpack.c.l.b16 %v36
  %v163 = vunpack.c.h.b16 %v36
  %v164 = vunpack.c.l.b16 %v37
  %v165 = vunpack.c.l.b16 %v38
  %v166 = vunpack.c.h.b16 %v38
  %v167 = vunpack.c.l.b16 %v39
  %v168 = vunpack.c.l.b16 %v40
  %v169 = vunpack.c.h.b16 %v40
  %v170 = vunpack.c.l.b16 %v41
  %v171 = vunpack.c.l.b16 %v42
  %v172 = vunpack.c.h.b16 %v42
  %v173 = vunpack.c.l.b16 %v43
  %v174 = vunpack.c.l.b16 %v44
  %v175 = vunpack.c.h.b16 %v44
  %v176 = vunpack.c.l.b16 %v45
  %v177 = vunpack.c.l.b16 %v46
  %v178 = vunpack.c.h.b16 %v46
  %v179 = vunpack.c.l.b16 %v47
  %v180 = vunpack.c.l.b16 %v48
  %v181 = vunpack.c.h.b16 %v48
  %v182 = vunpack.c.l.b16 %v49
  %v183 = vunpack.c.l.b16 %v50
  %v184 = vunpack.c.h.b16 %v50
  %v185 = vunpack.c.l.b16 %v51
  %v186 = vunpack.c.l.b16 %v52
  %v187 = vunpack.c.h.b16 %v52
  %v188 = vunpack.c.l.b16 %v53
  %v189 = vunpack.c.l.b16 %v54
  %v190 = vunpack.c.h.b16 %v54
  %v191 = vunpack.c.l.b16 %v55
  %v192 = vunpack.c.l.b16 %v56
  %v193 = vunpack.c.h.b16 %v56
  %v194 = vunpack.c.l.b16 %v57
  %v195 = vunpack.c.l.b16 %v58
  %v196 = vunpack.c.h.b16 %v58
  %v197 = vunpack.c.l.b16 %v59
  %v198 = vunpack.c.l.b16 %v60
  %v199 = vunpack.c.h.b16 %v60
  %v200 = vunpack.c.l.b16 %v61
  %v201 = vunpack.c.l.b16 %v62
  %v202 = vunpack.c.h.b16 %v62
  %v203 = vunpack.c.l.b16 %v63
  %v204 = vunpack.c.l.b16 %v64
  %v205 = vunpack.c.h.b16 %v64
  %v206 = vunpack.c.l.b16 %v65
  %v207 = vunpack.c.l.b16 %v66
  %v208 = vunpack.c.h.b16 %v66
  %v209 = vunpack.c.l.b16 %v67
  %v210 = vunpack.c.l.b16 %v68
  %v211 = vunpack.c.h.b16 %v68
  %v212 = vunpack.c.l.b16 %v69
  %v213 = vunpack.c.l.b16 %v70
  %v214 = vunpack.c.h.b16 %v70
  %v215 = vunpack.c.l.b16 %v71
  %v216 = vunpack.c.l.b16 %v72
  %v217 = vunpack.c.h.b16 %v72
  %v218 = vunpack.c.l.b16 %v73
  %v219 = vunpack.c.l.b16 %v74
  %v220 = vunpack.c.h.b16 %v74
  %v221 = vunpack.c.l.b16 %v75
  %v222 = vunpack.c.l.b16 %v76
  %v223 = vunpack.c.h.b16 %v76
  %v224 = vunpack.c.l.b16 %v77
  %v225 = vunpack.c.l.b16 %v78
  %v226 = vunpack.c.h.b16 %v78
  %v227 = vunpack.c.l.b16 %v79
  %v228 = vunpack.c.l.b16 %v80
  %v229 = vunpack.c.h.b16 %v80
  %v230 = vunpack.c.l.b16 %v81
  %v231 = vunpack.c.l.b16 %v82
  %v232 = vunpack.c.h.b16 %v82
  %v233 = vunpack.c.l.b16 %v83
  %v234 = vpack.c.b16 %v147, %v144
  %v235 = vpack.c.b16 %v148, %v145
  %v236 = vpack.c.b16 %v149, %v146
  %v237 = vpack.c.b16 %v153, %v150
  %v238 = vpack.c.b16 %v154, %v151
  %v239 = vpack.c.b16 %v155, %v152
  %v240 = vpack.c.b16 %v159, %v156
  %v241 = vpack.c.b16 %v160, %v157
  %v242 = vpack.c.b16 %v161, %v158
  %v243 = vpack.c.b16 %v165, %v162
  %v244 = vpack.c.b16 %v166, %v163
  %v245 = vpack.c.b16 %v167, %v164
  %v246 = vpack.c.b16 %v171, %v168
  %v247 = vpack.c.b16 %v172, %v169
  %v248 = vpack.c.b16 %v173, %v170
  %v249 = vpack.c.b16 %v177, %v174
  %v250 = vpack.c.b16 %v178, %v175
  %v251 = vpack.c.b16 %v179, %v176
  %v252 = vpack.c.b16 %v183, %v180
  %v253 = vpack.c.b16 %v184, %v181
  %v254 = vpack.c.b16 %v185, %v182
  %v255 = vpack.c.b16 %v189, %v186
  %v256 = vpack.c.b16 %v190, %v187
  %v257 = vpack.c.b16 %v191, %v188
  %v258 = vpack.c.b16 %v195, %v192
  %v259 = vpack.c.b16 %v196, %v193
  %v260 = vpack.c.b16 %v197, %v194
  %v261 = vpack.c.b16 %v201, %v198
  %v262 = vpack.c.b16 %v202, %v199
  %v263 = vpack.c.b16 %v203, %v200
  %v264 = vpack.c.b16 %v207, %v204
  %v265 = vpack.c.b16 %v208, %v205
  %v266 = vpack.c.b16 %v209, %v206
  %v267 = vpack.c.b16 %v213, %v210
  %v268 = vpack.c.b16 %v214, %v211
  %v269 = vpack.c.b16 %v215, %v212
  %v270 = vpack.c.b16 %v219, %v216
  %v271 = vpack.c.b16 %v220, %v217
  %v272 = vpack.c.b16 %v221, %v218
  %v273 = vpack.c.b16 %v225, %v222
  %v274 = vpack.c.b16 %v226, %v223
  %v275 = vpack.c.b16 %v227, %v224
  %v276 = vpack.c.b16 %v231, %v228
  %v277 = vpack.c.b16 %v232, %v229
  %v278 = vpack.c.b16 %v233, %v230
  %vm324 = vcmask 916480
  %v326 = vsel %vm324, %v23, 0
  %328 = vmatprep.subr.bf16.mxu0 %v235
  %329 = vmatpush1.bf16.msra.mxu0 %v234
  %330 = vmatprep.subr.bf16.mxu0 %v238
  %331 = vmatpush1.bf16.msra.mxu0 %v237
  %332 = vmatprep.subr.bf16.mxu0 %v241
  %333 = vmatpush1.bf16.msra.mxu0 %v240
  %334 = vmatprep.subr.bf16.mxu0 %v244
  %335 = vmatpush1.bf16.msra.mxu0 %v243
  %336 = vmatprep.subr.bf16.mxu0 %v247
  %337 = vmatpush1.bf16.msra.mxu0 %v246
  %338 = vmatprep.subr.bf16.mxu0 %v250
  %339 = vmatpush1.bf16.msra.mxu0 %v249
  %340 = vmatprep.subr.bf16.mxu0 %v253
  %341 = vmatpush1.bf16.msra.mxu0 %v252
  %342 = vmatprep.subr.bf16.mxu0 %v256
  %343 = vmatpush1.bf16.msra.mxu0 %v255
  %344 = vmatprep.subr.bf16.mxu0 %v259
  %345 = vmatpush1.bf16.msra.mxu0 %v258
  %346 = vmatprep.subr.bf16.mxu0 %v262
  %347 = vmatpush1.bf16.msra.mxu0 %v261
  %348 = vmatprep.subr.bf16.mxu0 %v265
  %349 = vmatpush1.bf16.msra.mxu0 %v264
  %350 = vmatprep.subr.bf16.mxu0 %v268
  %351 = vmatpush1.bf16.msra.mxu0 %v267
  %352 = vmatprep.subr.bf16.mxu0 %v271
  %353 = vmatpush1.bf16.msra.mxu0 %v270
  %354 = vmatprep.subr.bf16.mxu0 %v274
  %355 = vmatpush1.bf16.msra.mxu0 %v273
  %356 = vmatprep.subr.bf16.mxu0 %v277
  %357 = vmatpush1.bf16.msra.mxu0 %v276
  %358 = vmatprep.subr.bf16.mxu0 0
  %359 = vmatpush1.bf16.msra.mxu0 0
  %360 = vmatprep.mubr.bf16.mxu0 %v326
  %361 = vmatmul.mubr.bf16.gmra.mrb[0].mxu0 %v22
  %v362 = vpop.f32.mrb[0].mxu0
  %v363 = vadd.f32 0.0, %v362
  %v364 = vpop.f32.mrb[0].mxu0
  %v365 = vadd.f32 0.0, %v364
  %v366 = vpop.f32.mrb[0].mxu0
  %v367 = vpop.f32.mrb[0].mxu0
  %368 = vdwg.mxu0
  %369 = vmatprep.subr.bf16.mxu0 0
  %370 = vmatpush1.bf16.msra.mxu0 %v236
  %371 = vmatprep.subr.bf16.mxu0 0
  %372 = vmatpush1.bf16.msra.mxu0 %v239
  %373 = vmatprep.subr.bf16.mxu0 0
  %374 = vmatpush1.bf16.msra.mxu0 %v242
  %375 = vmatprep.subr.bf16.mxu0 0
  %376 = vmatpush1.bf16.msra.mxu0 %v245
  %377 = vmatprep.subr.bf16.mxu0 0
  %378 = vmatpush1.bf16.msra.mxu0 %v248
  %379 = vmatprep.subr.bf16.mxu0 0
  %380 = vmatpush1.bf16.msra.mxu0 %v251
  %381 = vmatprep.subr.bf16.mxu0 0
  %382 = vmatpush1.bf16.msra.mxu0 %v254
  %383 = vmatprep.subr.bf16.mxu0 0
  %384 = vmatpush1.bf16.msra.mxu0 %v257
  %385 = vmatprep.subr.bf16.mxu0 0
  %386 = vmatpush1.bf16.msra.mxu0 %v260
  %387 = vmatprep.subr.bf16.mxu0 0
  %388 = vmatpush1.bf16.msra.mxu0 %v263
  %389 = vmatprep.subr.bf16.mxu0 0
  %390 = vmatpush1.bf16.msra.mxu0 %v266
  %391 = vmatprep.subr.bf16.mxu0 0
  %392 = vmatpush1.bf16.msra.mxu0 %v269
  %393 = vmatprep.subr.bf16.mxu0 0
  %394 = vmatpush1.bf16.msra.mxu0 %v272
  %395 = vmatprep.subr.bf16.mxu0 0
  %396 = vmatpush1.bf16.msra.mxu0 %v275
  %397 = vmatprep.subr.bf16.mxu0 0
  %398 = vmatpush1.bf16.msra.mxu0 %v278
  %399 = vmatprep.subr.bf16.mxu0 0
  %400 = vmatpush1.bf16.msra.mxu0 0
  %401 = vmatprep.mubr.bf16.mxu0 %v326
  %402 = vmatmul.mubr.bf16.gmra.mrb[0].mxu0 %v22
  %v403 = vpop.f32.mrb[0].mxu0
  %v404 = vadd.f32 0.0, %v403
  %v405 = vpop.f32.mrb[0].mxu0
  %v406 = vpop.f32.mrb[0].mxu0
  %v407 = vpop.f32.mrb[0].mxu0
  %408 = vdwg.mxu0
  %v409 = vld [vmem:[%s3] sm:$0xff]
  %v410 = vld [vmem:[%s3 + $0x8] sm:$0x3]
  %v411 = vlaneseq
  %v412 = vshrl.u32 %v411, 7
  %v413 = vsub.s32 0, %v412
  %v414 = vrot.slane %v363, %v413
  %416 = vbcast.lane.b32.xlu0 %v414, 256
  %v417 = vpop.permute.xlu0 %416
  %s419 = sor.u32 256, 8
  %420 = vbcast.lane.b32.xlu0 %v414, %s419
  %v421 = vpop.permute.xlu0 %420
  %s423 = sor.u32 256, 16
  %424 = vbcast.lane.b32.xlu0 %v414, %s423
  %v425 = vpop.permute.xlu0 %424
  %s427 = sor.u32 256, 24
  %428 = vbcast.lane.b32.xlu0 %v414, %s427
  %v429 = vpop.permute.xlu0 %428
  %v430 = vlaneseq
  %v431 = vshrl.u32 %v430, 7
  %v432 = vsub.s32 1, %v431
  %v433 = vrot.slane %v363, %v432
  %435 = vbcast.lane.b32.xlu0 %v433, 256
  %v436 = vpop.permute.xlu0 %435
  %s438 = sor.u32 256, 8
  %439 = vbcast.lane.b32.xlu0 %v433, %s438
  %v440 = vpop.permute.xlu0 %439
  %s442 = sor.u32 256, 16
  %443 = vbcast.lane.b32.xlu0 %v433, %s442
  %v444 = vpop.permute.xlu0 %443
  %s446 = sor.u32 256, 24
  %447 = vbcast.lane.b32.xlu0 %v433, %s446
  %v448 = vpop.permute.xlu0 %447
  %v449 = vlaneseq
  %v450 = vshrl.u32 %v449, 7
  %v451 = vsub.s32 2, %v450
  %v452 = vrot.slane %v363, %v451
  %454 = vbcast.lane.b32.xlu0 %v452, 256
  %v455 = vpop.permute.xlu0 %454
  %s457 = sor.u32 256, 8
  %458 = vbcast.lane.b32.xlu0 %v452, %s457
  %v459 = vpop.permute.xlu0 %458
  %s461 = sor.u32 256, 16
  %462 = vbcast.lane.b32.xlu0 %v452, %s461
  %v463 = vpop.permute.xlu0 %462
  %s465 = sor.u32 256, 24
  %466 = vbcast.lane.b32.xlu0 %v452, %s465
  %v467 = vpop.permute.xlu0 %466
  %v468 = vlaneseq
  %v469 = vshrl.u32 %v468, 7
  %v470 = vsub.s32 3, %v469
  %v471 = vrot.slane %v363, %v470
  %473 = vbcast.lane.b32.xlu0 %v471, 256
  %v474 = vpop.permute.xlu0 %473
  %s476 = sor.u32 256, 8
  %477 = vbcast.lane.b32.xlu0 %v471, %s476
  %v478 = vpop.permute.xlu0 %477
  %s480 = sor.u32 256, 16
  %481 = vbcast.lane.b32.xlu0 %v471, %s480
  %v482 = vpop.permute.xlu0 %481
  %s484 = sor.u32 256, 24
  %485 = vbcast.lane.b32.xlu0 %v471, %s484
  %v486 = vpop.permute.xlu0 %485
  %v487 = vlaneseq
  %v488 = vshrl.u32 %v487, 7
  %v489 = vsub.s32 0, %v488
  %v490 = vrot.slane %v409, %v489
  %v491 = vmul.f32 %v417, %v490
  %v492 = vmul.f32 %v421, %v490
  %v493 = vmul.f32 %v425, %v490
  %v494 = vmul.f32 %v429, %v490
  %v495 = vmul.f32 %v436, %v490
  %v496 = vmul.f32 %v440, %v490
  %v497 = vmul.f32 %v444, %v490
  %v498 = vmul.f32 %v448, %v490
  %v499 = vmul.f32 %v455, %v490
  %v500 = vmul.f32 %v459, %v490
  %v501 = vmul.f32 %v463, %v490
  %v502 = vmul.f32 %v467, %v490
  %v503 = vmul.f32 %v474, %v490
  %v504 = vmul.f32 %v478, %v490
  %v505 = vmul.f32 %v482, %v490
  %v506 = vmul.f32 %v486, %v490
  %v507 = vadd.f32 %v491, 0.0
  %v508 = vadd.f32 %v492, 0.0
  %v509 = vadd.f32 %v493, 0.0
  %v510 = vadd.f32 %v494, 0.0
  %v511 = vadd.f32 %v495, 0.0
  %v512 = vadd.f32 %v496, 0.0
  %v513 = vadd.f32 %v497, 0.0
  %v514 = vadd.f32 %v498, 0.0
  %v515 = vadd.f32 %v499, 0.0
  %v516 = vadd.f32 %v500, 0.0
  %v517 = vadd.f32 %v501, 0.0
  %v518 = vadd.f32 %v502, 0.0
  %v519 = vadd.f32 %v503, 0.0
  %v520 = vadd.f32 %v504, 0.0
  %v521 = vadd.f32 %v505, 0.0
  %v522 = vadd.f32 %v506, 0.0
  %s524 = sor.u32 256, 32
  %525 = vbcast.lane.b32.xlu0 %v414, %s524
  %v526 = vpop.permute.xlu0 %525
  %s528 = sor.u32 256, 40
  %529 = vbcast.lane.b32.xlu0 %v414, %s528
  %v530 = vpop.permute.xlu0 %529
  %s532 = sor.u32 256, 48
  %533 = vbcast.lane.b32.xlu0 %v414, %s532
  %v534 = vpop.permute.xlu0 %533
  %s536 = sor.u32 256, 56
  %537 = vbcast.lane.b32.xlu0 %v414, %s536
  %v538 = vpop.permute.xlu0 %537
  %s540 = sor.u32 256, 32
  %541 = vbcast.lane.b32.xlu0 %v433, %s540
  %v542 = vpop.permute.xlu0 %541
  %s544 = sor.u32 256, 40
  %545 = vbcast.lane.b32.xlu0 %v433, %s544
  %v546 = vpop.permute.xlu0 %545
  %s548 = sor.u32 256, 48
  %549 = vbcast.lane.b32.xlu0 %v433, %s548
  %v550 = vpop.permute.xlu0 %549
  %s552 = sor.u32 256, 56
  %553 = vbcast.lane.b32.xlu0 %v433, %s552
  %v554 = vpop.permute.xlu0 %553
  %s556 = sor.u32 256, 32
  %557 = vbcast.lane.b32.xlu0 %v452, %s556
  %v558 = vpop.permute.xlu0 %557
  %s560 = sor.u32 256, 40
  %561 = vbcast.lane.b32.xlu0 %v452, %s560
  %v562 = vpop.permute.xlu0 %561
  %s564 = sor.u32 256, 48
  %565 = vbcast.lane.b32.xlu0 %v452, %s564
  %v566 = vpop.permute.xlu0 %565
  %s568 = sor.u32 256, 56
  %569 = vbcast.lane.b32.xlu0 %v452, %s568
  %v570 = vpop.permute.xlu0 %569
  %s572 = sor.u32 256, 32
  %573 = vbcast.lane.b32.xlu0 %v471, %s572
  %v574 = vpop.permute.xlu0 %573
  %s576 = sor.u32 256, 40
  %577 = vbcast.lane.b32.xlu0 %v471, %s576
  %v578 = vpop.permute.xlu0 %577
  %s580 = sor.u32 256, 48
  %581 = vbcast.lane.b32.xlu0 %v471, %s580
  %v582 = vpop.permute.xlu0 %581
  %s584 = sor.u32 256, 56
  %585 = vbcast.lane.b32.xlu0 %v471, %s584
  %v586 = vpop.permute.xlu0 %585
  %v587 = vlaneseq
  %v588 = vshrl.u32 %v587, 7
  %v589 = vsub.s32 1, %v588
  %v590 = vrot.slane %v409, %v589
  %v591 = vmul.f32 %v526, %v590
  %v592 = vmul.f32 %v530, %v590
  %v593 = vmul.f32 %v534, %v590
  %v594 = vmul.f32 %v538, %v590
  %v595 = vmul.f32 %v542, %v590
  %v596 = vmul.f32 %v546, %v590
  %v597 = vmul.f32 %v550, %v590
  %v598 = vmul.f32 %v554, %v590
  %v599 = vmul.f32 %v558, %v590
  %v600 = vmul.f32 %v562, %v590
  %v601 = vmul.f32 %v566, %v590
  %v602 = vmul.f32 %v570, %v590
  %v603 = vmul.f32 %v574, %v590
  %v604 = vmul.f32 %v578, %v590
  %v605 = vmul.f32 %v582, %v590
  %v606 = vmul.f32 %v586, %v590
  %v607 = vadd.f32 %v507, %v591
  %v608 = vadd.f32 %v508, %v592
  %v609 = vadd.f32 %v509, %v593
  %v610 = vadd.f32 %v510, %v594
  %v611 = vadd.f32 %v511, %v595
  %v612 = vadd.f32 %v512, %v596
  %v613 = vadd.f32 %v513, %v597
  %v614 = vadd.f32 %v514, %v598
  %v615 = vadd.f32 %v515, %v599
  %v616 = vadd.f32 %v516, %v600
  %v617 = vadd.f32 %v517, %v601
  %v618 = vadd.f32 %v518, %v602
  %v619 = vadd.f32 %v519, %v603
  %v620 = vadd.f32 %v520, %v604
  %v621 = vadd.f32 %v521, %v605
  %v622 = vadd.f32 %v522, %v606
  %s624 = sor.u32 256, 64
  %625 = vbcast.lane.b32.xlu0 %v414, %s624
  %v626 = vpop.permute.xlu0 %625
  %s628 = sor.u32 256, 72
  %629 = vbcast.lane.b32.xlu0 %v414, %s628
  %v630 = vpop.permute.xlu0 %629
  %s632 = sor.u32 256, 80
  %633 = vbcast.lane.b32.xlu0 %v414, %s632
  %v634 = vpop.permute.xlu0 %633
  %s636 = sor.u32 256, 88
  %637 = vbcast.lane.b32.xlu0 %v414, %s636
  %v638 = vpop.permute.xlu0 %637
  %s640 = sor.u32 256, 64
  %641 = vbcast.lane.b32.xlu0 %v433, %s640
  %v642 = vpop.permute.xlu0 %641
  %s644 = sor.u32 256, 72
  %645 = vbcast.lane.b32.xlu0 %v433, %s644
  %v646 = vpop.permute.xlu0 %645
  %s648 = sor.u32 256, 80
  %649 = vbcast.lane.b32.xlu0 %v433, %s648
  %v650 = vpop.permute.xlu0 %649
  %s652 = sor.u32 256, 88
  %653 = vbcast.lane.b32.xlu0 %v433, %s652
  %v654 = vpop.permute.xlu0 %653
  %s656 = sor.u32 256, 64
  %657 = vbcast.lane.b32.xlu0 %v452, %s656
  %v658 = vpop.permute.xlu0 %657
  %s660 = sor.u32 256, 72
  %661 = vbcast.lane.b32.xlu0 %v452, %s660
  %v662 = vpop.permute.xlu0 %661
  %s664 = sor.u32 256, 80
  %665 = vbcast.lane.b32.xlu0 %v452, %s664
  %v666 = vpop.permute.xlu0 %665
  %s668 = sor.u32 256, 88
  %669 = vbcast.lane.b32.xlu0 %v452, %s668
  %v670 = vpop.permute.xlu0 %669
  %s672 = sor.u32 256, 64
  %673 = vbcast.lane.b32.xlu0 %v471, %s672
  %v674 = vpop.permute.xlu0 %673
  %s676 = sor.u32 256, 72
  %677 = vbcast.lane.b32.xlu0 %v471, %s676
  %v678 = vpop.permute.xlu0 %677
  %s680 = sor.u32 256, 80
  %681 = vbcast.lane.b32.xlu0 %v471, %s680
  %v682 = vpop.permute.xlu0 %681
  %s684 = sor.u32 256, 88
  %685 = vbcast.lane.b32.xlu0 %v471, %s684
  %v686 = vpop.permute.xlu0 %685
  %v687 = vlaneseq
  %v688 = vshrl.u32 %v687, 7
  %v689 = vsub.s32 2, %v688
  %v690 = vrot.slane %v409, %v689
  %v691 = vmul.f32 %v626, %v690
  %v692 = vmul.f32 %v630, %v690
  %v693 = vmul.f32 %v634, %v690
  %v694 = vmul.f32 %v638, %v690
  %v695 = vmul.f32 %v642, %v690
  %v696 = vmul.f32 %v646, %v690
  %v697 = vmul.f32 %v650, %v690
  %v698 = vmul.f32 %v654, %v690
  %v699 = vmul.f32 %v658, %v690
  %v700 = vmul.f32 %v662, %v690
  %v701 = vmul.f32 %v666, %v690
  %v702 = vmul.f32 %v670, %v690
  %v703 = vmul.f32 %v674, %v690
  %v704 = vmul.f32 %v678, %v690
  %v705 = vmul.f32 %v682, %v690
  %v706 = vmul.f32 %v686, %v690
  %v707 = vadd.f32 %v607, %v691
  %v708 = vadd.f32 %v608, %v692
  %v709 = vadd.f32 %v609, %v693
  %v710 = vadd.f32 %v610, %v694
  %v711 = vadd.f32 %v611, %v695
  %v712 = vadd.f32 %v612, %v696
  %v713 = vadd.f32 %v613, %v697
  %v714 = vadd.f32 %v614, %v698
  %v715 = vadd.f32 %v615, %v699
  %v716 = vadd.f32 %v616, %v700
  %v717 = vadd.f32 %v617, %v701
  %v718 = vadd.f32 %v618, %v702
  %v719 = vadd.f32 %v619, %v703
  %v720 = vadd.f32 %v620, %v704
  %v721 = vadd.f32 %v621, %v705
  %v722 = vadd.f32 %v622, %v706
  %s724 = sor.u32 256, 96
  %725 = vbcast.lane.b32.xlu0 %v414, %s724
  %v726 = vpop.permute.xlu0 %725
  %s728 = sor.u32 256, 104
  %729 = vbcast.lane.b32.xlu0 %v414, %s728
  %v730 = vpop.permute.xlu0 %729
  %s732 = sor.u32 256, 112
  %733 = vbcast.lane.b32.xlu0 %v414, %s732
  %v734 = vpop.permute.xlu0 %733
  %s736 = sor.u32 256, 120
  %737 = vbcast.lane.b32.xlu0 %v414, %s736
  %v738 = vpop.permute.xlu0 %737
  %s740 = sor.u32 256, 96
  %741 = vbcast.lane.b32.xlu0 %v433, %s740
  %v742 = vpop.permute.xlu0 %741
  %s744 = sor.u32 256, 104
  %745 = vbcast.lane.b32.xlu0 %v433, %s744
  %v746 = vpop.permute.xlu0 %745
  %s748 = sor.u32 256, 112
  %749 = vbcast.lane.b32.xlu0 %v433, %s748
  %v750 = vpop.permute.xlu0 %749
  %s752 = sor.u32 256, 120
  %753 = vbcast.lane.b32.xlu0 %v433, %s752
  %v754 = vpop.permute.xlu0 %753
  %s756 = sor.u32 256, 96
  %757 = vbcast.lane.b32.xlu0 %v452, %s756
  %v758 = vpop.permute.xlu0 %757
  %s760 = sor.u32 256, 104
  %761 = vbcast.lane.b32.xlu0 %v452, %s760
  %v762 = vpop.permute.xlu0 %761
  %s764 = sor.u32 256, 112
  %765 = vbcast.lane.b32.xlu0 %v452, %s764
  %v766 = vpop.permute.xlu0 %765
  %s768 = sor.u32 256, 120
  %769 = vbcast.lane.b32.xlu0 %v452, %s768
  %v770 = vpop.permute.xlu0 %769
  %s772 = sor.u32 256, 96
  %773 = vbcast.lane.b32.xlu0 %v471, %s772
  %v774 = vpop.permute.xlu0 %773
  %s776 = sor.u32 256, 104
  %777 = vbcast.lane.b32.xlu0 %v471, %s776
  %v778 = vpop.permute.xlu0 %777
  %s780 = sor.u32 256, 112
  %781 = vbcast.lane.b32.xlu0 %v471, %s780
  %v782 = vpop.permute.xlu0 %781
  %s784 = sor.u32 256, 120
  %785 = vbcast.lane.b32.xlu0 %v471, %s784
  %v786 = vpop.permute.xlu0 %785
  %v787 = vlaneseq
  %v788 = vshrl.u32 %v787, 7
  %v789 = vsub.s32 3, %v788
  %v790 = vrot.slane %v409, %v789
  %v791 = vmul.f32 %v726, %v790
  %v792 = vmul.f32 %v730, %v790
  %v793 = vmul.f32 %v734, %v790
  %v794 = vmul.f32 %v738, %v790
  %v795 = vmul.f32 %v742, %v790
  %v796 = vmul.f32 %v746, %v790
  %v797 = vmul.f32 %v750, %v790
  %v798 = vmul.f32 %v754, %v790
  %v799 = vmul.f32 %v758, %v790
  %v800 = vmul.f32 %v762, %v790
  %v801 = vmul.f32 %v766, %v790
  %v802 = vmul.f32 %v770, %v790
  %v803 = vmul.f32 %v774, %v790
  %v804 = vmul.f32 %v778, %v790
  %v805 = vmul.f32 %v782, %v790
  %v806 = vmul.f32 %v786, %v790
  %v807 = vadd.f32 %v707, %v791
  %v808 = vadd.f32 %v708, %v792
  %v809 = vadd.f32 %v709, %v793
  %v810 = vadd.f32 %v710, %v794
  %v811 = vadd.f32 %v711, %v795
  %v812 = vadd.f32 %v712, %v796
  %v813 = vadd.f32 %v713, %v797
  %v814 = vadd.f32 %v714, %v798
  %v815 = vadd.f32 %v715, %v799
  %v816 = vadd.f32 %v716, %v800
  %v817 = vadd.f32 %v717, %v801
  %v818 = vadd.f32 %v718, %v802
  %v819 = vadd.f32 %v719, %v803
  %v820 = vadd.f32 %v720, %v804
  %v821 = vadd.f32 %v721, %v805
  %v822 = vadd.f32 %v722, %v806
  %v823 = vlaneseq
  %v824 = vshrl.u32 %v823, 7
  %v825 = vsub.s32 0, %v824
  %v826 = vrot.slane %v365, %v825
  %828 = vbcast.lane.b32.xlu0 %v826, 256
  %v829 = vpop.permute.xlu0 %828
  %s831 = sor.u32 256, 8
  %832 = vbcast.lane.b32.xlu0 %v826, %s831
  %v833 = vpop.permute.xlu0 %832
  %s835 = sor.u32 256, 16
  %836 = vbcast.lane.b32.xlu0 %v826, %s835
  %v837 = vpop.permute.xlu0 %836
  %s839 = sor.u32 256, 24
  %840 = vbcast.lane.b32.xlu0 %v826, %s839
  %v841 = vpop.permute.xlu0 %840
  %v842 = vlaneseq
  %v843 = vshrl.u32 %v842, 7
  %v844 = vsub.s32 1, %v843
  %v845 = vrot.slane %v365, %v844
  %847 = vbcast.lane.b32.xlu0 %v845, 256
  %v848 = vpop.permute.xlu0 %847
  %s850 = sor.u32 256, 8
  %851 = vbcast.lane.b32.xlu0 %v845, %s850
  %v852 = vpop.permute.xlu0 %851
  %s854 = sor.u32 256, 16
  %855 = vbcast.lane.b32.xlu0 %v845, %s854
  %v856 = vpop.permute.xlu0 %855
  %s858 = sor.u32 256, 24
  %859 = vbcast.lane.b32.xlu0 %v845, %s858
  %v860 = vpop.permute.xlu0 %859
  %v861 = vlaneseq
  %v862 = vshrl.u32 %v861, 7
  %v863 = vsub.s32 2, %v862
  %v864 = vrot.slane %v365, %v863
  %866 = vbcast.lane.b32.xlu0 %v864, 256
  %v867 = vpop.permute.xlu0 %866
  %s869 = sor.u32 256, 8
  %870 = vbcast.lane.b32.xlu0 %v864, %s869
  %v871 = vpop.permute.xlu0 %870
  %s873 = sor.u32 256, 16
  %874 = vbcast.lane.b32.xlu0 %v864, %s873
  %v875 = vpop.permute.xlu0 %874
  %s877 = sor.u32 256, 24
  %878 = vbcast.lane.b32.xlu0 %v864, %s877
  %v879 = vpop.permute.xlu0 %878
  %v880 = vlaneseq
  %v881 = vshrl.u32 %v880, 7
  %v882 = vsub.s32 3, %v881
  %v883 = vrot.slane %v365, %v882
  %885 = vbcast.lane.b32.xlu0 %v883, 256
  %v886 = vpop.permute.xlu0 %885
  %s888 = sor.u32 256, 8
  %889 = vbcast.lane.b32.xlu0 %v883, %s888
  %v890 = vpop.permute.xlu0 %889
  %s892 = sor.u32 256, 16
  %893 = vbcast.lane.b32.xlu0 %v883, %s892
  %v894 = vpop.permute.xlu0 %893
  %s896 = sor.u32 256, 24
  %897 = vbcast.lane.b32.xlu0 %v883, %s896
  %v898 = vpop.permute.xlu0 %897
  %v899 = vlaneseq
  %v900 = vshrl.u32 %v899, 7
  %v901 = vsub.s32 4, %v900
  %v902 = vrot.slane %v409, %v901
  %v903 = vmul.f32 %v829, %v902
  %v904 = vmul.f32 %v833, %v902
  %v905 = vmul.f32 %v837, %v902
  %v906 = vmul.f32 %v841, %v902
  %v907 = vmul.f32 %v848, %v902
  %v908 = vmul.f32 %v852, %v902
  %v909 = vmul.f32 %v856, %v902
  %v910 = vmul.f32 %v860, %v902
  %v911 = vmul.f32 %v867, %v902
  %v912 = vmul.f32 %v871, %v902
  %v913 = vmul.f32 %v875, %v902
  %v914 = vmul.f32 %v879, %v902
  %v915 = vmul.f32 %v886, %v902
  %v916 = vmul.f32 %v890, %v902
  %v917 = vmul.f32 %v894, %v902
  %v918 = vmul.f32 %v898, %v902
  %v919 = vadd.f32 %v807, %v903
  %v920 = vadd.f32 %v808, %v904
  %v921 = vadd.f32 %v809, %v905
  %v922 = vadd.f32 %v810, %v906
  %v923 = vadd.f32 %v811, %v907
  %v924 = vadd.f32 %v812, %v908
  %v925 = vadd.f32 %v813, %v909
  %v926 = vadd.f32 %v814, %v910
  %v927 = vadd.f32 %v815, %v911
  %v928 = vadd.f32 %v816, %v912
  %v929 = vadd.f32 %v817, %v913
  %v930 = vadd.f32 %v818, %v914
  %v931 = vadd.f32 %v819, %v915
  %v932 = vadd.f32 %v820, %v916
  %v933 = vadd.f32 %v821, %v917
  %v934 = vadd.f32 %v822, %v918
  %s936 = sor.u32 256, 32
  %937 = vbcast.lane.b32.xlu0 %v826, %s936
  %v938 = vpop.permute.xlu0 %937
  %s940 = sor.u32 256, 40
  %941 = vbcast.lane.b32.xlu0 %v826, %s940
  %v942 = vpop.permute.xlu0 %941
  %s944 = sor.u32 256, 48
  %945 = vbcast.lane.b32.xlu0 %v826, %s944
  %v946 = vpop.permute.xlu0 %945
  %s948 = sor.u32 256, 56
  %949 = vbcast.lane.b32.xlu0 %v826, %s948
  %v950 = vpop.permute.xlu0 %949
  %s952 = sor.u32 256, 32
  %953 = vbcast.lane.b32.xlu0 %v845, %s952
  %v954 = vpop.permute.xlu0 %953
  %s956 = sor.u32 256, 40
  %957 = vbcast.lane.b32.xlu0 %v845, %s956
  %v958 = vpop.permute.xlu0 %957
  %s960 = sor.u32 256, 48
  %961 = vbcast.lane.b32.xlu0 %v845, %s960
  %v962 = vpop.permute.xlu0 %961
  %s964 = sor.u32 256, 56
  %965 = vbcast.lane.b32.xlu0 %v845, %s964
  %v966 = vpop.permute.xlu0 %965
  %s968 = sor.u32 256, 32
  %969 = vbcast.lane.b32.xlu0 %v864, %s968
  %v970 = vpop.permute.xlu0 %969
  %s972 = sor.u32 256, 40
  %973 = vbcast.lane.b32.xlu0 %v864, %s972
  %v974 = vpop.permute.xlu0 %973
  %s976 = sor.u32 256, 48
  %977 = vbcast.lane.b32.xlu0 %v864, %s976
  %v978 = vpop.permute.xlu0 %977
  %s980 = sor.u32 256, 56
  %981 = vbcast.lane.b32.xlu0 %v864, %s980
  %v982 = vpop.permute.xlu0 %981
  %s984 = sor.u32 256, 32
  %985 = vbcast.lane.b32.xlu0 %v883, %s984
  %v986 = vpop.permute.xlu0 %985
  %s988 = sor.u32 256, 40
  %989 = vbcast.lane.b32.xlu0 %v883, %s988
  %v990 = vpop.permute.xlu0 %989
  %s992 = sor.u32 256, 48
  %993 = vbcast.lane.b32.xlu0 %v883, %s992
  %v994 = vpop.permute.xlu0 %993
  %s996 = sor.u32 256, 56
  %997 = vbcast.lane.b32.xlu0 %v883, %s996
  %v998 = vpop.permute.xlu0 %997
  %v999 = vlaneseq
  %v1000 = vshrl.u32 %v999, 7
  %v1001 = vsub.s32 5, %v1000
  %v1002 = vrot.slane %v409, %v1001
  %v1003 = vmul.f32 %v938, %v1002
  %v1004 = vmul.f32 %v942, %v1002
  %v1005 = vmul.f32 %v946, %v1002
  %v1006 = vmul.f32 %v950, %v1002
  %v1007 = vmul.f32 %v954, %v1002
  %v1008 = vmul.f32 %v958, %v1002
  %v1009 = vmul.f32 %v962, %v1002
  %v1010 = vmul.f32 %v966, %v1002
  %v1011 = vmul.f32 %v970, %v1002
  %v1012 = vmul.f32 %v974, %v1002
  %v1013 = vmul.f32 %v978, %v1002
  %v1014 = vmul.f32 %v982, %v1002
  %v1015 = vmul.f32 %v986, %v1002
  %v1016 = vmul.f32 %v990, %v1002
  %v1017 = vmul.f32 %v994, %v1002
  %v1018 = vmul.f32 %v998, %v1002
  %v1019 = vadd.f32 %v919, %v1003
  %v1020 = vadd.f32 %v920, %v1004
  %v1021 = vadd.f32 %v921, %v1005
  %v1022 = vadd.f32 %v922, %v1006
  %v1023 = vadd.f32 %v923, %v1007
  %v1024 = vadd.f32 %v924, %v1008
  %v1025 = vadd.f32 %v925, %v1009
  %v1026 = vadd.f32 %v926, %v1010
  %v1027 = vadd.f32 %v927, %v1011
  %v1028 = vadd.f32 %v928, %v1012
  %v1029 = vadd.f32 %v929, %v1013
  %v1030 = vadd.f32 %v930, %v1014
  %v1031 = vadd.f32 %v931, %v1015
  %v1032 = vadd.f32 %v932, %v1016
  %v1033 = vadd.f32 %v933, %v1017
  %v1034 = vadd.f32 %v934, %v1018
  %s1036 = sor.u32 256, 64
  %1037 = vbcast.lane.b32.xlu0 %v826, %s1036
  %v1038 = vpop.permute.xlu0 %1037
  %s1040 = sor.u32 256, 72
  %1041 = vbcast.lane.b32.xlu0 %v826, %s1040
  %v1042 = vpop.permute.xlu0 %1041
  %s1044 = sor.u32 256, 80
  %1045 = vbcast.lane.b32.xlu0 %v826, %s1044
  %v1046 = vpop.permute.xlu0 %1045
  %s1048 = sor.u32 256, 88
  %1049 = vbcast.lane.b32.xlu0 %v826, %s1048
  %v1050 = vpop.permute.xlu0 %1049
  %s1052 = sor.u32 256, 64
  %1053 = vbcast.lane.b32.xlu0 %v845, %s1052
  %v1054 = vpop.permute.xlu0 %1053
  %s1056 = sor.u32 256, 72
  %1057 = vbcast.lane.b32.xlu0 %v845, %s1056
  %v1058 = vpop.permute.xlu0 %1057
  %s1060 = sor.u32 256, 80
  %1061 = vbcast.lane.b32.xlu0 %v845, %s1060
  %v1062 = vpop.permute.xlu0 %1061
  %s1064 = sor.u32 256, 88
  %1065 = vbcast.lane.b32.xlu0 %v845, %s1064
  %v1066 = vpop.permute.xlu0 %1065
  %s1068 = sor.u32 256, 64
  %1069 = vbcast.lane.b32.xlu0 %v864, %s1068
  %v1070 = vpop.permute.xlu0 %1069
  %s1072 = sor.u32 256, 72
  %1073 = vbcast.lane.b32.xlu0 %v864, %s1072
  %v1074 = vpop.permute.xlu0 %1073
  %s1076 = sor.u32 256, 80
  %1077 = vbcast.lane.b32.xlu0 %v864, %s1076
  %v1078 = vpop.permute.xlu0 %1077
  %s1080 = sor.u32 256, 88
  %1081 = vbcast.lane.b32.xlu0 %v864, %s1080
  %v1082 = vpop.permute.xlu0 %1081
  %s1084 = sor.u32 256, 64
  %1085 = vbcast.lane.b32.xlu0 %v883, %s1084
  %v1086 = vpop.permute.xlu0 %1085
  %s1088 = sor.u32 256, 72
  %1089 = vbcast.lane.b32.xlu0 %v883, %s1088
  %v1090 = vpop.permute.xlu0 %1089
  %s1092 = sor.u32 256, 80
  %1093 = vbcast.lane.b32.xlu0 %v883, %s1092
  %v1094 = vpop.permute.xlu0 %1093
  %s1096 = sor.u32 256, 88
  %1097 = vbcast.lane.b32.xlu0 %v883, %s1096
  %v1098 = vpop.permute.xlu0 %1097
  %v1099 = vlaneseq
  %v1100 = vshrl.u32 %v1099, 7
  %v1101 = vsub.s32 6, %v1100
  %v1102 = vrot.slane %v409, %v1101
  %v1103 = vmul.f32 %v1038, %v1102
  %v1104 = vmul.f32 %v1042, %v1102
  %v1105 = vmul.f32 %v1046, %v1102
  %v1106 = vmul.f32 %v1050, %v1102
  %v1107 = vmul.f32 %v1054, %v1102
  %v1108 = vmul.f32 %v1058, %v1102
  %v1109 = vmul.f32 %v1062, %v1102
  %v1110 = vmul.f32 %v1066, %v1102
  %v1111 = vmul.f32 %v1070, %v1102
  %v1112 = vmul.f32 %v1074, %v1102
  %v1113 = vmul.f32 %v1078, %v1102
  %v1114 = vmul.f32 %v1082, %v1102
  %v1115 = vmul.f32 %v1086, %v1102
  %v1116 = vmul.f32 %v1090, %v1102
  %v1117 = vmul.f32 %v1094, %v1102
  %v1118 = vmul.f32 %v1098, %v1102
  %v1119 = vadd.f32 %v1019, %v1103
  %v1120 = vadd.f32 %v1020, %v1104
  %v1121 = vadd.f32 %v1021, %v1105
  %v1122 = vadd.f32 %v1022, %v1106
  %v1123 = vadd.f32 %v1023, %v1107
  %v1124 = vadd.f32 %v1024, %v1108
  %v1125 = vadd.f32 %v1025, %v1109
  %v1126 = vadd.f32 %v1026, %v1110
  %v1127 = vadd.f32 %v1027, %v1111
  %v1128 = vadd.f32 %v1028, %v1112
  %v1129 = vadd.f32 %v1029, %v1113
  %v1130 = vadd.f32 %v1030, %v1114
  %v1131 = vadd.f32 %v1031, %v1115
  %v1132 = vadd.f32 %v1032, %v1116
  %v1133 = vadd.f32 %v1033, %v1117
  %v1134 = vadd.f32 %v1034, %v1118
  %s1136 = sor.u32 256, 96
  %1137 = vbcast.lane.b32.xlu0 %v826, %s1136
  %v1138 = vpop.permute.xlu0 %1137
  %s1140 = sor.u32 256, 104
  %1141 = vbcast.lane.b32.xlu0 %v826, %s1140
  %v1142 = vpop.permute.xlu0 %1141
  %s1144 = sor.u32 256, 112
  %1145 = vbcast.lane.b32.xlu0 %v826, %s1144
  %v1146 = vpop.permute.xlu0 %1145
  %s1148 = sor.u32 256, 120
  %1149 = vbcast.lane.b32.xlu0 %v826, %s1148
  %v1150 = vpop.permute.xlu0 %1149
  %s1152 = sor.u32 256, 96
  %1153 = vbcast.lane.b32.xlu0 %v845, %s1152
  %v1154 = vpop.permute.xlu0 %1153
  %s1156 = sor.u32 256, 104
  %1157 = vbcast.lane.b32.xlu0 %v845, %s1156
  %v1158 = vpop.permute.xlu0 %1157
  %s1160 = sor.u32 256, 112
  %1161 = vbcast.lane.b32.xlu0 %v845, %s1160
  %v1162 = vpop.permute.xlu0 %1161
  %s1164 = sor.u32 256, 120
  %1165 = vbcast.lane.b32.xlu0 %v845, %s1164
  %v1166 = vpop.permute.xlu0 %1165
  %s1168 = sor.u32 256, 96
  %1169 = vbcast.lane.b32.xlu0 %v864, %s1168
  %v1170 = vpop.permute.xlu0 %1169
  %s1172 = sor.u32 256, 104
  %1173 = vbcast.lane.b32.xlu0 %v864, %s1172
  %v1174 = vpop.permute.xlu0 %1173
  %s1176 = sor.u32 256, 112
  %1177 = vbcast.lane.b32.xlu0 %v864, %s1176
  %v1178 = vpop.permute.xlu0 %1177
  %s1180 = sor.u32 256, 120
  %1181 = vbcast.lane.b32.xlu0 %v864, %s1180
  %v1182 = vpop.permute.xlu0 %1181
  %s1184 = sor.u32 256, 96
  %1185 = vbcast.lane.b32.xlu0 %v883, %s1184
  %v1186 = vpop.permute.xlu0 %1185
  %s1188 = sor.u32 256, 104
  %1189 = vbcast.lane.b32.xlu0 %v883, %s1188
  %v1190 = vpop.permute.xlu0 %1189
  %s1192 = sor.u32 256, 112
  %1193 = vbcast.lane.b32.xlu0 %v883, %s1192
  %v1194 = vpop.permute.xlu0 %1193
  %s1196 = sor.u32 256, 120
  %1197 = vbcast.lane.b32.xlu0 %v883, %s1196
  %v1198 = vpop.permute.xlu0 %1197
  %v1199 = vlaneseq
  %v1200 = vshrl.u32 %v1199, 7
  %v1201 = vsub.s32 7, %v1200
  %v1202 = vrot.slane %v409, %v1201
  %v1203 = vmul.f32 %v1138, %v1202
  %v1204 = vmul.f32 %v1142, %v1202
  %v1205 = vmul.f32 %v1146, %v1202
  %v1206 = vmul.f32 %v1150, %v1202
  %v1207 = vmul.f32 %v1154, %v1202
  %v1208 = vmul.f32 %v1158, %v1202
  %v1209 = vmul.f32 %v1162, %v1202
  %v1210 = vmul.f32 %v1166, %v1202
  %v1211 = vmul.f32 %v1170, %v1202
  %v1212 = vmul.f32 %v1174, %v1202
  %v1213 = vmul.f32 %v1178, %v1202
  %v1214 = vmul.f32 %v1182, %v1202
  %v1215 = vmul.f32 %v1186, %v1202
  %v1216 = vmul.f32 %v1190, %v1202
  %v1217 = vmul.f32 %v1194, %v1202
  %v1218 = vmul.f32 %v1198, %v1202
  %v1219 = vadd.f32 %v1119, %v1203
  %v1220 = vadd.f32 %v1120, %v1204
  %v1221 = vadd.f32 %v1121, %v1205
  %v1222 = vadd.f32 %v1122, %v1206
  %v1223 = vadd.f32 %v1123, %v1207
  %v1224 = vadd.f32 %v1124, %v1208
  %v1225 = vadd.f32 %v1125, %v1209
  %v1226 = vadd.f32 %v1126, %v1210
  %v1227 = vadd.f32 %v1127, %v1211
  %v1228 = vadd.f32 %v1128, %v1212
  %v1229 = vadd.f32 %v1129, %v1213
  %v1230 = vadd.f32 %v1130, %v1214
  %v1231 = vadd.f32 %v1131, %v1215
  %v1232 = vadd.f32 %v1132, %v1216
  %v1233 = vadd.f32 %v1133, %v1217
  %v1234 = vadd.f32 %v1134, %v1218
  %v1235 = vlaneseq
  %v1236 = vshrl.u32 %v1235, 7
  %v1237 = vsub.s32 0, %v1236
  %v1238 = vrot.slane %v404, %v1237
  %1240 = vbcast.lane.b32.xlu0 %v1238, 256
  %v1241 = vpop.permute.xlu0 %1240
  %s1243 = sor.u32 256, 8
  %1244 = vbcast.lane.b32.xlu0 %v1238, %s1243
  %v1245 = vpop.permute.xlu0 %1244
  %s1247 = sor.u32 256, 16
  %1248 = vbcast.lane.b32.xlu0 %v1238, %s1247
  %v1249 = vpop.permute.xlu0 %1248
  %s1251 = sor.u32 256, 24
  %1252 = vbcast.lane.b32.xlu0 %v1238, %s1251
  %v1253 = vpop.permute.xlu0 %1252
  %v1254 = vlaneseq
  %v1255 = vshrl.u32 %v1254, 7
  %v1256 = vsub.s32 1, %v1255
  %v1257 = vrot.slane %v404, %v1256
  %1259 = vbcast.lane.b32.xlu0 %v1257, 256
  %v1260 = vpop.permute.xlu0 %1259
  %s1262 = sor.u32 256, 8
  %1263 = vbcast.lane.b32.xlu0 %v1257, %s1262
  %v1264 = vpop.permute.xlu0 %1263
  %s1266 = sor.u32 256, 16
  %1267 = vbcast.lane.b32.xlu0 %v1257, %s1266
  %v1268 = vpop.permute.xlu0 %1267
  %s1270 = sor.u32 256, 24
  %1271 = vbcast.lane.b32.xlu0 %v1257, %s1270
  %v1272 = vpop.permute.xlu0 %1271
  %v1273 = vlaneseq
  %v1274 = vshrl.u32 %v1273, 7
  %v1275 = vsub.s32 2, %v1274
  %v1276 = vrot.slane %v404, %v1275
  %1278 = vbcast.lane.b32.xlu0 %v1276, 256
  %v1279 = vpop.permute.xlu0 %1278
  %s1281 = sor.u32 256, 8
  %1282 = vbcast.lane.b32.xlu0 %v1276, %s1281
  %v1283 = vpop.permute.xlu0 %1282
  %s1285 = sor.u32 256, 16
  %1286 = vbcast.lane.b32.xlu0 %v1276, %s1285
  %v1287 = vpop.permute.xlu0 %1286
  %s1289 = sor.u32 256, 24
  %1290 = vbcast.lane.b32.xlu0 %v1276, %s1289
  %v1291 = vpop.permute.xlu0 %1290
  %v1292 = vlaneseq
  %v1293 = vshrl.u32 %v1292, 7
  %v1294 = vsub.s32 3, %v1293
  %v1295 = vrot.slane %v404, %v1294
  %1297 = vbcast.lane.b32.xlu0 %v1295, 256
  %v1298 = vpop.permute.xlu0 %1297
  %s1300 = sor.u32 256, 8
  %1301 = vbcast.lane.b32.xlu0 %v1295, %s1300
  %v1302 = vpop.permute.xlu0 %1301
  %s1304 = sor.u32 256, 16
  %1305 = vbcast.lane.b32.xlu0 %v1295, %s1304
  %v1306 = vpop.permute.xlu0 %1305
  %s1308 = sor.u32 256, 24
  %1309 = vbcast.lane.b32.xlu0 %v1295, %s1308
  %v1310 = vpop.permute.xlu0 %1309
  %v1311 = vlaneseq
  %v1312 = vshrl.u32 %v1311, 7
  %v1313 = vsub.s32 0, %v1312
  %v1314 = vrot.slane %v410, %v1313
  %v1315 = vmul.f32 %v1241, %v1314
  %v1316 = vmul.f32 %v1245, %v1314
  %v1317 = vmul.f32 %v1249, %v1314
  %v1318 = vmul.f32 %v1253, %v1314
  %v1319 = vmul.f32 %v1260, %v1314
  %v1320 = vmul.f32 %v1264, %v1314
  %v1321 = vmul.f32 %v1268, %v1314
  %v1322 = vmul.f32 %v1272, %v1314
  %v1323 = vmul.f32 %v1279, %v1314
  %v1324 = vmul.f32 %v1283, %v1314
  %v1325 = vmul.f32 %v1287, %v1314
  %v1326 = vmul.f32 %v1291, %v1314
  %v1327 = vmul.f32 %v1298, %v1314
  %v1328 = vmul.f32 %v1302, %v1314
  %v1329 = vmul.f32 %v1306, %v1314
  %v1330 = vmul.f32 %v1310, %v1314
  %v1331 = vadd.f32 %v1219, %v1315
  %v1332 = vadd.f32 %v1220, %v1316
  %v1333 = vadd.f32 %v1221, %v1317
  %v1334 = vadd.f32 %v1222, %v1318
  %v1335 = vadd.f32 %v1223, %v1319
  %v1336 = vadd.f32 %v1224, %v1320
  %v1337 = vadd.f32 %v1225, %v1321
  %v1338 = vadd.f32 %v1226, %v1322
  %v1339 = vadd.f32 %v1227, %v1323
  %v1340 = vadd.f32 %v1228, %v1324
  %v1341 = vadd.f32 %v1229, %v1325
  %v1342 = vadd.f32 %v1230, %v1326
  %v1343 = vadd.f32 %v1231, %v1327
  %v1344 = vadd.f32 %v1232, %v1328
  %v1345 = vadd.f32 %v1233, %v1329
  %v1346 = vadd.f32 %v1234, %v1330
  %s1348 = sor.u32 256, 32
  %1349 = vbcast.lane.b32.xlu0 %v1238, %s1348
  %v1350 = vpop.permute.xlu0 %1349
  %s1352 = sor.u32 256, 40
  %1353 = vbcast.lane.b32.xlu0 %v1238, %s1352
  %v1354 = vpop.permute.xlu0 %1353
  %s1356 = sor.u32 256, 48
  %1357 = vbcast.lane.b32.xlu0 %v1238, %s1356
  %v1358 = vpop.permute.xlu0 %1357
  %s1360 = sor.u32 256, 56
  %1361 = vbcast.lane.b32.xlu0 %v1238, %s1360
  %v1362 = vpop.permute.xlu0 %1361
  %s1364 = sor.u32 256, 32
  %1365 = vbcast.lane.b32.xlu0 %v1257, %s1364
  %v1366 = vpop.permute.xlu0 %1365
  %s1368 = sor.u32 256, 40
  %1369 = vbcast.lane.b32.xlu0 %v1257, %s1368
  %v1370 = vpop.permute.xlu0 %1369
  %s1372 = sor.u32 256, 48
  %1373 = vbcast.lane.b32.xlu0 %v1257, %s1372
  %v1374 = vpop.permute.xlu0 %1373
  %s1376 = sor.u32 256, 56
  %1377 = vbcast.lane.b32.xlu0 %v1257, %s1376
  %v1378 = vpop.permute.xlu0 %1377
  %s1380 = sor.u32 256, 32
  %1381 = vbcast.lane.b32.xlu0 %v1276, %s1380
  %v1382 = vpop.permute.xlu0 %1381
  %s1384 = sor.u32 256, 40
  %1385 = vbcast.lane.b32.xlu0 %v1276, %s1384
  %v1386 = vpop.permute.xlu0 %1385
  %s1388 = sor.u32 256, 48
  %1389 = vbcast.lane.b32.xlu0 %v1276, %s1388
  %v1390 = vpop.permute.xlu0 %1389
  %s1392 = sor.u32 256, 56
  %1393 = vbcast.lane.b32.xlu0 %v1276, %s1392
  %v1394 = vpop.permute.xlu0 %1393
  %s1396 = sor.u32 256, 32
  %1397 = vbcast.lane.b32.xlu0 %v1295, %s1396
  %v1398 = vpop.permute.xlu0 %1397
  %s1400 = sor.u32 256, 40
  %1401 = vbcast.lane.b32.xlu0 %v1295, %s1400
  %v1402 = vpop.permute.xlu0 %1401
  %s1404 = sor.u32 256, 48
  %1405 = vbcast.lane.b32.xlu0 %v1295, %s1404
  %v1406 = vpop.permute.xlu0 %1405
  %s1408 = sor.u32 256, 56
  %1409 = vbcast.lane.b32.xlu0 %v1295, %s1408
  %v1410 = vpop.permute.xlu0 %1409
  %v1411 = vlaneseq
  %v1412 = vshrl.u32 %v1411, 7
  %v1413 = vsub.s32 1, %v1412
  %v1414 = vrot.slane %v410, %v1413
  %v1415 = vmul.f32 %v1350, %v1414
  %v1416 = vmul.f32 %v1354, %v1414
  %v1417 = vmul.f32 %v1358, %v1414
  %v1418 = vmul.f32 %v1362, %v1414
  %v1419 = vmul.f32 %v1366, %v1414
  %v1420 = vmul.f32 %v1370, %v1414
  %v1421 = vmul.f32 %v1374, %v1414
  %v1422 = vmul.f32 %v1378, %v1414
  %v1423 = vmul.f32 %v1382, %v1414
  %v1424 = vmul.f32 %v1386, %v1414
  %v1425 = vmul.f32 %v1390, %v1414
  %v1426 = vmul.f32 %v1394, %v1414
  %v1427 = vmul.f32 %v1398, %v1414
  %v1428 = vmul.f32 %v1402, %v1414
  %v1429 = vmul.f32 %v1406, %v1414
  %v1430 = vmul.f32 %v1410, %v1414
  %v1431 = vadd.f32 %v1331, %v1415
  %v1432 = vadd.f32 %v1332, %v1416
  %v1433 = vadd.f32 %v1333, %v1417
  %v1434 = vadd.f32 %v1334, %v1418
  %v1435 = vadd.f32 %v1335, %v1419
  %v1436 = vadd.f32 %v1336, %v1420
  %v1437 = vadd.f32 %v1337, %v1421
  %v1438 = vadd.f32 %v1338, %v1422
  %v1439 = vadd.f32 %v1339, %v1423
  %v1440 = vadd.f32 %v1340, %v1424
  %v1441 = vadd.f32 %v1341, %v1425
  %v1442 = vadd.f32 %v1342, %v1426
  %v1443 = vadd.f32 %v1343, %v1427
  %v1444 = vadd.f32 %v1344, %v1428
  %v1445 = vadd.f32 %v1345, %v1429
  %v1446 = vadd.f32 %v1346, %v1430
  %v1447 = vld [vmem:[%s3 + $0xa] sm:$0x1]
  %v1448 = vlaneseq
  %v1449 = vshrl.u32 %v1448, 7
  %v1450 = vsub.s32 0, %v1449
  %v1451 = vrot.slane %v1447, %v1450
  %v1452 = vadd.f32 %v1431, %v1451
  %v1453 = vadd.f32 %v1432, %v1451
  %v1454 = vadd.f32 %v1433, %v1451
  %v1455 = vadd.f32 %v1434, %v1451
  %v1456 = vadd.f32 %v1435, %v1451
  %v1457 = vadd.f32 %v1436, %v1451
  %v1458 = vadd.f32 %v1437, %v1451
  %v1459 = vadd.f32 %v1438, %v1451
  %v1460 = vadd.f32 %v1439, %v1451
  %v1461 = vadd.f32 %v1440, %v1451
  %v1462 = vadd.f32 %v1441, %v1451
  %v1463 = vadd.f32 %v1442, %v1451
  %v1464 = vadd.f32 %v1443, %v1451
  %v1465 = vadd.f32 %v1444, %v1451
  %v1466 = vadd.f32 %v1445, %v1451
  %v1467 = vadd.f32 %v1446, %v1451
  %v1468 = vmul.f32 %v1452, %v1452
  %v1469 = vmul.f32 %v1453, %v1453
  %v1470 = vmul.f32 %v1454, %v1454
  %v1471 = vmul.f32 %v1455, %v1455
  %v1472 = vmul.f32 %v1456, %v1456
  %v1473 = vmul.f32 %v1457, %v1457
  %v1474 = vmul.f32 %v1458, %v1458
  %v1475 = vmul.f32 %v1459, %v1459
  %v1476 = vmul.f32 %v1460, %v1460
  %v1477 = vmul.f32 %v1461, %v1461
  %v1478 = vmul.f32 %v1462, %v1462
  %v1479 = vmul.f32 %v1463, %v1463
  %v1480 = vmul.f32 %v1464, %v1464
  %v1481 = vmul.f32 %v1465, %v1465
  %v1482 = vmul.f32 %v1466, %v1466
  %v1483 = vmul.f32 %v1467, %v1467
  %v1484 = vmul.f32 %v1452, %v1468
  %v1485 = vmul.f32 %v1453, %v1469
  %v1486 = vmul.f32 %v1454, %v1470
  %v1487 = vmul.f32 %v1455, %v1471
  %v1488 = vmul.f32 %v1456, %v1472
  %v1489 = vmul.f32 %v1457, %v1473
  %v1490 = vmul.f32 %v1458, %v1474
  %v1491 = vmul.f32 %v1459, %v1475
  %v1492 = vmul.f32 %v1460, %v1476
  %v1493 = vmul.f32 %v1461, %v1477
  %v1494 = vmul.f32 %v1462, %v1478
  %v1495 = vmul.f32 %v1463, %v1479
  %v1496 = vmul.f32 %v1464, %v1480
  %v1497 = vmul.f32 %v1465, %v1481
  %v1498 = vmul.f32 %v1466, %v1482
  %v1499 = vmul.f32 %v1467, %v1483
  %v1500 = vmul.f32 %v1484, 0.044715
  %v1501 = vmul.f32 %v1485, 0.044715
  %v1502 = vmul.f32 %v1486, 0.044715
  %v1503 = vmul.f32 %v1487, 0.044715
  %v1504 = vmul.f32 %v1488, 0.044715
  %v1505 = vmul.f32 %v1489, 0.044715
  %v1506 = vmul.f32 %v1490, 0.044715
  %v1507 = vmul.f32 %v1491, 0.044715
  %v1508 = vmul.f32 %v1492, 0.044715
  %v1509 = vmul.f32 %v1493, 0.044715
  %v1510 = vmul.f32 %v1494, 0.044715
  %v1511 = vmul.f32 %v1495, 0.044715
  %v1512 = vmul.f32 %v1496, 0.044715
  %v1513 = vmul.f32 %v1497, 0.044715
  %v1514 = vmul.f32 %v1498, 0.044715
  %v1515 = vmul.f32 %v1499, 0.044715
  %v1516 = vadd.f32 %v1452, %v1500
  %v1517 = vadd.f32 %v1453, %v1501
  %v1518 = vadd.f32 %v1454, %v1502
  %v1519 = vadd.f32 %v1455, %v1503
  %v1520 = vadd.f32 %v1456, %v1504
  %v1521 = vadd.f32 %v1457, %v1505
  %v1522 = vadd.f32 %v1458, %v1506
  %v1523 = vadd.f32 %v1459, %v1507
  %v1524 = vadd.f32 %v1460, %v1508
  %v1525 = vadd.f32 %v1461, %v1509
  %v1526 = vadd.f32 %v1462, %v1510
  %v1527 = vadd.f32 %v1463, %v1511
  %v1528 = vadd.f32 %v1464, %v1512
  %v1529 = vadd.f32 %v1465, %v1513
  %v1530 = vadd.f32 %v1466, %v1514
  %v1531 = vadd.f32 %v1467, %v1515
  %v1532 = vmul.f32 %v1516, 0.7978846
  %v1533 = vmul.f32 %v1517, 0.7978846
  %v1534 = vmul.f32 %v1518, 0.7978846
  %v1535 = vmul.f32 %v1519, 0.7978846
  %v1536 = vmul.f32 %v1520, 0.7978846
  %v1537 = vmul.f32 %v1521, 0.7978846
  %v1538 = vmul.f32 %v1522, 0.7978846
  %v1539 = vmul.f32 %v1523, 0.7978846
  %v1540 = vmul.f32 %v1524, 0.7978846
  %v1541 = vmul.f32 %v1525, 0.7978846
  %v1542 = vmul.f32 %v1526, 0.7978846
  %v1543 = vmul.f32 %v1527, 0.7978846
  %v1544 = vmul.f32 %v1528, 0.7978846
  %v1545 = vmul.f32 %v1529, 0.7978846
  %v1546 = vmul.f32 %v1530, 0.7978846
  %v1547 = vmul.f32 %v1531, 0.7978846
  %v1548 = vtanh.pop %v1532
  %v1549 = vtanh.pop %v1533
  %v1550 = vtanh.pop %v1534
  %v1551 = vtanh.pop %v1535
  %v1552 = vtanh.pop %v1536
  %v1553 = vtanh.pop %v1537
  %v1554 = vtanh.pop %v1538
  %v1555 = vtanh.pop %v1539
  %v1556 = vtanh.pop %v1540
  %v1557 = vtanh.pop %v1541
  %v1558 = vtanh.pop %v1542
  %v1559 = vtanh.pop %v1543
  %v1560 = vtanh.pop %v1544
  %v1561 = vtanh.pop %v1545
  %v1562 = vtanh.pop %v1546
  %v1563 = vtanh.pop %v1547
  %v1564 = vadd.f32 %v1548, 1.0
  %v1565 = vadd.f32 %v1549, 1.0
  %v1566 = vadd.f32 %v1550, 1.0
  %v1567 = vadd.f32 %v1551, 1.0
  %v1568 = vadd.f32 %v1552, 1.0
  %v1569 = vadd.f32 %v1553, 1.0
  %v1570 = vadd.f32 %v1554, 1.0
  %v1571 = vadd.f32 %v1555, 1.0
  %v1572 = vadd.f32 %v1556, 1.0
  %v1573 = vadd.f32 %v1557, 1.0
  %v1574 = vadd.f32 %v1558, 1.0
  %v1575 = vadd.f32 %v1559, 1.0
  %v1576 = vadd.f32 %v1560, 1.0
  %v1577 = vadd.f32 %v1561, 1.0
  %v1578 = vadd.f32 %v1562, 1.0
  %v1579 = vadd.f32 %v1563, 1.0
  %v1580 = vmul.f32 %v1564, 0.5
  %v1581 = vmul.f32 %v1565, 0.5
  %v1582 = vmul.f32 %v1566, 0.5
  %v1583 = vmul.f32 %v1567, 0.5
  %v1584 = vmul.f32 %v1568, 0.5
  %v1585 = vmul.f32 %v1569, 0.5
  %v1586 = vmul.f32 %v1570, 0.5
  %v1587 = vmul.f32 %v1571, 0.5
  %v1588 = vmul.f32 %v1572, 0.5
  %v1589 = vmul.f32 %v1573, 0.5
  %v1590 = vmul.f32 %v1574, 0.5
  %v1591 = vmul.f32 %v1575, 0.5
  %v1592 = vmul.f32 %v1576, 0.5
  %v1593 = vmul.f32 %v1577, 0.5
  %v1594 = vmul.f32 %v1578, 0.5
  %v1595 = vmul.f32 %v1579, 0.5
  %v1596 = vmul.f32 %v1452, %v1580
  %v1597 = vmul.f32 %v1453, %v1581
  %v1598 = vmul.f32 %v1454, %v1582
  %v1599 = vmul.f32 %v1455, %v1583
  %v1600 = vmul.f32 %v1456, %v1584
  %v1601 = vmul.f32 %v1457, %v1585
  %v1602 = vmul.f32 %v1458, %v1586
  %v1603 = vmul.f32 %v1459, %v1587
  %v1604 = vmul.f32 %v1460, %v1588
  %v1605 = vmul.f32 %v1461, %v1589
  %v1606 = vmul.f32 %v1462, %v1590
  %v1607 = vmul.f32 %v1463, %v1591
  %v1608 = vmul.f32 %v1464, %v1592
  %v1609 = vmul.f32 %v1465, %v1593
  %v1610 = vmul.f32 %v1466, %v1594
  %v1611 = vmul.f32 %v1467, %v1595
  %v1612 = vld [vmem:[%s2] sm:$0xf]
  %v1613 = vld [vmem:[%s2 + $0x4] sm:$0xf]
  %v1614 = vld [vmem:[%s2 + $0x8] sm:$0xf]
  %v1615 = vld [vmem:[%s2 + $0xc] sm:$0xf]
  %v1616 = vpack.c.bf16 %v1597, %v1596
  %v1617 = vpack.c.bf16 %v1599, %v1598
  %v1618 = vpack.c.bf16 %v1601, %v1600
  %v1619 = vpack.c.bf16 %v1603, %v1602
  %v1620 = vpack.c.bf16 %v1605, %v1604
  %v1621 = vpack.c.bf16 %v1607, %v1606
  %v1622 = vpack.c.bf16 %v1609, %v1608
  %v1623 = vpack.c.bf16 %v1611, %v1610
  %v1624 = vld [vmem:[%s3 + $0xb] sm:$0x1]
  %v1625 = vlaneseq
  %v1626 = vshrl.u32 %v1625, 7
  %v1627 = vsub.s32 0, %v1626
  %v1628 = vrot.slane %v1624, %v1627
  %v1633 = vunpack.c.l.b16 %v1612
  %v1634 = vunpack.c.l.b16 %v1613
  %v1635 = vunpack.c.l.b16 %v1614
  %v1636 = vunpack.c.l.b16 %v1615
  %v1637 = vpack.c.b16 %v1634, %v1633
  %v1638 = vpack.c.b16 %v1636, %v1635
  %vm1641 = vcmask 261120
  %v1643 = vsel %vm1641, %v1616, 0
  %v1646 = vsel %vm1641, %v1617, 0
  %v1649 = vsel %vm1641, %v1618, 0
  %v1652 = vsel %vm1641, %v1619, 0
  %v1655 = vsel %vm1641, %v1620, 0
  %v1658 = vsel %vm1641, %v1621, 0
  %v1661 = vsel %vm1641, %v1622, 0
  %v1664 = vsel %vm1641, %v1623, 0
  %1666 = vmatprep.subr.bf16.mxu0 0
  %1667 = vmatpush1.bf16.msra.mxu0 %v1637
  %1668 = vmatprep.subr.bf16.mxu0 0
  %1669 = vmatpush1.bf16.msra.mxu0 %v1638
  %1670 = vmatprep.subr.bf16.mxu0 0
  %1671 = vmatpush1.bf16.msra.mxu0 0
  %1672 = vmatprep.subr.bf16.mxu0 0
  %1673 = vmatpush1.bf16.msra.mxu0 0
  %1674 = vmatprep.subr.bf16.mxu0 0
  %1675 = vmatpush1.bf16.msra.mxu0 0
  %1676 = vmatprep.subr.bf16.mxu0 0
  %1677 = vmatpush1.bf16.msra.mxu0 0
  %1678 = vmatprep.subr.bf16.mxu0 0
  %1679 = vmatpush1.bf16.msra.mxu0 0
  %1680 = vmatprep.subr.bf16.mxu0 0
  %1681 = vmatpush1.bf16.msra.mxu0 0
  %1682 = vmatprep.subr.bf16.mxu0 0
  %1683 = vmatpush1.bf16.msra.mxu0 0
  %1684 = vmatprep.subr.bf16.mxu0 0
  %1685 = vmatpush1.bf16.msra.mxu0 0
  %1686 = vmatprep.subr.bf16.mxu0 0
  %1687 = vmatpush1.bf16.msra.mxu0 0
  %1688 = vmatprep.subr.bf16.mxu0 0
  %1689 = vmatpush1.bf16.msra.mxu0 0
  %1690 = vmatprep.subr.bf16.mxu0 0
  %1691 = vmatpush1.bf16.msra.mxu0 0
  %1692 = vmatprep.subr.bf16.mxu0 0
  %1693 = vmatpush1.bf16.msra.mxu0 0
  %1694 = vmatprep.subr.bf16.mxu0 0
  %1695 = vmatpush1.bf16.msra.mxu0 0
  %1696 = vmatprep.subr.bf16.mxu0 0
  %1697 = vmatpush1.bf16.msra.mxu0 0
  %1698 = vmatprep.mubr.bf16.mxu0 0
  %1699 = vmatmul.mubr.bf16.gmra.mrb[0].mxu0 %v1643
  %v1700 = vpop.f32.mrb[0].mxu0
  %v1701 = vadd.f32 %v1628, %v1700
  %v1702 = vpop.f32.mrb[0].mxu0
  %v1703 = vpop.f32.mrb[0].mxu0
  %v1704 = vadd.f32 %v1628, %v1703
  %v1705 = vpop.f32.mrb[0].mxu0
  %1706 = vmatprep.mubr.bf16.mxu0 0
  %1707 = vmatmul.mubr.bf16.gmra.mrb[0].mxu0 %v1646
  %v1708 = vpop.f32.mrb[0].mxu0
  %v1709 = vadd.f32 %v1628, %v1708
  %v1710 = vpop.f32.mrb[0].mxu0
  %v1711 = vpop.f32.mrb[0].mxu0
  %v1712 = vadd.f32 %v1628, %v1711
  %v1713 = vpop.f32.mrb[0].mxu0
  %1714 = vmatprep.mubr.bf16.mxu0 0
  %1715 = vmatmul.mubr.bf16.gmra.mrb[0].mxu0 %v1649
  %v1716 = vpop.f32.mrb[0].mxu0
  %v1717 = vadd.f32 %v1628, %v1716
  %v1718 = vpop.f32.mrb[0].mxu0
  %v1719 = vpop.f32.mrb[0].mxu0
  %v1720 = vadd.f32 %v1628, %v1719
  %v1721 = vpop.f32.mrb[0].mxu0
  %1722 = vmatprep.mubr.bf16.mxu0 0
  %1723 = vmatmul.mubr.bf16.gmra.mrb[0].mxu0 %v1652
  %v1724 = vpop.f32.mrb[0].mxu0
  %v1725 = vadd.f32 %v1628, %v1724
  %v1726 = vpop.f32.mrb[0].mxu0
  %v1727 = vpop.f32.mrb[0].mxu0
  %v1728 = vadd.f32 %v1628, %v1727
  %v1729 = vpop.f32.mrb[0].mxu0
  %1730 = vmatprep.mubr.bf16.mxu0 0
  %1731 = vmatmul.mubr.bf16.gmra.mrb[0].mxu0 %v1655
  %v1732 = vpop.f32.mrb[0].mxu0
  %v1733 = vadd.f32 %v1628, %v1732
  %v1734 = vpop.f32.mrb[0].mxu0
  %v1735 = vpop.f32.mrb[0].mxu0
  %v1736 = vadd.f32 %v1628, %v1735
  %v1737 = vpop.f32.mrb[0].mxu0
  %1738 = vmatprep.mubr.bf16.mxu0 0
  %1739 = vmatmul.mubr.bf16.gmra.mrb[0].mxu0 %v1658
  %v1740 = vpop.f32.mrb[0].mxu0
  %v1741 = vadd.f32 %v1628, %v1740
  %v1742 = vpop.f32.mrb[0].mxu0
  %v1743 = vpop.f32.mrb[0].mxu0
  %v1744 = vadd.f32 %v1628, %v1743
  %v1745 = vpop.f32.mrb[0].mxu0
  %1746 = vmatprep.mubr.bf16.mxu0 0
  %1747 = vmatmul.mubr.bf16.gmra.mrb[0].mxu0 %v1661
  %v1748 = vpop.f32.mrb[0].mxu0
  %v1749 = vadd.f32 %v1628, %v1748
  %v1750 = vpop.f32.mrb[0].mxu0
  %v1751 = vpop.f32.mrb[0].mxu0
  %v1752 = vadd.f32 %v1628, %v1751
  %v1753 = vpop.f32.mrb[0].mxu0
  %1754 = vmatprep.mubr.bf16.mxu0 0
  %1755 = vmatmul.mubr.bf16.gmra.mrb[0].mxu0 %v1664
  %v1756 = vpop.f32.mrb[0].mxu0
  %v1757 = vadd.f32 %v1628, %v1756
  %v1758 = vpop.f32.mrb[0].mxu0
  %v1759 = vpop.f32.mrb[0].mxu0
  %v1760 = vadd.f32 %v1628, %v1759
  %v1761 = vpop.f32.mrb[0].mxu0
  %1762 = vdwg.mxu0
  %v1763 = vld [vmem:[%s3 + $0xc] sm:$0x1]
  %v1764 = vld [vmem:[%s3 + $0xd] sm:$0x1]
  %v1765 = vsel %vm1641, %v1701, 0.0
  %1766 = vadd.xlane.f32.xlu0 %v1765
  %v1767 = vpop.xlane.xlu0 %1766
  %v1768 = vsel %vm1641, %v1704, 0.0
  %1769 = vadd.xlane.f32.xlu0 %v1768
  %v1770 = vpop.xlane.xlu0 %1769
  %v1771 = vsel %vm1641, %v1709, 0.0
  %1772 = vadd.xlane.f32.xlu0 %v1771
  %v1773 = vpop.xlane.xlu0 %1772
  %v1774 = vsel %vm1641, %v1712, 0.0
  %1775 = vadd.xlane.f32.xlu0 %v1774
  %v1776 = vpop.xlane.xlu0 %1775
  %v1777 = vsel %vm1641, %v1717, 0.0
  %1778 = vadd.xlane.f32.xlu0 %v1777
  %v1779 = vpop.xlane.xlu0 %1778
  %v1780 = vsel %vm1641, %v1720, 0.0
  %1781 = vadd.xlane.f32.xlu0 %v1780
  %v1782 = vpop.xlane.xlu0 %1781
  %v1783 = vsel %vm1641, %v1725, 0.0
  %1784 = vadd.xlane.f32.xlu0 %v1783
  %v1785 = vpop.xlane.xlu0 %1784
  %v1786 = vsel %vm1641, %v1728, 0.0
  %1787 = vadd.xlane.f32.xlu0 %v1786
  %v1788 = vpop.xlane.xlu0 %1787
  %v1789 = vsel %vm1641, %v1733, 0.0
  %1790 = vadd.xlane.f32.xlu0 %v1789
  %v1791 = vpop.xlane.xlu0 %1790
  %v1792 = vsel %vm1641, %v1736, 0.0
  %1793 = vadd.xlane.f32.xlu0 %v1792
  %v1794 = vpop.xlane.xlu0 %1793
  %v1795 = vsel %vm1641, %v1741, 0.0
  %1796 = vadd.xlane.f32.xlu0 %v1795
  %v1797 = vpop.xlane.xlu0 %1796
  %v1798 = vsel %vm1641, %v1744, 0.0
  %1799 = vadd.xlane.f32.xlu0 %v1798
  %v1800 = vpop.xlane.xlu0 %1799
  %v1801 = vsel %vm1641, %v1749, 0.0
  %1802 = vadd.xlane.f32.xlu0 %v1801
  %v1803 = vpop.xlane.xlu0 %1802
  %v1804 = vsel %vm1641, %v1752, 0.0
  %1805 = vadd.xlane.f32.xlu0 %v1804
  %v1806 = vpop.xlane.xlu0 %1805
  %v1807 = vsel %vm1641, %v1757, 0.0
  %1808 = vadd.xlane.f32.xlu0 %v1807
  %v1809 = vpop.xlane.xlu0 %1808
  %v1810 = vsel %vm1641, %v1760, 0.0
  %1811 = vadd.xlane.f32.xlu0 %v1810
  %v1812 = vpop.xlane.xlu0 %1811
  %v1813 = vrcp.pop 32.0
  %v1814 = vmul.f32 %v1767, %v1813
  %v1815 = vmul.f32 %v1770, %v1813
  %v1816 = vmul.f32 %v1773, %v1813
  %v1817 = vmul.f32 %v1776, %v1813
  %v1818 = vmul.f32 %v1779, %v1813
  %v1819 = vmul.f32 %v1782, %v1813
  %v1820 = vmul.f32 %v1785, %v1813
  %v1821 = vmul.f32 %v1788, %v1813
  %v1822 = vmul.f32 %v1791, %v1813
  %v1823 = vmul.f32 %v1794, %v1813
  %v1824 = vmul.f32 %v1797, %v1813
  %v1825 = vmul.f32 %v1800, %v1813
  %v1826 = vmul.f32 %v1803, %v1813
  %v1827 = vmul.f32 %v1806, %v1813
  %v1828 = vmul.f32 %v1809, %v1813
  %v1829 = vmul.f32 %v1812, %v1813
  %v1830 = vsub.f32 %v1701, %v1814
  %v1831 = vsub.f32 %v1704, %v1815
  %v1832 = vsub.f32 %v1709, %v1816
  %v1833 = vsub.f32 %v1712, %v1817
  %v1834 = vsub.f32 %v1717, %v1818
  %v1835 = vsub.f32 %v1720, %v1819
  %v1836 = vsub.f32 %v1725, %v1820
  %v1837 = vsub.f32 %v1728, %v1821
  %v1838 = vsub.f32 %v1733, %v1822
  %v1839 = vsub.f32 %v1736, %v1823
  %v1840 = vsub.f32 %v1741, %v1824
  %v1841 = vsub.f32 %v1744, %v1825
  %v1842 = vsub.f32 %v1749, %v1826
  %v1843 = vsub.f32 %v1752, %v1827
  %v1844 = vsub.f32 %v1757, %v1828
  %v1845 = vsub.f32 %v1760, %v1829
  %v1846 = vmul.f32 %v1830, %v1830
  %v1847 = vmul.f32 %v1831, %v1831
  %v1848 = vmul.f32 %v1832, %v1832
  %v1849 = vmul.f32 %v1833, %v1833
  %v1850 = vmul.f32 %v1834, %v1834
  %v1851 = vmul.f32 %v1835, %v1835
  %v1852 = vmul.f32 %v1836, %v1836
  %v1853 = vmul.f32 %v1837, %v1837
  %v1854 = vmul.f32 %v1838, %v1838
  %v1855 = vmul.f32 %v1839, %v1839
  %v1856 = vmul.f32 %v1840, %v1840
  %v1857 = vmul.f32 %v1841, %v1841
  %v1858 = vmul.f32 %v1842, %v1842
  %v1859 = vmul.f32 %v1843, %v1843
  %v1860 = vmul.f32 %v1844, %v1844
  %v1861 = vmul.f32 %v1845, %v1845
  %v1862 = vsel %vm1641, %v1846, 0.0
  %1863 = vadd.xlane.f32.xlu0 %v1862
  %v1864 = vpop.xlane.xlu0 %1863
  %v1865 = vsel %vm1641, %v1847, 0.0
  %1866 = vadd.xlane.f32.xlu0 %v1865
  %v1867 = vpop.xlane.xlu0 %1866
  %v1868 = vsel %vm1641, %v1848, 0.0
  %1869 = vadd.xlane.f32.xlu0 %v1868
  %v1870 = vpop.xlane.xlu0 %1869
  %v1871 = vsel %vm1641, %v1849, 0.0
  %1872 = vadd.xlane.f32.xlu0 %v1871
  %v1873 = vpop.xlane.xlu0 %1872
  %v1874 = vsel %vm1641, %v1850, 0.0
  %1875 = vadd.xlane.f32.xlu0 %v1874
  %v1876 = vpop.xlane.xlu0 %1875
  %v1877 = vsel %vm1641, %v1851, 0.0
  %1878 = vadd.xlane.f32.xlu0 %v1877
  %v1879 = vpop.xlane.xlu0 %1878
  %v1880 = vsel %vm1641, %v1852, 0.0
  %1881 = vadd.xlane.f32.xlu0 %v1880
  %v1882 = vpop.xlane.xlu0 %1881
  %v1883 = vsel %vm1641, %v1853, 0.0
  %1884 = vadd.xlane.f32.xlu0 %v1883
  %v1885 = vpop.xlane.xlu0 %1884
  %v1886 = vsel %vm1641, %v1854, 0.0
  %1887 = vadd.xlane.f32.xlu0 %v1886
  %v1888 = vpop.xlane.xlu0 %1887
  %v1889 = vsel %vm1641, %v1855, 0.0
  %1890 = vadd.xlane.f32.xlu0 %v1889
  %v1891 = vpop.xlane.xlu0 %1890
  %v1892 = vsel %vm1641, %v1856, 0.0
  %1893 = vadd.xlane.f32.xlu0 %v1892
  %v1894 = vpop.xlane.xlu0 %1893
  %v1895 = vsel %vm1641, %v1857, 0.0
  %1896 = vadd.xlane.f32.xlu0 %v1895
  %v1897 = vpop.xlane.xlu0 %1896
  %v1898 = vsel %vm1641, %v1858, 0.0
  %1899 = vadd.xlane.f32.xlu0 %v1898
  %v1900 = vpop.xlane.xlu0 %1899
  %v1901 = vsel %vm1641, %v1859, 0.0
  %1902 = vadd.xlane.f32.xlu0 %v1901
  %v1903 = vpop.xlane.xlu0 %1902
  %v1904 = vsel %vm1641, %v1860, 0.0
  %1905 = vadd.xlane.f32.xlu0 %v1904
  %v1906 = vpop.xlane.xlu0 %1905
  %v1907 = vsel %vm1641, %v1861, 0.0
  %1908 = vadd.xlane.f32.xlu0 %v1907
  %v1909 = vpop.xlane.xlu0 %1908
  %v1910 = vmul.f32 %v1864, %v1813
  %v1911 = vmul.f32 %v1867, %v1813
  %v1912 = vmul.f32 %v1870, %v1813
  %v1913 = vmul.f32 %v1873, %v1813
  %v1914 = vmul.f32 %v1876, %v1813
  %v1915 = vmul.f32 %v1879, %v1813
  %v1916 = vmul.f32 %v1882, %v1813
  %v1917 = vmul.f32 %v1885, %v1813
  %v1918 = vmul.f32 %v1888, %v1813
  %v1919 = vmul.f32 %v1891, %v1813
  %v1920 = vmul.f32 %v1894, %v1813
  %v1921 = vmul.f32 %v1897, %v1813
  %v1922 = vmul.f32 %v1900, %v1813
  %v1923 = vmul.f32 %v1903, %v1813
  %v1924 = vmul.f32 %v1906, %v1813
  %v1925 = vmul.f32 %v1909, %v1813
  %v1926 = vadd.f32 %v1910, 1e-05
  %v1927 = vadd.f32 %v1911, 1e-05
  %v1928 = vadd.f32 %v1912, 1e-05
  %v1929 = vadd.f32 %v1913, 1e-05
  %v1930 = vadd.f32 %v1914, 1e-05
  %v1931 = vadd.f32 %v1915, 1e-05
  %v1932 = vadd.f32 %v1916, 1e-05
  %v1933 = vadd.f32 %v1917, 1e-05
  %v1934 = vadd.f32 %v1918, 1e-05
  %v1935 = vadd.f32 %v1919, 1e-05
  %v1936 = vadd.f32 %v1920, 1e-05
  %v1937 = vadd.f32 %v1921, 1e-05
  %v1938 = vadd.f32 %v1922, 1e-05
  %v1939 = vadd.f32 %v1923, 1e-05
  %v1940 = vadd.f32 %v1924, 1e-05
  %v1941 = vadd.f32 %v1925, 1e-05
  %v1942 = vrsqrt.pop %v1926
  %v1943 = vrsqrt.pop %v1927
  %v1944 = vrsqrt.pop %v1928
  %v1945 = vrsqrt.pop %v1929
  %v1946 = vrsqrt.pop %v1930
  %v1947 = vrsqrt.pop %v1931
  %v1948 = vrsqrt.pop %v1932
  %v1949 = vrsqrt.pop %v1933
  %v1950 = vrsqrt.pop %v1934
  %v1951 = vrsqrt.pop %v1935
  %v1952 = vrsqrt.pop %v1936
  %v1953 = vrsqrt.pop %v1937
  %v1954 = vrsqrt.pop %v1938
  %v1955 = vrsqrt.pop %v1939
  %v1956 = vrsqrt.pop %v1940
  %v1957 = vrsqrt.pop %v1941
  %v1958 = vmul.f32 %v1830, %v1942
  %v1959 = vmul.f32 %v1831, %v1943
  %v1960 = vmul.f32 %v1832, %v1944
  %v1961 = vmul.f32 %v1833, %v1945
  %v1962 = vmul.f32 %v1834, %v1946
  %v1963 = vmul.f32 %v1835, %v1947
  %v1964 = vmul.f32 %v1836, %v1948
  %v1965 = vmul.f32 %v1837, %v1949
  %v1966 = vmul.f32 %v1838, %v1950
  %v1967 = vmul.f32 %v1839, %v1951
  %v1968 = vmul.f32 %v1840, %v1952
  %v1969 = vmul.f32 %v1841, %v1953
  %v1970 = vmul.f32 %v1842, %v1954
  %v1971 = vmul.f32 %v1843, %v1955
  %v1972 = vmul.f32 %v1844, %v1956
  %v1973 = vmul.f32 %v1845, %v1957
  %v1974 = vlaneseq
  %v1975 = vshrl.u32 %v1974, 7
  %v1976 = vsub.s32 0, %v1975
  %v1977 = vrot.slane %v1763, %v1976
  %v1978 = vmul.f32 %v1958, %v1977
  %v1979 = vmul.f32 %v1959, %v1977
  %v1980 = vmul.f32 %v1960, %v1977
  %v1981 = vmul.f32 %v1961, %v1977
  %v1982 = vmul.f32 %v1962, %v1977
  %v1983 = vmul.f32 %v1963, %v1977
  %v1984 = vmul.f32 %v1964, %v1977
  %v1985 = vmul.f32 %v1965, %v1977
  %v1986 = vmul.f32 %v1966, %v1977
  %v1987 = vmul.f32 %v1967, %v1977
  %v1988 = vmul.f32 %v1968, %v1977
  %v1989 = vmul.f32 %v1969, %v1977
  %v1990 = vmul.f32 %v1970, %v1977
  %v1991 = vmul.f32 %v1971, %v1977
  %v1992 = vmul.f32 %v1972, %v1977
  %v1993 = vmul.f32 %v1973, %v1977
  %v1994 = vlaneseq
  %v1995 = vshrl.u32 %v1994, 7
  %v1996 = vsub.s32 0, %v1995
  %v1997 = vrot.slane %v1764, %v1996
  %v1998 = vadd.f32 %v1978, %v1997
  %v1999 = vadd.f32 %v1979, %v1997
  %v2000 = vadd.f32 %v1980, %v1997
  %v2001 = vadd.f32 %v1981, %v1997
  %v2002 = vadd.f32 %v1982, %v1997
  %v2003 = vadd.f32 %v1983, %v1997
  %v2004 = vadd.f32 %v1984, %v1997
  %v2005 = vadd.f32 %v1985, %v1997
  %v2006 = vadd.f32 %v1986, %v1997
  %v2007 = vadd.f32 %v1987, %v1997
  %v2008 = vadd.f32 %v1988, %v1997
  %v2009 = vadd.f32 %v1989, %v1997
  %v2010 = vadd.f32 %v1990, %v1997
  %v2011 = vadd.f32 %v1991, %v1997
  %v2012 = vadd.f32 %v1992, %v1997
  %v2013 = vadd.f32 %v1993, %v1997
  %v2014 = vlaneseq
  %v2015 = vshrl.u32 %v2014, 7
  %v2016 = vadd.s32 %v2015, 8
  %v2017 = vadd.s32 %v2015, 16
  %v2018 = vadd.s32 %v2015, 24
  %v2019 = vadd.s32 %v2015, 32
  %v2020 = vadd.s32 %v2015, 40
  %v2021 = vadd.s32 %v2015, 48
  %v2022 = vadd.s32 %v2015, 56
  %v2023 = vand.u32 %v2015, 31
  %v2024 = vand.u32 %v2016, 31
  %v2025 = vand.u32 %v2017, 31
  %v2026 = vand.u32 %v2018, 31
  %v2027 = vand.u32 %v2019, 31
  %v2028 = vand.u32 %v2020, 31
  %v2029 = vand.u32 %v2021, 31
  %v2030 = vand.u32 %v2022, 31
  %vm2031 = vcmp.lt.s32.totalorder %v2023, 31
  %vm2032 = vcmp.lt.s32.totalorder %v2024, 31
  %vm2033 = vcmp.lt.s32.totalorder %v2025, 31
  %vm2034 = vcmp.lt.s32.totalorder %v2026, 31
  %vm2035 = vcmp.lt.s32.totalorder %v2027, 31
  %vm2036 = vcmp.lt.s32.totalorder %v2028, 31
  %vm2037 = vcmp.lt.s32.totalorder %v2029, 31
  %vm2038 = vcmp.lt.s32.totalorder %v2030, 31
  %v2039 = vsel %vm2031, 1, 0
  %v2040 = vsel %vm2032, 1, 0
  %v2041 = vsel %vm2033, 1, 0
  %v2042 = vsel %vm2034, 1, 0
  %v2043 = vsel %vm2035, 1, 0
  %v2044 = vsel %vm2036, 1, 0
  %v2045 = vsel %vm2037, 1, 0
  %v2046 = vsel %vm2038, 1, 0
  %v2047 = vcvt.s32.f32 %v2039
  %v2048 = vcvt.s32.f32 %v2040
  %v2049 = vcvt.s32.f32 %v2041
  %v2050 = vcvt.s32.f32 %v2042
  %v2051 = vcvt.s32.f32 %v2043
  %v2052 = vcvt.s32.f32 %v2044
  %v2053 = vcvt.s32.f32 %v2045
  %v2054 = vcvt.s32.f32 %v2046
  %v2055 = vadd.s32 %v2015, 64
  %v2056 = vadd.s32 %v2015, 72
  %v2057 = vadd.s32 %v2015, 80
  %v2058 = vadd.s32 %v2015, 88
  %v2059 = vadd.s32 %v2015, 96
  %v2060 = vadd.s32 %v2015, 104
  %v2061 = vadd.s32 %v2015, 112
  %v2062 = vadd.s32 %v2015, 120
  %v2063 = vlaneseq
  %v2064 = vand.u32 %v2063, 127
  %v2065 = vshra.s32 %v2015, 5
  %v2066 = vshra.s32 %v2016, 5
  %v2067 = vshra.s32 %v2017, 5
  %v2068 = vshra.s32 %v2018, 5
  %v2069 = vshra.s32 %v2019, 5
  %v2070 = vshra.s32 %v2020, 5
  %v2071 = vshra.s32 %v2021, 5
  %v2072 = vshra.s32 %v2022, 5
  %v2073 = vshra.s32 %v2055, 5
  %v2074 = vshra.s32 %v2056, 5
  %v2075 = vshra.s32 %v2057, 5
  %v2076 = vshra.s32 %v2058, 5
  %v2077 = vshra.s32 %v2059, 5
  %v2078 = vshra.s32 %v2060, 5
  %v2079 = vshra.s32 %v2061, 5
  %v2080 = vshra.s32 %v2062, 5
  %v2081 = vshra.s32 %v2064, 5
  %vm2082 = vcmp.eq.s32.totalorder %v2065, %v2081
  %vm2083 = vcmp.eq.s32.totalorder %v2066, %v2081
  %vm2084 = vcmp.eq.s32.totalorder %v2067, %v2081
  %vm2085 = vcmp.eq.s32.totalorder %v2068, %v2081
  %vm2086 = vcmp.eq.s32.totalorder %v2069, %v2081
  %vm2087 = vcmp.eq.s32.totalorder %v2070, %v2081
  %vm2088 = vcmp.eq.s32.totalorder %v2071, %v2081
  %vm2089 = vcmp.eq.s32.totalorder %v2072, %v2081
  %vm2090 = vcmp.eq.s32.totalorder %v2073, %v2081
  %vm2091 = vcmp.eq.s32.totalorder %v2074, %v2081
  %vm2092 = vcmp.eq.s32.totalorder %v2075, %v2081
  %vm2093 = vcmp.eq.s32.totalorder %v2076, %v2081
  %vm2094 = vcmp.eq.s32.totalorder %v2077, %v2081
  %vm2095 = vcmp.eq.s32.totalorder %v2078, %v2081
  %vm2096 = vcmp.eq.s32.totalorder %v2079, %v2081
  %vm2097 = vcmp.eq.s32.totalorder %v2080, %v2081
  %v2098 = vand.u32 %v2064, 31
  %vm2099 = vcmp.lt.s32.totalorder %v2098, 31
  %vm2100 = vmand %vm2082, %vm2099
  %vm2101 = vmand %vm2083, %vm2099
  %vm2102 = vmand %vm2084, %vm2099
  %vm2103 = vmand %vm2085, %vm2099
  %vm2104 = vmand %vm2086, %vm2099
  %vm2105 = vmand %vm2087, %vm2099
  %vm2106 = vmand %vm2088, %vm2099
  %vm2107 = vmand %vm2089, %vm2099
  %vm2108 = vmand %vm2090, %vm2099
  %vm2109 = vmand %vm2091, %vm2099
  %vm2110 = vmand %vm2092, %vm2099
  %vm2111 = vmand %vm2093, %vm2099
  %vm2112 = vmand %vm2094, %vm2099
  %vm2113 = vmand %vm2095, %vm2099
  %vm2114 = vmand %vm2096, %vm2099
  %vm2115 = vmand %vm2097, %vm2099
  %v2116 = vsel %vm2100, 0.0, -1e+30
  %v2117 = vsel %vm2101, 0.0, -1e+30
  %v2118 = vsel %vm2102, 0.0, -1e+30
  %v2119 = vsel %vm2103, 0.0, -1e+30
  %v2120 = vsel %vm2104, 0.0, -1e+30
  %v2121 = vsel %vm2105, 0.0, -1e+30
  %v2122 = vsel %vm2106, 0.0, -1e+30
  %v2123 = vsel %vm2107, 0.0, -1e+30
  %v2124 = vsel %vm2108, 0.0, -1e+30
  %v2125 = vsel %vm2109, 0.0, -1e+30
  %v2126 = vsel %vm2110, 0.0, -1e+30
  %v2127 = vsel %vm2111, 0.0, -1e+30
  %v2128 = vsel %vm2112, 0.0, -1e+30
  %v2129 = vsel %vm2113, 0.0, -1e+30
  %v2130 = vsel %vm2114, 0.0, -1e+30
  %v2131 = vsel %vm2115, 0.0, -1e+30
  %v2132 = vsub.f32 %v1998, %v2006
  %v2133 = vsub.f32 %v1999, %v2007
  %v2134 = vsub.f32 %v2000, %v2008
  %v2135 = vsub.f32 %v2001, %v2009
  %v2136 = vsub.f32 %v2002, %v2010
  %v2137 = vsub.f32 %v2003, %v2011
  %v2138 = vsub.f32 %v2004, %v2012
  %v2139 = vsub.f32 %v2005, %v2013
  %v2140 = vand.u32 2147483647, %v2132
  %v2141 = vand.u32 2147483647, %v2133
  %v2142 = vand.u32 2147483647, %v2134
  %v2143 = vand.u32 2147483647, %v2135
  %v2144 = vand.u32 2147483647, %v2136
  %v2145 = vand.u32 2147483647, %v2137
  %v2146 = vand.u32 2147483647, %v2138
  %v2147 = vand.u32 2147483647, %v2139
  %v2148 = vmul.f32 %v2140, %v2047
  %v2149 = vmul.f32 %v2141, %v2048
  %v2150 = vmul.f32 %v2142, %v2049
  %v2151 = vmul.f32 %v2143, %v2050
  %v2152 = vmul.f32 %v2144, %v2051
  %v2153 = vmul.f32 %v2145, %v2052
  %v2154 = vmul.f32 %v2146, %v2053
  %v2155 = vmul.f32 %v2147, %v2054
  %v2156 = vsel %vm1641, %v2148, 0.0
  %v2157 = vsel %vm1641, %v2149, 0.0
  %v2158 = vadd.f32 %v2156, %v2157
  %v2159 = vsel %vm1641, %v2150, 0.0
  %v2160 = vadd.f32 %v2158, %v2159
  %v2161 = vsel %vm1641, %v2151, 0.0
  %v2162 = vadd.f32 %v2160, %v2161
  %v2163 = vsel %vm1641, %v2152, 0.0
  %v2164 = vadd.f32 %v2162, %v2163
  %v2165 = vsel %vm1641, %v2153, 0.0
  %v2166 = vadd.f32 %v2164, %v2165
  %v2167 = vsel %vm1641, %v2154, 0.0
  %v2168 = vadd.f32 %v2166, %v2167
  %v2169 = vsel %vm1641, %v2155, 0.0
  %v2170 = vadd.f32 %v2168, %v2169
  %2171 = vadd.xlane.f32.xlu0 %v2170
  %v2172 = vpop.xlane.xlu0 %2171
  %v2173 = vrot.slane %v2172, 4
  %v2174 = vadd.f32 %v2172, %v2173
  %v2175 = vrot.slane %v2174, 2
  %v2176 = vadd.f32 %v2174, %v2175
  %v2177 = vrot.slane %v2176, 1
  %v2178 = vadd.f32 %v2176, %v2177
  %s2179 = vtos %v2178
  %v2180 = vld [vmem:[%s2 + $0x10] sm:$0xf]
  %v2181 = vld [vmem:[%s2 + $0x14] sm:$0xf]
  %v2182 = vld [vmem:[%s2 + $0x18] sm:$0xf]
  %v2183 = vld [vmem:[%s2 + $0x1c] sm:$0xf]
  %v2184 = vpack.c.bf16 %v1999, %v1998
  %v2185 = vpack.c.bf16 %v2001, %v2000
  %v2186 = vpack.c.bf16 %v2003, %v2002
  %v2187 = vpack.c.bf16 %v2005, %v2004
  %v2188 = vpack.c.bf16 %v2007, %v2006
  %v2189 = vpack.c.bf16 %v2009, %v2008
  %v2190 = vpack.c.bf16 %v2011, %v2010
  %v2191 = vpack.c.bf16 %v2013, %v2012
  %v2192 = vld [vmem:[%s3 + $0xe] sm:$0x1]
  %v2193 = vlaneseq
  %v2194 = vshrl.u32 %v2193, 7
  %v2195 = vsub.s32 0, %v2194
  %v2196 = vrot.slane %v2192, %v2195
  %v2201 = vunpack.c.l.b16 %v2180
  %v2202 = vunpack.c.l.b16 %v2181
  %v2203 = vunpack.c.l.b16 %v2182
  %v2204 = vunpack.c.l.b16 %v2183
  %v2205 = vpack.c.b16 %v2202, %v2201
  %v2206 = vpack.c.b16 %v2204, %v2203
  %v2210 = vsel %vm1641, %v2184, 0
  %v2213 = vsel %vm1641, %v2185, 0
  %v2216 = vsel %vm1641, %v2186, 0
  %v2219 = vsel %vm1641, %v2187, 0
  %v2222 = vsel %vm1641, %v2188, 0
  %v2225 = vsel %vm1641, %v2189, 0
  %v2228 = vsel %vm1641, %v2190, 0
  %v2231 = vsel %vm1641, %v2191, 0
  %2233 = vmatprep.subr.bf16.mxu0 0
  %2234 = vmatpush1.bf16.msra.mxu0 %v2205
  %2235 = vmatprep.subr.bf16.mxu0 0
  %2236 = vmatpush1.bf16.msra.mxu0 %v2206
  %2237 = vmatprep.subr.bf16.mxu0 0
  %2238 = vmatpush1.bf16.msra.mxu0 0
  %2239 = vmatprep.subr.bf16.mxu0 0
  %2240 = vmatpush1.bf16.msra.mxu0 0
  %2241 = vmatprep.subr.bf16.mxu0 0
  %2242 = vmatpush1.bf16.msra.mxu0 0
  %2243 = vmatprep.subr.bf16.mxu0 0
  %2244 = vmatpush1.bf16.msra.mxu0 0
  %2245 = vmatprep.subr.bf16.mxu0 0
  %2246 = vmatpush1.bf16.msra.mxu0 0
  %2247 = vmatprep.subr.bf16.mxu0 0
  %2248 = vmatpush1.bf16.msra.mxu0 0
  %2249 = vmatprep.subr.bf16.mxu0 0
  %2250 = vmatpush1.bf16.msra.mxu0 0
  %2251 = vmatprep.subr.bf16.mxu0 0
  %2252 = vmatpush1.bf16.msra.mxu0 0
  %2253 = vmatprep.subr.bf16.mxu0 0
  %2254 = vmatpush1.bf16.msra.mxu0 0
  %2255 = vmatprep.subr.bf16.mxu0 0
  %2256 = vmatpush1.bf16.msra.mxu0 0
  %2257 = vmatprep.subr.bf16.mxu0 0
  %2258 = vmatpush1.bf16.msra.mxu0 0
  %2259 = vmatprep.subr.bf16.mxu0 0
  %2260 = vmatpush1.bf16.msra.mxu0 0
  %2261 = vmatprep.subr.bf16.mxu0 0
  %2262 = vmatpush1.bf16.msra.mxu0 0
  %2263 = vmatprep.subr.bf16.mxu0 0
  %2264 = vmatpush1.bf16.msra.mxu0 0
  %2265 = vmatprep.mubr.bf16.mxu0 0
  %2266 = vmatmul.mubr.bf16.gmra.mrb[0].mxu0 %v2210
  %v2267 = vpop.f32.mrb[0].mxu0
  %v2268 = vadd.f32 %v2196, %v2267
  %v2269 = vpop.f32.mrb[0].mxu0
  %v2270 = vpop.f32.mrb[0].mxu0
  %v2271 = vadd.f32 %v2196, %v2270
  %v2272 = vpop.f32.mrb[0].mxu0
  %2273 = vmatprep.mubr.bf16.mxu0 0
  %2274 = vmatmul.mubr.bf16.gmra.mrb[0].mxu0 %v2213
  %v2275 = vpop.f32.mrb[0].mxu0
  %v2276 = vadd.f32 %v2196, %v2275
  %v2277 = vpop.f32.mrb[0].mxu0
  %v2278 = vpop.f32.mrb[0].mxu0
  %v2279 = vadd.f32 %v2196, %v2278
  %v2280 = vpop.f32.mrb[0].mxu0
  %2281 = vmatprep.mubr.bf16.mxu0 0
  %2282 = vmatmul.mubr.bf16.gmra.mrb[0].mxu0 %v2216
  %v2283 = vpop.f32.mrb[0].mxu0
  %v2284 = vadd.f32 %v2196, %v2283
  %v2285 = vpop.f32.mrb[0].mxu0
  %v2286 = vpop.f32.mrb[0].mxu0
  %v2287 = vadd.f32 %v2196, %v2286
  %v2288 = vpop.f32.mrb[0].mxu0
  %2289 = vmatprep.mubr.bf16.mxu0 0
  %2290 = vmatmul.mubr.bf16.gmra.mrb[0].mxu0 %v2219
  %v2291 = vpop.f32.mrb[0].mxu0
  %v2292 = vadd.f32 %v2196, %v2291
  %v2293 = vpop.f32.mrb[0].mxu0
  %v2294 = vpop.f32.mrb[0].mxu0
  %v2295 = vadd.f32 %v2196, %v2294
  %v2296 = vpop.f32.mrb[0].mxu0
  %2297 = vmatprep.mubr.bf16.mxu0 0
  %2298 = vmatmul.mubr.bf16.gmra.mrb[0].mxu0 %v2222
  %v2299 = vpop.f32.mrb[0].mxu0
  %v2300 = vadd.f32 %v2196, %v2299
  %v2301 = vpop.f32.mrb[0].mxu0
  %v2302 = vpop.f32.mrb[0].mxu0
  %v2303 = vadd.f32 %v2196, %v2302
  %v2304 = vpop.f32.mrb[0].mxu0
  %2305 = vmatprep.mubr.bf16.mxu0 0
  %2306 = vmatmul.mubr.bf16.gmra.mrb[0].mxu0 %v2225
  %v2307 = vpop.f32.mrb[0].mxu0
  %v2308 = vadd.f32 %v2196, %v2307
  %v2309 = vpop.f32.mrb[0].mxu0
  %v2310 = vpop.f32.mrb[0].mxu0
  %v2311 = vadd.f32 %v2196, %v2310
  %v2312 = vpop.f32.mrb[0].mxu0
  %2313 = vmatprep.mubr.bf16.mxu0 0
  %2314 = vmatmul.mubr.bf16.gmra.mrb[0].mxu0 %v2228
  %v2315 = vpop.f32.mrb[0].mxu0
  %v2316 = vadd.f32 %v2196, %v2315
  %v2317 = vpop.f32.mrb[0].mxu0
  %v2318 = vpop.f32.mrb[0].mxu0
  %v2319 = vadd.f32 %v2196, %v2318
  %v2320 = vpop.f32.mrb[0].mxu0
  %2321 = vmatprep.mubr.bf16.mxu0 0
  %2322 = vmatmul.mubr.bf16.gmra.mrb[0].mxu0 %v2231
  %v2323 = vpop.f32.mrb[0].mxu0
  %v2324 = vadd.f32 %v2196, %v2323
  %v2325 = vpop.f32.mrb[0].mxu0
  %v2326 = vpop.f32.mrb[0].mxu0
  %v2327 = vadd.f32 %v2196, %v2326
  %v2328 = vpop.f32.mrb[0].mxu0
  %2329 = vdwg.mxu0
  %v2330 = vpack.c.bf16 %v2271, %v2268
  %v2331 = vpack.c.bf16 %v2279, %v2276
  %v2332 = vpack.c.bf16 %v2287, %v2284
  %v2333 = vpack.c.bf16 %v2295, %v2292
  %v2334 = vpack.c.bf16 %v2303, %v2300
  %v2335 = vpack.c.bf16 %v2311, %v2308
  %v2336 = vpack.c.bf16 %v2319, %v2316
  %v2337 = vpack.c.bf16 %v2327, %v2324
  %2346 = vrot.lane.b32.xlu0 %v2330, 96
  %v2347 = vpop.permute.xlu0 %2346
  %2348 = vrot.lane.b32.xlu0 %v2331, 96
  %v2349 = vpop.permute.xlu0 %2348
  %2350 = vrot.lane.b32.xlu0 %v2332, 96
  %v2351 = vpop.permute.xlu0 %2350
  %2352 = vrot.lane.b32.xlu0 %v2333, 96
  %v2353 = vpop.permute.xlu0 %2352
  %2354 = vrot.lane.b32.xlu0 %v2334, 96
  %v2355 = vpop.permute.xlu0 %2354
  %2356 = vrot.lane.b32.xlu0 %v2335, 96
  %v2357 = vpop.permute.xlu0 %2356
  %2358 = vrot.lane.b32.xlu0 %v2336, 96
  %v2359 = vpop.permute.xlu0 %2358
  %2360 = vrot.lane.b32.xlu0 %v2337, 96
  %v2361 = vpop.permute.xlu0 %2360
  %vm2362 = vcmask 64512
  %v2364 = vsel %vm2362, %v2330, 0
  %v2367 = vsel %vm2362, %v2331, 0
  %v2370 = vsel %vm2362, %v2332, 0
  %v2373 = vsel %vm2362, %v2333, 0
  %v2376 = vsel %vm2362, %v2334, 0
  %v2379 = vsel %vm2362, %v2335, 0
  %v2382 = vsel %vm2362, %v2336, 0
  %v2385 = vsel %vm2362, %v2337, 0
  %v2388 = vsel %vm2362, %v2347, 0
  %v2391 = vsel %vm2362, %v2349, 0
  %v2394 = vsel %vm2362, %v2351, 0
  %v2397 = vsel %vm2362, %v2353, 0
  %v2400 = vsel %vm2362, %v2355, 0
  %v2403 = vsel %vm2362, %v2357, 0
  %v2406 = vsel %vm2362, %v2359, 0
  %v2409 = vsel %vm2362, %v2361, 0
  %2411 = vmatprep.subr.bf16.mxu0 0
  %2412 = vmatpush1.bf16.xpose.msra.mxu0 %v2388
  %2413 = vmatprep.subr.bf16.mxu0 0
  %2414 = vmatpush1.bf16.xpose.msra.mxu0 %v2391
  %2415 = vmatprep.subr.bf16.mxu0 0
  %2416 = vmatpush1.bf16.xpose.msra.mxu0 %v2394
  %2417 = vmatprep.subr.bf16.mxu0 0
  %2418 = vmatpush1.bf16.xpose.msra.mxu0 %v2397
  %2419 = vmatprep.subr.bf16.mxu0 0
  %2420 = vmatpush1.bf16.xpose.msra.mxu0 %v2400
  %2421 = vmatprep.subr.bf16.mxu0 0
  %2422 = vmatpush1.bf16.xpose.msra.mxu0 %v2403
  %2423 = vmatprep.subr.bf16.mxu0 0
  %2424 = vmatpush1.bf16.xpose.msra.mxu0 %v2406
  %2425 = vmatprep.subr.bf16.mxu0 0
  %2426 = vmatpush1.bf16.xpose.msra.mxu0 %v2409
  %2427 = vmatprep.subr.bf16.mxu0 0
  %2428 = vmatpush1.bf16.xpose.msra.mxu0 0
  %2429 = vmatprep.subr.bf16.mxu0 0
  %2430 = vmatpush1.bf16.xpose.msra.mxu0 0
  %2431 = vmatprep.subr.bf16.mxu0 0
  %2432 = vmatpush1.bf16.xpose.msra.mxu0 0
  %2433 = vmatprep.subr.bf16.mxu0 0
  %2434 = vmatpush1.bf16.xpose.msra.mxu0 0
  %2435 = vmatprep.subr.bf16.mxu0 0
  %2436 = vmatpush1.bf16.xpose.msra.mxu0 0
  %2437 = vmatprep.subr.bf16.mxu0 0
  %2438 = vmatpush1.bf16.xpose.msra.mxu0 0
  %2439 = vmatprep.subr.bf16.mxu0 0
  %2440 = vmatpush1.bf16.xpose.msra.mxu0 0
  %2441 = vmatprep.subr.bf16.mxu0 0
  %2442 = vmatpush1.bf16.xpose.msra.mxu0 0
  %2443 = vmatprep.mubr.bf16.mxu0 0
  %2444 = vmatmul.mubr.bf16.gmra.mrb[0].mxu0 %v2364
  %v2445 = vpop.f32.mrb[0].mxu0
  %v2446 = vadd.f32 0.0, %v2445
  %v2447 = vpop.f32.mrb[0].mxu0
  %v2448 = vpop.f32.mrb[0].mxu0
  %v2449 = vadd.f32 0.0, %v2448
  %v2450 = vpop.f32.mrb[0].mxu0
  %2451 = vmatprep.mubr.bf16.mxu0 0
  %2452 = vmatmul.mubr.bf16.gmra.mrb[0].mxu0 %v2367
  %v2453 = vpop.f32.mrb[0].mxu0
  %v2454 = vadd.f32 0.0, %v2453
  %v2455 = vpop.f32.mrb[0].mxu0
  %v2456 = vpop.f32.mrb[0].mxu0
  %v2457 = vadd.f32 0.0, %v2456
  %v2458 = vpop.f32.mrb[0].mxu0
  %2459 = vmatprep.mubr.bf16.mxu0 0
  %2460 = vmatmul.mubr.bf16.gmra.mrb[0].mxu0 %v2370
  %v2461 = vpop.f32.mrb[0].mxu0
  %v2462 = vadd.f32 0.0, %v2461
  %v2463 = vpop.f32.mrb[0].mxu0
  %v2464 = vpop.f32.mrb[0].mxu0
  %v2465 = vadd.f32 0.0, %v2464
  %v2466 = vpop.f32.mrb[0].mxu0
  %2467 = vmatprep.mubr.bf16.mxu0 0
  %2468 = vmatmul.mubr.bf16.gmra.mrb[0].mxu0 %v2373
  %v2469 = vpop.f32.mrb[0].mxu0
  %v2470 = vadd.f32 0.0, %v2469
  %v2471 = vpop.f32.mrb[0].mxu0
  %v2472 = vpop.f32.mrb[0].mxu0
  %v2473 = vadd.f32 0.0, %v2472
  %v2474 = vpop.f32.mrb[0].mxu0
  %2475 = vmatprep.mubr.bf16.mxu0 0
  %2476 = vmatmul.mubr.bf16.gmra.mrb[0].mxu0 %v2376
  %v2477 = vpop.f32.mrb[0].mxu0
  %v2478 = vadd.f32 0.0, %v2477
  %v2479 = vpop.f32.mrb[0].mxu0
  %v2480 = vpop.f32.mrb[0].mxu0
  %v2481 = vadd.f32 0.0, %v2480
  %v2482 = vpop.f32.mrb[0].mxu0
  %2483 = vmatprep.mubr.bf16.mxu0 0
  %2484 = vmatmul.mubr.bf16.gmra.mrb[0].mxu0 %v2379
  %v2485 = vpop.f32.mrb[0].mxu0
  %v2486 = vadd.f32 0.0, %v2485
  %v2487 = vpop.f32.mrb[0].mxu0
  %v2488 = vpop.f32.mrb[0].mxu0
  %v2489 = vadd.f32 0.0, %v2488
  %v2490 = vpop.f32.mrb[0].mxu0
  %2491 = vmatprep.mubr.bf16.mxu0 0
  %2492 = vmatmul.mubr.bf16.gmra.mrb[0].mxu0 %v2382
  %v2493 = vpop.f32.mrb[0].mxu0
  %v2494 = vadd.f32 0.0, %v2493
  %v2495 = vpop.f32.mrb[0].mxu0
  %v2496 = vpop.f32.mrb[0].mxu0
  %v2497 = vadd.f32 0.0, %v2496
  %v2498 = vpop.f32.mrb[0].mxu0
  %2499 = vmatprep.mubr.bf16.mxu0 0
  %2500 = vmatmul.mubr.bf16.gmra.mrb[0].mxu0 %v2385
  %v2501 = vpop.f32.mrb[0].mxu0
  %v2502 = vadd.f32 0.0, %v2501
  %v2503 = vpop.f32.mrb[0].mxu0
  %v2504 = vpop.f32.mrb[0].mxu0
  %v2505 = vadd.f32 0.0, %v2504
  %v2506 = vpop.f32.mrb[0].mxu0
  %2507 = vdwg.mxu0
  %v2508 = vmul.f32 %v2446, 0.35355338
  %v2509 = vmul.f32 %v2449, 0.35355338
  %v2510 = vmul.f32 %v2454, 0.35355338
  %v2511 = vmul.f32 %v2457, 0.35355338
  %v2512 = vmul.f32 %v2462, 0.35355338
  %v2513 = vmul.f32 %v2465, 0.35355338
  %v2514 = vmul.f32 %v2470, 0.35355338
  %v2515 = vmul.f32 %v2473, 0.35355338
  %v2516 = vmul.f32 %v2478, 0.35355338
  %v2517 = vmul.f32 %v2481, 0.35355338
  %v2518 = vmul.f32 %v2486, 0.35355338
  %v2519 = vmul.f32 %v2489, 0.35355338
  %v2520 = vmul.f32 %v2494, 0.35355338
  %v2521 = vmul.f32 %v2497, 0.35355338
  %v2522 = vmul.f32 %v2502, 0.35355338
  %v2523 = vmul.f32 %v2505, 0.35355338
  %v2524 = vadd.f32 %v2508, %v2116
  %v2525 = vadd.f32 %v2509, %v2117
  %v2526 = vadd.f32 %v2510, %v2118
  %v2527 = vadd.f32 %v2511, %v2119
  %v2528 = vadd.f32 %v2512, %v2120
  %v2529 = vadd.f32 %v2513, %v2121
  %v2530 = vadd.f32 %v2514, %v2122
  %v2531 = vadd.f32 %v2515, %v2123
  %v2532 = vadd.f32 %v2516, %v2124
  %v2533 = vadd.f32 %v2517, %v2125
  %v2534 = vadd.f32 %v2518, %v2126
  %v2535 = vadd.f32 %v2519, %v2127
  %v2536 = vadd.f32 %v2520, %v2128
  %v2537 = vadd.f32 %v2521, %v2129
  %v2538 = vadd.f32 %v2522, %v2130
  %v2539 = vadd.f32 %v2523, %v2131
  %2540 = vmax.xlane.f32.xlu0 %v2524
  %v2541 = vpop.xlane.xlu0 %2540
  %2542 = vmax.xlane.f32.xlu0 %v2525
  %v2543 = vpop.xlane.xlu0 %2542
  %2544 = vmax.xlane.f32.xlu0 %v2526
  %v2545 = vpop.xlane.xlu0 %2544
  %2546 = vmax.xlane.f32.xlu0 %v2527
  %v2547 = vpop.xlane.xlu0 %2546
  %2548 = vmax.xlane.f32.xlu0 %v2528
  %v2549 = vpop.xlane.xlu0 %2548
  %2550 = vmax.xlane.f32.xlu0 %v2529
  %v2551 = vpop.xlane.xlu0 %2550
  %2552 = vmax.xlane.f32.xlu0 %v2530
  %v2553 = vpop.xlane.xlu0 %2552
  %2554 = vmax.xlane.f32.xlu0 %v2531
  %v2555 = vpop.xlane.xlu0 %2554
  %2556 = vmax.xlane.f32.xlu0 %v2532
  %v2557 = vpop.xlane.xlu0 %2556
  %2558 = vmax.xlane.f32.xlu0 %v2533
  %v2559 = vpop.xlane.xlu0 %2558
  %2560 = vmax.xlane.f32.xlu0 %v2534
  %v2561 = vpop.xlane.xlu0 %2560
  %2562 = vmax.xlane.f32.xlu0 %v2535
  %v2563 = vpop.xlane.xlu0 %2562
  %2564 = vmax.xlane.f32.xlu0 %v2536
  %v2565 = vpop.xlane.xlu0 %2564
  %2566 = vmax.xlane.f32.xlu0 %v2537
  %v2567 = vpop.xlane.xlu0 %2566
  %2568 = vmax.xlane.f32.xlu0 %v2538
  %v2569 = vpop.xlane.xlu0 %2568
  %2570 = vmax.xlane.f32.xlu0 %v2539
  %v2571 = vpop.xlane.xlu0 %2570
  %v2572 = vsub.f32 %v2524, %v2541
  %v2573 = vsub.f32 %v2525, %v2543
  %v2574 = vsub.f32 %v2526, %v2545
  %v2575 = vsub.f32 %v2527, %v2547
  %v2576 = vsub.f32 %v2528, %v2549
  %v2577 = vsub.f32 %v2529, %v2551
  %v2578 = vsub.f32 %v2530, %v2553
  %v2579 = vsub.f32 %v2531, %v2555
  %v2580 = vsub.f32 %v2532, %v2557
  %v2581 = vsub.f32 %v2533, %v2559
  %v2582 = vsub.f32 %v2534, %v2561
  %v2583 = vsub.f32 %v2535, %v2563
  %v2584 = vsub.f32 %v2536, %v2565
  %v2585 = vsub.f32 %v2537, %v2567
  %v2586 = vsub.f32 %v2538, %v2569
  %v2587 = vsub.f32 %v2539, %v2571
  %v2588 = vmul.f32 %v2572, 1.442695
  %v2589 = vpow.pop %v2588
  %v2590 = vmul.f32 %v2573, 1.442695
  %v2591 = vpow.pop %v2590
  %v2592 = vmul.f32 %v2574, 1.442695
  %v2593 = vpow.pop %v2592
  %v2594 = vmul.f32 %v2575, 1.442695
  %v2595 = vpow.pop %v2594
  %v2596 = vmul.f32 %v2576, 1.442695
  %v2597 = vpow.pop %v2596
  %v2598 = vmul.f32 %v2577, 1.442695
  %v2599 = vpow.pop %v2598
  %v2600 = vmul.f32 %v2578, 1.442695
  %v2601 = vpow.pop %v2600
  %v2602 = vmul.f32 %v2579, 1.442695
  %v2603 = vpow.pop %v2602
  %v2604 = vmul.f32 %v2580, 1.442695
  %v2605 = vpow.pop %v2604
  %v2606 = vmul.f32 %v2581, 1.442695
  %v2607 = vpow.pop %v2606
  %v2608 = vmul.f32 %v2582, 1.442695
  %v2609 = vpow.pop %v2608
  %v2610 = vmul.f32 %v2583, 1.442695
  %v2611 = vpow.pop %v2610
  %v2612 = vmul.f32 %v2584, 1.442695
  %v2613 = vpow.pop %v2612
  %v2614 = vmul.f32 %v2585, 1.442695
  %v2615 = vpow.pop %v2614
  %v2616 = vmul.f32 %v2586, 1.442695
  %v2617 = vpow.pop %v2616
  %v2618 = vmul.f32 %v2587, 1.442695
  %v2619 = vpow.pop %v2618
  %2620 = vadd.xlane.f32.xlu0 %v2589
  %v2621 = vpop.xlane.xlu0 %2620
  %2622 = vadd.xlane.f32.xlu0 %v2591
  %v2623 = vpop.xlane.xlu0 %2622
  %2624 = vadd.xlane.f32.xlu0 %v2593
  %v2625 = vpop.xlane.xlu0 %2624
  %2626 = vadd.xlane.f32.xlu0 %v2595
  %v2627 = vpop.xlane.xlu0 %2626
  %2628 = vadd.xlane.f32.xlu0 %v2597
  %v2629 = vpop.xlane.xlu0 %2628
  %2630 = vadd.xlane.f32.xlu0 %v2599
  %v2631 = vpop.xlane.xlu0 %2630
  %2632 = vadd.xlane.f32.xlu0 %v2601
  %v2633 = vpop.xlane.xlu0 %2632
  %2634 = vadd.xlane.f32.xlu0 %v2603
  %v2635 = vpop.xlane.xlu0 %2634
  %2636 = vadd.xlane.f32.xlu0 %v2605
  %v2637 = vpop.xlane.xlu0 %2636
  %2638 = vadd.xlane.f32.xlu0 %v2607
  %v2639 = vpop.xlane.xlu0 %2638
  %2640 = vadd.xlane.f32.xlu0 %v2609
  %v2641 = vpop.xlane.xlu0 %2640
  %2642 = vadd.xlane.f32.xlu0 %v2611
  %v2643 = vpop.xlane.xlu0 %2642
  %2644 = vadd.xlane.f32.xlu0 %v2613
  %v2645 = vpop.xlane.xlu0 %2644
  %2646 = vadd.xlane.f32.xlu0 %v2615
  %v2647 = vpop.xlane.xlu0 %2646
  %2648 = vadd.xlane.f32.xlu0 %v2617
  %v2649 = vpop.xlane.xlu0 %2648
  %2650 = vadd.xlane.f32.xlu0 %v2619
  %v2651 = vpop.xlane.xlu0 %2650
  %v2652 = vrcp.pop %v2621
  %v2653 = vrcp.pop %v2623
  %v2654 = vrcp.pop %v2625
  %v2655 = vrcp.pop %v2627
  %v2656 = vrcp.pop %v2629
  %v2657 = vrcp.pop %v2631
  %v2658 = vrcp.pop %v2633
  %v2659 = vrcp.pop %v2635
  %v2660 = vrcp.pop %v2637
  %v2661 = vrcp.pop %v2639
  %v2662 = vrcp.pop %v2641
  %v2663 = vrcp.pop %v2643
  %v2664 = vrcp.pop %v2645
  %v2665 = vrcp.pop %v2647
  %v2666 = vrcp.pop %v2649
  %v2667 = vrcp.pop %v2651
  %v2668 = vmul.f32 %v2589, %v2652
  %v2669 = vmul.f32 %v2591, %v2653
  %v2670 = vmul.f32 %v2593, %v2654
  %v2671 = vmul.f32 %v2595, %v2655
  %v2672 = vmul.f32 %v2597, %v2656
  %v2673 = vmul.f32 %v2599, %v2657
  %v2674 = vmul.f32 %v2601, %v2658
  %v2675 = vmul.f32 %v2603, %v2659
  %v2676 = vmul.f32 %v2605, %v2660
  %v2677 = vmul.f32 %v2607, %v2661
  %v2678 = vmul.f32 %v2609, %v2662
  %v2679 = vmul.f32 %v2611, %v2663
  %v2680 = vmul.f32 %v2613, %v2664
  %v2681 = vmul.f32 %v2615, %v2665
  %v2682 = vmul.f32 %v2617, %v2666
  %v2683 = vmul.f32 %v2619, %v2667
  %v2684 = vpack.c.bf16 %v2669, %v2668
  %v2685 = vpack.c.bf16 %v2671, %v2670
  %v2686 = vpack.c.bf16 %v2673, %v2672
  %v2687 = vpack.c.bf16 %v2675, %v2674
  %v2688 = vpack.c.bf16 %v2677, %v2676
  %v2689 = vpack.c.bf16 %v2679, %v2678
  %v2690 = vpack.c.bf16 %v2681, %v2680
  %v2691 = vpack.c.bf16 %v2683, %v2682
  %2692 = vrot.lane.b32.xlu0 %v2330, 64
  %v2693 = vpop.permute.xlu0 %2692
  %2694 = vrot.lane.b32.xlu0 %v2331, 64
  %v2695 = vpop.permute.xlu0 %2694
  %2696 = vrot.lane.b32.xlu0 %v2332, 64
  %v2697 = vpop.permute.xlu0 %2696
  %2698 = vrot.lane.b32.xlu0 %v2333, 64
  %v2699 = vpop.permute.xlu0 %2698
  %2700 = vrot.lane.b32.xlu0 %v2334, 64
  %v2701 = vpop.permute.xlu0 %2700
  %2702 = vrot.lane.b32.xlu0 %v2335, 64
  %v2703 = vpop.permute.xlu0 %2702
  %2704 = vrot.lane.b32.xlu0 %v2336, 64
  %v2705 = vpop.permute.xlu0 %2704
  %2706 = vrot.lane.b32.xlu0 %v2337, 64
  %v2707 = vpop.permute.xlu0 %2706
  %2716 = vmatprep.subr.bf16.mxu0 0
  %2717 = vmatpush1.bf16.msra.mxu0 %v2693
  %2718 = vmatprep.subr.bf16.mxu0 0
  %2719 = vmatpush1.bf16.msra.mxu0 %v2695
  %2720 = vmatprep.subr.bf16.mxu0 0
  %2721 = vmatpush1.bf16.msra.mxu0 %v2697
  %2722 = vmatprep.subr.bf16.mxu0 0
  %2723 = vmatpush1.bf16.msra.mxu0 %v2699
  %2724 = vmatprep.subr.bf16.mxu0 0
  %2725 = vmatpush1.bf16.msra.mxu0 %v2701
  %2726 = vmatprep.subr.bf16.mxu0 0
  %2727 = vmatpush1.bf16.msra.mxu0 %v2703
  %2728 = vmatprep.subr.bf16.mxu0 0
  %2729 = vmatpush1.bf16.msra.mxu0 %v2705
  %2730 = vmatprep.subr.bf16.mxu0 0
  %2731 = vmatpush1.bf16.msra.mxu0 %v2707
  %2732 = vmatprep.subr.bf16.mxu0 0
  %2733 = vmatpush1.bf16.msra.mxu0 0
  %2734 = vmatprep.subr.bf16.mxu0 0
  %2735 = vmatpush1.bf16.msra.mxu0 0
  %2736 = vmatprep.subr.bf16.mxu0 0
  %2737 = vmatpush1.bf16.msra.mxu0 0
  %2738 = vmatprep.subr.bf16.mxu0 0
  %2739 = vmatpush1.bf16.msra.mxu0 0
  %2740 = vmatprep.subr.bf16.mxu0 0
  %2741 = vmatpush1.bf16.msra.mxu0 0
  %2742 = vmatprep.subr.bf16.mxu0 0
  %2743 = vmatpush1.bf16.msra.mxu0 0
  %2744 = vmatprep.subr.bf16.mxu0 0
  %2745 = vmatpush1.bf16.msra.mxu0 0
  %2746 = vmatprep.subr.bf16.mxu0 0
  %2747 = vmatpush1.bf16.msra.mxu0 0
  %2748 = vmatprep.mubr.bf16.mxu0 0
  %2749 = vmatmul.mubr.bf16.gmra.mrb[0].mxu0 %v2684
  %v2750 = vpop.f32.mrb[0].mxu0
  %v2751 = vadd.f32 0.0, %v2750
  %v2752 = vpop.f32.mrb[0].mxu0
  %v2753 = vpop.f32.mrb[0].mxu0
  %v2754 = vadd.f32 0.0, %v2753
  %v2755 = vpop.f32.mrb[0].mxu0
  %2756 = vmatprep.mubr.bf16.mxu0 0
  %2757 = vmatmul.mubr.bf16.gmra.mrb[0].mxu0 %v2685
  %v2758 = vpop.f32.mrb[0].mxu0
  %v2759 = vadd.f32 0.0, %v2758
  %v2760 = vpop.f32.mrb[0].mxu0
  %v2761 = vpop.f32.mrb[0].mxu0
  %v2762 = vadd.f32 0.0, %v2761
  %v2763 = vpop.f32.mrb[0].mxu0
  %2764 = vmatprep.mubr.bf16.mxu0 0
  %2765 = vmatmul.mubr.bf16.gmra.mrb[0].mxu0 %v2686
  %v2766 = vpop.f32.mrb[0].mxu0
  %v2767 = vadd.f32 0.0, %v2766
  %v2768 = vpop.f32.mrb[0].mxu0
  %v2769 = vpop.f32.mrb[0].mxu0
  %v2770 = vadd.f32 0.0, %v2769
  %v2771 = vpop.f32.mrb[0].mxu0
  %2772 = vmatprep.mubr.bf16.mxu0 0
  %2773 = vmatmul.mubr.bf16.gmra.mrb[0].mxu0 %v2687
  %v2774 = vpop.f32.mrb[0].mxu0
  %v2775 = vadd.f32 0.0, %v2774
  %v2776 = vpop.f32.mrb[0].mxu0
  %v2777 = vpop.f32.mrb[0].mxu0
  %v2778 = vadd.f32 0.0, %v2777
  %v2779 = vpop.f32.mrb[0].mxu0
  %2780 = vmatprep.mubr.bf16.mxu0 0
  %2781 = vmatmul.mubr.bf16.gmra.mrb[0].mxu0 %v2688
  %v2782 = vpop.f32.mrb[0].mxu0
  %v2783 = vadd.f32 0.0, %v2782
  %v2784 = vpop.f32.mrb[0].mxu0
  %v2785 = vpop.f32.mrb[0].mxu0
  %v2786 = vadd.f32 0.0, %v2785
  %v2787 = vpop.f32.mrb[0].mxu0
  %2788 = vmatprep.mubr.bf16.mxu0 0
  %2789 = vmatmul.mubr.bf16.gmra.mrb[0].mxu0 %v2689
  %v2790 = vpop.f32.mrb[0].mxu0
  %v2791 = vadd.f32 0.0, %v2790
  %v2792 = vpop.f32.mrb[0].mxu0
  %v2793 = vpop.f32.mrb[0].mxu0
  %v2794 = vadd.f32 0.0, %v2793
  %v2795 = vpop.f32.mrb[0].mxu0
  %2796 = vmatprep.mubr.bf16.mxu0 0
  %2797 = vmatmul.mubr.bf16.gmra.mrb[0].mxu0 %v2690
  %v2798 = vpop.f32.mrb[0].mxu0
  %v2799 = vadd.f32 0.0, %v2798
  %v2800 = vpop.f32.mrb[0].mxu0
  %v2801 = vpop.f32.mrb[0].mxu0
  %v2802 = vadd.f32 0.0, %v2801
  %v2803 = vpop.f32.mrb[0].mxu0
  %2804 = vmatprep.mubr.bf16.mxu0 0
  %2805 = vmatmul.mubr.bf16.gmra.mrb[0].mxu0 %v2691
  %v2806 = vpop.f32.mrb[0].mxu0
  %v2807 = vadd.f32 0.0, %v2806
  %v2808 = vpop.f32.mrb[0].mxu0
  %v2809 = vpop.f32.mrb[0].mxu0
  %v2810 = vadd.f32 0.0, %v2809
  %v2811 = vpop.f32.mrb[0].mxu0
  %2812 = vdwg.mxu0
  %2813 = vrot.lane.b32.xlu0 %v2330, 120
  %v2814 = vpop.permute.xlu0 %2813
  %2815 = vrot.lane.b32.xlu0 %v2331, 120
  %v2816 = vpop.permute.xlu0 %2815
  %2817 = vrot.lane.b32.xlu0 %v2332, 120
  %v2818 = vpop.permute.xlu0 %2817
  %2819 = vrot.lane.b32.xlu0 %v2333, 120
  %v2820 = vpop.permute.xlu0 %2819
  %2821 = vrot.lane.b32.xlu0 %v2334, 120
  %v2822 = vpop.permute.xlu0 %2821
  %2823 = vrot.lane.b32.xlu0 %v2335, 120
  %v2824 = vpop.permute.xlu0 %2823
  %2825 = vrot.lane.b32.xlu0 %v2336, 120
  %v2826 = vpop.permute.xlu0 %2825
  %2827 = vrot.lane.b32.xlu0 %v2337, 120
  %v2828 = vpop.permute.xlu0 %2827
  %2829 = vrot.lane.b32.xlu0 %v2330, 88
  %v2830 = vpop.permute.xlu0 %2829
  %2831 = vrot.lane.b32.xlu0 %v2331, 88
  %v2832 = vpop.permute.xlu0 %2831
  %2833 = vrot.lane.b32.xlu0 %v2332, 88
  %v2834 = vpop.permute.xlu0 %2833
  %2835 = vrot.lane.b32.xlu0 %v2333, 88
  %v2836 = vpop.permute.xlu0 %2835
  %2837 = vrot.lane.b32.xlu0 %v2334, 88
  %v2838 = vpop.permute.xlu0 %2837
  %2839 = vrot.lane.b32.xlu0 %v2335, 88
  %v2840 = vpop.permute.xlu0 %2839
  %2841 = vrot.lane.b32.xlu0 %v2336, 88
  %v2842 = vpop.permute.xlu0 %2841
  %2843 = vrot.lane.b32.xlu0 %v2337, 88
  %v2844 = vpop.permute.xlu0 %2843
  %v2846 = vsel %vm2362, %v2814, 0
  %v2849 = vsel %vm2362, %v2816, 0
  %v2852 = vsel %vm2362, %v2818, 0
  %v2855 = vsel %vm2362, %v2820, 0
  %v2858 = vsel %vm2362, %v2822, 0
  %v2861 = vsel %vm2362, %v2824, 0
  %v2864 = vsel %vm2362, %v2826, 0
  %v2867 = vsel %vm2362, %v2828, 0
  %v2870 = vsel %vm2362, %v2830, 0
  %v2873 = vsel %vm2362, %v2832, 0
  %v2876 = vsel %vm2362, %v2834, 0
  %v2879 = vsel %vm2362, %v2836, 0
  %v2882 = vsel %vm2362, %v2838, 0
  %v2885 = vsel %vm2362, %v2840, 0
  %v2888 = vsel %vm2362, %v2842, 0
  %v2891 = vsel %vm2362, %v2844, 0
  %2893 = vmatprep.subr.bf16.mxu0 0
  %2894 = vmatpush1.bf16.xpose.msra.mxu0 %v2870
  %2895 = vmatprep.subr.bf16.mxu0 0
  %2896 = vmatpush1.bf16.xpose.msra.mxu0 %v2873
  %2897 = vmatprep.subr.bf16.mxu0 0
  %2898 = vmatpush1.bf16.xpose.msra.mxu0 %v2876
  %2899 = vmatprep.subr.bf16.mxu0 0
  %2900 = vmatpush1.bf16.xpose.msra.mxu0 %v2879
  %2901 = vmatprep.subr.bf16.mxu0 0
  %2902 = vmatpush1.bf16.xpose.msra.mxu0 %v2882
  %2903 = vmatprep.subr.bf16.mxu0 0
  %2904 = vmatpush1.bf16.xpose.msra.mxu0 %v2885
  %2905 = vmatprep.subr.bf16.mxu0 0
  %2906 = vmatpush1.bf16.xpose.msra.mxu0 %v2888
  %2907 = vmatprep.subr.bf16.mxu0 0
  %2908 = vmatpush1.bf16.xpose.msra.mxu0 %v2891
  %2909 = vmatprep.subr.bf16.mxu0 0
  %2910 = vmatpush1.bf16.xpose.msra.mxu0 0
  %2911 = vmatprep.subr.bf16.mxu0 0
  %2912 = vmatpush1.bf16.xpose.msra.mxu0 0
  %2913 = vmatprep.subr.bf16.mxu0 0
  %2914 = vmatpush1.bf16.xpose.msra.mxu0 0
  %2915 = vmatprep.subr.bf16.mxu0 0
  %2916 = vmatpush1.bf16.xpose.msra.mxu0 0
  %2917 = vmatprep.subr.bf16.mxu0 0
  %2918 = vmatpush1.bf16.xpose.msra.mxu0 0
  %2919 = vmatprep.subr.bf16.mxu0 0
  %2920 = vmatpush1.bf16.xpose.msra.mxu0 0
  %2921 = vmatprep.subr.bf16.mxu0 0
  %2922 = vmatpush1.bf16.xpose.msra.mxu0 0
  %2923 = vmatprep.subr.bf16.mxu0 0
  %2924 = vmatpush1.bf16.xpose.msra.mxu0 0
  %2925 = vmatprep.mubr.bf16.mxu0 0
  %2926 = vmatmul.mubr.bf16.gmra.mrb[0].mxu0 %v2846
  %v2927 = vpop.f32.mrb[0].mxu0
  %v2928 = vadd.f32 0.0, %v2927
  %v2929 = vpop.f32.mrb[0].mxu0
  %v2930 = vpop.f32.mrb[0].mxu0
  %v2931 = vadd.f32 0.0, %v2930
  %v2932 = vpop.f32.mrb[0].mxu0
  %2933 = vmatprep.mubr.bf16.mxu0 0
  %2934 = vmatmul.mubr.bf16.gmra.mrb[0].mxu0 %v2849
  %v2935 = vpop.f32.mrb[0].mxu0
  %v2936 = vadd.f32 0.0, %v2935
  %v2937 = vpop.f32.mrb[0].mxu0
  %v2938 = vpop.f32.mrb[0].mxu0
  %v2939 = vadd.f32 0.0, %v2938
  %v2940 = vpop.f32.mrb[0].mxu0
  %2941 = vmatprep.mubr.bf16.mxu0 0
  %2942 = vmatmul.mubr.bf16.gmra.mrb[0].mxu0 %v2852
  %v2943 = vpop.f32.mrb[0].mxu0
  %v2944 = vadd.f32 0.0, %v2943
  %v2945 = vpop.f32.mrb[0].mxu0
  %v2946 = vpop.f32.mrb[0].mxu0
  %v2947 = vadd.f32 0.0, %v2946
  %v2948 = vpop.f32.mrb[0].mxu0
  %2949 = vmatprep.mubr.bf16.mxu0 0
  %2950 = vmatmul.mubr.bf16.gmra.mrb[0].mxu0 %v2855
  %v2951 = vpop.f32.mrb[0].mxu0
  %v2952 = vadd.f32 0.0, %v2951
  %v2953 = vpop.f32.mrb[0].mxu0
  %v2954 = vpop.f32.mrb[0].mxu0
  %v2955 = vadd.f32 0.0, %v2954
  %v2956 = vpop.f32.mrb[0].mxu0
  %2957 = vmatprep.mubr.bf16.mxu0 0
  %2958 = vmatmul.mubr.bf16.gmra.mrb[0].mxu0 %v2858
  %v2959 = vpop.f32.mrb[0].mxu0
  %v2960 = vadd.f32 0.0, %v2959
  %v2961 = vpop.f32.mrb[0].mxu0
  %v2962 = vpop.f32.mrb[0].mxu0
  %v2963 = vadd.f32 0.0, %v2962
  %v2964 = vpop.f32.mrb[0].mxu0
  %2965 = vmatprep.mubr.bf16.mxu0 0
  %2966 = vmatmul.mubr.bf16.gmra.mrb[0].mxu0 %v2861
  %v2967 = vpop.f32.mrb[0].mxu0
  %v2968 = vadd.f32 0.0, %v2967
  %v2969 = vpop.f32.mrb[0].mxu0
  %v2970 = vpop.f32.mrb[0].mxu0
  %v2971 = vadd.f32 0.0, %v2970
  %v2972 = vpop.f32.mrb[0].mxu0
  %2973 = vmatprep.mubr.bf16.mxu0 0
  %2974 = vmatmul.mubr.bf16.gmra.mrb[0].mxu0 %v2864
  %v2975 = vpop.f32.mrb[0].mxu0
  %v2976 = vadd.f32 0.0, %v2975
  %v2977 = vpop.f32.mrb[0].mxu0
  %v2978 = vpop.f32.mrb[0].mxu0
  %v2979 = vadd.f32 0.0, %v2978
  %v2980 = vpop.f32.mrb[0].mxu0
  %2981 = vmatprep.mubr.bf16.mxu0 0
  %2982 = vmatmul.mubr.bf16.gmra.mrb[0].mxu0 %v2867
  %v2983 = vpop.f32.mrb[0].mxu0
  %v2984 = vadd.f32 0.0, %v2983
  %v2985 = vpop.f32.mrb[0].mxu0
  %v2986 = vpop.f32.mrb[0].mxu0
  %v2987 = vadd.f32 0.0, %v2986
  %v2988 = vpop.f32.mrb[0].mxu0
  %2989 = vdwg.mxu0
  %v2990 = vmul.f32 %v2928, 0.35355338
  %v2991 = vmul.f32 %v2931, 0.35355338
  %v2992 = vmul.f32 %v2936, 0.35355338
  %v2993 = vmul.f32 %v2939, 0.35355338
  %v2994 = vmul.f32 %v2944, 0.35355338
  %v2995 = vmul.f32 %v2947, 0.35355338
  %v2996 = vmul.f32 %v2952, 0.35355338
  %v2997 = vmul.f32 %v2955, 0.35355338
  %v2998 = vmul.f32 %v2960, 0.35355338
  %v2999 = vmul.f32 %v2963, 0.35355338
  %v3000 = vmul.f32 %v2968, 0.35355338
  %v3001 = vmul.f32 %v2971, 0.35355338
  %v3002 = vmul.f32 %v2976, 0.35355338
  %v3003 = vmul.f32 %v2979, 0.35355338
  %v3004 = vmul.f32 %v2984, 0.35355338
  %v3005 = vmul.f32 %v2987, 0.35355338
  %v3006 = vadd.f32 %v2990, %v2116
  %v3007 = vadd.f32 %v2991, %v2117
  %v3008 = vadd.f32 %v2992, %v2118
  %v3009 = vadd.f32 %v2993, %v2119
  %v3010 = vadd.f32 %v2994, %v2120
  %v3011 = vadd.f32 %v2995, %v2121
  %v3012 = vadd.f32 %v2996, %v2122
  %v3013 = vadd.f32 %v2997, %v2123
  %v3014 = vadd.f32 %v2998, %v2124
  %v3015 = vadd.f32 %v2999, %v2125
  %v3016 = vadd.f32 %v3000, %v2126
  %v3017 = vadd.f32 %v3001, %v2127
  %v3018 = vadd.f32 %v3002, %v2128
  %v3019 = vadd.f32 %v3003, %v2129
  %v3020 = vadd.f32 %v3004, %v2130
  %v3021 = vadd.f32 %v3005, %v2131
  %3022 = vmax.xlane.f32.xlu0 %v3006
  %v3023 = vpop.xlane.xlu0 %3022
  %3024 = vmax.xlane.f32.xlu0 %v3007
  %v3025 = vpop.xlane.xlu0 %3024
  %3026 = vmax.xlane.f32.xlu0 %v3008
  %v3027 = vpop.xlane.xlu0 %3026
  %3028 = vmax.xlane.f32.xlu0 %v3009
  %v3029 = vpop.xlane.xlu0 %3028
  %3030 = vmax.xlane.f32.xlu0 %v3010
  %v3031 = vpop.xlane.xlu0 %3030
  %3032 = vmax.xlane.f32.xlu0 %v3011
  %v3033 = vpop.xlane.xlu0 %3032
  %3034 = vmax.xlane.f32.xlu0 %v3012
  %v3035 = vpop.xlane.xlu0 %3034
  %3036 = vmax.xlane.f32.xlu0 %v3013
  %v3037 = vpop.xlane.xlu0 %3036
  %3038 = vmax.xlane.f32.xlu0 %v3014
  %v3039 = vpop.xlane.xlu0 %3038
  %3040 = vmax.xlane.f32.xlu0 %v3015
  %v3041 = vpop.xlane.xlu0 %3040
  %3042 = vmax.xlane.f32.xlu0 %v3016
  %v3043 = vpop.xlane.xlu0 %3042
  %3044 = vmax.xlane.f32.xlu0 %v3017
  %v3045 = vpop.xlane.xlu0 %3044
  %3046 = vmax.xlane.f32.xlu0 %v3018
  %v3047 = vpop.xlane.xlu0 %3046
  %3048 = vmax.xlane.f32.xlu0 %v3019
  %v3049 = vpop.xlane.xlu0 %3048
  %3050 = vmax.xlane.f32.xlu0 %v3020
  %v3051 = vpop.xlane.xlu0 %3050
  %3052 = vmax.xlane.f32.xlu0 %v3021
  %v3053 = vpop.xlane.xlu0 %3052
  %v3054 = vsub.f32 %v3006, %v3023
  %v3055 = vsub.f32 %v3007, %v3025
  %v3056 = vsub.f32 %v3008, %v3027
  %v3057 = vsub.f32 %v3009, %v3029
  %v3058 = vsub.f32 %v3010, %v3031
  %v3059 = vsub.f32 %v3011, %v3033
  %v3060 = vsub.f32 %v3012, %v3035
  %v3061 = vsub.f32 %v3013, %v3037
  %v3062 = vsub.f32 %v3014, %v3039
  %v3063 = vsub.f32 %v3015, %v3041
  %v3064 = vsub.f32 %v3016, %v3043
  %v3065 = vsub.f32 %v3017, %v3045
  %v3066 = vsub.f32 %v3018, %v3047
  %v3067 = vsub.f32 %v3019, %v3049
  %v3068 = vsub.f32 %v3020, %v3051
  %v3069 = vsub.f32 %v3021, %v3053
  %v3070 = vmul.f32 %v3054, 1.442695
  %v3071 = vpow.pop %v3070
  %v3072 = vmul.f32 %v3055, 1.442695
  %v3073 = vpow.pop %v3072
  %v3074 = vmul.f32 %v3056, 1.442695
  %v3075 = vpow.pop %v3074
  %v3076 = vmul.f32 %v3057, 1.442695
  %v3077 = vpow.pop %v3076
  %v3078 = vmul.f32 %v3058, 1.442695
  %v3079 = vpow.pop %v3078
  %v3080 = vmul.f32 %v3059, 1.442695
  %v3081 = vpow.pop %v3080
  %v3082 = vmul.f32 %v3060, 1.442695
  %v3083 = vpow.pop %v3082
  %v3084 = vmul.f32 %v3061, 1.442695
  %v3085 = vpow.pop %v3084
  %v3086 = vmul.f32 %v3062, 1.442695
  %v3087 = vpow.pop %v3086
  %v3088 = vmul.f32 %v3063, 1.442695
  %v3089 = vpow.pop %v3088
  %v3090 = vmul.f32 %v3064, 1.442695
  %v3091 = vpow.pop %v3090
  %v3092 = vmul.f32 %v3065, 1.442695
  %v3093 = vpow.pop %v3092
  %v3094 = vmul.f32 %v3066, 1.442695
  %v3095 = vpow.pop %v3094
  %v3096 = vmul.f32 %v3067, 1.442695
  %v3097 = vpow.pop %v3096
  %v3098 = vmul.f32 %v3068, 1.442695
  %v3099 = vpow.pop %v3098
  %v3100 = vmul.f32 %v3069, 1.442695
  %v3101 = vpow.pop %v3100
  %3102 = vadd.xlane.f32.xlu0 %v3071
  %v3103 = vpop.xlane.xlu0 %3102
  %3104 = vadd.xlane.f32.xlu0 %v3073
  %v3105 = vpop.xlane.xlu0 %3104
  %3106 = vadd.xlane.f32.xlu0 %v3075
  %v3107 = vpop.xlane.xlu0 %3106
  %3108 = vadd.xlane.f32.xlu0 %v3077
  %v3109 = vpop.xlane.xlu0 %3108
  %3110 = vadd.xlane.f32.xlu0 %v3079
  %v3111 = vpop.xlane.xlu0 %3110
  %3112 = vadd.xlane.f32.xlu0 %v3081
  %v3113 = vpop.xlane.xlu0 %3112
  %3114 = vadd.xlane.f32.xlu0 %v3083
  %v3115 = vpop.xlane.xlu0 %3114
  %3116 = vadd.xlane.f32.xlu0 %v3085
  %v3117 = vpop.xlane.xlu0 %3116
  %3118 = vadd.xlane.f32.xlu0 %v3087
  %v3119 = vpop.xlane.xlu0 %3118
  %3120 = vadd.xlane.f32.xlu0 %v3089
  %v3121 = vpop.xlane.xlu0 %3120
  %3122 = vadd.xlane.f32.xlu0 %v3091
  %v3123 = vpop.xlane.xlu0 %3122
  %3124 = vadd.xlane.f32.xlu0 %v3093
  %v3125 = vpop.xlane.xlu0 %3124
  %3126 = vadd.xlane.f32.xlu0 %v3095
  %v3127 = vpop.xlane.xlu0 %3126
  %3128 = vadd.xlane.f32.xlu0 %v3097
  %v3129 = vpop.xlane.xlu0 %3128
  %3130 = vadd.xlane.f32.xlu0 %v3099
  %v3131 = vpop.xlane.xlu0 %3130
  %3132 = vadd.xlane.f32.xlu0 %v3101
  %v3133 = vpop.xlane.xlu0 %3132
  %v3134 = vrcp.pop %v3103
  %v3135 = vrcp.pop %v3105
  %v3136 = vrcp.pop %v3107
  %v3137 = vrcp.pop %v3109
  %v3138 = vrcp.pop %v3111
  %v3139 = vrcp.pop %v3113
  %v3140 = vrcp.pop %v3115
  %v3141 = vrcp.pop %v3117
  %v3142 = vrcp.pop %v3119
  %v3143 = vrcp.pop %v3121
  %v3144 = vrcp.pop %v3123
  %v3145 = vrcp.pop %v3125
  %v3146 = vrcp.pop %v3127
  %v3147 = vrcp.pop %v3129
  %v3148 = vrcp.pop %v3131
  %v3149 = vrcp.pop %v3133
  %v3150 = vmul.f32 %v3071, %v3134
  %v3151 = vmul.f32 %v3073, %v3135
  %v3152 = vmul.f32 %v3075, %v3136
  %v3153 = vmul.f32 %v3077, %v3137
  %v3154 = vmul.f32 %v3079, %v3138
  %v3155 = vmul.f32 %v3081, %v3139
  %v3156 = vmul.f32 %v3083, %v3140
  %v3157 = vmul.f32 %v3085, %v3141
  %v3158 = vmul.f32 %v3087, %v3142
  %v3159 = vmul.f32 %v3089, %v3143
  %v3160 = vmul.f32 %v3091, %v3144
  %v3161 = vmul.f32 %v3093, %v3145
  %v3162 = vmul.f32 %v3095, %v3146
  %v3163 = vmul.f32 %v3097, %v3147
  %v3164 = vmul.f32 %v3099, %v3148
  %v3165 = vmul.f32 %v3101, %v3149
  %v3166 = vpack.c.bf16 %v3151, %v3150
  %v3167 = vpack.c.bf16 %v3153, %v3152
  %v3168 = vpack.c.bf16 %v3155, %v3154
  %v3169 = vpack.c.bf16 %v3157, %v3156
  %v3170 = vpack.c.bf16 %v3159, %v3158
  %v3171 = vpack.c.bf16 %v3161, %v3160
  %v3172 = vpack.c.bf16 %v3163, %v3162
  %v3173 = vpack.c.bf16 %v3165, %v3164
  %3174 = vrot.lane.b32.xlu0 %v2330, 56
  %v3175 = vpop.permute.xlu0 %3174
  %3176 = vrot.lane.b32.xlu0 %v2331, 56
  %v3177 = vpop.permute.xlu0 %3176
  %3178 = vrot.lane.b32.xlu0 %v2332, 56
  %v3179 = vpop.permute.xlu0 %3178
  %3180 = vrot.lane.b32.xlu0 %v2333, 56
  %v3181 = vpop.permute.xlu0 %3180
  %3182 = vrot.lane.b32.xlu0 %v2334, 56
  %v3183 = vpop.permute.xlu0 %3182
  %3184 = vrot.lane.b32.xlu0 %v2335, 56
  %v3185 = vpop.permute.xlu0 %3184
  %3186 = vrot.lane.b32.xlu0 %v2336, 56
  %v3187 = vpop.permute.xlu0 %3186
  %3188 = vrot.lane.b32.xlu0 %v2337, 56
  %v3189 = vpop.permute.xlu0 %3188
  %3198 = vmatprep.subr.bf16.mxu0 0
  %3199 = vmatpush1.bf16.msra.mxu0 %v3175
  %3200 = vmatprep.subr.bf16.mxu0 0
  %3201 = vmatpush1.bf16.msra.mxu0 %v3177
  %3202 = vmatprep.subr.bf16.mxu0 0
  %3203 = vmatpush1.bf16.msra.mxu0 %v3179
  %3204 = vmatprep.subr.bf16.mxu0 0
  %3205 = vmatpush1.bf16.msra.mxu0 %v3181
  %3206 = vmatprep.subr.bf16.mxu0 0
  %3207 = vmatpush1.bf16.msra.mxu0 %v3183
  %3208 = vmatprep.subr.bf16.mxu0 0
  %3209 = vmatpush1.bf16.msra.mxu0 %v3185
  %3210 = vmatprep.subr.bf16.mxu0 0
  %3211 = vmatpush1.bf16.msra.mxu0 %v3187
  %3212 = vmatprep.subr.bf16.mxu0 0
  %3213 = vmatpush1.bf16.msra.mxu0 %v3189
  %3214 = vmatprep.subr.bf16.mxu0 0
  %3215 = vmatpush1.bf16.msra.mxu0 0
  %3216 = vmatprep.subr.bf16.mxu0 0
  %3217 = vmatpush1.bf16.msra.mxu0 0
  %3218 = vmatprep.subr.bf16.mxu0 0
  %3219 = vmatpush1.bf16.msra.mxu0 0
  %3220 = vmatprep.subr.bf16.mxu0 0
  %3221 = vmatpush1.bf16.msra.mxu0 0
  %3222 = vmatprep.subr.bf16.mxu0 0
  %3223 = vmatpush1.bf16.msra.mxu0 0
  %3224 = vmatprep.subr.bf16.mxu0 0
  %3225 = vmatpush1.bf16.msra.mxu0 0
  %3226 = vmatprep.subr.bf16.mxu0 0
  %3227 = vmatpush1.bf16.msra.mxu0 0
  %3228 = vmatprep.subr.bf16.mxu0 0
  %3229 = vmatpush1.bf16.msra.mxu0 0
  %3230 = vmatprep.mubr.bf16.mxu0 0
  %3231 = vmatmul.mubr.bf16.gmra.mrb[0].mxu0 %v3166
  %v3232 = vpop.f32.mrb[0].mxu0
  %v3233 = vadd.f32 0.0, %v3232
  %v3234 = vpop.f32.mrb[0].mxu0
  %v3235 = vpop.f32.mrb[0].mxu0
  %v3236 = vadd.f32 0.0, %v3235
  %v3237 = vpop.f32.mrb[0].mxu0
  %3238 = vmatprep.mubr.bf16.mxu0 0
  %3239 = vmatmul.mubr.bf16.gmra.mrb[0].mxu0 %v3167
  %v3240 = vpop.f32.mrb[0].mxu0
  %v3241 = vadd.f32 0.0, %v3240
  %v3242 = vpop.f32.mrb[0].mxu0
  %v3243 = vpop.f32.mrb[0].mxu0
  %v3244 = vadd.f32 0.0, %v3243
  %v3245 = vpop.f32.mrb[0].mxu0
  %3246 = vmatprep.mubr.bf16.mxu0 0
  %3247 = vmatmul.mubr.bf16.gmra.mrb[0].mxu0 %v3168
  %v3248 = vpop.f32.mrb[0].mxu0
  %v3249 = vadd.f32 0.0, %v3248
  %v3250 = vpop.f32.mrb[0].mxu0
  %v3251 = vpop.f32.mrb[0].mxu0
  %v3252 = vadd.f32 0.0, %v3251
  %v3253 = vpop.f32.mrb[0].mxu0
  %3254 = vmatprep.mubr.bf16.mxu0 0
  %3255 = vmatmul.mubr.bf16.gmra.mrb[0].mxu0 %v3169
  %v3256 = vpop.f32.mrb[0].mxu0
  %v3257 = vadd.f32 0.0, %v3256
  %v3258 = vpop.f32.mrb[0].mxu0
  %v3259 = vpop.f32.mrb[0].mxu0
  %v3260 = vadd.f32 0.0, %v3259
  %v3261 = vpop.f32.mrb[0].mxu0
  %3262 = vmatprep.mubr.bf16.mxu0 0
  %3263 = vmatmul.mubr.bf16.gmra.mrb[0].mxu0 %v3170
  %v3264 = vpop.f32.mrb[0].mxu0
  %v3265 = vadd.f32 0.0, %v3264
  %v3266 = vpop.f32.mrb[0].mxu0
  %v3267 = vpop.f32.mrb[0].mxu0
  %v3268 = vadd.f32 0.0, %v3267
  %v3269 = vpop.f32.mrb[0].mxu0
  %3270 = vmatprep.mubr.bf16.mxu0 0
  %3271 = vmatmul.mubr.bf16.gmra.mrb[0].mxu0 %v3171
  %v3272 = vpop.f32.mrb[0].mxu0
  %v3273 = vadd.f32 0.0, %v3272
  %v3274 = vpop.f32.mrb[0].mxu0
  %v3275 = vpop.f32.mrb[0].mxu0
  %v3276 = vadd.f32 0.0, %v3275
  %v3277 = vpop.f32.mrb[0].mxu0
  %3278 = vmatprep.mubr.bf16.mxu0 0
  %3279 = vmatmul.mubr.bf16.gmra.mrb[0].mxu0 %v3172
  %v3280 = vpop.f32.mrb[0].mxu0
  %v3281 = vadd.f32 0.0, %v3280
  %v3282 = vpop.f32.mrb[0].mxu0
  %v3283 = vpop.f32.mrb[0].mxu0
  %v3284 = vadd.f32 0.0, %v3283
  %v3285 = vpop.f32.mrb[0].mxu0
  %3286 = vmatprep.mubr.bf16.mxu0 0
  %3287 = vmatmul.mubr.bf16.gmra.mrb[0].mxu0 %v3173
  %v3288 = vpop.f32.mrb[0].mxu0
  %v3289 = vadd.f32 0.0, %v3288
  %v3290 = vpop.f32.mrb[0].mxu0
  %v3291 = vpop.f32.mrb[0].mxu0
  %v3292 = vadd.f32 0.0, %v3291
  %v3293 = vpop.f32.mrb[0].mxu0
  %3294 = vdwg.mxu0
  %3295 = vrot.lane.b32.xlu0 %v2330, 112
  %v3296 = vpop.permute.xlu0 %3295
  %3297 = vrot.lane.b32.xlu0 %v2331, 112
  %v3298 = vpop.permute.xlu0 %3297
  %3299 = vrot.lane.b32.xlu0 %v2332, 112
  %v3300 = vpop.permute.xlu0 %3299
  %3301 = vrot.lane.b32.xlu0 %v2333, 112
  %v3302 = vpop.permute.xlu0 %3301
  %3303 = vrot.lane.b32.xlu0 %v2334, 112
  %v3304 = vpop.permute.xlu0 %3303
  %3305 = vrot.lane.b32.xlu0 %v2335, 112
  %v3306 = vpop.permute.xlu0 %3305
  %3307 = vrot.lane.b32.xlu0 %v2336, 112
  %v3308 = vpop.permute.xlu0 %3307
  %3309 = vrot.lane.b32.xlu0 %v2337, 112
  %v3310 = vpop.permute.xlu0 %3309
  %3311 = vrot.lane.b32.xlu0 %v2330, 80
  %v3312 = vpop.permute.xlu0 %3311
  %3313 = vrot.lane.b32.xlu0 %v2331, 80
  %v3314 = vpop.permute.xlu0 %3313
  %3315 = vrot.lane.b32.xlu0 %v2332, 80
  %v3316 = vpop.permute.xlu0 %3315
  %3317 = vrot.lane.b32.xlu0 %v2333, 80
  %v3318 = vpop.permute.xlu0 %3317
  %3319 = vrot.lane.b32.xlu0 %v2334, 80
  %v3320 = vpop.permute.xlu0 %3319
  %3321 = vrot.lane.b32.xlu0 %v2335, 80
  %v3322 = vpop.permute.xlu0 %3321
  %3323 = vrot.lane.b32.xlu0 %v2336, 80
  %v3324 = vpop.permute.xlu0 %3323
  %3325 = vrot.lane.b32.xlu0 %v2337, 80
  %v3326 = vpop.permute.xlu0 %3325
  %v3328 = vsel %vm2362, %v3296, 0
  %v3331 = vsel %vm2362, %v3298, 0
  %v3334 = vsel %vm2362, %v3300, 0
  %v3337 = vsel %vm2362, %v3302, 0
  %v3340 = vsel %vm2362, %v3304, 0
  %v3343 = vsel %vm2362, %v3306, 0
  %v3346 = vsel %vm2362, %v3308, 0
  %v3349 = vsel %vm2362, %v3310, 0
  %v3352 = vsel %vm2362, %v3312, 0
  %v3355 = vsel %vm2362, %v3314, 0
  %v3358 = vsel %vm2362, %v3316, 0
  %v3361 = vsel %vm2362, %v3318, 0
  %v3364 = vsel %vm2362, %v3320, 0
  %v3367 = vsel %vm2362, %v3322, 0
  %v3370 = vsel %vm2362, %v3324, 0
  %v3373 = vsel %vm2362, %v3326, 0
  %3375 = vmatprep.subr.bf16.mxu0 0
  %3376 = vmatpush1.bf16.xpose.msra.mxu0 %v3352
  %3377 = vmatprep.subr.bf16.mxu0 0
  %3378 = vmatpush1.bf16.xpose.msra.mxu0 %v3355
  %3379 = vmatprep.subr.bf16.mxu0 0
  %3380 = vmatpush1.bf16.xpose.msra.mxu0 %v3358
  %3381 = vmatprep.subr.bf16.mxu0 0
  %3382 = vmatpush1.bf16.xpose.msra.mxu0 %v3361
  %3383 = vmatprep.subr.bf16.mxu0 0
  %3384 = vmatpush1.bf16.xpose.msra.mxu0 %v3364
  %3385 = vmatprep.subr.bf16.mxu0 0
  %3386 = vmatpush1.bf16.xpose.msra.mxu0 %v3367
  %3387 = vmatprep.subr.bf16.mxu0 0
  %3388 = vmatpush1.bf16.xpose.msra.mxu0 %v3370
  %3389 = vmatprep.subr.bf16.mxu0 0
  %3390 = vmatpush1.bf16.xpose.msra.mxu0 %v3373
  %3391 = vmatprep.subr.bf16.mxu0 0
  %3392 = vmatpush1.bf16.xpose.msra.mxu0 0
  %3393 = vmatprep.subr.bf16.mxu0 0
  %3394 = vmatpush1.bf16.xpose.msra.mxu0 0
  %3395 = vmatprep.subr.bf16.mxu0 0
  %3396 = vmatpush1.bf16.xpose.msra.mxu0 0
  %3397 = vmatprep.subr.bf16.mxu0 0
  %3398 = vmatpush1.bf16.xpose.msra.mxu0 0
  %3399 = vmatprep.subr.bf16.mxu0 0
  %3400 = vmatpush1.bf16.xpose.msra.mxu0 0
  %3401 = vmatprep.subr.bf16.mxu0 0
  %3402 = vmatpush1.bf16.xpose.msra.mxu0 0
  %3403 = vmatprep.subr.bf16.mxu0 0
  %3404 = vmatpush1.bf16.xpose.msra.mxu0 0
  %3405 = vmatprep.subr.bf16.mxu0 0
  %3406 = vmatpush1.bf16.xpose.msra.mxu0 0
  %3407 = vmatprep.mubr.bf16.mxu0 0
  %3408 = vmatmul.mubr.bf16.gmra.mrb[0].mxu0 %v3328
  %v3409 = vpop.f32.mrb[0].mxu0
  %v3410 = vadd.f32 0.0, %v3409
  %v3411 = vpop.f32.mrb[0].mxu0
  %v3412 = vpop.f32.mrb[0].mxu0
  %v3413 = vadd.f32 0.0, %v3412
  %v3414 = vpop.f32.mrb[0].mxu0
  %3415 = vmatprep.mubr.bf16.mxu0 0
  %3416 = vmatmul.mubr.bf16.gmra.mrb[0].mxu0 %v3331
  %v3417 = vpop.f32.mrb[0].mxu0
  %v3418 = vadd.f32 0.0, %v3417
  %v3419 = vpop.f32.mrb[0].mxu0
  %v3420 = vpop.f32.mrb[0].mxu0
  %v3421 = vadd.f32 0.0, %v3420
  %v3422 = vpop.f32.mrb[0].mxu0
  %3423 = vmatprep.mubr.bf16.mxu0 0
  %3424 = vmatmul.mubr.bf16.gmra.mrb[0].mxu0 %v3334
  %v3425 = vpop.f32.mrb[0].mxu0
  %v3426 = vadd.f32 0.0, %v3425
  %v3427 = vpop.f32.mrb[0].mxu0
  %v3428 = vpop.f32.mrb[0].mxu0
  %v3429 = vadd.f32 0.0, %v3428
  %v3430 = vpop.f32.mrb[0].mxu0
  %3431 = vmatprep.mubr.bf16.mxu0 0
  %3432 = vmatmul.mubr.bf16.gmra.mrb[0].mxu0 %v3337
  %v3433 = vpop.f32.mrb[0].mxu0
  %v3434 = vadd.f32 0.0, %v3433
  %v3435 = vpop.f32.mrb[0].mxu0
  %v3436 = vpop.f32.mrb[0].mxu0
  %v3437 = vadd.f32 0.0, %v3436
  %v3438 = vpop.f32.mrb[0].mxu0
  %3439 = vmatprep.mubr.bf16.mxu0 0
  %3440 = vmatmul.mubr.bf16.gmra.mrb[0].mxu0 %v3340
  %v3441 = vpop.f32.mrb[0].mxu0
  %v3442 = vadd.f32 0.0, %v3441
  %v3443 = vpop.f32.mrb[0].mxu0
  %v3444 = vpop.f32.mrb[0].mxu0
  %v3445 = vadd.f32 0.0, %v3444
  %v3446 = vpop.f32.mrb[0].mxu0
  %3447 = vmatprep.mubr.bf16.mxu0 0
  %3448 = vmatmul.mubr.bf16.gmra.mrb[0].mxu0 %v3343
  %v3449 = vpop.f32.mrb[0].mxu0
  %v3450 = vadd.f32 0.0, %v3449
  %v3451 = vpop.f32.mrb[0].mxu0
  %v3452 = vpop.f32.mrb[0].mxu0
  %v3453 = vadd.f32 0.0, %v3452
  %v3454 = vpop.f32.mrb[0].mxu0
  %3455 = vmatprep.mubr.bf16.mxu0 0
  %3456 = vmatmul.mubr.bf16.gmra.mrb[0].mxu0 %v3346
  %v3457 = vpop.f32.mrb[0].mxu0
  %v3458 = vadd.f32 0.0, %v3457
  %v3459 = vpop.f32.mrb[0].mxu0
  %v3460 = vpop.f32.mrb[0].mxu0
  %v3461 = vadd.f32 0.0, %v3460
  %v3462 = vpop.f32.mrb[0].mxu0
  %3463 = vmatprep.mubr.bf16.mxu0 0
  %3464 = vmatmul.mubr.bf16.gmra.mrb[0].mxu0 %v3349
  %v3465 = vpop.f32.mrb[0].mxu0
  %v3466 = vadd.f32 0.0, %v3465
  %v3467 = vpop.f32.mrb[0].mxu0
  %v3468 = vpop.f32.mrb[0].mxu0
  %v3469 = vadd.f32 0.0, %v3468
  %v3470 = vpop.f32.mrb[0].mxu0
  %3471 = vdwg.mxu0
  %v3472 = vmul.f32 %v3410, 0.35355338
  %v3473 = vmul.f32 %v3413, 0.35355338
  %v3474 = vmul.f32 %v3418, 0.35355338
  %v3475 = vmul.f32 %v3421, 0.35355338
  %v3476 = vmul.f32 %v3426, 0.35355338
  %v3477 = vmul.f32 %v3429, 0.35355338
  %v3478 = vmul.f32 %v3434, 0.35355338
  %v3479 = vmul.f32 %v3437, 0.35355338
  %v3480 = vmul.f32 %v3442, 0.35355338
  %v3481 = vmul.f32 %v3445, 0.35355338
  %v3482 = vmul.f32 %v3450, 0.35355338
  %v3483 = vmul.f32 %v3453, 0.35355338
  %v3484 = vmul.f32 %v3458, 0.35355338
  %v3485 = vmul.f32 %v3461, 0.35355338
  %v3486 = vmul.f32 %v3466, 0.35355338
  %v3487 = vmul.f32 %v3469, 0.35355338
  %v3488 = vadd.f32 %v3472, %v2116
  %v3489 = vadd.f32 %v3473, %v2117
  %v3490 = vadd.f32 %v3474, %v2118
  %v3491 = vadd.f32 %v3475, %v2119
  %v3492 = vadd.f32 %v3476, %v2120
  %v3493 = vadd.f32 %v3477, %v2121
  %v3494 = vadd.f32 %v3478, %v2122
  %v3495 = vadd.f32 %v3479, %v2123
  %v3496 = vadd.f32 %v3480, %v2124
  %v3497 = vadd.f32 %v3481, %v2125
  %v3498 = vadd.f32 %v3482, %v2126
  %v3499 = vadd.f32 %v3483, %v2127
  %v3500 = vadd.f32 %v3484, %v2128
  %v3501 = vadd.f32 %v3485, %v2129
  %v3502 = vadd.f32 %v3486, %v2130
  %v3503 = vadd.f32 %v3487, %v2131
  %3504 = vmax.xlane.f32.xlu0 %v3488
  %v3505 = vpop.xlane.xlu0 %3504
  %3506 = vmax.xlane.f32.xlu0 %v3489
  %v3507 = vpop.xlane.xlu0 %3506
  %3508 = vmax.xlane.f32.xlu0 %v3490
  %v3509 = vpop.xlane.xlu0 %3508
  %3510 = vmax.xlane.f32.xlu0 %v3491
  %v3511 = vpop.xlane.xlu0 %3510
  %3512 = vmax.xlane.f32.xlu0 %v3492
  %v3513 = vpop.xlane.xlu0 %3512
  %3514 = vmax.xlane.f32.xlu0 %v3493
  %v3515 = vpop.xlane.xlu0 %3514
  %3516 = vmax.xlane.f32.xlu0 %v3494
  %v3517 = vpop.xlane.xlu0 %3516
  %3518 = vmax.xlane.f32.xlu0 %v3495
  %v3519 = vpop.xlane.xlu0 %3518
  %3520 = vmax.xlane.f32.xlu0 %v3496
  %v3521 = vpop.xlane.xlu0 %3520
  %3522 = vmax.xlane.f32.xlu0 %v3497
  %v3523 = vpop.xlane.xlu0 %3522
  %3524 = vmax.xlane.f32.xlu0 %v3498
  %v3525 = vpop.xlane.xlu0 %3524
  %3526 = vmax.xlane.f32.xlu0 %v3499
  %v3527 = vpop.xlane.xlu0 %3526
  %3528 = vmax.xlane.f32.xlu0 %v3500
  %v3529 = vpop.xlane.xlu0 %3528
  %3530 = vmax.xlane.f32.xlu0 %v3501
  %v3531 = vpop.xlane.xlu0 %3530
  %3532 = vmax.xlane.f32.xlu0 %v3502
  %v3533 = vpop.xlane.xlu0 %3532
  %3534 = vmax.xlane.f32.xlu0 %v3503
  %v3535 = vpop.xlane.xlu0 %3534
  %v3536 = vsub.f32 %v3488, %v3505
  %v3537 = vsub.f32 %v3489, %v3507
  %v3538 = vsub.f32 %v3490, %v3509
  %v3539 = vsub.f32 %v3491, %v3511
  %v3540 = vsub.f32 %v3492, %v3513
  %v3541 = vsub.f32 %v3493, %v3515
  %v3542 = vsub.f32 %v3494, %v3517
  %v3543 = vsub.f32 %v3495, %v3519
  %v3544 = vsub.f32 %v3496, %v3521
  %v3545 = vsub.f32 %v3497, %v3523
  %v3546 = vsub.f32 %v3498, %v3525
  %v3547 = vsub.f32 %v3499, %v3527
  %v3548 = vsub.f32 %v3500, %v3529
  %v3549 = vsub.f32 %v3501, %v3531
  %v3550 = vsub.f32 %v3502, %v3533
  %v3551 = vsub.f32 %v3503, %v3535
  %v3552 = vmul.f32 %v3536, 1.442695
  %v3553 = vpow.pop %v3552
  %v3554 = vmul.f32 %v3537, 1.442695
  %v3555 = vpow.pop %v3554
  %v3556 = vmul.f32 %v3538, 1.442695
  %v3557 = vpow.pop %v3556
  %v3558 = vmul.f32 %v3539, 1.442695
  %v3559 = vpow.pop %v3558
  %v3560 = vmul.f32 %v3540, 1.442695
  %v3561 = vpow.pop %v3560
  %v3562 = vmul.f32 %v3541, 1.442695
  %v3563 = vpow.pop %v3562
  %v3564 = vmul.f32 %v3542, 1.442695
  %v3565 = vpow.pop %v3564
  %v3566 = vmul.f32 %v3543, 1.442695
  %v3567 = vpow.pop %v3566
  %v3568 = vmul.f32 %v3544, 1.442695
  %v3569 = vpow.pop %v3568
  %v3570 = vmul.f32 %v3545, 1.442695
  %v3571 = vpow.pop %v3570
  %v3572 = vmul.f32 %v3546, 1.442695
  %v3573 = vpow.pop %v3572
  %v3574 = vmul.f32 %v3547, 1.442695
  %v3575 = vpow.pop %v3574
  %v3576 = vmul.f32 %v3548, 1.442695
  %v3577 = vpow.pop %v3576
  %v3578 = vmul.f32 %v3549, 1.442695
  %v3579 = vpow.pop %v3578
  %v3580 = vmul.f32 %v3550, 1.442695
  %v3581 = vpow.pop %v3580
  %v3582 = vmul.f32 %v3551, 1.442695
  %v3583 = vpow.pop %v3582
  %3584 = vadd.xlane.f32.xlu0 %v3553
  %v3585 = vpop.xlane.xlu0 %3584
  %3586 = vadd.xlane.f32.xlu0 %v3555
  %v3587 = vpop.xlane.xlu0 %3586
  %3588 = vadd.xlane.f32.xlu0 %v3557
  %v3589 = vpop.xlane.xlu0 %3588
  %3590 = vadd.xlane.f32.xlu0 %v3559
  %v3591 = vpop.xlane.xlu0 %3590
  %3592 = vadd.xlane.f32.xlu0 %v3561
  %v3593 = vpop.xlane.xlu0 %3592
  %3594 = vadd.xlane.f32.xlu0 %v3563
  %v3595 = vpop.xlane.xlu0 %3594
  %3596 = vadd.xlane.f32.xlu0 %v3565
  %v3597 = vpop.xlane.xlu0 %3596
  %3598 = vadd.xlane.f32.xlu0 %v3567
  %v3599 = vpop.xlane.xlu0 %3598
  %3600 = vadd.xlane.f32.xlu0 %v3569
  %v3601 = vpop.xlane.xlu0 %3600
  %3602 = vadd.xlane.f32.xlu0 %v3571
  %v3603 = vpop.xlane.xlu0 %3602
  %3604 = vadd.xlane.f32.xlu0 %v3573
  %v3605 = vpop.xlane.xlu0 %3604
  %3606 = vadd.xlane.f32.xlu0 %v3575
  %v3607 = vpop.xlane.xlu0 %3606
  %3608 = vadd.xlane.f32.xlu0 %v3577
  %v3609 = vpop.xlane.xlu0 %3608
  %3610 = vadd.xlane.f32.xlu0 %v3579
  %v3611 = vpop.xlane.xlu0 %3610
  %3612 = vadd.xlane.f32.xlu0 %v3581
  %v3613 = vpop.xlane.xlu0 %3612
  %3614 = vadd.xlane.f32.xlu0 %v3583
  %v3615 = vpop.xlane.xlu0 %3614
  %v3616 = vrcp.pop %v3585
  %v3617 = vrcp.pop %v3587
  %v3618 = vrcp.pop %v3589
  %v3619 = vrcp.pop %v3591
  %v3620 = vrcp.pop %v3593
  %v3621 = vrcp.pop %v3595
  %v3622 = vrcp.pop %v3597
  %v3623 = vrcp.pop %v3599
  %v3624 = vrcp.pop %v3601
  %v3625 = vrcp.pop %v3603
  %v3626 = vrcp.pop %v3605
  %v3627 = vrcp.pop %v3607
  %v3628 = vrcp.pop %v3609
  %v3629 = vrcp.pop %v3611
  %v3630 = vrcp.pop %v3613
  %v3631 = vrcp.pop %v3615
  %v3632 = vmul.f32 %v3553, %v3616
  %v3633 = vmul.f32 %v3555, %v3617
  %v3634 = vmul.f32 %v3557, %v3618
  %v3635 = vmul.f32 %v3559, %v3619
  %v3636 = vmul.f32 %v3561, %v3620
  %v3637 = vmul.f32 %v3563, %v3621
  %v3638 = vmul.f32 %v3565, %v3622
  %v3639 = vmul.f32 %v3567, %v3623
  %v3640 = vmul.f32 %v3569, %v3624
  %v3641 = vmul.f32 %v3571, %v3625
  %v3642 = vmul.f32 %v3573, %v3626
  %v3643 = vmul.f32 %v3575, %v3627
  %v3644 = vmul.f32 %v3577, %v3628
  %v3645 = vmul.f32 %v3579, %v3629
  %v3646 = vmul.f32 %v3581, %v3630
  %v3647 = vmul.f32 %v3583, %v3631
  %v3648 = vpack.c.bf16 %v3633, %v3632
  %v3649 = vpack.c.bf16 %v3635, %v3634
  %v3650 = vpack.c.bf16 %v3637, %v3636
  %v3651 = vpack.c.bf16 %v3639, %v3638
  %v3652 = vpack.c.bf16 %v3641, %v3640
  %v3653 = vpack.c.bf16 %v3643, %v3642
  %v3654 = vpack.c.bf16 %v3645, %v3644
  %v3655 = vpack.c.bf16 %v3647, %v3646
  %3656 = vrot.lane.b32.xlu0 %v2330, 48
  %v3657 = vpop.permute.xlu0 %3656
  %3658 = vrot.lane.b32.xlu0 %v2331, 48
  %v3659 = vpop.permute.xlu0 %3658
  %3660 = vrot.lane.b32.xlu0 %v2332, 48
  %v3661 = vpop.permute.xlu0 %3660
  %3662 = vrot.lane.b32.xlu0 %v2333, 48
  %v3663 = vpop.permute.xlu0 %3662
  %3664 = vrot.lane.b32.xlu0 %v2334, 48
  %v3665 = vpop.permute.xlu0 %3664
  %3666 = vrot.lane.b32.xlu0 %v2335, 48
  %v3667 = vpop.permute.xlu0 %3666
  %3668 = vrot.lane.b32.xlu0 %v2336, 48
  %v3669 = vpop.permute.xlu0 %3668
  %3670 = vrot.lane.b32.xlu0 %v2337, 48
  %v3671 = vpop.permute.xlu0 %3670
  %3680 = vmatprep.subr.bf16.mxu0 0
  %3681 = vmatpush1.bf16.msra.mxu0 %v3657
  %3682 = vmatprep.subr.bf16.mxu0 0
  %3683 = vmatpush1.bf16.msra.mxu0 %v3659
  %3684 = vmatprep.subr.bf16.mxu0 0
  %3685 = vmatpush1.bf16.msra.mxu0 %v3661
  %3686 = vmatprep.subr.bf16.mxu0 0
  %3687 = vmatpush1.bf16.msra.mxu0 %v3663
  %3688 = vmatprep.subr.bf16.mxu0 0
  %3689 = vmatpush1.bf16.msra.mxu0 %v3665
  %3690 = vmatprep.subr.bf16.mxu0 0
  %3691 = vmatpush1.bf16.msra.mxu0 %v3667
  %3692 = vmatprep.subr.bf16.mxu0 0
  %3693 = vmatpush1.bf16.msra.mxu0 %v3669
  %3694 = vmatprep.subr.bf16.mxu0 0
  %3695 = vmatpush1.bf16.msra.mxu0 %v3671
  %3696 = vmatprep.subr.bf16.mxu0 0
  %3697 = vmatpush1.bf16.msra.mxu0 0
  %3698 = vmatprep.subr.bf16.mxu0 0
  %3699 = vmatpush1.bf16.msra.mxu0 0
  %3700 = vmatprep.subr.bf16.mxu0 0
  %3701 = vmatpush1.bf16.msra.mxu0 0
  %3702 = vmatprep.subr.bf16.mxu0 0
  %3703 = vmatpush1.bf16.msra.mxu0 0
  %3704 = vmatprep.subr.bf16.mxu0 0
  %3705 = vmatpush1.bf16.msra.mxu0 0
  %3706 = vmatprep.subr.bf16.mxu0 0
  %3707 = vmatpush1.bf16.msra.mxu0 0
  %3708 = vmatprep.subr.bf16.mxu0 0
  %3709 = vmatpush1.bf16.msra.mxu0 0
  %3710 = vmatprep.subr.bf16.mxu0 0
  %3711 = vmatpush1.bf16.msra.mxu0 0
  %3712 = vmatprep.mubr.bf16.mxu0 0
  %3713 = vmatmul.mubr.bf16.gmra.mrb[0].mxu0 %v3648
  %v3714 = vpop.f32.mrb[0].mxu0
  %v3715 = vadd.f32 0.0, %v3714
  %v3716 = vpop.f32.mrb[0].mxu0
  %v3717 = vpop.f32.mrb[0].mxu0
  %v3718 = vadd.f32 0.0, %v3717
  %v3719 = vpop.f32.mrb[0].mxu0
  %3720 = vmatprep.mubr.bf16.mxu0 0
  %3721 = vmatmul.mubr.bf16.gmra.mrb[0].mxu0 %v3649
  %v3722 = vpop.f32.mrb[0].mxu0
  %v3723 = vadd.f32 0.0, %v3722
  %v3724 = vpop.f32.mrb[0].mxu0
  %v3725 = vpop.f32.mrb[0].mxu0
  %v3726 = vadd.f32 0.0, %v3725
  %v3727 = vpop.f32.mrb[0].mxu0
  %3728 = vmatprep.mubr.bf16.mxu0 0
  %3729 = vmatmul.mubr.bf16.gmra.mrb[0].mxu0 %v3650
  %v3730 = vpop.f32.mrb[0].mxu0
  %v3731 = vadd.f32 0.0, %v3730
  %v3732 = vpop.f32.mrb[0].mxu0
  %v3733 = vpop.f32.mrb[0].mxu0
  %v3734 = vadd.f32 0.0, %v3733
  %v3735 = vpop.f32.mrb[0].mxu0
  %3736 = vmatprep.mubr.bf16.mxu0 0
  %3737 = vmatmul.mubr.bf16.gmra.mrb[0].mxu0 %v3651
  %v3738 = vpop.f32.mrb[0].mxu0
  %v3739 = vadd.f32 0.0, %v3738
  %v3740 = vpop.f32.mrb[0].mxu0
  %v3741 = vpop.f32.mrb[0].mxu0
  %v3742 = vadd.f32 0.0, %v3741
  %v3743 = vpop.f32.mrb[0].mxu0
  %3744 = vmatprep.mubr.bf16.mxu0 0
  %3745 = vmatmul.mubr.bf16.gmra.mrb[0].mxu0 %v3652
  %v3746 = vpop.f32.mrb[0].mxu0
  %v3747 = vadd.f32 0.0, %v3746
  %v3748 = vpop.f32.mrb[0].mxu0
  %v3749 = vpop.f32.mrb[0].mxu0
  %v3750 = vadd.f32 0.0, %v3749
  %v3751 = vpop.f32.mrb[0].mxu0
  %3752 = vmatprep.mubr.bf16.mxu0 0
  %3753 = vmatmul.mubr.bf16.gmra.mrb[0].mxu0 %v3653
  %v3754 = vpop.f32.mrb[0].mxu0
  %v3755 = vadd.f32 0.0, %v3754
  %v3756 = vpop.f32.mrb[0].mxu0
  %v3757 = vpop.f32.mrb[0].mxu0
  %v3758 = vadd.f32 0.0, %v3757
  %v3759 = vpop.f32.mrb[0].mxu0
  %3760 = vmatprep.mubr.bf16.mxu0 0
  %3761 = vmatmul.mubr.bf16.gmra.mrb[0].mxu0 %v3654
  %v3762 = vpop.f32.mrb[0].mxu0
  %v3763 = vadd.f32 0.0, %v3762
  %v3764 = vpop.f32.mrb[0].mxu0
  %v3765 = vpop.f32.mrb[0].mxu0
  %v3766 = vadd.f32 0.0, %v3765
  %v3767 = vpop.f32.mrb[0].mxu0
  %3768 = vmatprep.mubr.bf16.mxu0 0
  %3769 = vmatmul.mubr.bf16.gmra.mrb[0].mxu0 %v3655
  %v3770 = vpop.f32.mrb[0].mxu0
  %v3771 = vadd.f32 0.0, %v3770
  %v3772 = vpop.f32.mrb[0].mxu0
  %v3773 = vpop.f32.mrb[0].mxu0
  %v3774 = vadd.f32 0.0, %v3773
  %v3775 = vpop.f32.mrb[0].mxu0
  %3776 = vdwg.mxu0
  %3777 = vrot.lane.b32.xlu0 %v2330, 104
  %v3778 = vpop.permute.xlu0 %3777
  %3779 = vrot.lane.b32.xlu0 %v2331, 104
  %v3780 = vpop.permute.xlu0 %3779
  %3781 = vrot.lane.b32.xlu0 %v2332, 104
  %v3782 = vpop.permute.xlu0 %3781
  %3783 = vrot.lane.b32.xlu0 %v2333, 104
  %v3784 = vpop.permute.xlu0 %3783
  %3785 = vrot.lane.b32.xlu0 %v2334, 104
  %v3786 = vpop.permute.xlu0 %3785
  %3787 = vrot.lane.b32.xlu0 %v2335, 104
  %v3788 = vpop.permute.xlu0 %3787
  %3789 = vrot.lane.b32.xlu0 %v2336, 104
  %v3790 = vpop.permute.xlu0 %3789
  %3791 = vrot.lane.b32.xlu0 %v2337, 104
  %v3792 = vpop.permute.xlu0 %3791
  %3793 = vrot.lane.b32.xlu0 %v2330, 72
  %v3794 = vpop.permute.xlu0 %3793
  %3795 = vrot.lane.b32.xlu0 %v2331, 72
  %v3796 = vpop.permute.xlu0 %3795
  %3797 = vrot.lane.b32.xlu0 %v2332, 72
  %v3798 = vpop.permute.xlu0 %3797
  %3799 = vrot.lane.b32.xlu0 %v2333, 72
  %v3800 = vpop.permute.xlu0 %3799
  %3801 = vrot.lane.b32.xlu0 %v2334, 72
  %v3802 = vpop.permute.xlu0 %3801
  %3803 = vrot.lane.b32.xlu0 %v2335, 72
  %v3804 = vpop.permute.xlu0 %3803
  %3805 = vrot.lane.b32.xlu0 %v2336, 72
  %v3806 = vpop.permute.xlu0 %3805
  %3807 = vrot.lane.b32.xlu0 %v2337, 72
  %v3808 = vpop.permute.xlu0 %3807
  %v3810 = vsel %vm2362, %v3778, 0
  %v3813 = vsel %vm2362, %v3780, 0
  %v3816 = vsel %vm2362, %v3782, 0
  %v3819 = vsel %vm2362, %v3784, 0
  %v3822 = vsel %vm2362, %v3786, 0
  %v3825 = vsel %vm2362, %v3788, 0
  %v3828 = vsel %vm2362, %v3790, 0
  %v3831 = vsel %vm2362, %v3792, 0
  %v3834 = vsel %vm2362, %v3794, 0
  %v3837 = vsel %vm2362, %v3796, 0
  %v3840 = vsel %vm2362, %v3798, 0
  %v3843 = vsel %vm2362, %v3800, 0
  %v3846 = vsel %vm2362, %v3802, 0
  %v3849 = vsel %vm2362, %v3804, 0
  %v3852 = vsel %vm2362, %v3806, 0
  %v3855 = vsel %vm2362, %v3808, 0
  %3857 = vmatprep.subr.bf16.mxu0 0
  %3858 = vmatpush1.bf16.xpose.msra.mxu0 %v3834
  %3859 = vmatprep.subr.bf16.mxu0 0
  %3860 = vmatpush1.bf16.xpose.msra.mxu0 %v3837
  %3861 = vmatprep.subr.bf16.mxu0 0
  %3862 = vmatpush1.bf16.xpose.msra.mxu0 %v3840
  %3863 = vmatprep.subr.bf16.mxu0 0
  %3864 = vmatpush1.bf16.xpose.msra.mxu0 %v3843
  %3865 = vmatprep.subr.bf16.mxu0 0
  %3866 = vmatpush1.bf16.xpose.msra.mxu0 %v3846
  %3867 = vmatprep.subr.bf16.mxu0 0
  %3868 = vmatpush1.bf16.xpose.msra.mxu0 %v3849
  %3869 = vmatprep.subr.bf16.mxu0 0
  %3870 = vmatpush1.bf16.xpose.msra.mxu0 %v3852
  %3871 = vmatprep.subr.bf16.mxu0 0
  %3872 = vmatpush1.bf16.xpose.msra.mxu0 %v3855
  %3873 = vmatprep.subr.bf16.mxu0 0
  %3874 = vmatpush1.bf16.xpose.msra.mxu0 0
  %3875 = vmatprep.subr.bf16.mxu0 0
  %3876 = vmatpush1.bf16.xpose.msra.mxu0 0
  %3877 = vmatprep.subr.bf16.mxu0 0
  %3878 = vmatpush1.bf16.xpose.msra.mxu0 0
  %3879 = vmatprep.subr.bf16.mxu0 0
  %3880 = vmatpush1.bf16.xpose.msra.mxu0 0
  %3881 = vmatprep.subr.bf16.mxu0 0
  %3882 = vmatpush1.bf16.xpose.msra.mxu0 0
  %3883 = vmatprep.subr.bf16.mxu0 0
  %3884 = vmatpush1.bf16.xpose.msra.mxu0 0
  %3885 = vmatprep.subr.bf16.mxu0 0
  %3886 = vmatpush1.bf16.xpose.msra.mxu0 0
  %3887 = vmatprep.subr.bf16.mxu0 0
  %3888 = vmatpush1.bf16.xpose.msra.mxu0 0
  %3889 = vmatprep.mubr.bf16.mxu0 0
  %3890 = vmatmul.mubr.bf16.gmra.mrb[0].mxu0 %v3810
  %v3891 = vpop.f32.mrb[0].mxu0
  %v3892 = vadd.f32 0.0, %v3891
  %v3893 = vpop.f32.mrb[0].mxu0
  %v3894 = vpop.f32.mrb[0].mxu0
  %v3895 = vadd.f32 0.0, %v3894
  %v3896 = vpop.f32.mrb[0].mxu0
  %3897 = vmatprep.mubr.bf16.mxu0 0
  %3898 = vmatmul.mubr.bf16.gmra.mrb[0].mxu0 %v3813
  %v3899 = vpop.f32.mrb[0].mxu0
  %v3900 = vadd.f32 0.0, %v3899
  %v3901 = vpop.f32.mrb[0].mxu0
  %v3902 = vpop.f32.mrb[0].mxu0
  %v3903 = vadd.f32 0.0, %v3902
  %v3904 = vpop.f32.mrb[0].mxu0
  %3905 = vmatprep.mubr.bf16.mxu0 0
  %3906 = vmatmul.mubr.bf16.gmra.mrb[0].mxu0 %v3816
  %v3907 = vpop.f32.mrb[0].mxu0
  %v3908 = vadd.f32 0.0, %v3907
  %v3909 = vpop.f32.mrb[0].mxu0
  %v3910 = vpop.f32.mrb[0].mxu0
  %v3911 = vadd.f32 0.0, %v3910
  %v3912 = vpop.f32.mrb[0].mxu0
  %3913 = vmatprep.mubr.bf16.mxu0 0
  %3914 = vmatmul.mubr.bf16.gmra.mrb[0].mxu0 %v3819
  %v3915 = vpop.f32.mrb[0].mxu0
  %v3916 = vadd.f32 0.0, %v3915
  %v3917 = vpop.f32.mrb[0].mxu0
  %v3918 = vpop.f32.mrb[0].mxu0
  %v3919 = vadd.f32 0.0, %v3918
  %v3920 = vpop.f32.mrb[0].mxu0
  %3921 = vmatprep.mubr.bf16.mxu0 0
  %3922 = vmatmul.mubr.bf16.gmra.mrb[0].mxu0 %v3822
  %v3923 = vpop.f32.mrb[0].mxu0
  %v3924 = vadd.f32 0.0, %v3923
  %v3925 = vpop.f32.mrb[0].mxu0
  %v3926 = vpop.f32.mrb[0].mxu0
  %v3927 = vadd.f32 0.0, %v3926
  %v3928 = vpop.f32.mrb[0].mxu0
  %3929 = vmatprep.mubr.bf16.mxu0 0
  %3930 = vmatmul.mubr.bf16.gmra.mrb[0].mxu0 %v3825
  %v3931 = vpop.f32.mrb[0].mxu0
  %v3932 = vadd.f32 0.0, %v3931
  %v3933 = vpop.f32.mrb[0].mxu0
  %v3934 = vpop.f32.mrb[0].mxu0
  %v3935 = vadd.f32 0.0, %v3934
  %v3936 = vpop.f32.mrb[0].mxu0
  %3937 = vmatprep.mubr.bf16.mxu0 0
  %3938 = vmatmul.mubr.bf16.gmra.mrb[0].mxu0 %v3828
  %v3939 = vpop.f32.mrb[0].mxu0
  %v3940 = vadd.f32 0.0, %v3939
  %v3941 = vpop.f32.mrb[0].mxu0
  %v3942 = vpop.f32.mrb[0].mxu0
  %v3943 = vadd.f32 0.0, %v3942
  %v3944 = vpop.f32.mrb[0].mxu0
  %3945 = vmatprep.mubr.bf16.mxu0 0
  %3946 = vmatmul.mubr.bf16.gmra.mrb[0].mxu0 %v3831
  %v3947 = vpop.f32.mrb[0].mxu0
  %v3948 = vadd.f32 0.0, %v3947
  %v3949 = vpop.f32.mrb[0].mxu0
  %v3950 = vpop.f32.mrb[0].mxu0
  %v3951 = vadd.f32 0.0, %v3950
  %v3952 = vpop.f32.mrb[0].mxu0
  %3953 = vdwg.mxu0
  %v3954 = vmul.f32 %v3892, 0.35355338
  %v3955 = vmul.f32 %v3895, 0.35355338
  %v3956 = vmul.f32 %v3900, 0.35355338
  %v3957 = vmul.f32 %v3903, 0.35355338
  %v3958 = vmul.f32 %v3908, 0.35355338
  %v3959 = vmul.f32 %v3911, 0.35355338
  %v3960 = vmul.f32 %v3916, 0.35355338
  %v3961 = vmul.f32 %v3919, 0.35355338
  %v3962 = vmul.f32 %v3924, 0.35355338
  %v3963 = vmul.f32 %v3927, 0.35355338
  %v3964 = vmul.f32 %v3932, 0.35355338
  %v3965 = vmul.f32 %v3935, 0.35355338
  %v3966 = vmul.f32 %v3940, 0.35355338
  %v3967 = vmul.f32 %v3943, 0.35355338
  %v3968 = vmul.f32 %v3948, 0.35355338
  %v3969 = vmul.f32 %v3951, 0.35355338
  %v3970 = vadd.f32 %v3954, %v2116
  %v3971 = vadd.f32 %v3955, %v2117
  %v3972 = vadd.f32 %v3956, %v2118
  %v3973 = vadd.f32 %v3957, %v2119
  %v3974 = vadd.f32 %v3958, %v2120
  %v3975 = vadd.f32 %v3959, %v2121
  %v3976 = vadd.f32 %v3960, %v2122
  %v3977 = vadd.f32 %v3961, %v2123
  %v3978 = vadd.f32 %v3962, %v2124
  %v3979 = vadd.f32 %v3963, %v2125
  %v3980 = vadd.f32 %v3964, %v2126
  %v3981 = vadd.f32 %v3965, %v2127
  %v3982 = vadd.f32 %v3966, %v2128
  %v3983 = vadd.f32 %v3967, %v2129
  %v3984 = vadd.f32 %v3968, %v2130
  %v3985 = vadd.f32 %v3969, %v2131
  %3986 = vmax.xlane.f32.xlu0 %v3970
  %v3987 = vpop.xlane.xlu0 %3986
  %3988 = vmax.xlane.f32.xlu0 %v3971
  %v3989 = vpop.xlane.xlu0 %3988
  %3990 = vmax.xlane.f32.xlu0 %v3972
  %v3991 = vpop.xlane.xlu0 %3990
  %3992 = vmax.xlane.f32.xlu0 %v3973
  %v3993 = vpop.xlane.xlu0 %3992
  %3994 = vmax.xlane.f32.xlu0 %v3974
  %v3995 = vpop.xlane.xlu0 %3994
  %3996 = vmax.xlane.f32.xlu0 %v3975
  %v3997 = vpop.xlane.xlu0 %3996
  %3998 = vmax.xlane.f32.xlu0 %v3976
  %v3999 = vpop.xlane.xlu0 %3998
  %4000 = vmax.xlane.f32.xlu0 %v3977
  %v4001 = vpop.xlane.xlu0 %4000
  %4002 = vmax.xlane.f32.xlu0 %v3978
  %v4003 = vpop.xlane.xlu0 %4002
  %4004 = vmax.xlane.f32.xlu0 %v3979
  %v4005 = vpop.xlane.xlu0 %4004
  %4006 = vmax.xlane.f32.xlu0 %v3980
  %v4007 = vpop.xlane.xlu0 %4006
  %4008 = vmax.xlane.f32.xlu0 %v3981
  %v4009 = vpop.xlane.xlu0 %4008
  %4010 = vmax.xlane.f32.xlu0 %v3982
  %v4011 = vpop.xlane.xlu0 %4010
  %4012 = vmax.xlane.f32.xlu0 %v3983
  %v4013 = vpop.xlane.xlu0 %4012
  %4014 = vmax.xlane.f32.xlu0 %v3984
  %v4015 = vpop.xlane.xlu0 %4014
  %4016 = vmax.xlane.f32.xlu0 %v3985
  %v4017 = vpop.xlane.xlu0 %4016
  %v4018 = vsub.f32 %v3970, %v3987
  %v4019 = vsub.f32 %v3971, %v3989
  %v4020 = vsub.f32 %v3972, %v3991
  %v4021 = vsub.f32 %v3973, %v3993
  %v4022 = vsub.f32 %v3974, %v3995
  %v4023 = vsub.f32 %v3975, %v3997
  %v4024 = vsub.f32 %v3976, %v3999
  %v4025 = vsub.f32 %v3977, %v4001
  %v4026 = vsub.f32 %v3978, %v4003
  %v4027 = vsub.f32 %v3979, %v4005
  %v4028 = vsub.f32 %v3980, %v4007
  %v4029 = vsub.f32 %v3981, %v4009
  %v4030 = vsub.f32 %v3982, %v4011
  %v4031 = vsub.f32 %v3983, %v4013
  %v4032 = vsub.f32 %v3984, %v4015
  %v4033 = vsub.f32 %v3985, %v4017
  %v4034 = vmul.f32 %v4018, 1.442695
  %v4035 = vpow.pop %v4034
  %v4036 = vmul.f32 %v4019, 1.442695
  %v4037 = vpow.pop %v4036
  %v4038 = vmul.f32 %v4020, 1.442695
  %v4039 = vpow.pop %v4038
  %v4040 = vmul.f32 %v4021, 1.442695
  %v4041 = vpow.pop %v4040
  %v4042 = vmul.f32 %v4022, 1.442695
  %v4043 = vpow.pop %v4042
  %v4044 = vmul.f32 %v4023, 1.442695
  %v4045 = vpow.pop %v4044
  %v4046 = vmul.f32 %v4024, 1.442695
  %v4047 = vpow.pop %v4046
  %v4048 = vmul.f32 %v4025, 1.442695
  %v4049 = vpow.pop %v4048
  %v4050 = vmul.f32 %v4026, 1.442695
  %v4051 = vpow.pop %v4050
  %v4052 = vmul.f32 %v4027, 1.442695
  %v4053 = vpow.pop %v4052
  %v4054 = vmul.f32 %v4028, 1.442695
  %v4055 = vpow.pop %v4054
  %v4056 = vmul.f32 %v4029, 1.442695
  %v4057 = vpow.pop %v4056
  %v4058 = vmul.f32 %v4030, 1.442695
  %v4059 = vpow.pop %v4058
  %v4060 = vmul.f32 %v4031, 1.442695
  %v4061 = vpow.pop %v4060
  %v4062 = vmul.f32 %v4032, 1.442695
  %v4063 = vpow.pop %v4062
  %v4064 = vmul.f32 %v4033, 1.442695
  %v4065 = vpow.pop %v4064
  %4066 = vadd.xlane.f32.xlu0 %v4035
  %v4067 = vpop.xlane.xlu0 %4066
  %4068 = vadd.xlane.f32.xlu0 %v4037
  %v4069 = vpop.xlane.xlu0 %4068
  %4070 = vadd.xlane.f32.xlu0 %v4039
  %v4071 = vpop.xlane.xlu0 %4070
  %4072 = vadd.xlane.f32.xlu0 %v4041
  %v4073 = vpop.xlane.xlu0 %4072
  %4074 = vadd.xlane.f32.xlu0 %v4043
  %v4075 = vpop.xlane.xlu0 %4074
  %4076 = vadd.xlane.f32.xlu0 %v4045
  %v4077 = vpop.xlane.xlu0 %4076
  %4078 = vadd.xlane.f32.xlu0 %v4047
  %v4079 = vpop.xlane.xlu0 %4078
  %4080 = vadd.xlane.f32.xlu0 %v4049
  %v4081 = vpop.xlane.xlu0 %4080
  %4082 = vadd.xlane.f32.xlu0 %v4051
  %v4083 = vpop.xlane.xlu0 %4082
  %4084 = vadd.xlane.f32.xlu0 %v4053
  %v4085 = vpop.xlane.xlu0 %4084
  %4086 = vadd.xlane.f32.xlu0 %v4055
  %v4087 = vpop.xlane.xlu0 %4086
  %4088 = vadd.xlane.f32.xlu0 %v4057
  %v4089 = vpop.xlane.xlu0 %4088
  %4090 = vadd.xlane.f32.xlu0 %v4059
  %v4091 = vpop.xlane.xlu0 %4090
  %4092 = vadd.xlane.f32.xlu0 %v4061
  %v4093 = vpop.xlane.xlu0 %4092
  %4094 = vadd.xlane.f32.xlu0 %v4063
  %v4095 = vpop.xlane.xlu0 %4094
  %4096 = vadd.xlane.f32.xlu0 %v4065
  %v4097 = vpop.xlane.xlu0 %4096
  %v4098 = vrcp.pop %v4067
  %v4099 = vrcp.pop %v4069
  %v4100 = vrcp.pop %v4071
  %v4101 = vrcp.pop %v4073
  %v4102 = vrcp.pop %v4075
  %v4103 = vrcp.pop %v4077
  %v4104 = vrcp.pop %v4079
  %v4105 = vrcp.pop %v4081
  %v4106 = vrcp.pop %v4083
  %v4107 = vrcp.pop %v4085
  %v4108 = vrcp.pop %v4087
  %v4109 = vrcp.pop %v4089
  %v4110 = vrcp.pop %v4091
  %v4111 = vrcp.pop %v4093
  %v4112 = vrcp.pop %v4095
  %v4113 = vrcp.pop %v4097
  %v4114 = vmul.f32 %v4035, %v4098
  %v4115 = vmul.f32 %v4037, %v4099
  %v4116 = vmul.f32 %v4039, %v4100
  %v4117 = vmul.f32 %v4041, %v4101
  %v4118 = vmul.f32 %v4043, %v4102
  %v4119 = vmul.f32 %v4045, %v4103
  %v4120 = vmul.f32 %v4047, %v4104
  %v4121 = vmul.f32 %v4049, %v4105
  %v4122 = vmul.f32 %v4051, %v4106
  %v4123 = vmul.f32 %v4053, %v4107
  %v4124 = vmul.f32 %v4055, %v4108
  %v4125 = vmul.f32 %v4057, %v4109
  %v4126 = vmul.f32 %v4059, %v4110
  %v4127 = vmul.f32 %v4061, %v4111
  %v4128 = vmul.f32 %v4063, %v4112
  %v4129 = vmul.f32 %v4065, %v4113
  %v4130 = vpack.c.bf16 %v4115, %v4114
  %v4131 = vpack.c.bf16 %v4117, %v4116
  %v4132 = vpack.c.bf16 %v4119, %v4118
  %v4133 = vpack.c.bf16 %v4121, %v4120
  %v4134 = vpack.c.bf16 %v4123, %v4122
  %v4135 = vpack.c.bf16 %v4125, %v4124
  %v4136 = vpack.c.bf16 %v4127, %v4126
  %v4137 = vpack.c.bf16 %v4129, %v4128
  %4138 = vrot.lane.b32.xlu0 %v2330, 40
  %v4139 = vpop.permute.xlu0 %4138
  %4140 = vrot.lane.b32.xlu0 %v2331, 40
  %v4141 = vpop.permute.xlu0 %4140
  %4142 = vrot.lane.b32.xlu0 %v2332, 40
  %v4143 = vpop.permute.xlu0 %4142
  %4144 = vrot.lane.b32.xlu0 %v2333, 40
  %v4145 = vpop.permute.xlu0 %4144
  %4146 = vrot.lane.b32.xlu0 %v2334, 40
  %v4147 = vpop.permute.xlu0 %4146
  %4148 = vrot.lane.b32.xlu0 %v2335, 40
  %v4149 = vpop.permute.xlu0 %4148
  %4150 = vrot.lane.b32.xlu0 %v2336, 40
  %v4151 = vpop.permute.xlu0 %4150
  %4152 = vrot.lane.b32.xlu0 %v2337, 40
  %v4153 = vpop.permute.xlu0 %4152
  %4162 = vmatprep.subr.bf16.mxu0 0
  %4163 = vmatpush1.bf16.msra.mxu0 %v4139
  %4164 = vmatprep.subr.bf16.mxu0 0
  %4165 = vmatpush1.bf16.msra.mxu0 %v4141
  %4166 = vmatprep.subr.bf16.mxu0 0
  %4167 = vmatpush1.bf16.msra.mxu0 %v4143
  %4168 = vmatprep.subr.bf16.mxu0 0
  %4169 = vmatpush1.bf16.msra.mxu0 %v4145
  %4170 = vmatprep.subr.bf16.mxu0 0
  %4171 = vmatpush1.bf16.msra.mxu0 %v4147
  %4172 = vmatprep.subr.bf16.mxu0 0
  %4173 = vmatpush1.bf16.msra.mxu0 %v4149
  %4174 = vmatprep.subr.bf16.mxu0 0
  %4175 = vmatpush1.bf16.msra.mxu0 %v4151
  %4176 = vmatprep.subr.bf16.mxu0 0
  %4177 = vmatpush1.bf16.msra.mxu0 %v4153
  %4178 = vmatprep.subr.bf16.mxu0 0
  %4179 = vmatpush1.bf16.msra.mxu0 0
  %4180 = vmatprep.subr.bf16.mxu0 0
  %4181 = vmatpush1.bf16.msra.mxu0 0
  %4182 = vmatprep.subr.bf16.mxu0 0
  %4183 = vmatpush1.bf16.msra.mxu0 0
  %4184 = vmatprep.subr.bf16.mxu0 0
  %4185 = vmatpush1.bf16.msra.mxu0 0
  %4186 = vmatprep.subr.bf16.mxu0 0
  %4187 = vmatpush1.bf16.msra.mxu0 0
  %4188 = vmatprep.subr.bf16.mxu0 0
  %4189 = vmatpush1.bf16.msra.mxu0 0
  %4190 = vmatprep.subr.bf16.mxu0 0
  %4191 = vmatpush1.bf16.msra.mxu0 0
  %4192 = vmatprep.subr.bf16.mxu0 0
  %4193 = vmatpush1.bf16.msra.mxu0 0
  %4194 = vmatprep.mubr.bf16.mxu0 0
  %4195 = vmatmul.mubr.bf16.gmra.mrb[0].mxu0 %v4130
  %v4196 = vpop.f32.mrb[0].mxu0
  %v4197 = vadd.f32 0.0, %v4196
  %v4198 = vpop.f32.mrb[0].mxu0
  %v4199 = vpop.f32.mrb[0].mxu0
  %v4200 = vadd.f32 0.0, %v4199
  %v4201 = vpop.f32.mrb[0].mxu0
  %4202 = vmatprep.mubr.bf16.mxu0 0
  %4203 = vmatmul.mubr.bf16.gmra.mrb[0].mxu0 %v4131
  %v4204 = vpop.f32.mrb[0].mxu0
  %v4205 = vadd.f32 0.0, %v4204
  %v4206 = vpop.f32.mrb[0].mxu0
  %v4207 = vpop.f32.mrb[0].mxu0
  %v4208 = vadd.f32 0.0, %v4207
  %v4209 = vpop.f32.mrb[0].mxu0
  %4210 = vmatprep.mubr.bf16.mxu0 0
  %4211 = vmatmul.mubr.bf16.gmra.mrb[0].mxu0 %v4132
  %v4212 = vpop.f32.mrb[0].mxu0
  %v4213 = vadd.f32 0.0, %v4212
  %v4214 = vpop.f32.mrb[0].mxu0
  %v4215 = vpop.f32.mrb[0].mxu0
  %v4216 = vadd.f32 0.0, %v4215
  %v4217 = vpop.f32.mrb[0].mxu0
  %4218 = vmatprep.mubr.bf16.mxu0 0
  %4219 = vmatmul.mubr.bf16.gmra.mrb[0].mxu0 %v4133
  %v4220 = vpop.f32.mrb[0].mxu0
  %v4221 = vadd.f32 0.0, %v4220
  %v4222 = vpop.f32.mrb[0].mxu0
  %v4223 = vpop.f32.mrb[0].mxu0
  %v4224 = vadd.f32 0.0, %v4223
  %v4225 = vpop.f32.mrb[0].mxu0
  %4226 = vmatprep.mubr.bf16.mxu0 0
  %4227 = vmatmul.mubr.bf16.gmra.mrb[0].mxu0 %v4134
  %v4228 = vpop.f32.mrb[0].mxu0
  %v4229 = vadd.f32 0.0, %v4228
  %v4230 = vpop.f32.mrb[0].mxu0
  %v4231 = vpop.f32.mrb[0].mxu0
  %v4232 = vadd.f32 0.0, %v4231
  %v4233 = vpop.f32.mrb[0].mxu0
  %4234 = vmatprep.mubr.bf16.mxu0 0
  %4235 = vmatmul.mubr.bf16.gmra.mrb[0].mxu0 %v4135
  %v4236 = vpop.f32.mrb[0].mxu0
  %v4237 = vadd.f32 0.0, %v4236
  %v4238 = vpop.f32.mrb[0].mxu0
  %v4239 = vpop.f32.mrb[0].mxu0
  %v4240 = vadd.f32 0.0, %v4239
  %v4241 = vpop.f32.mrb[0].mxu0
  %4242 = vmatprep.mubr.bf16.mxu0 0
  %4243 = vmatmul.mubr.bf16.gmra.mrb[0].mxu0 %v4136
  %v4244 = vpop.f32.mrb[0].mxu0
  %v4245 = vadd.f32 0.0, %v4244
  %v4246 = vpop.f32.mrb[0].mxu0
  %v4247 = vpop.f32.mrb[0].mxu0
  %v4248 = vadd.f32 0.0, %v4247
  %v4249 = vpop.f32.mrb[0].mxu0
  %4250 = vmatprep.mubr.bf16.mxu0 0
  %4251 = vmatmul.mubr.bf16.gmra.mrb[0].mxu0 %v4137
  %v4252 = vpop.f32.mrb[0].mxu0
  %v4253 = vadd.f32 0.0, %v4252
  %v4254 = vpop.f32.mrb[0].mxu0
  %v4255 = vpop.f32.mrb[0].mxu0
  %v4256 = vadd.f32 0.0, %v4255
  %v4257 = vpop.f32.mrb[0].mxu0
  %4258 = vdwg.mxu0
  %4275 = vrot.lane.b32.xlu0 %v3233, 8
  %v4276 = vpop.permute.xlu0 %4275
  %4277 = vrot.lane.b32.xlu0 %v3236, 8
  %v4278 = vpop.permute.xlu0 %4277
  %4279 = vrot.lane.b32.xlu0 %v3241, 8
  %v4280 = vpop.permute.xlu0 %4279
  %4281 = vrot.lane.b32.xlu0 %v3244, 8
  %v4282 = vpop.permute.xlu0 %4281
  %4283 = vrot.lane.b32.xlu0 %v3249, 8
  %v4284 = vpop.permute.xlu0 %4283
  %4285 = vrot.lane.b32.xlu0 %v3252, 8
  %v4286 = vpop.permute.xlu0 %4285
  %4287 = vrot.lane.b32.xlu0 %v3257, 8
  %v4288 = vpop.permute.xlu0 %4287
  %4289 = vrot.lane.b32.xlu0 %v3260, 8
  %v4290 = vpop.permute.xlu0 %4289
  %4291 = vrot.lane.b32.xlu0 %v3265, 8
  %v4292 = vpop.permute.xlu0 %4291
  %4293 = vrot.lane.b32.xlu0 %v3268, 8
  %v4294 = vpop.permute.xlu0 %4293
  %4295 = vrot.lane.b32.xlu0 %v3273, 8
  %v4296 = vpop.permute.xlu0 %4295
  %4297 = vrot.lane.b32.xlu0 %v3276, 8
  %v4298 = vpop.permute.xlu0 %4297
  %4299 = vrot.lane.b32.xlu0 %v3281, 8
  %v4300 = vpop.permute.xlu0 %4299
  %4301 = vrot.lane.b32.xlu0 %v3284, 8
  %v4302 = vpop.permute.xlu0 %4301
  %4303 = vrot.lane.b32.xlu0 %v3289, 8
  %v4304 = vpop.permute.xlu0 %4303
  %4305 = vrot.lane.b32.xlu0 %v3292, 8
  %v4306 = vpop.permute.xlu0 %4305
  %4339 = vrot.lane.b32.xlu0 %v3715, 16
  %v4340 = vpop.permute.xlu0 %4339
  %4341 = vrot.lane.b32.xlu0 %v3718, 16
  %v4342 = vpop.permute.xlu0 %4341
  %4343 = vrot.lane.b32.xlu0 %v3723, 16
  %v4344 = vpop.permute.xlu0 %4343
  %4345 = vrot.lane.b32.xlu0 %v3726, 16
  %v4346 = vpop.permute.xlu0 %4345
  %4347 = vrot.lane.b32.xlu0 %v3731, 16
  %v4348 = vpop.permute.xlu0 %4347
  %4349 = vrot.lane.b32.xlu0 %v3734, 16
  %v4350 = vpop.permute.xlu0 %4349
  %4351 = vrot.lane.b32.xlu0 %v3739, 16
  %v4352 = vpop.permute.xlu0 %4351
  %4353 = vrot.lane.b32.xlu0 %v3742, 16
  %v4354 = vpop.permute.xlu0 %4353
  %4355 = vrot.lane.b32.xlu0 %v3747, 16
  %v4356 = vpop.permute.xlu0 %4355
  %4357 = vrot.lane.b32.xlu0 %v3750, 16
  %v4358 = vpop.permute.xlu0 %4357
  %4359 = vrot.lane.b32.xlu0 %v3755, 16
  %v4360 = vpop.permute.xlu0 %4359
  %4361 = vrot.lane.b32.xlu0 %v3758, 16
  %v4362 = vpop.permute.xlu0 %4361
  %4363 = vrot.lane.b32.xlu0 %v3763, 16
  %v4364 = vpop.permute.xlu0 %4363
  %4365 = vrot.lane.b32.xlu0 %v3766, 16
  %v4366 = vpop.permute.xlu0 %4365
  %4367 = vrot.lane.b32.xlu0 %v3771, 16
  %v4368 = vpop.permute.xlu0 %4367
  %4369 = vrot.lane.b32.xlu0 %v3774, 16
  %v4370 = vpop.permute.xlu0 %4369
  %4403 = vrot.lane.b32.xlu0 %v4197, 24
  %v4404 = vpop.permute.xlu0 %4403
  %4405 = vrot.lane.b32.xlu0 %v4200, 24
  %v4406 = vpop.permute.xlu0 %4405
  %4407 = vrot.lane.b32.xlu0 %v4205, 24
  %v4408 = vpop.permute.xlu0 %4407
  %4409 = vrot.lane.b32.xlu0 %v4208, 24
  %v4410 = vpop.permute.xlu0 %4409
  %4411 = vrot.lane.b32.xlu0 %v4213, 24
  %v4412 = vpop.permute.xlu0 %4411
  %4413 = vrot.lane.b32.xlu0 %v4216, 24
  %v4414 = vpop.permute.xlu0 %4413
  %4415 = vrot.lane.b32.xlu0 %v4221, 24
  %v4416 = vpop.permute.xlu0 %4415
  %4417 = vrot.lane.b32.xlu0 %v4224, 24
  %v4418 = vpop.permute.xlu0 %4417
  %4419 = vrot.lane.b32.xlu0 %v4229, 24
  %v4420 = vpop.permute.xlu0 %4419
  %4421 = vrot.lane.b32.xlu0 %v4232, 24
  %v4422 = vpop.permute.xlu0 %4421
  %4423 = vrot.lane.b32.xlu0 %v4237, 24
  %v4424 = vpop.permute.xlu0 %4423
  %4425 = vrot.lane.b32.xlu0 %v4240, 24
  %v4426 = vpop.permute.xlu0 %4425
  %4427 = vrot.lane.b32.xlu0 %v4245, 24
  %v4428 = vpop.permute.xlu0 %4427
  %4429 = vrot.lane.b32.xlu0 %v4248, 24
  %v4430 = vpop.permute.xlu0 %4429
  %4431 = vrot.lane.b32.xlu0 %v4253, 24
  %v4432 = vpop.permute.xlu0 %4431
  %4433 = vrot.lane.b32.xlu0 %v4256, 24
  %v4434 = vpop.permute.xlu0 %4433
  %v4451 = vsel %vm2362, %v2751, %v4276
  %v4452 = vsel %vm2362, %v2754, %v4278
  %v4453 = vsel %vm2362, %v2759, %v4280
  %v4454 = vsel %vm2362, %v2762, %v4282
  %v4455 = vsel %vm2362, %v2767, %v4284
  %v4456 = vsel %vm2362, %v2770, %v4286
  %v4457 = vsel %vm2362, %v2775, %v4288
  %v4458 = vsel %vm2362, %v2778, %v4290
  %v4459 = vsel %vm2362, %v2783, %v4292
  %v4460 = vsel %vm2362, %v2786, %v4294
  %v4461 = vsel %vm2362, %v2791, %v4296
  %v4462 = vsel %vm2362, %v2794, %v4298
  %v4463 = vsel %vm2362, %v2799, %v4300
  %v4464 = vsel %vm2362, %v2802, %v4302
  %v4465 = vsel %vm2362, %v2807, %v4304
  %v4466 = vsel %vm2362, %v2810, %v4306
  %vm4467 = vcmask 130048
  %v4468 = vsel %vm4467, %v4451, %v4340
  %v4469 = vsel %vm4467, %v4452, %v4342
  %v4470 = vsel %vm4467, %v4453, %v4344
  %v4471 = vsel %vm4467, %v4454, %v4346
  %v4472 = vsel %vm4467, %v4455, %v4348
  %v4473 = vsel %vm4467, %v4456, %v4350
  %v4474 = vsel %vm4467, %v4457, %v4352
  %v4475 = vsel %vm4467, %v4458, %v4354
  %v4476 = vsel %vm4467, %v4459, %v4356
  %v4477 = vsel %vm4467, %v4460, %v4358
  %v4478 = vsel %vm4467, %v4461, %v4360
  %v4479 = vsel %vm4467, %v4462, %v4362
  %v4480 = vsel %vm4467, %v4463, %v4364
  %v4481 = vsel %vm4467, %v4464, %v4366
  %v4482 = vsel %vm4467, %v4465, %v4368
  %v4483 = vsel %vm4467, %v4466, %v4370
  %vm4484 = vcmask 195584
  %v4485 = vsel %vm4484, %v4468, %v4404
  %v4486 = vsel %vm4484, %v4469, %v4406
  %v4487 = vsel %vm4484, %v4470, %v4408
  %v4488 = vsel %vm4484, %v4471, %v4410
  %v4489 = vsel %vm4484, %v4472, %v4412
  %v4490 = vsel %vm4484, %v4473, %v4414
  %v4491 = vsel %vm4484, %v4474, %v4416
  %v4492 = vsel %vm4484, %v4475, %v4418
  %v4493 = vsel %vm4484, %v4476, %v4420
  %v4494 = vsel %vm4484, %v4477, %v4422
  %v4495 = vsel %vm4484, %v4478, %v4424
  %v4496 = vsel %vm4484, %v4479, %v4426
  %v4497 = vsel %vm4484, %v4480, %v4428
  %v4498 = vsel %vm4484, %v4481, %v4430
  %v4499 = vsel %vm4484, %v4482, %v4432
  %v4500 = vsel %vm4484, %v4483, %v4434
  %v4501 = vld [vmem:[%s2 + $0x20] sm:$0xf]
  %v4502 = vld [vmem:[%s2 + $0x24] sm:$0xf]
  %v4503 = vld [vmem:[%s2 + $0x28] sm:$0xf]
  %v4504 = vld [vmem:[%s2 + $0x2c] sm:$0xf]
  %v4505 = vpack.c.bf16 %v4486, %v4485
  %v4506 = vpack.c.bf16 %v4488, %v4487
  %v4507 = vpack.c.bf16 %v4490, %v4489
  %v4508 = vpack.c.bf16 %v4492, %v4491
  %v4509 = vpack.c.bf16 %v4494, %v4493
  %v4510 = vpack.c.bf16 %v4496, %v4495
  %v4511 = vpack.c.bf16 %v4498, %v4497
  %v4512 = vpack.c.bf16 %v4500, %v4499
  %v4513 = vld [vmem:[%s3 + $0xf] sm:$0x1]
  %v4514 = vlaneseq
  %v4515 = vshrl.u32 %v4514, 7
  %v4516 = vsub.s32 0, %v4515
  %v4517 = vrot.slane %v4513, %v4516
  %v4522 = vunpack.c.l.b16 %v4501
  %v4523 = vunpack.c.l.b16 %v4502
  %v4524 = vunpack.c.l.b16 %v4503
  %v4525 = vunpack.c.l.b16 %v4504
  %v4526 = vpack.c.b16 %v4523, %v4522
  %v4527 = vpack.c.b16 %v4525, %v4524
  %v4531 = vsel %vm1641, %v4505, 0
  %v4534 = vsel %vm1641, %v4506, 0
  %v4537 = vsel %vm1641, %v4507, 0
  %v4540 = vsel %vm1641, %v4508, 0
  %v4543 = vsel %vm1641, %v4509, 0
  %v4546 = vsel %vm1641, %v4510, 0
  %v4549 = vsel %vm1641, %v4511, 0
  %v4552 = vsel %vm1641, %v4512, 0
  %4554 = vmatprep.subr.bf16.mxu0 0
  %4555 = vmatpush1.bf16.msra.mxu0 %v4526
  %4556 = vmatprep.subr.bf16.mxu0 0
  %4557 = vmatpush1.bf16.msra.mxu0 %v4527
  %4558 = vmatprep.subr.bf16.mxu0 0
  %4559 = vmatpush1.bf16.msra.mxu0 0
  %4560 = vmatprep.subr.bf16.mxu0 0
  %4561 = vmatpush1.bf16.msra.mxu0 0
  %4562 = vmatprep.subr.bf16.mxu0 0
  %4563 = vmatpush1.bf16.msra.mxu0 0
  %4564 = vmatprep.subr.bf16.mxu0 0
  %4565 = vmatpush1.bf16.msra.mxu0 0
  %4566 = vmatprep.subr.bf16.mxu0 0
  %4567 = vmatpush1.bf16.msra.mxu0 0
  %4568 = vmatprep.subr.bf16.mxu0 0
  %4569 = vmatpush1.bf16.msra.mxu0 0
  %4570 = vmatprep.subr.bf16.mxu0 0
  %4571 = vmatpush1.bf16.msra.mxu0 0
  %4572 = vmatprep.subr.bf16.mxu0 0
  %4573 = vmatpush1.bf16.msra.mxu0 0
  %4574 = vmatprep.subr.bf16.mxu0 0
  %4575 = vmatpush1.bf16.msra.mxu0 0
  %4576 = vmatprep.subr.bf16.mxu0 0
  %4577 = vmatpush1.bf16.msra.mxu0 0
  %4578 = vmatprep.subr.bf16.mxu0 0
  %4579 = vmatpush1.bf16.msra.mxu0 0
  %4580 = vmatprep.subr.bf16.mxu0 0
  %4581 = vmatpush1.bf16.msra.mxu0 0
  %4582 = vmatprep.subr.bf16.mxu0 0
  %4583 = vmatpush1.bf16.msra.mxu0 0
  %4584 = vmatprep.subr.bf16.mxu0 0
  %4585 = vmatpush1.bf16.msra.mxu0 0
  %4586 = vmatprep.mubr.bf16.mxu0 0
  %4587 = vmatmul.mubr.bf16.gmra.mrb[0].mxu0 %v4531
  %v4588 = vpop.f32.mrb[0].mxu0
  %v4589 = vadd.f32 %v4517, %v4588
  %v4590 = vpop.f32.mrb[0].mxu0
  %v4591 = vpop.f32.mrb[0].mxu0
  %v4592 = vadd.f32 %v4517, %v4591
  %v4593 = vpop.f32.mrb[0].mxu0
  %4594 = vmatprep.mubr.bf16.mxu0 0
  %4595 = vmatmul.mubr.bf16.gmra.mrb[0].mxu0 %v4534
  %v4596 = vpop.f32.mrb[0].mxu0
  %v4597 = vadd.f32 %v4517, %v4596
  %v4598 = vpop.f32.mrb[0].mxu0
  %v4599 = vpop.f32.mrb[0].mxu0
  %v4600 = vadd.f32 %v4517, %v4599
  %v4601 = vpop.f32.mrb[0].mxu0
  %4602 = vmatprep.mubr.bf16.mxu0 0
  %4603 = vmatmul.mubr.bf16.gmra.mrb[0].mxu0 %v4537
  %v4604 = vpop.f32.mrb[0].mxu0
  %v4605 = vadd.f32 %v4517, %v4604
  %v4606 = vpop.f32.mrb[0].mxu0
  %v4607 = vpop.f32.mrb[0].mxu0
  %v4608 = vadd.f32 %v4517, %v4607
  %v4609 = vpop.f32.mrb[0].mxu0
  %4610 = vmatprep.mubr.bf16.mxu0 0
  %4611 = vmatmul.mubr.bf16.gmra.mrb[0].mxu0 %v4540
  %v4612 = vpop.f32.mrb[0].mxu0
  %v4613 = vadd.f32 %v4517, %v4612
  %v4614 = vpop.f32.mrb[0].mxu0
  %v4615 = vpop.f32.mrb[0].mxu0
  %v4616 = vadd.f32 %v4517, %v4615
  %v4617 = vpop.f32.mrb[0].mxu0
  %4618 = vmatprep.mubr.bf16.mxu0 0
  %4619 = vmatmul.mubr.bf16.gmra.mrb[0].mxu0 %v4543
  %v4620 = vpop.f32.mrb[0].mxu0
  %v4621 = vadd.f32 %v4517, %v4620
  %v4622 = vpop.f32.mrb[0].mxu0
  %v4623 = vpop.f32.mrb[0].mxu0
  %v4624 = vadd.f32 %v4517, %v4623
  %v4625 = vpop.f32.mrb[0].mxu0
  %4626 = vmatprep.mubr.bf16.mxu0 0
  %4627 = vmatmul.mubr.bf16.gmra.mrb[0].mxu0 %v4546
  %v4628 = vpop.f32.mrb[0].mxu0
  %v4629 = vadd.f32 %v4517, %v4628
  %v4630 = vpop.f32.mrb[0].mxu0
  %v4631 = vpop.f32.mrb[0].mxu0
  %v4632 = vadd.f32 %v4517, %v4631
  %v4633 = vpop.f32.mrb[0].mxu0
  %4634 = vmatprep.mubr.bf16.mxu0 0
  %4635 = vmatmul.mubr.bf16.gmra.mrb[0].mxu0 %v4549
  %v4636 = vpop.f32.mrb[0].mxu0
  %v4637 = vadd.f32 %v4517, %v4636
  %v4638 = vpop.f32.mrb[0].mxu0
  %v4639 = vpop.f32.mrb[0].mxu0
  %v4640 = vadd.f32 %v4517, %v4639
  %v4641 = vpop.f32.mrb[0].mxu0
  %4642 = vmatprep.mubr.bf16.mxu0 0
  %4643 = vmatmul.mubr.bf16.gmra.mrb[0].mxu0 %v4552
  %v4644 = vpop.f32.mrb[0].mxu0
  %v4645 = vadd.f32 %v4517, %v4644
  %v4646 = vpop.f32.mrb[0].mxu0
  %v4647 = vpop.f32.mrb[0].mxu0
  %v4648 = vadd.f32 %v4517, %v4647
  %v4649 = vpop.f32.mrb[0].mxu0
  %4650 = vdwg.mxu0
  %v4651 = vadd.f32 %v1998, %v4589
  %v4652 = vadd.f32 %v1999, %v4592
  %v4653 = vadd.f32 %v2000, %v4597
  %v4654 = vadd.f32 %v2001, %v4600
  %v4655 = vadd.f32 %v2002, %v4605
  %v4656 = vadd.f32 %v2003, %v4608
  %v4657 = vadd.f32 %v2004, %v4613
  %v4658 = vadd.f32 %v2005, %v4616
  %v4659 = vadd.f32 %v2006, %v4621
  %v4660 = vadd.f32 %v2007, %v4624
  %v4661 = vadd.f32 %v2008, %v4629
  %v4662 = vadd.f32 %v2009, %v4632
  %v4663 = vadd.f32 %v2010, %v4637
  %v4664 = vadd.f32 %v2011, %v4640
  %v4665 = vadd.f32 %v2012, %v4645
  %v4666 = vadd.f32 %v2013, %v4648
  %v4667 = vld [vmem:[%s3 + $0x10] sm:$0x1]
  %v4668 = vld [vmem:[%s3 + $0x11] sm:$0x1]
  %v4669 = vsel %vm1641, %v4651, 0.0
  %4670 = vadd.xlane.f32.xlu0 %v4669
  %v4671 = vpop.xlane.xlu0 %4670
  %v4672 = vsel %vm1641, %v4652, 0.0
  %4673 = vadd.xlane.f32.xlu0 %v4672
  %v4674 = vpop.xlane.xlu0 %4673
  %v4675 = vsel %vm1641, %v4653, 0.0
  %4676 = vadd.xlane.f32.xlu0 %v4675
  %v4677 = vpop.xlane.xlu0 %4676
  %v4678 = vsel %vm1641, %v4654, 0.0
  %4679 = vadd.xlane.f32.xlu0 %v4678
  %v4680 = vpop.xlane.xlu0 %4679
  %v4681 = vsel %vm1641, %v4655, 0.0
  %4682 = vadd.xlane.f32.xlu0 %v4681
  %v4683 = vpop.xlane.xlu0 %4682
  %v4684 = vsel %vm1641, %v4656, 0.0
  %4685 = vadd.xlane.f32.xlu0 %v4684
  %v4686 = vpop.xlane.xlu0 %4685
  %v4687 = vsel %vm1641, %v4657, 0.0
  %4688 = vadd.xlane.f32.xlu0 %v4687
  %v4689 = vpop.xlane.xlu0 %4688
  %v4690 = vsel %vm1641, %v4658, 0.0
  %4691 = vadd.xlane.f32.xlu0 %v4690
  %v4692 = vpop.xlane.xlu0 %4691
  %v4693 = vsel %vm1641, %v4659, 0.0
  %4694 = vadd.xlane.f32.xlu0 %v4693
  %v4695 = vpop.xlane.xlu0 %4694
  %v4696 = vsel %vm1641, %v4660, 0.0
  %4697 = vadd.xlane.f32.xlu0 %v4696
  %v4698 = vpop.xlane.xlu0 %4697
  %v4699 = vsel %vm1641, %v4661, 0.0
  %4700 = vadd.xlane.f32.xlu0 %v4699
  %v4701 = vpop.xlane.xlu0 %4700
  %v4702 = vsel %vm1641, %v4662, 0.0
  %4703 = vadd.xlane.f32.xlu0 %v4702
  %v4704 = vpop.xlane.xlu0 %4703
  %v4705 = vsel %vm1641, %v4663, 0.0
  %4706 = vadd.xlane.f32.xlu0 %v4705
  %v4707 = vpop.xlane.xlu0 %4706
  %v4708 = vsel %vm1641, %v4664, 0.0
  %4709 = vadd.xlane.f32.xlu0 %v4708
  %v4710 = vpop.xlane.xlu0 %4709
  %v4711 = vsel %vm1641, %v4665, 0.0
  %4712 = vadd.xlane.f32.xlu0 %v4711
  %v4713 = vpop.xlane.xlu0 %4712
  %v4714 = vsel %vm1641, %v4666, 0.0
  %4715 = vadd.xlane.f32.xlu0 %v4714
  %v4716 = vpop.xlane.xlu0 %4715
  %v4717 = vmul.f32 %v4671, %v1813
  %v4718 = vmul.f32 %v4674, %v1813
  %v4719 = vmul.f32 %v4677, %v1813
  %v4720 = vmul.f32 %v4680, %v1813
  %v4721 = vmul.f32 %v4683, %v1813
  %v4722 = vmul.f32 %v4686, %v1813
  %v4723 = vmul.f32 %v4689, %v1813
  %v4724 = vmul.f32 %v4692, %v1813
  %v4725 = vmul.f32 %v4695, %v1813
  %v4726 = vmul.f32 %v4698, %v1813
  %v4727 = vmul.f32 %v4701, %v1813
  %v4728 = vmul.f32 %v4704, %v1813
  %v4729 = vmul.f32 %v4707, %v1813
  %v4730 = vmul.f32 %v4710, %v1813
  %v4731 = vmul.f32 %v4713, %v1813
  %v4732 = vmul.f32 %v4716, %v1813
  %v4733 = vsub.f32 %v4651, %v4717
  %v4734 = vsub.f32 %v4652, %v4718
  %v4735 = vsub.f32 %v4653, %v4719
  %v4736 = vsub.f32 %v4654, %v4720
  %v4737 = vsub.f32 %v4655, %v4721
  %v4738 = vsub.f32 %v4656, %v4722
  %v4739 = vsub.f32 %v4657, %v4723
  %v4740 = vsub.f32 %v4658, %v4724
  %v4741 = vsub.f32 %v4659, %v4725
  %v4742 = vsub.f32 %v4660, %v4726
  %v4743 = vsub.f32 %v4661, %v4727
  %v4744 = vsub.f32 %v4662, %v4728
  %v4745 = vsub.f32 %v4663, %v4729
  %v4746 = vsub.f32 %v4664, %v4730
  %v4747 = vsub.f32 %v4665, %v4731
  %v4748 = vsub.f32 %v4666, %v4732
  %v4749 = vmul.f32 %v4733, %v4733
  %v4750 = vmul.f32 %v4734, %v4734
  %v4751 = vmul.f32 %v4735, %v4735
  %v4752 = vmul.f32 %v4736, %v4736
  %v4753 = vmul.f32 %v4737, %v4737
  %v4754 = vmul.f32 %v4738, %v4738
  %v4755 = vmul.f32 %v4739, %v4739
  %v4756 = vmul.f32 %v4740, %v4740
  %v4757 = vmul.f32 %v4741, %v4741
  %v4758 = vmul.f32 %v4742, %v4742
  %v4759 = vmul.f32 %v4743, %v4743
  %v4760 = vmul.f32 %v4744, %v4744
  %v4761 = vmul.f32 %v4745, %v4745
  %v4762 = vmul.f32 %v4746, %v4746
  %v4763 = vmul.f32 %v4747, %v4747
  %v4764 = vmul.f32 %v4748, %v4748
  %v4765 = vsel %vm1641, %v4749, 0.0
  %4766 = vadd.xlane.f32.xlu0 %v4765
  %v4767 = vpop.xlane.xlu0 %4766
  %v4768 = vsel %vm1641, %v4750, 0.0
  %4769 = vadd.xlane.f32.xlu0 %v4768
  %v4770 = vpop.xlane.xlu0 %4769
  %v4771 = vsel %vm1641, %v4751, 0.0
  %4772 = vadd.xlane.f32.xlu0 %v4771
  %v4773 = vpop.xlane.xlu0 %4772
  %v4774 = vsel %vm1641, %v4752, 0.0
  %4775 = vadd.xlane.f32.xlu0 %v4774
  %v4776 = vpop.xlane.xlu0 %4775
  %v4777 = vsel %vm1641, %v4753, 0.0
  %4778 = vadd.xlane.f32.xlu0 %v4777
  %v4779 = vpop.xlane.xlu0 %4778
  %v4780 = vsel %vm1641, %v4754, 0.0
  %4781 = vadd.xlane.f32.xlu0 %v4780
  %v4782 = vpop.xlane.xlu0 %4781
  %v4783 = vsel %vm1641, %v4755, 0.0
  %4784 = vadd.xlane.f32.xlu0 %v4783
  %v4785 = vpop.xlane.xlu0 %4784
  %v4786 = vsel %vm1641, %v4756, 0.0
  %4787 = vadd.xlane.f32.xlu0 %v4786
  %v4788 = vpop.xlane.xlu0 %4787
  %v4789 = vsel %vm1641, %v4757, 0.0
  %4790 = vadd.xlane.f32.xlu0 %v4789
  %v4791 = vpop.xlane.xlu0 %4790
  %v4792 = vsel %vm1641, %v4758, 0.0
  %4793 = vadd.xlane.f32.xlu0 %v4792
  %v4794 = vpop.xlane.xlu0 %4793
  %v4795 = vsel %vm1641, %v4759, 0.0
  %4796 = vadd.xlane.f32.xlu0 %v4795
  %v4797 = vpop.xlane.xlu0 %4796
  %v4798 = vsel %vm1641, %v4760, 0.0
  %4799 = vadd.xlane.f32.xlu0 %v4798
  %v4800 = vpop.xlane.xlu0 %4799
  %v4801 = vsel %vm1641, %v4761, 0.0
  %4802 = vadd.xlane.f32.xlu0 %v4801
  %v4803 = vpop.xlane.xlu0 %4802
  %v4804 = vsel %vm1641, %v4762, 0.0
  %4805 = vadd.xlane.f32.xlu0 %v4804
  %v4806 = vpop.xlane.xlu0 %4805
  %v4807 = vsel %vm1641, %v4763, 0.0
  %4808 = vadd.xlane.f32.xlu0 %v4807
  %v4809 = vpop.xlane.xlu0 %4808
  %v4810 = vsel %vm1641, %v4764, 0.0
  %4811 = vadd.xlane.f32.xlu0 %v4810
  %v4812 = vpop.xlane.xlu0 %4811
  %v4813 = vmul.f32 %v4767, %v1813
  %v4814 = vmul.f32 %v4770, %v1813
  %v4815 = vmul.f32 %v4773, %v1813
  %v4816 = vmul.f32 %v4776, %v1813
  %v4817 = vmul.f32 %v4779, %v1813
  %v4818 = vmul.f32 %v4782, %v1813
  %v4819 = vmul.f32 %v4785, %v1813
  %v4820 = vmul.f32 %v4788, %v1813
  %v4821 = vmul.f32 %v4791, %v1813
  %v4822 = vmul.f32 %v4794, %v1813
  %v4823 = vmul.f32 %v4797, %v1813
  %v4824 = vmul.f32 %v4800, %v1813
  %v4825 = vmul.f32 %v4803, %v1813
  %v4826 = vmul.f32 %v4806, %v1813
  %v4827 = vmul.f32 %v4809, %v1813
  %v4828 = vmul.f32 %v4812, %v1813
  %v4829 = vadd.f32 %v4813, 1e-05
  %v4830 = vadd.f32 %v4814, 1e-05
  %v4831 = vadd.f32 %v4815, 1e-05
  %v4832 = vadd.f32 %v4816, 1e-05
  %v4833 = vadd.f32 %v4817, 1e-05
  %v4834 = vadd.f32 %v4818, 1e-05
  %v4835 = vadd.f32 %v4819, 1e-05
  %v4836 = vadd.f32 %v4820, 1e-05
  %v4837 = vadd.f32 %v4821, 1e-05
  %v4838 = vadd.f32 %v4822, 1e-05
  %v4839 = vadd.f32 %v4823, 1e-05
  %v4840 = vadd.f32 %v4824, 1e-05
  %v4841 = vadd.f32 %v4825, 1e-05
  %v4842 = vadd.f32 %v4826, 1e-05
  %v4843 = vadd.f32 %v4827, 1e-05
  %v4844 = vadd.f32 %v4828, 1e-05
  %v4845 = vrsqrt.pop %v4829
  %v4846 = vrsqrt.pop %v4830
  %v4847 = vrsqrt.pop %v4831
  %v4848 = vrsqrt.pop %v4832
  %v4849 = vrsqrt.pop %v4833
  %v4850 = vrsqrt.pop %v4834
  %v4851 = vrsqrt.pop %v4835
  %v4852 = vrsqrt.pop %v4836
  %v4853 = vrsqrt.pop %v4837
  %v4854 = vrsqrt.pop %v4838
  %v4855 = vrsqrt.pop %v4839
  %v4856 = vrsqrt.pop %v4840
  %v4857 = vrsqrt.pop %v4841
  %v4858 = vrsqrt.pop %v4842
  %v4859 = vrsqrt.pop %v4843
  %v4860 = vrsqrt.pop %v4844
  %v4861 = vmul.f32 %v4733, %v4845
  %v4862 = vmul.f32 %v4734, %v4846
  %v4863 = vmul.f32 %v4735, %v4847
  %v4864 = vmul.f32 %v4736, %v4848
  %v4865 = vmul.f32 %v4737, %v4849
  %v4866 = vmul.f32 %v4738, %v4850
  %v4867 = vmul.f32 %v4739, %v4851
  %v4868 = vmul.f32 %v4740, %v4852
  %v4869 = vmul.f32 %v4741, %v4853
  %v4870 = vmul.f32 %v4742, %v4854
  %v4871 = vmul.f32 %v4743, %v4855
  %v4872 = vmul.f32 %v4744, %v4856
  %v4873 = vmul.f32 %v4745, %v4857
  %v4874 = vmul.f32 %v4746, %v4858
  %v4875 = vmul.f32 %v4747, %v4859
  %v4876 = vmul.f32 %v4748, %v4860
  %v4877 = vlaneseq
  %v4878 = vshrl.u32 %v4877, 7
  %v4879 = vsub.s32 0, %v4878
  %v4880 = vrot.slane %v4667, %v4879
  %v4881 = vmul.f32 %v4861, %v4880
  %v4882 = vmul.f32 %v4862, %v4880
  %v4883 = vmul.f32 %v4863, %v4880
  %v4884 = vmul.f32 %v4864, %v4880
  %v4885 = vmul.f32 %v4865, %v4880
  %v4886 = vmul.f32 %v4866, %v4880
  %v4887 = vmul.f32 %v4867, %v4880
  %v4888 = vmul.f32 %v4868, %v4880
  %v4889 = vmul.f32 %v4869, %v4880
  %v4890 = vmul.f32 %v4870, %v4880
  %v4891 = vmul.f32 %v4871, %v4880
  %v4892 = vmul.f32 %v4872, %v4880
  %v4893 = vmul.f32 %v4873, %v4880
  %v4894 = vmul.f32 %v4874, %v4880
  %v4895 = vmul.f32 %v4875, %v4880
  %v4896 = vmul.f32 %v4876, %v4880
  %v4897 = vlaneseq
  %v4898 = vshrl.u32 %v4897, 7
  %v4899 = vsub.s32 0, %v4898
  %v4900 = vrot.slane %v4668, %v4899
  %v4901 = vadd.f32 %v4881, %v4900
  %v4902 = vadd.f32 %v4882, %v4900
  %v4903 = vadd.f32 %v4883, %v4900
  %v4904 = vadd.f32 %v4884, %v4900
  %v4905 = vadd.f32 %v4885, %v4900
  %v4906 = vadd.f32 %v4886, %v4900
  %v4907 = vadd.f32 %v4887, %v4900
  %v4908 = vadd.f32 %v4888, %v4900
  %v4909 = vadd.f32 %v4889, %v4900
  %v4910 = vadd.f32 %v4890, %v4900
  %v4911 = vadd.f32 %v4891, %v4900
  %v4912 = vadd.f32 %v4892, %v4900
  %v4913 = vadd.f32 %v4893, %v4900
  %v4914 = vadd.f32 %v4894, %v4900
  %v4915 = vadd.f32 %v4895, %v4900
  %v4916 = vadd.f32 %v4896, %v4900
  %v4917 = vld [vmem:[%s2 + $0x30] sm:$0xf]
  %v4918 = vld [vmem:[%s2 + $0x34] sm:$0xf]
  %v4919 = vld [vmem:[%s2 + $0x38] sm:$0xf]
  %v4920 = vld [vmem:[%s2 + $0x3c] sm:$0xf]
  %v4921 = vpack.c.bf16 %v4902, %v4901
  %v4922 = vpack.c.bf16 %v4904, %v4903
  %v4923 = vpack.c.bf16 %v4906, %v4905
  %v4924 = vpack.c.bf16 %v4908, %v4907
  %v4925 = vpack.c.bf16 %v4910, %v4909
  %v4926 = vpack.c.bf16 %v4912, %v4911
  %v4927 = vpack.c.bf16 %v4914, %v4913
  %v4928 = vpack.c.bf16 %v4916, %v4915
  %v4929 = vld [vmem:[%s3 + $0x12] sm:$0x1]
  %v4930 = vlaneseq
  %v4931 = vshrl.u32 %v4930, 7
  %v4932 = vsub.s32 0, %v4931
  %v4933 = vrot.slane %v4929, %v4932
  %v4938 = vunpack.c.l.b16 %v4917
  %v4939 = vunpack.c.l.b16 %v4918
  %v4940 = vunpack.c.l.b16 %v4919
  %v4941 = vunpack.c.l.b16 %v4920
  %v4942 = vpack.c.b16 %v4939, %v4938
  %v4943 = vpack.c.b16 %v4941, %v4940
  %v4947 = vsel %vm1641, %v4921, 0
  %v4950 = vsel %vm1641, %v4922, 0
  %v4953 = vsel %vm1641, %v4923, 0
  %v4956 = vsel %vm1641, %v4924, 0
  %v4959 = vsel %vm1641, %v4925, 0
  %v4962 = vsel %vm1641, %v4926, 0
  %v4965 = vsel %vm1641, %v4927, 0
  %v4968 = vsel %vm1641, %v4928, 0
  %4970 = vmatprep.subr.bf16.mxu0 0
  %4971 = vmatpush1.bf16.msra.mxu0 %v4942
  %4972 = vmatprep.subr.bf16.mxu0 0
  %4973 = vmatpush1.bf16.msra.mxu0 %v4943
  %4974 = vmatprep.subr.bf16.mxu0 0
  %4975 = vmatpush1.bf16.msra.mxu0 0
  %4976 = vmatprep.subr.bf16.mxu0 0
  %4977 = vmatpush1.bf16.msra.mxu0 0
  %4978 = vmatprep.subr.bf16.mxu0 0
  %4979 = vmatpush1.bf16.msra.mxu0 0
  %4980 = vmatprep.subr.bf16.mxu0 0
  %4981 = vmatpush1.bf16.msra.mxu0 0
  %4982 = vmatprep.subr.bf16.mxu0 0
  %4983 = vmatpush1.bf16.msra.mxu0 0
  %4984 = vmatprep.subr.bf16.mxu0 0
  %4985 = vmatpush1.bf16.msra.mxu0 0
  %4986 = vmatprep.subr.bf16.mxu0 0
  %4987 = vmatpush1.bf16.msra.mxu0 0
  %4988 = vmatprep.subr.bf16.mxu0 0
  %4989 = vmatpush1.bf16.msra.mxu0 0
  %4990 = vmatprep.subr.bf16.mxu0 0
  %4991 = vmatpush1.bf16.msra.mxu0 0
  %4992 = vmatprep.subr.bf16.mxu0 0
  %4993 = vmatpush1.bf16.msra.mxu0 0
  %4994 = vmatprep.subr.bf16.mxu0 0
  %4995 = vmatpush1.bf16.msra.mxu0 0
  %4996 = vmatprep.subr.bf16.mxu0 0
  %4997 = vmatpush1.bf16.msra.mxu0 0
  %4998 = vmatprep.subr.bf16.mxu0 0
  %4999 = vmatpush1.bf16.msra.mxu0 0
  %5000 = vmatprep.subr.bf16.mxu0 0
  %5001 = vmatpush1.bf16.msra.mxu0 0
  %5002 = vmatprep.mubr.bf16.mxu0 0
  %5003 = vmatmul.mubr.bf16.gmra.mrb[0].mxu0 %v4947
  %v5004 = vpop.f32.mrb[0].mxu0
  %v5005 = vadd.f32 %v4933, %v5004
  %v5006 = vpop.f32.mrb[0].mxu0
  %v5007 = vpop.f32.mrb[0].mxu0
  %v5008 = vadd.f32 %v4933, %v5007
  %v5009 = vpop.f32.mrb[0].mxu0
  %5010 = vmatprep.mubr.bf16.mxu0 0
  %5011 = vmatmul.mubr.bf16.gmra.mrb[0].mxu0 %v4950
  %v5012 = vpop.f32.mrb[0].mxu0
  %v5013 = vadd.f32 %v4933, %v5012
  %v5014 = vpop.f32.mrb[0].mxu0
  %v5015 = vpop.f32.mrb[0].mxu0
  %v5016 = vadd.f32 %v4933, %v5015
  %v5017 = vpop.f32.mrb[0].mxu0
  %5018 = vmatprep.mubr.bf16.mxu0 0
  %5019 = vmatmul.mubr.bf16.gmra.mrb[0].mxu0 %v4953
  %v5020 = vpop.f32.mrb[0].mxu0
  %v5021 = vadd.f32 %v4933, %v5020
  %v5022 = vpop.f32.mrb[0].mxu0
  %v5023 = vpop.f32.mrb[0].mxu0
  %v5024 = vadd.f32 %v4933, %v5023
  %v5025 = vpop.f32.mrb[0].mxu0
  %5026 = vmatprep.mubr.bf16.mxu0 0
  %5027 = vmatmul.mubr.bf16.gmra.mrb[0].mxu0 %v4956
  %v5028 = vpop.f32.mrb[0].mxu0
  %v5029 = vadd.f32 %v4933, %v5028
  %v5030 = vpop.f32.mrb[0].mxu0
  %v5031 = vpop.f32.mrb[0].mxu0
  %v5032 = vadd.f32 %v4933, %v5031
  %v5033 = vpop.f32.mrb[0].mxu0
  %5034 = vmatprep.mubr.bf16.mxu0 0
  %5035 = vmatmul.mubr.bf16.gmra.mrb[0].mxu0 %v4959
  %v5036 = vpop.f32.mrb[0].mxu0
  %v5037 = vadd.f32 %v4933, %v5036
  %v5038 = vpop.f32.mrb[0].mxu0
  %v5039 = vpop.f32.mrb[0].mxu0
  %v5040 = vadd.f32 %v4933, %v5039
  %v5041 = vpop.f32.mrb[0].mxu0
  %5042 = vmatprep.mubr.bf16.mxu0 0
  %5043 = vmatmul.mubr.bf16.gmra.mrb[0].mxu0 %v4962
  %v5044 = vpop.f32.mrb[0].mxu0
  %v5045 = vadd.f32 %v4933, %v5044
  %v5046 = vpop.f32.mrb[0].mxu0
  %v5047 = vpop.f32.mrb[0].mxu0
  %v5048 = vadd.f32 %v4933, %v5047
  %v5049 = vpop.f32.mrb[0].mxu0
  %5050 = vmatprep.mubr.bf16.mxu0 0
  %5051 = vmatmul.mubr.bf16.gmra.mrb[0].mxu0 %v4965
  %v5052 = vpop.f32.mrb[0].mxu0
  %v5053 = vadd.f32 %v4933, %v5052
  %v5054 = vpop.f32.mrb[0].mxu0
  %v5055 = vpop.f32.mrb[0].mxu0
  %v5056 = vadd.f32 %v4933, %v5055
  %v5057 = vpop.f32.mrb[0].mxu0
  %5058 = vmatprep.mubr.bf16.mxu0 0
  %5059 = vmatmul.mubr.bf16.gmra.mrb[0].mxu0 %v4968
  %v5060 = vpop.f32.mrb[0].mxu0
  %v5061 = vadd.f32 %v4933, %v5060
  %v5062 = vpop.f32.mrb[0].mxu0
  %v5063 = vpop.f32.mrb[0].mxu0
  %v5064 = vadd.f32 %v4933, %v5063
  %v5065 = vpop.f32.mrb[0].mxu0
  %5066 = vdwg.mxu0
  %v5067 = vmul.f32 %v5005, %v5005
  %v5068 = vmul.f32 %v5008, %v5008
  %v5069 = vmul.f32 %v5013, %v5013
  %v5070 = vmul.f32 %v5016, %v5016
  %v5071 = vmul.f32 %v5021, %v5021
  %v5072 = vmul.f32 %v5024, %v5024
  %v5073 = vmul.f32 %v5029, %v5029
  %v5074 = vmul.f32 %v5032, %v5032
  %v5075 = vmul.f32 %v5037, %v5037
  %v5076 = vmul.f32 %v5040, %v5040
  %v5077 = vmul.f32 %v5045, %v5045
  %v5078 = vmul.f32 %v5048, %v5048
  %v5079 = vmul.f32 %v5053, %v5053
  %v5080 = vmul.f32 %v5056, %v5056
  %v5081 = vmul.f32 %v5061, %v5061
  %v5082 = vmul.f32 %v5064, %v5064
  %v5083 = vmul.f32 %v5005, %v5067
  %v5084 = vmul.f32 %v5008, %v5068
  %v5085 = vmul.f32 %v5013, %v5069
  %v5086 = vmul.f32 %v5016, %v5070
  %v5087 = vmul.f32 %v5021, %v5071
  %v5088 = vmul.f32 %v5024, %v5072
  %v5089 = vmul.f32 %v5029, %v5073
  %v5090 = vmul.f32 %v5032, %v5074
  %v5091 = vmul.f32 %v5037, %v5075
  %v5092 = vmul.f32 %v5040, %v5076
  %v5093 = vmul.f32 %v5045, %v5077
  %v5094 = vmul.f32 %v5048, %v5078
  %v5095 = vmul.f32 %v5053, %v5079
  %v5096 = vmul.f32 %v5056, %v5080
  %v5097 = vmul.f32 %v5061, %v5081
  %v5098 = vmul.f32 %v5064, %v5082
  %v5099 = vmul.f32 %v5083, 0.044715
  %v5100 = vmul.f32 %v5084, 0.044715
  %v5101 = vmul.f32 %v5085, 0.044715
  %v5102 = vmul.f32 %v5086, 0.044715
  %v5103 = vmul.f32 %v5087, 0.044715
  %v5104 = vmul.f32 %v5088, 0.044715
  %v5105 = vmul.f32 %v5089, 0.044715
  %v5106 = vmul.f32 %v5090, 0.044715
  %v5107 = vmul.f32 %v5091, 0.044715
  %v5108 = vmul.f32 %v5092, 0.044715
  %v5109 = vmul.f32 %v5093, 0.044715
  %v5110 = vmul.f32 %v5094, 0.044715
  %v5111 = vmul.f32 %v5095, 0.044715
  %v5112 = vmul.f32 %v5096, 0.044715
  %v5113 = vmul.f32 %v5097, 0.044715
  %v5114 = vmul.f32 %v5098, 0.044715
  %v5115 = vadd.f32 %v5005, %v5099
  %v5116 = vadd.f32 %v5008, %v5100
  %v5117 = vadd.f32 %v5013, %v5101
  %v5118 = vadd.f32 %v5016, %v5102
  %v5119 = vadd.f32 %v5021, %v5103
  %v5120 = vadd.f32 %v5024, %v5104
  %v5121 = vadd.f32 %v5029, %v5105
  %v5122 = vadd.f32 %v5032, %v5106
  %v5123 = vadd.f32 %v5037, %v5107
  %v5124 = vadd.f32 %v5040, %v5108
  %v5125 = vadd.f32 %v5045, %v5109
  %v5126 = vadd.f32 %v5048, %v5110
  %v5127 = vadd.f32 %v5053, %v5111
  %v5128 = vadd.f32 %v5056, %v5112
  %v5129 = vadd.f32 %v5061, %v5113
  %v5130 = vadd.f32 %v5064, %v5114
  %v5131 = vmul.f32 %v5115, 0.7978846
  %v5132 = vmul.f32 %v5116, 0.7978846
  %v5133 = vmul.f32 %v5117, 0.7978846
  %v5134 = vmul.f32 %v5118, 0.7978846
  %v5135 = vmul.f32 %v5119, 0.7978846
  %v5136 = vmul.f32 %v5120, 0.7978846
  %v5137 = vmul.f32 %v5121, 0.7978846
  %v5138 = vmul.f32 %v5122, 0.7978846
  %v5139 = vmul.f32 %v5123, 0.7978846
  %v5140 = vmul.f32 %v5124, 0.7978846
  %v5141 = vmul.f32 %v5125, 0.7978846
  %v5142 = vmul.f32 %v5126, 0.7978846
  %v5143 = vmul.f32 %v5127, 0.7978846
  %v5144 = vmul.f32 %v5128, 0.7978846
  %v5145 = vmul.f32 %v5129, 0.7978846
  %v5146 = vmul.f32 %v5130, 0.7978846
  %v5147 = vtanh.pop %v5131
  %v5148 = vtanh.pop %v5132
  %v5149 = vtanh.pop %v5133
  %v5150 = vtanh.pop %v5134
  %v5151 = vtanh.pop %v5135
  %v5152 = vtanh.pop %v5136
  %v5153 = vtanh.pop %v5137
  %v5154 = vtanh.pop %v5138
  %v5155 = vtanh.pop %v5139
  %v5156 = vtanh.pop %v5140
  %v5157 = vtanh.pop %v5141
  %v5158 = vtanh.pop %v5142
  %v5159 = vtanh.pop %v5143
  %v5160 = vtanh.pop %v5144
  %v5161 = vtanh.pop %v5145
  %v5162 = vtanh.pop %v5146
  %v5163 = vadd.f32 %v5147, 1.0
  %v5164 = vadd.f32 %v5148, 1.0
  %v5165 = vadd.f32 %v5149, 1.0
  %v5166 = vadd.f32 %v5150, 1.0
  %v5167 = vadd.f32 %v5151, 1.0
  %v5168 = vadd.f32 %v5152, 1.0
  %v5169 = vadd.f32 %v5153, 1.0
  %v5170 = vadd.f32 %v5154, 1.0
  %v5171 = vadd.f32 %v5155, 1.0
  %v5172 = vadd.f32 %v5156, 1.0
  %v5173 = vadd.f32 %v5157, 1.0
  %v5174 = vadd.f32 %v5158, 1.0
  %v5175 = vadd.f32 %v5159, 1.0
  %v5176 = vadd.f32 %v5160, 1.0
  %v5177 = vadd.f32 %v5161, 1.0
  %v5178 = vadd.f32 %v5162, 1.0
  %v5179 = vmul.f32 %v5163, 0.5
  %v5180 = vmul.f32 %v5164, 0.5
  %v5181 = vmul.f32 %v5165, 0.5
  %v5182 = vmul.f32 %v5166, 0.5
  %v5183 = vmul.f32 %v5167, 0.5
  %v5184 = vmul.f32 %v5168, 0.5
  %v5185 = vmul.f32 %v5169, 0.5
  %v5186 = vmul.f32 %v5170, 0.5
  %v5187 = vmul.f32 %v5171, 0.5
  %v5188 = vmul.f32 %v5172, 0.5
  %v5189 = vmul.f32 %v5173, 0.5
  %v5190 = vmul.f32 %v5174, 0.5
  %v5191 = vmul.f32 %v5175, 0.5
  %v5192 = vmul.f32 %v5176, 0.5
  %v5193 = vmul.f32 %v5177, 0.5
  %v5194 = vmul.f32 %v5178, 0.5
  %v5195 = vmul.f32 %v5005, %v5179
  %v5196 = vmul.f32 %v5008, %v5180
  %v5197 = vmul.f32 %v5013, %v5181
  %v5198 = vmul.f32 %v5016, %v5182
  %v5199 = vmul.f32 %v5021, %v5183
  %v5200 = vmul.f32 %v5024, %v5184
  %v5201 = vmul.f32 %v5029, %v5185
  %v5202 = vmul.f32 %v5032, %v5186
  %v5203 = vmul.f32 %v5037, %v5187
  %v5204 = vmul.f32 %v5040, %v5188
  %v5205 = vmul.f32 %v5045, %v5189
  %v5206 = vmul.f32 %v5048, %v5190
  %v5207 = vmul.f32 %v5053, %v5191
  %v5208 = vmul.f32 %v5056, %v5192
  %v5209 = vmul.f32 %v5061, %v5193
  %v5210 = vmul.f32 %v5064, %v5194
  %v5211 = vld [vmem:[%s2 + $0x40] sm:$0xf]
  %v5212 = vld [vmem:[%s2 + $0x44] sm:$0xf]
  %v5213 = vld [vmem:[%s2 + $0x48] sm:$0xf]
  %v5214 = vld [vmem:[%s2 + $0x4c] sm:$0xf]
  %v5215 = vld [vmem:[%s2 + $0x50] sm:$0xf]
  %v5216 = vld [vmem:[%s2 + $0x54] sm:$0xf]
  %v5217 = vld [vmem:[%s2 + $0x58] sm:$0xf]
  %v5218 = vld [vmem:[%s2 + $0x5c] sm:$0xf]
  %v5219 = vld [vmem:[%s2 + $0x60] sm:$0xf]
  %v5220 = vld [vmem:[%s2 + $0x64] sm:$0xf]
  %v5221 = vld [vmem:[%s2 + $0x68] sm:$0xf]
  %v5222 = vld [vmem:[%s2 + $0x6c] sm:$0xf]
  %v5223 = vld [vmem:[%s2 + $0x70] sm:$0xf]
  %v5224 = vld [vmem:[%s2 + $0x74] sm:$0xf]
  %v5225 = vld [vmem:[%s2 + $0x78] sm:$0xf]
  %v5226 = vld [vmem:[%s2 + $0x7c] sm:$0xf]
  %v5227 = vpack.c.bf16 %v5196, %v5195
  %v5228 = vpack.c.bf16 %v5198, %v5197
  %v5229 = vpack.c.bf16 %v5200, %v5199
  %v5230 = vpack.c.bf16 %v5202, %v5201
  %v5231 = vpack.c.bf16 %v5204, %v5203
  %v5232 = vpack.c.bf16 %v5206, %v5205
  %v5233 = vpack.c.bf16 %v5208, %v5207
  %v5234 = vpack.c.bf16 %v5210, %v5209
  %v5251 = vunpack.c.l.b16 %v5211
  %v5252 = vunpack.c.l.b16 %v5212
  %v5253 = vunpack.c.l.b16 %v5213
  %v5254 = vunpack.c.l.b16 %v5214
  %v5255 = vunpack.c.l.b16 %v5215
  %v5256 = vunpack.c.l.b16 %v5216
  %v5257 = vunpack.c.l.b16 %v5217
  %v5258 = vunpack.c.l.b16 %v5218
  %v5259 = vunpack.c.l.b16 %v5219
  %v5260 = vunpack.c.l.b16 %v5220
  %v5261 = vunpack.c.l.b16 %v5221
  %v5262 = vunpack.c.l.b16 %v5222
  %v5263 = vunpack.c.l.b16 %v5223
  %v5264 = vunpack.c.l.b16 %v5224
  %v5265 = vunpack.c.l.b16 %v5225
  %v5266 = vunpack.c.l.b16 %v5226
  %v5267 = vpack.c.b16 %v5252, %v5251
  %v5268 = vpack.c.b16 %v5254, %v5253
  %v5269 = vpack.c.b16 %v5256, %v5255
  %v5270 = vpack.c.b16 %v5258, %v5257
  %v5271 = vpack.c.b16 %v5260, %v5259
  %v5272 = vpack.c.b16 %v5262, %v5261
  %v5273 = vpack.c.b16 %v5264, %v5263
  %v5274 = vpack.c.b16 %v5266, %v5265
  %5283 = vmatprep.subr.bf16.mxu0 0
  %5284 = vmatpush1.bf16.msra.mxu0 %v5267
  %5285 = vmatprep.subr.bf16.mxu0 0
  %5286 = vmatpush1.bf16.msra.mxu0 %v5268
  %5287 = vmatprep.subr.bf16.mxu0 0
  %5288 = vmatpush1.bf16.msra.mxu0 %v5269
  %5289 = vmatprep.subr.bf16.mxu0 0
  %5290 = vmatpush1.bf16.msra.mxu0 %v5270
  %5291 = vmatprep.subr.bf16.mxu0 0
  %5292 = vmatpush1.bf16.msra.mxu0 %v5271
  %5293 = vmatprep.subr.bf16.mxu0 0
  %5294 = vmatpush1.bf16.msra.mxu0 %v5272
  %5295 = vmatprep.subr.bf16.mxu0 0
  %5296 = vmatpush1.bf16.msra.mxu0 %v5273
  %5297 = vmatprep.subr.bf16.mxu0 0
  %5298 = vmatpush1.bf16.msra.mxu0 %v5274
  %5299 = vmatprep.subr.bf16.mxu0 0
  %5300 = vmatpush1.bf16.msra.mxu0 0
  %5301 = vmatprep.subr.bf16.mxu0 0
  %5302 = vmatpush1.bf16.msra.mxu0 0
  %5303 = vmatprep.subr.bf16.mxu0 0
  %5304 = vmatpush1.bf16.msra.mxu0 0
  %5305 = vmatprep.subr.bf16.mxu0 0
  %5306 = vmatpush1.bf16.msra.mxu0 0
  %5307 = vmatprep.subr.bf16.mxu0 0
  %5308 = vmatpush1.bf16.msra.mxu0 0
  %5309 = vmatprep.subr.bf16.mxu0 0
  %5310 = vmatpush1.bf16.msra.mxu0 0
  %5311 = vmatprep.subr.bf16.mxu0 0
  %5312 = vmatpush1.bf16.msra.mxu0 0
  %5313 = vmatprep.subr.bf16.mxu0 0
  %5314 = vmatpush1.bf16.msra.mxu0 0
  %5315 = vmatprep.mubr.bf16.mxu0 0
  %5316 = vmatmul.mubr.bf16.gmra.mrb[0].mxu0 %v5227
  %v5317 = vpop.f32.mrb[0].mxu0
  %v5318 = vadd.f32 0.0, %v5317
  %v5319 = vpop.f32.mrb[0].mxu0
  %v5320 = vpop.f32.mrb[0].mxu0
  %v5321 = vadd.f32 0.0, %v5320
  %v5322 = vpop.f32.mrb[0].mxu0
  %5323 = vmatprep.mubr.bf16.mxu0 0
  %5324 = vmatmul.mubr.bf16.gmra.mrb[0].mxu0 %v5228
  %v5325 = vpop.f32.mrb[0].mxu0
  %v5326 = vadd.f32 0.0, %v5325
  %v5327 = vpop.f32.mrb[0].mxu0
  %v5328 = vpop.f32.mrb[0].mxu0
  %v5329 = vadd.f32 0.0, %v5328
  %v5330 = vpop.f32.mrb[0].mxu0
  %5331 = vmatprep.mubr.bf16.mxu0 0
  %5332 = vmatmul.mubr.bf16.gmra.mrb[0].mxu0 %v5229
  %v5333 = vpop.f32.mrb[0].mxu0
  %v5334 = vadd.f32 0.0, %v5333
  %v5335 = vpop.f32.mrb[0].mxu0
  %v5336 = vpop.f32.mrb[0].mxu0
  %v5337 = vadd.f32 0.0, %v5336
  %v5338 = vpop.f32.mrb[0].mxu0
  %5339 = vmatprep.mubr.bf16.mxu0 0
  %5340 = vmatmul.mubr.bf16.gmra.mrb[0].mxu0 %v5230
  %v5341 = vpop.f32.mrb[0].mxu0
  %v5342 = vadd.f32 0.0, %v5341
  %v5343 = vpop.f32.mrb[0].mxu0
  %v5344 = vpop.f32.mrb[0].mxu0
  %v5345 = vadd.f32 0.0, %v5344
  %v5346 = vpop.f32.mrb[0].mxu0
  %5347 = vmatprep.mubr.bf16.mxu0 0
  %5348 = vmatmul.mubr.bf16.gmra.mrb[0].mxu0 %v5231
  %v5349 = vpop.f32.mrb[0].mxu0
  %v5350 = vadd.f32 0.0, %v5349
  %v5351 = vpop.f32.mrb[0].mxu0
  %v5352 = vpop.f32.mrb[0].mxu0
  %v5353 = vadd.f32 0.0, %v5352
  %v5354 = vpop.f32.mrb[0].mxu0
  %5355 = vmatprep.mubr.bf16.mxu0 0
  %5356 = vmatmul.mubr.bf16.gmra.mrb[0].mxu0 %v5232
  %v5357 = vpop.f32.mrb[0].mxu0
  %v5358 = vadd.f32 0.0, %v5357
  %v5359 = vpop.f32.mrb[0].mxu0
  %v5360 = vpop.f32.mrb[0].mxu0
  %v5361 = vadd.f32 0.0, %v5360
  %v5362 = vpop.f32.mrb[0].mxu0
  %5363 = vmatprep.mubr.bf16.mxu0 0
  %5364 = vmatmul.mubr.bf16.gmra.mrb[0].mxu0 %v5233
  %v5365 = vpop.f32.mrb[0].mxu0
  %v5366 = vadd.f32 0.0, %v5365
  %v5367 = vpop.f32.mrb[0].mxu0
  %v5368 = vpop.f32.mrb[0].mxu0
  %v5369 = vadd.f32 0.0, %v5368
  %v5370 = vpop.f32.mrb[0].mxu0
  %5371 = vmatprep.mubr.bf16.mxu0 0
  %5372 = vmatmul.mubr.bf16.gmra.mrb[0].mxu0 %v5234
  %v5373 = vpop.f32.mrb[0].mxu0
  %v5374 = vadd.f32 0.0, %v5373
  %v5375 = vpop.f32.mrb[0].mxu0
  %v5376 = vpop.f32.mrb[0].mxu0
  %v5377 = vadd.f32 0.0, %v5376
  %v5378 = vpop.f32.mrb[0].mxu0
  %5379 = vdwg.mxu0
  %v5380 = vadd.f32 %v4901, %v5318
  %v5381 = vadd.f32 %v4902, %v5321
  %v5382 = vadd.f32 %v4903, %v5326
  %v5383 = vadd.f32 %v4904, %v5329
  %v5384 = vadd.f32 %v4905, %v5334
  %v5385 = vadd.f32 %v4906, %v5337
  %v5386 = vadd.f32 %v4907, %v5342
  %v5387 = vadd.f32 %v4908, %v5345
  %v5388 = vadd.f32 %v4909, %v5350
  %v5389 = vadd.f32 %v4910, %v5353
  %v5390 = vadd.f32 %v4911, %v5358
  %v5391 = vadd.f32 %v4912, %v5361
  %v5392 = vadd.f32 %v4913, %v5366
  %v5393 = vadd.f32 %v4914, %v5369
  %v5394 = vadd.f32 %v4915, %v5374
  %v5395 = vadd.f32 %v4916, %v5377
  %v5396 = vld [vmem:[%s3 + $0x13] sm:$0x1]
  %v5397 = vlaneseq
  %v5398 = vshrl.u32 %v5397, 7
  %v5399 = vsub.s32 0, %v5398
  %v5400 = vrot.slane %v5396, %v5399
  %v5401 = vadd.f32 %v5380, %v5400
  %v5402 = vadd.f32 %v5381, %v5400
  %v5403 = vadd.f32 %v5382, %v5400
  %v5404 = vadd.f32 %v5383, %v5400
  %v5405 = vadd.f32 %v5384, %v5400
  %v5406 = vadd.f32 %v5385, %v5400
  %v5407 = vadd.f32 %v5386, %v5400
  %v5408 = vadd.f32 %v5387, %v5400
  %v5409 = vadd.f32 %v5388, %v5400
  %v5410 = vadd.f32 %v5389, %v5400
  %v5411 = vadd.f32 %v5390, %v5400
  %v5412 = vadd.f32 %v5391, %v5400
  %v5413 = vadd.f32 %v5392, %v5400
  %v5414 = vadd.f32 %v5393, %v5400
  %v5415 = vadd.f32 %v5394, %v5400
  %v5416 = vadd.f32 %v5395, %v5400
  %v5417 = vld [vmem:[%s3 + $0x14] sm:$0x1]
  %v5418 = vld [vmem:[%s3 + $0x15] sm:$0x1]
  %v5419 = vsel %vm1641, %v5401, 0.0
  %5420 = vadd.xlane.f32.xlu0 %v5419
  %v5421 = vpop.xlane.xlu0 %5420
  %v5422 = vsel %vm1641, %v5402, 0.0
  %5423 = vadd.xlane.f32.xlu0 %v5422
  %v5424 = vpop.xlane.xlu0 %5423
  %v5425 = vsel %vm1641, %v5403, 0.0
  %5426 = vadd.xlane.f32.xlu0 %v5425
  %v5427 = vpop.xlane.xlu0 %5426
  %v5428 = vsel %vm1641, %v5404, 0.0
  %5429 = vadd.xlane.f32.xlu0 %v5428
  %v5430 = vpop.xlane.xlu0 %5429
  %v5431 = vsel %vm1641, %v5405, 0.0
  %5432 = vadd.xlane.f32.xlu0 %v5431
  %v5433 = vpop.xlane.xlu0 %5432
  %v5434 = vsel %vm1641, %v5406, 0.0
  %5435 = vadd.xlane.f32.xlu0 %v5434
  %v5436 = vpop.xlane.xlu0 %5435
  %v5437 = vsel %vm1641, %v5407, 0.0
  %5438 = vadd.xlane.f32.xlu0 %v5437
  %v5439 = vpop.xlane.xlu0 %5438
  %v5440 = vsel %vm1641, %v5408, 0.0
  %5441 = vadd.xlane.f32.xlu0 %v5440
  %v5442 = vpop.xlane.xlu0 %5441
  %v5443 = vsel %vm1641, %v5409, 0.0
  %5444 = vadd.xlane.f32.xlu0 %v5443
  %v5445 = vpop.xlane.xlu0 %5444
  %v5446 = vsel %vm1641, %v5410, 0.0
  %5447 = vadd.xlane.f32.xlu0 %v5446
  %v5448 = vpop.xlane.xlu0 %5447
  %v5449 = vsel %vm1641, %v5411, 0.0
  %5450 = vadd.xlane.f32.xlu0 %v5449
  %v5451 = vpop.xlane.xlu0 %5450
  %v5452 = vsel %vm1641, %v5412, 0.0
  %5453 = vadd.xlane.f32.xlu0 %v5452
  %v5454 = vpop.xlane.xlu0 %5453
  %v5455 = vsel %vm1641, %v5413, 0.0
  %5456 = vadd.xlane.f32.xlu0 %v5455
  %v5457 = vpop.xlane.xlu0 %5456
  %v5458 = vsel %vm1641, %v5414, 0.0
  %5459 = vadd.xlane.f32.xlu0 %v5458
  %v5460 = vpop.xlane.xlu0 %5459
  %v5461 = vsel %vm1641, %v5415, 0.0
  %5462 = vadd.xlane.f32.xlu0 %v5461
  %v5463 = vpop.xlane.xlu0 %5462
  %v5464 = vsel %vm1641, %v5416, 0.0
  %5465 = vadd.xlane.f32.xlu0 %v5464
  %v5466 = vpop.xlane.xlu0 %5465
  %v5467 = vmul.f32 %v5421, %v1813
  %v5468 = vmul.f32 %v5424, %v1813
  %v5469 = vmul.f32 %v5427, %v1813
  %v5470 = vmul.f32 %v5430, %v1813
  %v5471 = vmul.f32 %v5433, %v1813
  %v5472 = vmul.f32 %v5436, %v1813
  %v5473 = vmul.f32 %v5439, %v1813
  %v5474 = vmul.f32 %v5442, %v1813
  %v5475 = vmul.f32 %v5445, %v1813
  %v5476 = vmul.f32 %v5448, %v1813
  %v5477 = vmul.f32 %v5451, %v1813
  %v5478 = vmul.f32 %v5454, %v1813
  %v5479 = vmul.f32 %v5457, %v1813
  %v5480 = vmul.f32 %v5460, %v1813
  %v5481 = vmul.f32 %v5463, %v1813
  %v5482 = vmul.f32 %v5466, %v1813
  %v5483 = vsub.f32 %v5401, %v5467
  %v5484 = vsub.f32 %v5402, %v5468
  %v5485 = vsub.f32 %v5403, %v5469
  %v5486 = vsub.f32 %v5404, %v5470
  %v5487 = vsub.f32 %v5405, %v5471
  %v5488 = vsub.f32 %v5406, %v5472
  %v5489 = vsub.f32 %v5407, %v5473
  %v5490 = vsub.f32 %v5408, %v5474
  %v5491 = vsub.f32 %v5409, %v5475
  %v5492 = vsub.f32 %v5410, %v5476
  %v5493 = vsub.f32 %v5411, %v5477
  %v5494 = vsub.f32 %v5412, %v5478
  %v5495 = vsub.f32 %v5413, %v5479
  %v5496 = vsub.f32 %v5414, %v5480
  %v5497 = vsub.f32 %v5415, %v5481
  %v5498 = vsub.f32 %v5416, %v5482
  %v5499 = vmul.f32 %v5483, %v5483
  %v5500 = vmul.f32 %v5484, %v5484
  %v5501 = vmul.f32 %v5485, %v5485
  %v5502 = vmul.f32 %v5486, %v5486
  %v5503 = vmul.f32 %v5487, %v5487
  %v5504 = vmul.f32 %v5488, %v5488
  %v5505 = vmul.f32 %v5489, %v5489
  %v5506 = vmul.f32 %v5490, %v5490
  %v5507 = vmul.f32 %v5491, %v5491
  %v5508 = vmul.f32 %v5492, %v5492
  %v5509 = vmul.f32 %v5493, %v5493
  %v5510 = vmul.f32 %v5494, %v5494
  %v5511 = vmul.f32 %v5495, %v5495
  %v5512 = vmul.f32 %v5496, %v5496
  %v5513 = vmul.f32 %v5497, %v5497
  %v5514 = vmul.f32 %v5498, %v5498
  %v5515 = vsel %vm1641, %v5499, 0.0
  %5516 = vadd.xlane.f32.xlu0 %v5515
  %v5517 = vpop.xlane.xlu0 %5516
  %v5518 = vsel %vm1641, %v5500, 0.0
  %5519 = vadd.xlane.f32.xlu0 %v5518
  %v5520 = vpop.xlane.xlu0 %5519
  %v5521 = vsel %vm1641, %v5501, 0.0
  %5522 = vadd.xlane.f32.xlu0 %v5521
  %v5523 = vpop.xlane.xlu0 %5522
  %v5524 = vsel %vm1641, %v5502, 0.0
  %5525 = vadd.xlane.f32.xlu0 %v5524
  %v5526 = vpop.xlane.xlu0 %5525
  %v5527 = vsel %vm1641, %v5503, 0.0
  %5528 = vadd.xlane.f32.xlu0 %v5527
  %v5529 = vpop.xlane.xlu0 %5528
  %v5530 = vsel %vm1641, %v5504, 0.0
  %5531 = vadd.xlane.f32.xlu0 %v5530
  %v5532 = vpop.xlane.xlu0 %5531
  %v5533 = vsel %vm1641, %v5505, 0.0
  %5534 = vadd.xlane.f32.xlu0 %v5533
  %v5535 = vpop.xlane.xlu0 %5534
  %v5536 = vsel %vm1641, %v5506, 0.0
  %5537 = vadd.xlane.f32.xlu0 %v5536
  %v5538 = vpop.xlane.xlu0 %5537
  %v5539 = vsel %vm1641, %v5507, 0.0
  %5540 = vadd.xlane.f32.xlu0 %v5539
  %v5541 = vpop.xlane.xlu0 %5540
  %v5542 = vsel %vm1641, %v5508, 0.0
  %5543 = vadd.xlane.f32.xlu0 %v5542
  %v5544 = vpop.xlane.xlu0 %5543
  %v5545 = vsel %vm1641, %v5509, 0.0
  %5546 = vadd.xlane.f32.xlu0 %v5545
  %v5547 = vpop.xlane.xlu0 %5546
  %v5548 = vsel %vm1641, %v5510, 0.0
  %5549 = vadd.xlane.f32.xlu0 %v5548
  %v5550 = vpop.xlane.xlu0 %5549
  %v5551 = vsel %vm1641, %v5511, 0.0
  %5552 = vadd.xlane.f32.xlu0 %v5551
  %v5553 = vpop.xlane.xlu0 %5552
  %v5554 = vsel %vm1641, %v5512, 0.0
  %5555 = vadd.xlane.f32.xlu0 %v5554
  %v5556 = vpop.xlane.xlu0 %5555
  %v5557 = vsel %vm1641, %v5513, 0.0
  %5558 = vadd.xlane.f32.xlu0 %v5557
  %v5559 = vpop.xlane.xlu0 %5558
  %v5560 = vsel %vm1641, %v5514, 0.0
  %5561 = vadd.xlane.f32.xlu0 %v5560
  %v5562 = vpop.xlane.xlu0 %5561
  %v5563 = vmul.f32 %v5517, %v1813
  %v5564 = vmul.f32 %v5520, %v1813
  %v5565 = vmul.f32 %v5523, %v1813
  %v5566 = vmul.f32 %v5526, %v1813
  %v5567 = vmul.f32 %v5529, %v1813
  %v5568 = vmul.f32 %v5532, %v1813
  %v5569 = vmul.f32 %v5535, %v1813
  %v5570 = vmul.f32 %v5538, %v1813
  %v5571 = vmul.f32 %v5541, %v1813
  %v5572 = vmul.f32 %v5544, %v1813
  %v5573 = vmul.f32 %v5547, %v1813
  %v5574 = vmul.f32 %v5550, %v1813
  %v5575 = vmul.f32 %v5553, %v1813
  %v5576 = vmul.f32 %v5556, %v1813
  %v5577 = vmul.f32 %v5559, %v1813
  %v5578 = vmul.f32 %v5562, %v1813
  %v5579 = vadd.f32 %v5563, 1e-05
  %v5580 = vadd.f32 %v5564, 1e-05
  %v5581 = vadd.f32 %v5565, 1e-05
  %v5582 = vadd.f32 %v5566, 1e-05
  %v5583 = vadd.f32 %v5567, 1e-05
  %v5584 = vadd.f32 %v5568, 1e-05
  %v5585 = vadd.f32 %v5569, 1e-05
  %v5586 = vadd.f32 %v5570, 1e-05
  %v5587 = vadd.f32 %v5571, 1e-05
  %v5588 = vadd.f32 %v5572, 1e-05
  %v5589 = vadd.f32 %v5573, 1e-05
  %v5590 = vadd.f32 %v5574, 1e-05
  %v5591 = vadd.f32 %v5575, 1e-05
  %v5592 = vadd.f32 %v5576, 1e-05
  %v5593 = vadd.f32 %v5577, 1e-05
  %v5594 = vadd.f32 %v5578, 1e-05
  %v5595 = vrsqrt.pop %v5579
  %v5596 = vrsqrt.pop %v5580
  %v5597 = vrsqrt.pop %v5581
  %v5598 = vrsqrt.pop %v5582
  %v5599 = vrsqrt.pop %v5583
  %v5600 = vrsqrt.pop %v5584
  %v5601 = vrsqrt.pop %v5585
  %v5602 = vrsqrt.pop %v5586
  %v5603 = vrsqrt.pop %v5587
  %v5604 = vrsqrt.pop %v5588
  %v5605 = vrsqrt.pop %v5589
  %v5606 = vrsqrt.pop %v5590
  %v5607 = vrsqrt.pop %v5591
  %v5608 = vrsqrt.pop %v5592
  %v5609 = vrsqrt.pop %v5593
  %v5610 = vrsqrt.pop %v5594
  %v5611 = vmul.f32 %v5483, %v5595
  %v5612 = vmul.f32 %v5484, %v5596
  %v5613 = vmul.f32 %v5485, %v5597
  %v5614 = vmul.f32 %v5486, %v5598
  %v5615 = vmul.f32 %v5487, %v5599
  %v5616 = vmul.f32 %v5488, %v5600
  %v5617 = vmul.f32 %v5489, %v5601
  %v5618 = vmul.f32 %v5490, %v5602
  %v5619 = vmul.f32 %v5491, %v5603
  %v5620 = vmul.f32 %v5492, %v5604
  %v5621 = vmul.f32 %v5493, %v5605
  %v5622 = vmul.f32 %v5494, %v5606
  %v5623 = vmul.f32 %v5495, %v5607
  %v5624 = vmul.f32 %v5496, %v5608
  %v5625 = vmul.f32 %v5497, %v5609
  %v5626 = vmul.f32 %v5498, %v5610
  %v5627 = vlaneseq
  %v5628 = vshrl.u32 %v5627, 7
  %v5629 = vsub.s32 0, %v5628
  %v5630 = vrot.slane %v5417, %v5629
  %v5631 = vmul.f32 %v5611, %v5630
  %v5632 = vmul.f32 %v5612, %v5630
  %v5633 = vmul.f32 %v5613, %v5630
  %v5634 = vmul.f32 %v5614, %v5630
  %v5635 = vmul.f32 %v5615, %v5630
  %v5636 = vmul.f32 %v5616, %v5630
  %v5637 = vmul.f32 %v5617, %v5630
  %v5638 = vmul.f32 %v5618, %v5630
  %v5639 = vmul.f32 %v5619, %v5630
  %v5640 = vmul.f32 %v5620, %v5630
  %v5641 = vmul.f32 %v5621, %v5630
  %v5642 = vmul.f32 %v5622, %v5630
  %v5643 = vmul.f32 %v5623, %v5630
  %v5644 = vmul.f32 %v5624, %v5630
  %v5645 = vmul.f32 %v5625, %v5630
  %v5646 = vmul.f32 %v5626, %v5630
  %v5647 = vlaneseq
  %v5648 = vshrl.u32 %v5647, 7
  %v5649 = vsub.s32 0, %v5648
  %v5650 = vrot.slane %v5418, %v5649
  %v5651 = vadd.f32 %v5631, %v5650
  %v5652 = vadd.f32 %v5632, %v5650
  %v5653 = vadd.f32 %v5633, %v5650
  %v5654 = vadd.f32 %v5634, %v5650
  %v5655 = vadd.f32 %v5635, %v5650
  %v5656 = vadd.f32 %v5636, %v5650
  %v5657 = vadd.f32 %v5637, %v5650
  %v5658 = vadd.f32 %v5638, %v5650
  %v5659 = vadd.f32 %v5639, %v5650
  %v5660 = vadd.f32 %v5640, %v5650
  %v5661 = vadd.f32 %v5641, %v5650
  %v5662 = vadd.f32 %v5642, %v5650
  %v5663 = vadd.f32 %v5643, %v5650
  %v5664 = vadd.f32 %v5644, %v5650
  %v5665 = vadd.f32 %v5645, %v5650
  %v5666 = vadd.f32 %v5646, %v5650
  %v5667 = vsub.f32 %v5651, %v5659
  %v5668 = vsub.f32 %v5652, %v5660
  %v5669 = vsub.f32 %v5653, %v5661
  %v5670 = vsub.f32 %v5654, %v5662
  %v5671 = vsub.f32 %v5655, %v5663
  %v5672 = vsub.f32 %v5656, %v5664
  %v5673 = vsub.f32 %v5657, %v5665
  %v5674 = vsub.f32 %v5658, %v5666
  %v5675 = vand.u32 2147483647, %v5667
  %v5676 = vand.u32 2147483647, %v5668
  %v5677 = vand.u32 2147483647, %v5669
  %v5678 = vand.u32 2147483647, %v5670
  %v5679 = vand.u32 2147483647, %v5671
  %v5680 = vand.u32 2147483647, %v5672
  %v5681 = vand.u32 2147483647, %v5673
  %v5682 = vand.u32 2147483647, %v5674
  %v5683 = vmul.f32 %v5675, %v2047
  %v5684 = vmul.f32 %v5676, %v2048
  %v5685 = vmul.f32 %v5677, %v2049
  %v5686 = vmul.f32 %v5678, %v2050
  %v5687 = vmul.f32 %v5679, %v2051
  %v5688 = vmul.f32 %v5680, %v2052
  %v5689 = vmul.f32 %v5681, %v2053
  %v5690 = vmul.f32 %v5682, %v2054
  %v5691 = vsel %vm1641, %v5683, 0.0
  %v5692 = vsel %vm1641, %v5684, 0.0
  %v5693 = vadd.f32 %v5691, %v5692
  %v5694 = vsel %vm1641, %v5685, 0.0
  %v5695 = vadd.f32 %v5693, %v5694
  %v5696 = vsel %vm1641, %v5686, 0.0
  %v5697 = vadd.f32 %v5695, %v5696
  %v5698 = vsel %vm1641, %v5687, 0.0
  %v5699 = vadd.f32 %v5697, %v5698
  %v5700 = vsel %vm1641, %v5688, 0.0
  %v5701 = vadd.f32 %v5699, %v5700
  %v5702 = vsel %vm1641, %v5689, 0.0
  %v5703 = vadd.f32 %v5701, %v5702
  %v5704 = vsel %vm1641, %v5690, 0.0
  %v5705 = vadd.f32 %v5703, %v5704
  %5706 = vadd.xlane.f32.xlu0 %v5705
  %v5707 = vpop.xlane.xlu0 %5706
  %v5708 = vrot.slane %v5707, 4
  %v5709 = vadd.f32 %v5707, %v5708
  %v5710 = vrot.slane %v5709, 2
  %v5711 = vadd.f32 %v5709, %v5710
  %v5712 = vrot.slane %v5711, 1
  %v5713 = vadd.f32 %v5711, %v5712
  %s5714 = vtos %v5713
  %s5715 = sadd.f32 %s2179, %s5714
  %v5716 = vld [vmem:[%s2 + $0x80] sm:$0xf]
  %v5717 = vld [vmem:[%s2 + $0x84] sm:$0xf]
  %v5718 = vld [vmem:[%s2 + $0x88] sm:$0xf]
  %v5719 = vld [vmem:[%s2 + $0x8c] sm:$0xf]
  %v5720 = vpack.c.bf16 %v5652, %v5651
  %v5721 = vpack.c.bf16 %v5654, %v5653
  %v5722 = vpack.c.bf16 %v5656, %v5655
  %v5723 = vpack.c.bf16 %v5658, %v5657
  %v5724 = vpack.c.bf16 %v5660, %v5659
  %v5725 = vpack.c.bf16 %v5662, %v5661
  %v5726 = vpack.c.bf16 %v5664, %v5663
  %v5727 = vpack.c.bf16 %v5666, %v5665
  %v5728 = vld [vmem:[%s3 + $0x16] sm:$0x1]
  %v5729 = vlaneseq
  %v5730 = vshrl.u32 %v5729, 7
  %v5731 = vsub.s32 0, %v5730
  %v5732 = vrot.slane %v5728, %v5731
  %v5737 = vunpack.c.l.b16 %v5716
  %v5738 = vunpack.c.l.b16 %v5717
  %v5739 = vunpack.c.l.b16 %v5718
  %v5740 = vunpack.c.l.b16 %v5719
  %v5741 = vpack.c.b16 %v5738, %v5737
  %v5742 = vpack.c.b16 %v5740, %v5739
  %v5746 = vsel %vm1641, %v5720, 0
  %v5749 = vsel %vm1641, %v5721, 0
  %v5752 = vsel %vm1641, %v5722, 0
  %v5755 = vsel %vm1641, %v5723, 0
  %v5758 = vsel %vm1641, %v5724, 0
  %v5761 = vsel %vm1641, %v5725, 0
  %v5764 = vsel %vm1641, %v5726, 0
  %v5767 = vsel %vm1641, %v5727, 0
  %5769 = vmatprep.subr.bf16.mxu0 0
  %5770 = vmatpush1.bf16.msra.mxu0 %v5741
  %5771 = vmatprep.subr.bf16.mxu0 0
  %5772 = vmatpush1.bf16.msra.mxu0 %v5742
  %5773 = vmatprep.subr.bf16.mxu0 0
  %5774 = vmatpush1.bf16.msra.mxu0 0
  %5775 = vmatprep.subr.bf16.mxu0 0
  %5776 = vmatpush1.bf16.msra.mxu0 0
  %5777 = vmatprep.subr.bf16.mxu0 0
  %5778 = vmatpush1.bf16.msra.mxu0 0
  %5779 = vmatprep.subr.bf16.mxu0 0
  %5780 = vmatpush1.bf16.msra.mxu0 0
  %5781 = vmatprep.subr.bf16.mxu0 0
  %5782 = vmatpush1.bf16.msra.mxu0 0
  %5783 = vmatprep.subr.bf16.mxu0 0
  %5784 = vmatpush1.bf16.msra.mxu0 0
  %5785 = vmatprep.subr.bf16.mxu0 0
  %5786 = vmatpush1.bf16.msra.mxu0 0
  %5787 = vmatprep.subr.bf16.mxu0 0
  %5788 = vmatpush1.bf16.msra.mxu0 0
  %5789 = vmatprep.subr.bf16.mxu0 0
  %5790 = vmatpush1.bf16.msra.mxu0 0
  %5791 = vmatprep.subr.bf16.mxu0 0
  %5792 = vmatpush1.bf16.msra.mxu0 0
  %5793 = vmatprep.subr.bf16.mxu0 0
  %5794 = vmatpush1.bf16.msra.mxu0 0
  %5795 = vmatprep.subr.bf16.mxu0 0
  %5796 = vmatpush1.bf16.msra.mxu0 0
  %5797 = vmatprep.subr.bf16.mxu0 0
  %5798 = vmatpush1.bf16.msra.mxu0 0
  %5799 = vmatprep.subr.bf16.mxu0 0
  %5800 = vmatpush1.bf16.msra.mxu0 0
  %5801 = vmatprep.mubr.bf16.mxu0 0
  %5802 = vmatmul.mubr.bf16.gmra.mrb[0].mxu0 %v5746
  %v5803 = vpop.f32.mrb[0].mxu0
  %v5804 = vadd.f32 %v5732, %v5803
  %v5805 = vpop.f32.mrb[0].mxu0
  %v5806 = vpop.f32.mrb[0].mxu0
  %v5807 = vadd.f32 %v5732, %v5806
  %v5808 = vpop.f32.mrb[0].mxu0
  %5809 = vmatprep.mubr.bf16.mxu0 0
  %5810 = vmatmul.mubr.bf16.gmra.mrb[0].mxu0 %v5749
  %v5811 = vpop.f32.mrb[0].mxu0
  %v5812 = vadd.f32 %v5732, %v5811
  %v5813 = vpop.f32.mrb[0].mxu0
  %v5814 = vpop.f32.mrb[0].mxu0
  %v5815 = vadd.f32 %v5732, %v5814
  %v5816 = vpop.f32.mrb[0].mxu0
  %5817 = vmatprep.mubr.bf16.mxu0 0
  %5818 = vmatmul.mubr.bf16.gmra.mrb[0].mxu0 %v5752
  %v5819 = vpop.f32.mrb[0].mxu0
  %v5820 = vadd.f32 %v5732, %v5819
  %v5821 = vpop.f32.mrb[0].mxu0
  %v5822 = vpop.f32.mrb[0].mxu0
  %v5823 = vadd.f32 %v5732, %v5822
  %v5824 = vpop.f32.mrb[0].mxu0
  %5825 = vmatprep.mubr.bf16.mxu0 0
  %5826 = vmatmul.mubr.bf16.gmra.mrb[0].mxu0 %v5755
  %v5827 = vpop.f32.mrb[0].mxu0
  %v5828 = vadd.f32 %v5732, %v5827
  %v5829 = vpop.f32.mrb[0].mxu0
  %v5830 = vpop.f32.mrb[0].mxu0
  %v5831 = vadd.f32 %v5732, %v5830
  %v5832 = vpop.f32.mrb[0].mxu0
  %5833 = vmatprep.mubr.bf16.mxu0 0
  %5834 = vmatmul.mubr.bf16.gmra.mrb[0].mxu0 %v5758
  %v5835 = vpop.f32.mrb[0].mxu0
  %v5836 = vadd.f32 %v5732, %v5835
  %v5837 = vpop.f32.mrb[0].mxu0
  %v5838 = vpop.f32.mrb[0].mxu0
  %v5839 = vadd.f32 %v5732, %v5838
  %v5840 = vpop.f32.mrb[0].mxu0
  %5841 = vmatprep.mubr.bf16.mxu0 0
  %5842 = vmatmul.mubr.bf16.gmra.mrb[0].mxu0 %v5761
  %v5843 = vpop.f32.mrb[0].mxu0
  %v5844 = vadd.f32 %v5732, %v5843
  %v5845 = vpop.f32.mrb[0].mxu0
  %v5846 = vpop.f32.mrb[0].mxu0
  %v5847 = vadd.f32 %v5732, %v5846
  %v5848 = vpop.f32.mrb[0].mxu0
  %5849 = vmatprep.mubr.bf16.mxu0 0
  %5850 = vmatmul.mubr.bf16.gmra.mrb[0].mxu0 %v5764
  %v5851 = vpop.f32.mrb[0].mxu0
  %v5852 = vadd.f32 %v5732, %v5851
  %v5853 = vpop.f32.mrb[0].mxu0
  %v5854 = vpop.f32.mrb[0].mxu0
  %v5855 = vadd.f32 %v5732, %v5854
  %v5856 = vpop.f32.mrb[0].mxu0
  %5857 = vmatprep.mubr.bf16.mxu0 0
  %5858 = vmatmul.mubr.bf16.gmra.mrb[0].mxu0 %v5767
  %v5859 = vpop.f32.mrb[0].mxu0
  %v5860 = vadd.f32 %v5732, %v5859
  %v5861 = vpop.f32.mrb[0].mxu0
  %v5862 = vpop.f32.mrb[0].mxu0
  %v5863 = vadd.f32 %v5732, %v5862
  %v5864 = vpop.f32.mrb[0].mxu0
  %5865 = vdwg.mxu0
  %v5866 = vpack.c.bf16 %v5807, %v5804
  %v5867 = vpack.c.bf16 %v5815, %v5812
  %v5868 = vpack.c.bf16 %v5823, %v5820
  %v5869 = vpack.c.bf16 %v5831, %v5828
  %v5870 = vpack.c.bf16 %v5839, %v5836
  %v5871 = vpack.c.bf16 %v5847, %v5844
  %v5872 = vpack.c.bf16 %v5855, %v5852
  %v5873 = vpack.c.bf16 %v5863, %v5860
  %5882 = vrot.lane.b32.xlu0 %v5866, 96
  %v5883 = vpop.permute.xlu0 %5882
  %5884 = vrot.lane.b32.xlu0 %v5867, 96
  %v5885 = vpop.permute.xlu0 %5884
  %5886 = vrot.lane.b32.xlu0 %v5868, 96
  %v5887 = vpop.permute.xlu0 %5886
  %5888 = vrot.lane.b32.xlu0 %v5869, 96
  %v5889 = vpop.permute.xlu0 %5888
  %5890 = vrot.lane.b32.xlu0 %v5870, 96
  %v5891 = vpop.permute.xlu0 %5890
  %5892 = vrot.lane.b32.xlu0 %v5871, 96
  %v5893 = vpop.permute.xlu0 %5892
  %5894 = vrot.lane.b32.xlu0 %v5872, 96
  %v5895 = vpop.permute.xlu0 %5894
  %5896 = vrot.lane.b32.xlu0 %v5873, 96
  %v5897 = vpop.permute.xlu0 %5896
  %v5899 = vsel %vm2362, %v5866, 0
  %v5902 = vsel %vm2362, %v5867, 0
  %v5905 = vsel %vm2362, %v5868, 0
  %v5908 = vsel %vm2362, %v5869, 0
  %v5911 = vsel %vm2362, %v5870, 0
  %v5914 = vsel %vm2362, %v5871, 0
  %v5917 = vsel %vm2362, %v5872, 0
  %v5920 = vsel %vm2362, %v5873, 0
  %v5923 = vsel %vm2362, %v5883, 0
  %v5926 = vsel %vm2362, %v5885, 0
  %v5929 = vsel %vm2362, %v5887, 0
  %v5932 = vsel %vm2362, %v5889, 0
  %v5935 = vsel %vm2362, %v5891, 0
  %v5938 = vsel %vm2362, %v5893, 0
  %v5941 = vsel %vm2362, %v5895, 0
  %v5944 = vsel %vm2362, %v5897, 0
  %5946 = vmatprep.subr.bf16.mxu0 0
  %5947 = vmatpush1.bf16.xpose.msra.mxu0 %v5923
  %5948 = vmatprep.subr.bf16.mxu0 0
  %5949 = vmatpush1.bf16.xpose.msra.mxu0 %v5926
  %5950 = vmatprep.subr.bf16.mxu0 0
  %5951 = vmatpush1.bf16.xpose.msra.mxu0 %v5929
  %5952 = vmatprep.subr.bf16.mxu0 0
  %5953 = vmatpush1.bf16.xpose.msra.mxu0 %v5932
  %5954 = vmatprep.subr.bf16.mxu0 0
  %5955 = vmatpush1.bf16.xpose.msra.mxu0 %v5935
  %5956 = vmatprep.subr.bf16.mxu0 0
  %5957 = vmatpush1.bf16.xpose.msra.mxu0 %v5938
  %5958 = vmatprep.subr.bf16.mxu0 0
  %5959 = vmatpush1.bf16.xpose.msra.mxu0 %v5941
  %5960 = vmatprep.subr.bf16.mxu0 0
  %5961 = vmatpush1.bf16.xpose.msra.mxu0 %v5944
  %5962 = vmatprep.subr.bf16.mxu0 0
  %5963 = vmatpush1.bf16.xpose.msra.mxu0 0
  %5964 = vmatprep.subr.bf16.mxu0 0
  %5965 = vmatpush1.bf16.xpose.msra.mxu0 0
  %5966 = vmatprep.subr.bf16.mxu0 0
  %5967 = vmatpush1.bf16.xpose.msra.mxu0 0
  %5968 = vmatprep.subr.bf16.mxu0 0
  %5969 = vmatpush1.bf16.xpose.msra.mxu0 0
  %5970 = vmatprep.subr.bf16.mxu0 0
  %5971 = vmatpush1.bf16.xpose.msra.mxu0 0
  %5972 = vmatprep.subr.bf16.mxu0 0
  %5973 = vmatpush1.bf16.xpose.msra.mxu0 0
  %5974 = vmatprep.subr.bf16.mxu0 0
  %5975 = vmatpush1.bf16.xpose.msra.mxu0 0
  %5976 = vmatprep.subr.bf16.mxu0 0
  %5977 = vmatpush1.bf16.xpose.msra.mxu0 0
  %5978 = vmatprep.mubr.bf16.mxu0 0
  %5979 = vmatmul.mubr.bf16.gmra.mrb[0].mxu0 %v5899
  %v5980 = vpop.f32.mrb[0].mxu0
  %v5981 = vadd.f32 0.0, %v5980
  %v5982 = vpop.f32.mrb[0].mxu0
  %v5983 = vpop.f32.mrb[0].mxu0
  %v5984 = vadd.f32 0.0, %v5983
  %v5985 = vpop.f32.mrb[0].mxu0
  %5986 = vmatprep.mubr.bf16.mxu0 0
  %5987 = vmatmul.mubr.bf16.gmra.mrb[0].mxu0 %v5902
  %v5988 = vpop.f32.mrb[0].mxu0
  %v5989 = vadd.f32 0.0, %v5988
  %v5990 = vpop.f32.mrb[0].mxu0
  %v5991 = vpop.f32.mrb[0].mxu0
  %v5992 = vadd.f32 0.0, %v5991
  %v5993 = vpop.f32.mrb[0].mxu0
  %5994 = vmatprep.mubr.bf16.mxu0 0
  %5995 = vmatmul.mubr.bf16.gmra.mrb[0].mxu0 %v5905
  %v5996 = vpop.f32.mrb[0].mxu0
  %v5997 = vadd.f32 0.0, %v5996
  %v5998 = vpop.f32.mrb[0].mxu0
  %v5999 = vpop.f32.mrb[0].mxu0
  %v6000 = vadd.f32 0.0, %v5999
  %v6001 = vpop.f32.mrb[0].mxu0
  %6002 = vmatprep.mubr.bf16.mxu0 0
  %6003 = vmatmul.mubr.bf16.gmra.mrb[0].mxu0 %v5908
  %v6004 = vpop.f32.mrb[0].mxu0
  %v6005 = vadd.f32 0.0, %v6004
  %v6006 = vpop.f32.mrb[0].mxu0
  %v6007 = vpop.f32.mrb[0].mxu0
  %v6008 = vadd.f32 0.0, %v6007
  %v6009 = vpop.f32.mrb[0].mxu0
  %6010 = vmatprep.mubr.bf16.mxu0 0
  %6011 = vmatmul.mubr.bf16.gmra.mrb[0].mxu0 %v5911
  %v6012 = vpop.f32.mrb[0].mxu0
  %v6013 = vadd.f32 0.0, %v6012
  %v6014 = vpop.f32.mrb[0].mxu0
  %v6015 = vpop.f32.mrb[0].mxu0
  %v6016 = vadd.f32 0.0, %v6015
  %v6017 = vpop.f32.mrb[0].mxu0
  %6018 = vmatprep.mubr.bf16.mxu0 0
  %6019 = vmatmul.mubr.bf16.gmra.mrb[0].mxu0 %v5914
  %v6020 = vpop.f32.mrb[0].mxu0
  %v6021 = vadd.f32 0.0, %v6020
  %v6022 = vpop.f32.mrb[0].mxu0
  %v6023 = vpop.f32.mrb[0].mxu0
  %v6024 = vadd.f32 0.0, %v6023
  %v6025 = vpop.f32.mrb[0].mxu0
  %6026 = vmatprep.mubr.bf16.mxu0 0
  %6027 = vmatmul.mubr.bf16.gmra.mrb[0].mxu0 %v5917
  %v6028 = vpop.f32.mrb[0].mxu0
  %v6029 = vadd.f32 0.0, %v6028
  %v6030 = vpop.f32.mrb[0].mxu0
  %v6031 = vpop.f32.mrb[0].mxu0
  %v6032 = vadd.f32 0.0, %v6031
  %v6033 = vpop.f32.mrb[0].mxu0
  %6034 = vmatprep.mubr.bf16.mxu0 0
  %6035 = vmatmul.mubr.bf16.gmra.mrb[0].mxu0 %v5920
  %v6036 = vpop.f32.mrb[0].mxu0
  %v6037 = vadd.f32 0.0, %v6036
  %v6038 = vpop.f32.mrb[0].mxu0
  %v6039 = vpop.f32.mrb[0].mxu0
  %v6040 = vadd.f32 0.0, %v6039
  %v6041 = vpop.f32.mrb[0].mxu0
  %6042 = vdwg.mxu0
  %v6043 = vmul.f32 %v5981, 0.35355338
  %v6044 = vmul.f32 %v5984, 0.35355338
  %v6045 = vmul.f32 %v5989, 0.35355338
  %v6046 = vmul.f32 %v5992, 0.35355338
  %v6047 = vmul.f32 %v5997, 0.35355338
  %v6048 = vmul.f32 %v6000, 0.35355338
  %v6049 = vmul.f32 %v6005, 0.35355338
  %v6050 = vmul.f32 %v6008, 0.35355338
  %v6051 = vmul.f32 %v6013, 0.35355338
  %v6052 = vmul.f32 %v6016, 0.35355338
  %v6053 = vmul.f32 %v6021, 0.35355338
  %v6054 = vmul.f32 %v6024, 0.35355338
  %v6055 = vmul.f32 %v6029, 0.35355338
  %v6056 = vmul.f32 %v6032, 0.35355338
  %v6057 = vmul.f32 %v6037, 0.35355338
  %v6058 = vmul.f32 %v6040, 0.35355338
  %v6059 = vadd.f32 %v6043, %v2116
  %v6060 = vadd.f32 %v6044, %v2117
  %v6061 = vadd.f32 %v6045, %v2118
  %v6062 = vadd.f32 %v6046, %v2119
  %v6063 = vadd.f32 %v6047, %v2120
  %v6064 = vadd.f32 %v6048, %v2121
  %v6065 = vadd.f32 %v6049, %v2122
  %v6066 = vadd.f32 %v6050, %v2123
  %v6067 = vadd.f32 %v6051, %v2124
  %v6068 = vadd.f32 %v6052, %v2125
  %v6069 = vadd.f32 %v6053, %v2126
  %v6070 = vadd.f32 %v6054, %v2127
  %v6071 = vadd.f32 %v6055, %v2128
  %v6072 = vadd.f32 %v6056, %v2129
  %v6073 = vadd.f32 %v6057, %v2130
  %v6074 = vadd.f32 %v6058, %v2131
  %6075 = vmax.xlane.f32.xlu0 %v6059
  %v6076 = vpop.xlane.xlu0 %6075
  %6077 = vmax.xlane.f32.xlu0 %v6060
  %v6078 = vpop.xlane.xlu0 %6077
  %6079 = vmax.xlane.f32.xlu0 %v6061
  %v6080 = vpop.xlane.xlu0 %6079
  %6081 = vmax.xlane.f32.xlu0 %v6062
  %v6082 = vpop.xlane.xlu0 %6081
  %6083 = vmax.xlane.f32.xlu0 %v6063
  %v6084 = vpop.xlane.xlu0 %6083
  %6085 = vmax.xlane.f32.xlu0 %v6064
  %v6086 = vpop.xlane.xlu0 %6085
  %6087 = vmax.xlane.f32.xlu0 %v6065
  %v6088 = vpop.xlane.xlu0 %6087
  %6089 = vmax.xlane.f32.xlu0 %v6066
  %v6090 = vpop.xlane.xlu0 %6089
  %6091 = vmax.xlane.f32.xlu0 %v6067
  %v6092 = vpop.xlane.xlu0 %6091
  %6093 = vmax.xlane.f32.xlu0 %v6068
  %v6094 = vpop.xlane.xlu0 %6093
  %6095 = vmax.xlane.f32.xlu0 %v6069
  %v6096 = vpop.xlane.xlu0 %6095
  %6097 = vmax.xlane.f32.xlu0 %v6070
  %v6098 = vpop.xlane.xlu0 %6097
  %6099 = vmax.xlane.f32.xlu0 %v6071
  %v6100 = vpop.xlane.xlu0 %6099
  %6101 = vmax.xlane.f32.xlu0 %v6072
  %v6102 = vpop.xlane.xlu0 %6101
  %6103 = vmax.xlane.f32.xlu0 %v6073
  %v6104 = vpop.xlane.xlu0 %6103
  %6105 = vmax.xlane.f32.xlu0 %v6074
  %v6106 = vpop.xlane.xlu0 %6105
  %v6107 = vsub.f32 %v6059, %v6076
  %v6108 = vsub.f32 %v6060, %v6078
  %v6109 = vsub.f32 %v6061, %v6080
  %v6110 = vsub.f32 %v6062, %v6082
  %v6111 = vsub.f32 %v6063, %v6084
  %v6112 = vsub.f32 %v6064, %v6086
  %v6113 = vsub.f32 %v6065, %v6088
  %v6114 = vsub.f32 %v6066, %v6090
  %v6115 = vsub.f32 %v6067, %v6092
  %v6116 = vsub.f32 %v6068, %v6094
  %v6117 = vsub.f32 %v6069, %v6096
  %v6118 = vsub.f32 %v6070, %v6098
  %v6119 = vsub.f32 %v6071, %v6100
  %v6120 = vsub.f32 %v6072, %v6102
  %v6121 = vsub.f32 %v6073, %v6104
  %v6122 = vsub.f32 %v6074, %v6106
  %v6123 = vmul.f32 %v6107, 1.442695
  %v6124 = vpow.pop %v6123
  %v6125 = vmul.f32 %v6108, 1.442695
  %v6126 = vpow.pop %v6125
  %v6127 = vmul.f32 %v6109, 1.442695
  %v6128 = vpow.pop %v6127
  %v6129 = vmul.f32 %v6110, 1.442695
  %v6130 = vpow.pop %v6129
  %v6131 = vmul.f32 %v6111, 1.442695
  %v6132 = vpow.pop %v6131
  %v6133 = vmul.f32 %v6112, 1.442695
  %v6134 = vpow.pop %v6133
  %v6135 = vmul.f32 %v6113, 1.442695
  %v6136 = vpow.pop %v6135
  %v6137 = vmul.f32 %v6114, 1.442695
  %v6138 = vpow.pop %v6137
  %v6139 = vmul.f32 %v6115, 1.442695
  %v6140 = vpow.pop %v6139
  %v6141 = vmul.f32 %v6116, 1.442695
  %v6142 = vpow.pop %v6141
  %v6143 = vmul.f32 %v6117, 1.442695
  %v6144 = vpow.pop %v6143
  %v6145 = vmul.f32 %v6118, 1.442695
  %v6146 = vpow.pop %v6145
  %v6147 = vmul.f32 %v6119, 1.442695
  %v6148 = vpow.pop %v6147
  %v6149 = vmul.f32 %v6120, 1.442695
  %v6150 = vpow.pop %v6149
  %v6151 = vmul.f32 %v6121, 1.442695
  %v6152 = vpow.pop %v6151
  %v6153 = vmul.f32 %v6122, 1.442695
  %v6154 = vpow.pop %v6153
  %6155 = vadd.xlane.f32.xlu0 %v6124
  %v6156 = vpop.xlane.xlu0 %6155
  %6157 = vadd.xlane.f32.xlu0 %v6126
  %v6158 = vpop.xlane.xlu0 %6157
  %6159 = vadd.xlane.f32.xlu0 %v6128
  %v6160 = vpop.xlane.xlu0 %6159
  %6161 = vadd.xlane.f32.xlu0 %v6130
  %v6162 = vpop.xlane.xlu0 %6161
  %6163 = vadd.xlane.f32.xlu0 %v6132
  %v6164 = vpop.xlane.xlu0 %6163
  %6165 = vadd.xlane.f32.xlu0 %v6134
  %v6166 = vpop.xlane.xlu0 %6165
  %6167 = vadd.xlane.f32.xlu0 %v6136
  %v6168 = vpop.xlane.xlu0 %6167
  %6169 = vadd.xlane.f32.xlu0 %v6138
  %v6170 = vpop.xlane.xlu0 %6169
  %6171 = vadd.xlane.f32.xlu0 %v6140
  %v6172 = vpop.xlane.xlu0 %6171
  %6173 = vadd.xlane.f32.xlu0 %v6142
  %v6174 = vpop.xlane.xlu0 %6173
  %6175 = vadd.xlane.f32.xlu0 %v6144
  %v6176 = vpop.xlane.xlu0 %6175
  %6177 = vadd.xlane.f32.xlu0 %v6146
  %v6178 = vpop.xlane.xlu0 %6177
  %6179 = vadd.xlane.f32.xlu0 %v6148
  %v6180 = vpop.xlane.xlu0 %6179
  %6181 = vadd.xlane.f32.xlu0 %v6150
  %v6182 = vpop.xlane.xlu0 %6181
  %6183 = vadd.xlane.f32.xlu0 %v6152
  %v6184 = vpop.xlane.xlu0 %6183
  %6185 = vadd.xlane.f32.xlu0 %v6154
  %v6186 = vpop.xlane.xlu0 %6185
  %v6187 = vrcp.pop %v6156
  %v6188 = vrcp.pop %v6158
  %v6189 = vrcp.pop %v6160
  %v6190 = vrcp.pop %v6162
  %v6191 = vrcp.pop %v6164
  %v6192 = vrcp.pop %v6166
  %v6193 = vrcp.pop %v6168
  %v6194 = vrcp.pop %v6170
  %v6195 = vrcp.pop %v6172
  %v6196 = vrcp.pop %v6174
  %v6197 = vrcp.pop %v6176
  %v6198 = vrcp.pop %v6178
  %v6199 = vrcp.pop %v6180
  %v6200 = vrcp.pop %v6182
  %v6201 = vrcp.pop %v6184
  %v6202 = vrcp.pop %v6186
  %v6203 = vmul.f32 %v6124, %v6187
  %v6204 = vmul.f32 %v6126, %v6188
  %v6205 = vmul.f32 %v6128, %v6189
  %v6206 = vmul.f32 %v6130, %v6190
  %v6207 = vmul.f32 %v6132, %v6191
  %v6208 = vmul.f32 %v6134, %v6192
  %v6209 = vmul.f32 %v6136, %v6193
  %v6210 = vmul.f32 %v6138, %v6194
  %v6211 = vmul.f32 %v6140, %v6195
  %v6212 = vmul.f32 %v6142, %v6196
  %v6213 = vmul.f32 %v6144, %v6197
  %v6214 = vmul.f32 %v6146, %v6198
  %v6215 = vmul.f32 %v6148, %v6199
  %v6216 = vmul.f32 %v6150, %v6200
  %v6217 = vmul.f32 %v6152, %v6201
  %v6218 = vmul.f32 %v6154, %v6202
  %v6219 = vpack.c.bf16 %v6204, %v6203
  %v6220 = vpack.c.bf16 %v6206, %v6205
  %v6221 = vpack.c.bf16 %v6208, %v6207
  %v6222 = vpack.c.bf16 %v6210, %v6209
  %v6223 = vpack.c.bf16 %v6212, %v6211
  %v6224 = vpack.c.bf16 %v6214, %v6213
  %v6225 = vpack.c.bf16 %v6216, %v6215
  %v6226 = vpack.c.bf16 %v6218, %v6217
  %6227 = vrot.lane.b32.xlu0 %v5866, 64
  %v6228 = vpop.permute.xlu0 %6227
  %6229 = vrot.lane.b32.xlu0 %v5867, 64
  %v6230 = vpop.permute.xlu0 %6229
  %6231 = vrot.lane.b32.xlu0 %v5868, 64
  %v6232 = vpop.permute.xlu0 %6231
  %6233 = vrot.lane.b32.xlu0 %v5869, 64
  %v6234 = vpop.permute.xlu0 %6233
  %6235 = vrot.lane.b32.xlu0 %v5870, 64
  %v6236 = vpop.permute.xlu0 %6235
  %6237 = vrot.lane.b32.xlu0 %v5871, 64
  %v6238 = vpop.permute.xlu0 %6237
  %6239 = vrot.lane.b32.xlu0 %v5872, 64
  %v6240 = vpop.permute.xlu0 %6239
  %6241 = vrot.lane.b32.xlu0 %v5873, 64
  %v6242 = vpop.permute.xlu0 %6241
  %6251 = vmatprep.subr.bf16.mxu0 0
  %6252 = vmatpush1.bf16.msra.mxu0 %v6228
  %6253 = vmatprep.subr.bf16.mxu0 0
  %6254 = vmatpush1.bf16.msra.mxu0 %v6230
  %6255 = vmatprep.subr.bf16.mxu0 0
  %6256 = vmatpush1.bf16.msra.mxu0 %v6232
  %6257 = vmatprep.subr.bf16.mxu0 0
  %6258 = vmatpush1.bf16.msra.mxu0 %v6234
  %6259 = vmatprep.subr.bf16.mxu0 0
  %6260 = vmatpush1.bf16.msra.mxu0 %v6236
  %6261 = vmatprep.subr.bf16.mxu0 0
  %6262 = vmatpush1.bf16.msra.mxu0 %v6238
  %6263 = vmatprep.subr.bf16.mxu0 0
  %6264 = vmatpush1.bf16.msra.mxu0 %v6240
  %6265 = vmatprep.subr.bf16.mxu0 0
  %6266 = vmatpush1.bf16.msra.mxu0 %v6242
  %6267 = vmatprep.subr.bf16.mxu0 0
  %6268 = vmatpush1.bf16.msra.mxu0 0
  %6269 = vmatprep.subr.bf16.mxu0 0
  %6270 = vmatpush1.bf16.msra.mxu0 0
  %6271 = vmatprep.subr.bf16.mxu0 0
  %6272 = vmatpush1.bf16.msra.mxu0 0
  %6273 = vmatprep.subr.bf16.mxu0 0
  %6274 = vmatpush1.bf16.msra.mxu0 0
  %6275 = vmatprep.subr.bf16.mxu0 0
  %6276 = vmatpush1.bf16.msra.mxu0 0
  %6277 = vmatprep.subr.bf16.mxu0 0
  %6278 = vmatpush1.bf16.msra.mxu0 0
  %6279 = vmatprep.subr.bf16.mxu0 0
  %6280 = vmatpush1.bf16.msra.mxu0 0
  %6281 = vmatprep.subr.bf16.mxu0 0
  %6282 = vmatpush1.bf16.msra.mxu0 0
  %6283 = vmatprep.mubr.bf16.mxu0 0
  %6284 = vmatmul.mubr.bf16.gmra.mrb[0].mxu0 %v6219
  %v6285 = vpop.f32.mrb[0].mxu0
  %v6286 = vadd.f32 0.0, %v6285
  %v6287 = vpop.f32.mrb[0].mxu0
  %v6288 = vpop.f32.mrb[0].mxu0
  %v6289 = vadd.f32 0.0, %v6288
  %v6290 = vpop.f32.mrb[0].mxu0
  %6291 = vmatprep.mubr.bf16.mxu0 0
  %6292 = vmatmul.mubr.bf16.gmra.mrb[0].mxu0 %v6220
  %v6293 = vpop.f32.mrb[0].mxu0
  %v6294 = vadd.f32 0.0, %v6293
  %v6295 = vpop.f32.mrb[0].mxu0
  %v6296 = vpop.f32.mrb[0].mxu0
  %v6297 = vadd.f32 0.0, %v6296
  %v6298 = vpop.f32.mrb[0].mxu0
  %6299 = vmatprep.mubr.bf16.mxu0 0
  %6300 = vmatmul.mubr.bf16.gmra.mrb[0].mxu0 %v6221
  %v6301 = vpop.f32.mrb[0].mxu0
  %v6302 = vadd.f32 0.0, %v6301
  %v6303 = vpop.f32.mrb[0].mxu0
  %v6304 = vpop.f32.mrb[0].mxu0
  %v6305 = vadd.f32 0.0, %v6304
  %v6306 = vpop.f32.mrb[0].mxu0
  %6307 = vmatprep.mubr.bf16.mxu0 0
  %6308 = vmatmul.mubr.bf16.gmra.mrb[0].mxu0 %v6222
  %v6309 = vpop.f32.mrb[0].mxu0
  %v6310 = vadd.f32 0.0, %v6309
  %v6311 = vpop.f32.mrb[0].mxu0
  %v6312 = vpop.f32.mrb[0].mxu0
  %v6313 = vadd.f32 0.0, %v6312
  %v6314 = vpop.f32.mrb[0].mxu0
  %6315 = vmatprep.mubr.bf16.mxu0 0
  %6316 = vmatmul.mubr.bf16.gmra.mrb[0].mxu0 %v6223
  %v6317 = vpop.f32.mrb[0].mxu0
  %v6318 = vadd.f32 0.0, %v6317
  %v6319 = vpop.f32.mrb[0].mxu0
  %v6320 = vpop.f32.mrb[0].mxu0
  %v6321 = vadd.f32 0.0, %v6320
  %v6322 = vpop.f32.mrb[0].mxu0
  %6323 = vmatprep.mubr.bf16.mxu0 0
  %6324 = vmatmul.mubr.bf16.gmra.mrb[0].mxu0 %v6224
  %v6325 = vpop.f32.mrb[0].mxu0
  %v6326 = vadd.f32 0.0, %v6325
  %v6327 = vpop.f32.mrb[0].mxu0
  %v6328 = vpop.f32.mrb[0].mxu0
  %v6329 = vadd.f32 0.0, %v6328
  %v6330 = vpop.f32.mrb[0].mxu0
  %6331 = vmatprep.mubr.bf16.mxu0 0
  %6332 = vmatmul.mubr.bf16.gmra.mrb[0].mxu0 %v6225
  %v6333 = vpop.f32.mrb[0].mxu0
  %v6334 = vadd.f32 0.0, %v6333
  %v6335 = vpop.f32.mrb[0].mxu0
  %v6336 = vpop.f32.mrb[0].mxu0
  %v6337 = vadd.f32 0.0, %v6336
  %v6338 = vpop.f32.mrb[0].mxu0
  %6339 = vmatprep.mubr.bf16.mxu0 0
  %6340 = vmatmul.mubr.bf16.gmra.mrb[0].mxu0 %v6226
  %v6341 = vpop.f32.mrb[0].mxu0
  %v6342 = vadd.f32 0.0, %v6341
  %v6343 = vpop.f32.mrb[0].mxu0
  %v6344 = vpop.f32.mrb[0].mxu0
  %v6345 = vadd.f32 0.0, %v6344
  %v6346 = vpop.f32.mrb[0].mxu0
  %6347 = vdwg.mxu0
  %6348 = vrot.lane.b32.xlu0 %v5866, 120
  %v6349 = vpop.permute.xlu0 %6348
  %6350 = vrot.lane.b32.xlu0 %v5867, 120
  %v6351 = vpop.permute.xlu0 %6350
  %6352 = vrot.lane.b32.xlu0 %v5868, 120
  %v6353 = vpop.permute.xlu0 %6352
  %6354 = vrot.lane.b32.xlu0 %v5869, 120
  %v6355 = vpop.permute.xlu0 %6354
  %6356 = vrot.lane.b32.xlu0 %v5870, 120
  %v6357 = vpop.permute.xlu0 %6356
  %6358 = vrot.lane.b32.xlu0 %v5871, 120
  %v6359 = vpop.permute.xlu0 %6358
  %6360 = vrot.lane.b32.xlu0 %v5872, 120
  %v6361 = vpop.permute.xlu0 %6360
  %6362 = vrot.lane.b32.xlu0 %v5873, 120
  %v6363 = vpop.permute.xlu0 %6362
  %6364 = vrot.lane.b32.xlu0 %v5866, 88
  %v6365 = vpop.permute.xlu0 %6364
  %6366 = vrot.lane.b32.xlu0 %v5867, 88
  %v6367 = vpop.permute.xlu0 %6366
  %6368 = vrot.lane.b32.xlu0 %v5868, 88
  %v6369 = vpop.permute.xlu0 %6368
  %6370 = vrot.lane.b32.xlu0 %v5869, 88
  %v6371 = vpop.permute.xlu0 %6370
  %6372 = vrot.lane.b32.xlu0 %v5870, 88
  %v6373 = vpop.permute.xlu0 %6372
  %6374 = vrot.lane.b32.xlu0 %v5871, 88
  %v6375 = vpop.permute.xlu0 %6374
  %6376 = vrot.lane.b32.xlu0 %v5872, 88
  %v6377 = vpop.permute.xlu0 %6376
  %6378 = vrot.lane.b32.xlu0 %v5873, 88
  %v6379 = vpop.permute.xlu0 %6378
  %v6381 = vsel %vm2362, %v6349, 0
  %v6384 = vsel %vm2362, %v6351, 0
  %v6387 = vsel %vm2362, %v6353, 0
  %v6390 = vsel %vm2362, %v6355, 0
  %v6393 = vsel %vm2362, %v6357, 0
  %v6396 = vsel %vm2362, %v6359, 0
  %v6399 = vsel %vm2362, %v6361, 0
  %v6402 = vsel %vm2362, %v6363, 0
  %v6405 = vsel %vm2362, %v6365, 0
  %v6408 = vsel %vm2362, %v6367, 0
  %v6411 = vsel %vm2362, %v6369, 0
  %v6414 = vsel %vm2362, %v6371, 0
  %v6417 = vsel %vm2362, %v6373, 0
  %v6420 = vsel %vm2362, %v6375, 0
  %v6423 = vsel %vm2362, %v6377, 0
  %v6426 = vsel %vm2362, %v6379, 0
  %6428 = vmatprep.subr.bf16.mxu0 0
  %6429 = vmatpush1.bf16.xpose.msra.mxu0 %v6405
  %6430 = vmatprep.subr.bf16.mxu0 0
  %6431 = vmatpush1.bf16.xpose.msra.mxu0 %v6408
  %6432 = vmatprep.subr.bf16.mxu0 0
  %6433 = vmatpush1.bf16.xpose.msra.mxu0 %v6411
  %6434 = vmatprep.subr.bf16.mxu0 0
  %6435 = vmatpush1.bf16.xpose.msra.mxu0 %v6414
  %6436 = vmatprep.subr.bf16.mxu0 0
  %6437 = vmatpush1.bf16.xpose.msra.mxu0 %v6417
  %6438 = vmatprep.subr.bf16.mxu0 0
  %6439 = vmatpush1.bf16.xpose.msra.mxu0 %v6420
  %6440 = vmatprep.subr.bf16.mxu0 0
  %6441 = vmatpush1.bf16.xpose.msra.mxu0 %v6423
  %6442 = vmatprep.subr.bf16.mxu0 0
  %6443 = vmatpush1.bf16.xpose.msra.mxu0 %v6426
  %6444 = vmatprep.subr.bf16.mxu0 0
  %6445 = vmatpush1.bf16.xpose.msra.mxu0 0
  %6446 = vmatprep.subr.bf16.mxu0 0
  %6447 = vmatpush1.bf16.xpose.msra.mxu0 0
  %6448 = vmatprep.subr.bf16.mxu0 0
  %6449 = vmatpush1.bf16.xpose.msra.mxu0 0
  %6450 = vmatprep.subr.bf16.mxu0 0
  %6451 = vmatpush1.bf16.xpose.msra.mxu0 0
  %6452 = vmatprep.subr.bf16.mxu0 0
  %6453 = vmatpush1.bf16.xpose.msra.mxu0 0
  %6454 = vmatprep.subr.bf16.mxu0 0
  %6455 = vmatpush1.bf16.xpose.msra.mxu0 0
  %6456 = vmatprep.subr.bf16.mxu0 0
  %6457 = vmatpush1.bf16.xpose.msra.mxu0 0
  %6458 = vmatprep.subr.bf16.mxu0 0
  %6459 = vmatpush1.bf16.xpose.msra.mxu0 0
  %6460 = vmatprep.mubr.bf16.mxu0 0
  %6461 = vmatmul.mubr.bf16.gmra.mrb[0].mxu0 %v6381
  %v6462 = vpop.f32.mrb[0].mxu0
  %v6463 = vadd.f32 0.0, %v6462
  %v6464 = vpop.f32.mrb[0].mxu0
  %v6465 = vpop.f32.mrb[0].mxu0
  %v6466 = vadd.f32 0.0, %v6465
  %v6467 = vpop.f32.mrb[0].mxu0
  %6468 = vmatprep.mubr.bf16.mxu0 0
  %6469 = vmatmul.mubr.bf16.gmra.mrb[0].mxu0 %v6384
  %v6470 = vpop.f32.mrb[0].mxu0
  %v6471 = vadd.f32 0.0, %v6470
  %v6472 = vpop.f32.mrb[0].mxu0
  %v6473 = vpop.f32.mrb[0].mxu0
  %v6474 = vadd.f32 0.0, %v6473
  %v6475 = vpop.f32.mrb[0].mxu0
  %6476 = vmatprep.mubr.bf16.mxu0 0
  %6477 = vmatmul.mubr.bf16.gmra.mrb[0].mxu0 %v6387
  %v6478 = vpop.f32.mrb[0].mxu0
  %v6479 = vadd.f32 0.0, %v6478
  %v6480 = vpop.f32.mrb[0].mxu0
  %v6481 = vpop.f32.mrb[0].mxu0
  %v6482 = vadd.f32 0.0, %v6481
  %v6483 = vpop.f32.mrb[0].mxu0
  %6484 = vmatprep.mubr.bf16.mxu0 0
  %6485 = vmatmul.mubr.bf16.gmra.mrb[0].mxu0 %v6390
  %v6486 = vpop.f32.mrb[0].mxu0
  %v6487 = vadd.f32 0.0, %v6486
  %v6488 = vpop.f32.mrb[0].mxu0
  %v6489 = vpop.f32.mrb[0].mxu0
  %v6490 = vadd.f32 0.0, %v6489
  %v6491 = vpop.f32.mrb[0].mxu0
  %6492 = vmatprep.mubr.bf16.mxu0 0
  %6493 = vmatmul.mubr.bf16.gmra.mrb[0].mxu0 %v6393
  %v6494 = vpop.f32.mrb[0].mxu0
  %v6495 = vadd.f32 0.0, %v6494
  %v6496 = vpop.f32.mrb[0].mxu0
  %v6497 = vpop.f32.mrb[0].mxu0
  %v6498 = vadd.f32 0.0, %v6497
  %v6499 = vpop.f32.mrb[0].mxu0
  %6500 = vmatprep.mubr.bf16.mxu0 0
  %6501 = vmatmul.mubr.bf16.gmra.mrb[0].mxu0 %v6396
  %v6502 = vpop.f32.mrb[0].mxu0
  %v6503 = vadd.f32 0.0, %v6502
  %v6504 = vpop.f32.mrb[0].mxu0
  %v6505 = vpop.f32.mrb[0].mxu0
  %v6506 = vadd.f32 0.0, %v6505
  %v6507 = vpop.f32.mrb[0].mxu0
  %6508 = vmatprep.mubr.bf16.mxu0 0
  %6509 = vmatmul.mubr.bf16.gmra.mrb[0].mxu0 %v6399
  %v6510 = vpop.f32.mrb[0].mxu0
  %v6511 = vadd.f32 0.0, %v6510
  %v6512 = vpop.f32.mrb[0].mxu0
  %v6513 = vpop.f32.mrb[0].mxu0
  %v6514 = vadd.f32 0.0, %v6513
  %v6515 = vpop.f32.mrb[0].mxu0
  %6516 = vmatprep.mubr.bf16.mxu0 0
  %6517 = vmatmul.mubr.bf16.gmra.mrb[0].mxu0 %v6402
  %v6518 = vpop.f32.mrb[0].mxu0
  %v6519 = vadd.f32 0.0, %v6518
  %v6520 = vpop.f32.mrb[0].mxu0
  %v6521 = vpop.f32.mrb[0].mxu0
  %v6522 = vadd.f32 0.0, %v6521
  %v6523 = vpop.f32.mrb[0].mxu0
  %6524 = vdwg.mxu0
  %v6525 = vmul.f32 %v6463, 0.35355338
  %v6526 = vmul.f32 %v6466, 0.35355338
  %v6527 = vmul.f32 %v6471, 0.35355338
  %v6528 = vmul.f32 %v6474, 0.35355338
  %v6529 = vmul.f32 %v6479, 0.35355338
  %v6530 = vmul.f32 %v6482, 0.35355338
  %v6531 = vmul.f32 %v6487, 0.35355338
  %v6532 = vmul.f32 %v6490, 0.35355338
  %v6533 = vmul.f32 %v6495, 0.35355338
  %v6534 = vmul.f32 %v6498, 0.35355338
  %v6535 = vmul.f32 %v6503, 0.35355338
  %v6536 = vmul.f32 %v6506, 0.35355338
  %v6537 = vmul.f32 %v6511, 0.35355338
  %v6538 = vmul.f32 %v6514, 0.35355338
  %v6539 = vmul.f32 %v6519, 0.35355338
  %v6540 = vmul.f32 %v6522, 0.35355338
  %v6541 = vadd.f32 %v6525, %v2116
  %v6542 = vadd.f32 %v6526, %v2117
  %v6543 = vadd.f32 %v6527, %v2118
  %v6544 = vadd.f32 %v6528, %v2119
  %v6545 = vadd.f32 %v6529, %v2120
  %v6546 = vadd.f32 %v6530, %v2121
  %v6547 = vadd.f32 %v6531, %v2122
  %v6548 = vadd.f32 %v6532, %v2123
  %v6549 = vadd.f32 %v6533, %v2124
  %v6550 = vadd.f32 %v6534, %v2125
  %v6551 = vadd.f32 %v6535, %v2126
  %v6552 = vadd.f32 %v6536, %v2127
  %v6553 = vadd.f32 %v6537, %v2128
  %v6554 = vadd.f32 %v6538, %v2129
  %v6555 = vadd.f32 %v6539, %v2130
  %v6556 = vadd.f32 %v6540, %v2131
  %6557 = vmax.xlane.f32.xlu0 %v6541
  %v6558 = vpop.xlane.xlu0 %6557
  %6559 = vmax.xlane.f32.xlu0 %v6542
  %v6560 = vpop.xlane.xlu0 %6559
  %6561 = vmax.xlane.f32.xlu0 %v6543
  %v6562 = vpop.xlane.xlu0 %6561
  %6563 = vmax.xlane.f32.xlu0 %v6544
  %v6564 = vpop.xlane.xlu0 %6563
  %6565 = vmax.xlane.f32.xlu0 %v6545
  %v6566 = vpop.xlane.xlu0 %6565
  %6567 = vmax.xlane.f32.xlu0 %v6546
  %v6568 = vpop.xlane.xlu0 %6567
  %6569 = vmax.xlane.f32.xlu0 %v6547
  %v6570 = vpop.xlane.xlu0 %6569
  %6571 = vmax.xlane.f32.xlu0 %v6548
  %v6572 = vpop.xlane.xlu0 %6571
  %6573 = vmax.xlane.f32.xlu0 %v6549
  %v6574 = vpop.xlane.xlu0 %6573
  %6575 = vmax.xlane.f32.xlu0 %v6550
  %v6576 = vpop.xlane.xlu0 %6575
  %6577 = vmax.xlane.f32.xlu0 %v6551
  %v6578 = vpop.xlane.xlu0 %6577
  %6579 = vmax.xlane.f32.xlu0 %v6552
  %v6580 = vpop.xlane.xlu0 %6579
  %6581 = vmax.xlane.f32.xlu0 %v6553
  %v6582 = vpop.xlane.xlu0 %6581
  %6583 = vmax.xlane.f32.xlu0 %v6554
  %v6584 = vpop.xlane.xlu0 %6583
  %6585 = vmax.xlane.f32.xlu0 %v6555
  %v6586 = vpop.xlane.xlu0 %6585
  %6587 = vmax.xlane.f32.xlu0 %v6556
  %v6588 = vpop.xlane.xlu0 %6587
  %v6589 = vsub.f32 %v6541, %v6558
  %v6590 = vsub.f32 %v6542, %v6560
  %v6591 = vsub.f32 %v6543, %v6562
  %v6592 = vsub.f32 %v6544, %v6564
  %v6593 = vsub.f32 %v6545, %v6566
  %v6594 = vsub.f32 %v6546, %v6568
  %v6595 = vsub.f32 %v6547, %v6570
  %v6596 = vsub.f32 %v6548, %v6572
  %v6597 = vsub.f32 %v6549, %v6574
  %v6598 = vsub.f32 %v6550, %v6576
  %v6599 = vsub.f32 %v6551, %v6578
  %v6600 = vsub.f32 %v6552, %v6580
  %v6601 = vsub.f32 %v6553, %v6582
  %v6602 = vsub.f32 %v6554, %v6584
  %v6603 = vsub.f32 %v6555, %v6586
  %v6604 = vsub.f32 %v6556, %v6588
  %v6605 = vmul.f32 %v6589, 1.442695
  %v6606 = vpow.pop %v6605
  %v6607 = vmul.f32 %v6590, 1.442695
  %v6608 = vpow.pop %v6607
  %v6609 = vmul.f32 %v6591, 1.442695
  %v6610 = vpow.pop %v6609
  %v6611 = vmul.f32 %v6592, 1.442695
  %v6612 = vpow.pop %v6611
  %v6613 = vmul.f32 %v6593, 1.442695
  %v6614 = vpow.pop %v6613
  %v6615 = vmul.f32 %v6594, 1.442695
  %v6616 = vpow.pop %v6615
  %v6617 = vmul.f32 %v6595, 1.442695
  %v6618 = vpow.pop %v6617
  %v6619 = vmul.f32 %v6596, 1.442695
  %v6620 = vpow.pop %v6619
  %v6621 = vmul.f32 %v6597, 1.442695
  %v6622 = vpow.pop %v6621
  %v6623 = vmul.f32 %v6598, 1.442695
  %v6624 = vpow.pop %v6623
  %v6625 = vmul.f32 %v6599, 1.442695
  %v6626 = vpow.pop %v6625
  %v6627 = vmul.f32 %v6600, 1.442695
  %v6628 = vpow.pop %v6627
  %v6629 = vmul.f32 %v6601, 1.442695
  %v6630 = vpow.pop %v6629
  %v6631 = vmul.f32 %v6602, 1.442695
  %v6632 = vpow.pop %v6631
  %v6633 = vmul.f32 %v6603, 1.442695
  %v6634 = vpow.pop %v6633
  %v6635 = vmul.f32 %v6604, 1.442695
  %v6636 = vpow.pop %v6635
  %6637 = vadd.xlane.f32.xlu0 %v6606
  %v6638 = vpop.xlane.xlu0 %6637
  %6639 = vadd.xlane.f32.xlu0 %v6608
  %v6640 = vpop.xlane.xlu0 %6639
  %6641 = vadd.xlane.f32.xlu0 %v6610
  %v6642 = vpop.xlane.xlu0 %6641
  %6643 = vadd.xlane.f32.xlu0 %v6612
  %v6644 = vpop.xlane.xlu0 %6643
  %6645 = vadd.xlane.f32.xlu0 %v6614
  %v6646 = vpop.xlane.xlu0 %6645
  %6647 = vadd.xlane.f32.xlu0 %v6616
  %v6648 = vpop.xlane.xlu0 %6647
  %6649 = vadd.xlane.f32.xlu0 %v6618
  %v6650 = vpop.xlane.xlu0 %6649
  %6651 = vadd.xlane.f32.xlu0 %v6620
  %v6652 = vpop.xlane.xlu0 %6651
  %6653 = vadd.xlane.f32.xlu0 %v6622
  %v6654 = vpop.xlane.xlu0 %6653
  %6655 = vadd.xlane.f32.xlu0 %v6624
  %v6656 = vpop.xlane.xlu0 %6655
  %6657 = vadd.xlane.f32.xlu0 %v6626
  %v6658 = vpop.xlane.xlu0 %6657
  %6659 = vadd.xlane.f32.xlu0 %v6628
  %v6660 = vpop.xlane.xlu0 %6659
  %6661 = vadd.xlane.f32.xlu0 %v6630
  %v6662 = vpop.xlane.xlu0 %6661
  %6663 = vadd.xlane.f32.xlu0 %v6632
  %v6664 = vpop.xlane.xlu0 %6663
  %6665 = vadd.xlane.f32.xlu0 %v6634
  %v6666 = vpop.xlane.xlu0 %6665
  %6667 = vadd.xlane.f32.xlu0 %v6636
  %v6668 = vpop.xlane.xlu0 %6667
  %v6669 = vrcp.pop %v6638
  %v6670 = vrcp.pop %v6640
  %v6671 = vrcp.pop %v6642
  %v6672 = vrcp.pop %v6644
  %v6673 = vrcp.pop %v6646
  %v6674 = vrcp.pop %v6648
  %v6675 = vrcp.pop %v6650
  %v6676 = vrcp.pop %v6652
  %v6677 = vrcp.pop %v6654
  %v6678 = vrcp.pop %v6656
  %v6679 = vrcp.pop %v6658
  %v6680 = vrcp.pop %v6660
  %v6681 = vrcp.pop %v6662
  %v6682 = vrcp.pop %v6664
  %v6683 = vrcp.pop %v6666
  %v6684 = vrcp.pop %v6668
  %v6685 = vmul.f32 %v6606, %v6669
  %v6686 = vmul.f32 %v6608, %v6670
  %v6687 = vmul.f32 %v6610, %v6671
  %v6688 = vmul.f32 %v6612, %v6672
  %v6689 = vmul.f32 %v6614, %v6673
  %v6690 = vmul.f32 %v6616, %v6674
  %v6691 = vmul.f32 %v6618, %v6675
  %v6692 = vmul.f32 %v6620, %v6676
  %v6693 = vmul.f32 %v6622, %v6677
  %v6694 = vmul.f32 %v6624, %v6678
  %v6695 = vmul.f32 %v6626, %v6679
  %v6696 = vmul.f32 %v6628, %v6680
  %v6697 = vmul.f32 %v6630, %v6681
  %v6698 = vmul.f32 %v6632, %v6682
  %v6699 = vmul.f32 %v6634, %v6683
  %v6700 = vmul.f32 %v6636, %v6684
  %v6701 = vpack.c.bf16 %v6686, %v6685
  %v6702 = vpack.c.bf16 %v6688, %v6687
  %v6703 = vpack.c.bf16 %v6690, %v6689
  %v6704 = vpack.c.bf16 %v6692, %v6691
  %v6705 = vpack.c.bf16 %v6694, %v6693
  %v6706 = vpack.c.bf16 %v6696, %v6695
  %v6707 = vpack.c.bf16 %v6698, %v6697
  %v6708 = vpack.c.bf16 %v6700, %v6699
  %6709 = vrot.lane.b32.xlu0 %v5866, 56
  %v6710 = vpop.permute.xlu0 %6709
  %6711 = vrot.lane.b32.xlu0 %v5867, 56
  %v6712 = vpop.permute.xlu0 %6711
  %6713 = vrot.lane.b32.xlu0 %v5868, 56
  %v6714 = vpop.permute.xlu0 %6713
  %6715 = vrot.lane.b32.xlu0 %v5869, 56
  %v6716 = vpop.permute.xlu0 %6715
  %6717 = vrot.lane.b32.xlu0 %v5870, 56
  %v6718 = vpop.permute.xlu0 %6717
  %6719 = vrot.lane.b32.xlu0 %v5871, 56
  %v6720 = vpop.permute.xlu0 %6719
  %6721 = vrot.lane.b32.xlu0 %v5872, 56
  %v6722 = vpop.permute.xlu0 %6721
  %6723 = vrot.lane.b32.xlu0 %v5873, 56
  %v6724 = vpop.permute.xlu0 %6723
  %6733 = vmatprep.subr.bf16.mxu0 0
  %6734 = vmatpush1.bf16.msra.mxu0 %v6710
  %6735 = vmatprep.subr.bf16.mxu0 0
  %6736 = vmatpush1.bf16.msra.mxu0 %v6712
  %6737 = vmatprep.subr.bf16.mxu0 0
  %6738 = vmatpush1.bf16.msra.mxu0 %v6714
  %6739 = vmatprep.subr.bf16.mxu0 0
  %6740 = vmatpush1.bf16.msra.mxu0 %v6716
  %6741 = vmatprep.subr.bf16.mxu0 0
  %6742 = vmatpush1.bf16.msra.mxu0 %v6718
  %6743 = vmatprep.subr.bf16.mxu0 0
  %6744 = vmatpush1.bf16.msra.mxu0 %v6720
  %6745 = vmatprep.subr.bf16.mxu0 0
  %6746 = vmatpush1.bf16.msra.mxu0 %v6722
  %6747 = vmatprep.subr.bf16.mxu0 0
  %6748 = vmatpush1.bf16.msra.mxu0 %v6724
  %6749 = vmatprep.subr.bf16.mxu0 0
  %6750 = vmatpush1.bf16.msra.mxu0 0
  %6751 = vmatprep.subr.bf16.mxu0 0
  %6752 = vmatpush1.bf16.msra.mxu0 0
  %6753 = vmatprep.subr.bf16.mxu0 0
  %6754 = vmatpush1.bf16.msra.mxu0 0
  %6755 = vmatprep.subr.bf16.mxu0 0
  %6756 = vmatpush1.bf16.msra.mxu0 0
  %6757 = vmatprep.subr.bf16.mxu0 0
  %6758 = vmatpush1.bf16.msra.mxu0 0
  %6759 = vmatprep.subr.bf16.mxu0 0
  %6760 = vmatpush1.bf16.msra.mxu0 0
  %6761 = vmatprep.subr.bf16.mxu0 0
  %6762 = vmatpush1.bf16.msra.mxu0 0
  %6763 = vmatprep.subr.bf16.mxu0 0
  %6764 = vmatpush1.bf16.msra.mxu0 0
  %6765 = vmatprep.mubr.bf16.mxu0 0
  %6766 = vmatmul.mubr.bf16.gmra.mrb[0].mxu0 %v6701
  %v6767 = vpop.f32.mrb[0].mxu0
  %v6768 = vadd.f32 0.0, %v6767
  %v6769 = vpop.f32.mrb[0].mxu0
  %v6770 = vpop.f32.mrb[0].mxu0
  %v6771 = vadd.f32 0.0, %v6770
  %v6772 = vpop.f32.mrb[0].mxu0
  %6773 = vmatprep.mubr.bf16.mxu0 0
  %6774 = vmatmul.mubr.bf16.gmra.mrb[0].mxu0 %v6702
  %v6775 = vpop.f32.mrb[0].mxu0
  %v6776 = vadd.f32 0.0, %v6775
  %v6777 = vpop.f32.mrb[0].mxu0
  %v6778 = vpop.f32.mrb[0].mxu0
  %v6779 = vadd.f32 0.0, %v6778
  %v6780 = vpop.f32.mrb[0].mxu0
  %6781 = vmatprep.mubr.bf16.mxu0 0
  %6782 = vmatmul.mubr.bf16.gmra.mrb[0].mxu0 %v6703
  %v6783 = vpop.f32.mrb[0].mxu0
  %v6784 = vadd.f32 0.0, %v6783
  %v6785 = vpop.f32.mrb[0].mxu0
  %v6786 = vpop.f32.mrb[0].mxu0
  %v6787 = vadd.f32 0.0, %v6786
  %v6788 = vpop.f32.mrb[0].mxu0
  %6789 = vmatprep.mubr.bf16.mxu0 0
  %6790 = vmatmul.mubr.bf16.gmra.mrb[0].mxu0 %v6704
  %v6791 = vpop.f32.mrb[0].mxu0
  %v6792 = vadd.f32 0.0, %v6791
  %v6793 = vpop.f32.mrb[0].mxu0
  %v6794 = vpop.f32.mrb[0].mxu0
  %v6795 = vadd.f32 0.0, %v6794
  %v6796 = vpop.f32.mrb[0].mxu0
  %6797 = vmatprep.mubr.bf16.mxu0 0
  %6798 = vmatmul.mubr.bf16.gmra.mrb[0].mxu0 %v6705
  %v6799 = vpop.f32.mrb[0].mxu0
  %v6800 = vadd.f32 0.0, %v6799
  %v6801 = vpop.f32.mrb[0].mxu0
  %v6802 = vpop.f32.mrb[0].mxu0
  %v6803 = vadd.f32 0.0, %v6802
  %v6804 = vpop.f32.mrb[0].mxu0
  %6805 = vmatprep.mubr.bf16.mxu0 0
  %6806 = vmatmul.mubr.bf16.gmra.mrb[0].mxu0 %v6706
  %v6807 = vpop.f32.mrb[0].mxu0
  %v6808 = vadd.f32 0.0, %v6807
  %v6809 = vpop.f32.mrb[0].mxu0
  %v6810 = vpop.f32.mrb[0].mxu0
  %v6811 = vadd.f32 0.0, %v6810
  %v6812 = vpop.f32.mrb[0].mxu0
  %6813 = vmatprep.mubr.bf16.mxu0 0
  %6814 = vmatmul.mubr.bf16.gmra.mrb[0].mxu0 %v6707
  %v6815 = vpop.f32.mrb[0].mxu0
  %v6816 = vadd.f32 0.0, %v6815
  %v6817 = vpop.f32.mrb[0].mxu0
  %v6818 = vpop.f32.mrb[0].mxu0
  %v6819 = vadd.f32 0.0, %v6818
  %v6820 = vpop.f32.mrb[0].mxu0
  %6821 = vmatprep.mubr.bf16.mxu0 0
  %6822 = vmatmul.mubr.bf16.gmra.mrb[0].mxu0 %v6708
  %v6823 = vpop.f32.mrb[0].mxu0
  %v6824 = vadd.f32 0.0, %v6823
  %v6825 = vpop.f32.mrb[0].mxu0
  %v6826 = vpop.f32.mrb[0].mxu0
  %v6827 = vadd.f32 0.0, %v6826
  %v6828 = vpop.f32.mrb[0].mxu0
  %6829 = vdwg.mxu0
  %6830 = vrot.lane.b32.xlu0 %v5866, 112
  %v6831 = vpop.permute.xlu0 %6830
  %6832 = vrot.lane.b32.xlu0 %v5867, 112
  %v6833 = vpop.permute.xlu0 %6832
  %6834 = vrot.lane.b32.xlu0 %v5868, 112
  %v6835 = vpop.permute.xlu0 %6834
  %6836 = vrot.lane.b32.xlu0 %v5869, 112
  %v6837 = vpop.permute.xlu0 %6836
  %6838 = vrot.lane.b32.xlu0 %v5870, 112
  %v6839 = vpop.permute.xlu0 %6838
  %6840 = vrot.lane.b32.xlu0 %v5871, 112
  %v6841 = vpop.permute.xlu0 %6840
  %6842 = vrot.lane.b32.xlu0 %v5872, 112
  %v6843 = vpop.permute.xlu0 %6842
  %6844 = vrot.lane.b32.xlu0 %v5873, 112
  %v6845 = vpop.permute.xlu0 %6844
  %6846 = vrot.lane.b32.xlu0 %v5866, 80
  %v6847 = vpop.permute.xlu0 %6846
  %6848 = vrot.lane.b32.xlu0 %v5867, 80
  %v6849 = vpop.permute.xlu0 %6848
  %6850 = vrot.lane.b32.xlu0 %v5868, 80
  %v6851 = vpop.permute.xlu0 %6850
  %6852 = vrot.lane.b32.xlu0 %v5869, 80
  %v6853 = vpop.permute.xlu0 %6852
  %6854 = vrot.lane.b32.xlu0 %v5870, 80
  %v6855 = vpop.permute.xlu0 %6854
  %6856 = vrot.lane.b32.xlu0 %v5871, 80
  %v6857 = vpop.permute.xlu0 %6856
  %6858 = vrot.lane.b32.xlu0 %v5872, 80
  %v6859 = vpop.permute.xlu0 %6858
  %6860 = vrot.lane.b32.xlu0 %v5873, 80
  %v6861 = vpop.permute.xlu0 %6860
  %v6863 = vsel %vm2362, %v6831, 0
  %v6866 = vsel %vm2362, %v6833, 0
  %v6869 = vsel %vm2362, %v6835, 0
  %v6872 = vsel %vm2362, %v6837, 0
  %v6875 = vsel %vm2362, %v6839, 0
  %v6878 = vsel %vm2362, %v6841, 0
  %v6881 = vsel %vm2362, %v6843, 0
  %v6884 = vsel %vm2362, %v6845, 0
  %v6887 = vsel %vm2362, %v6847, 0
  %v6890 = vsel %vm2362, %v6849, 0
  %v6893 = vsel %vm2362, %v6851, 0
  %v6896 = vsel %vm2362, %v6853, 0
  %v6899 = vsel %vm2362, %v6855, 0
  %v6902 = vsel %vm2362, %v6857, 0
  %v6905 = vsel %vm2362, %v6859, 0
  %v6908 = vsel %vm2362, %v6861, 0
  %6910 = vmatprep.subr.bf16.mxu0 0
  %6911 = vmatpush1.bf16.xpose.msra.mxu0 %v6887
  %6912 = vmatprep.subr.bf16.mxu0 0
  %6913 = vmatpush1.bf16.xpose.msra.mxu0 %v6890
  %6914 = vmatprep.subr.bf16.mxu0 0
  %6915 = vmatpush1.bf16.xpose.msra.mxu0 %v6893
  %6916 = vmatprep.subr.bf16.mxu0 0
  %6917 = vmatpush1.bf16.xpose.msra.mxu0 %v6896
  %6918 = vmatprep.subr.bf16.mxu0 0
  %6919 = vmatpush1.bf16.xpose.msra.mxu0 %v6899
  %6920 = vmatprep.subr.bf16.mxu0 0
  %6921 = vmatpush1.bf16.xpose.msra.mxu0 %v6902
  %6922 = vmatprep.subr.bf16.mxu0 0
  %6923 = vmatpush1.bf16.xpose.msra.mxu0 %v6905
  %6924 = vmatprep.subr.bf16.mxu0 0
  %6925 = vmatpush1.bf16.xpose.msra.mxu0 %v6908
  %6926 = vmatprep.subr.bf16.mxu0 0
  %6927 = vmatpush1.bf16.xpose.msra.mxu0 0
  %6928 = vmatprep.subr.bf16.mxu0 0
  %6929 = vmatpush1.bf16.xpose.msra.mxu0 0
  %6930 = vmatprep.subr.bf16.mxu0 0
  %6931 = vmatpush1.bf16.xpose.msra.mxu0 0
  %6932 = vmatprep.subr.bf16.mxu0 0
  %6933 = vmatpush1.bf16.xpose.msra.mxu0 0
  %6934 = vmatprep.subr.bf16.mxu0 0
  %6935 = vmatpush1.bf16.xpose.msra.mxu0 0
  %6936 = vmatprep.subr.bf16.mxu0 0
  %6937 = vmatpush1.bf16.xpose.msra.mxu0 0
  %6938 = vmatprep.subr.bf16.mxu0 0
  %6939 = vmatpush1.bf16.xpose.msra.mxu0 0
  %6940 = vmatprep.subr.bf16.mxu0 0
  %6941 = vmatpush1.bf16.xpose.msra.mxu0 0
  %6942 = vmatprep.mubr.bf16.mxu0 0
  %6943 = vmatmul.mubr.bf16.gmra.mrb[0].mxu0 %v6863
  %v6944 = vpop.f32.mrb[0].mxu0
  %v6945 = vadd.f32 0.0, %v6944
  %v6946 = vpop.f32.mrb[0].mxu0
  %v6947 = vpop.f32.mrb[0].mxu0
  %v6948 = vadd.f32 0.0, %v6947
  %v6949 = vpop.f32.mrb[0].mxu0
  %6950 = vmatprep.mubr.bf16.mxu0 0
  %6951 = vmatmul.mubr.bf16.gmra.mrb[0].mxu0 %v6866
  %v6952 = vpop.f32.mrb[0].mxu0
  %v6953 = vadd.f32 0.0, %v6952
  %v6954 = vpop.f32.mrb[0].mxu0
  %v6955 = vpop.f32.mrb[0].mxu0
  %v6956 = vadd.f32 0.0, %v6955
  %v6957 = vpop.f32.mrb[0].mxu0
  %6958 = vmatprep.mubr.bf16.mxu0 0
  %6959 = vmatmul.mubr.bf16.gmra.mrb[0].mxu0 %v6869
  %v6960 = vpop.f32.mrb[0].mxu0
  %v6961 = vadd.f32 0.0, %v6960
  %v6962 = vpop.f32.mrb[0].mxu0
  %v6963 = vpop.f32.mrb[0].mxu0
  %v6964 = vadd.f32 0.0, %v6963
  %v6965 = vpop.f32.mrb[0].mxu0
  %6966 = vmatprep.mubr.bf16.mxu0 0
  %6967 = vmatmul.mubr.bf16.gmra.mrb[0].mxu0 %v6872
  %v6968 = vpop.f32.mrb[0].mxu0
  %v6969 = vadd.f32 0.0, %v6968
  %v6970 = vpop.f32.mrb[0].mxu0
  %v6971 = vpop.f32.mrb[0].mxu0
  %v6972 = vadd.f32 0.0, %v6971
  %v6973 = vpop.f32.mrb[0].mxu0
  %6974 = vmatprep.mubr.bf16.mxu0 0
  %6975 = vmatmul.mubr.bf16.gmra.mrb[0].mxu0 %v6875
  %v6976 = vpop.f32.mrb[0].mxu0
  %v6977 = vadd.f32 0.0, %v6976
  %v6978 = vpop.f32.mrb[0].mxu0
  %v6979 = vpop.f32.mrb[0].mxu0
  %v6980 = vadd.f32 0.0, %v6979
  %v6981 = vpop.f32.mrb[0].mxu0
  %6982 = vmatprep.mubr.bf16.mxu0 0
  %6983 = vmatmul.mubr.bf16.gmra.mrb[0].mxu0 %v6878
  %v6984 = vpop.f32.mrb[0].mxu0
  %v6985 = vadd.f32 0.0, %v6984
  %v6986 = vpop.f32.mrb[0].mxu0
  %v6987 = vpop.f32.mrb[0].mxu0
  %v6988 = vadd.f32 0.0, %v6987
  %v6989 = vpop.f32.mrb[0].mxu0
  %6990 = vmatprep.mubr.bf16.mxu0 0
  %6991 = vmatmul.mubr.bf16.gmra.mrb[0].mxu0 %v6881
  %v6992 = vpop.f32.mrb[0].mxu0
  %v6993 = vadd.f32 0.0, %v6992
  %v6994 = vpop.f32.mrb[0].mxu0
  %v6995 = vpop.f32.mrb[0].mxu0
  %v6996 = vadd.f32 0.0, %v6995
  %v6997 = vpop.f32.mrb[0].mxu0
  %6998 = vmatprep.mubr.bf16.mxu0 0
  %6999 = vmatmul.mubr.bf16.gmra.mrb[0].mxu0 %v6884
  %v7000 = vpop.f32.mrb[0].mxu0
  %v7001 = vadd.f32 0.0, %v7000
  %v7002 = vpop.f32.mrb[0].mxu0
  %v7003 = vpop.f32.mrb[0].mxu0
  %v7004 = vadd.f32 0.0, %v7003
  %v7005 = vpop.f32.mrb[0].mxu0
  %7006 = vdwg.mxu0
  %v7007 = vmul.f32 %v6945, 0.35355338
  %v7008 = vmul.f32 %v6948, 0.35355338
  %v7009 = vmul.f32 %v6953, 0.35355338
  %v7010 = vmul.f32 %v6956, 0.35355338
  %v7011 = vmul.f32 %v6961, 0.35355338
  %v7012 = vmul.f32 %v6964, 0.35355338
  %v7013 = vmul.f32 %v6969, 0.35355338
  %v7014 = vmul.f32 %v6972, 0.35355338
  %v7015 = vmul.f32 %v6977, 0.35355338
  %v7016 = vmul.f32 %v6980, 0.35355338
  %v7017 = vmul.f32 %v6985, 0.35355338
  %v7018 = vmul.f32 %v6988, 0.35355338
  %v7019 = vmul.f32 %v6993, 0.35355338
  %v7020 = vmul.f32 %v6996, 0.35355338
  %v7021 = vmul.f32 %v7001, 0.35355338
  %v7022 = vmul.f32 %v7004, 0.35355338
  %v7023 = vadd.f32 %v7007, %v2116
  %v7024 = vadd.f32 %v7008, %v2117
  %v7025 = vadd.f32 %v7009, %v2118
  %v7026 = vadd.f32 %v7010, %v2119
  %v7027 = vadd.f32 %v7011, %v2120
  %v7028 = vadd.f32 %v7012, %v2121
  %v7029 = vadd.f32 %v7013, %v2122
  %v7030 = vadd.f32 %v7014, %v2123
  %v7031 = vadd.f32 %v7015, %v2124
  %v7032 = vadd.f32 %v7016, %v2125
  %v7033 = vadd.f32 %v7017, %v2126
  %v7034 = vadd.f32 %v7018, %v2127
  %v7035 = vadd.f32 %v7019, %v2128
  %v7036 = vadd.f32 %v7020, %v2129
  %v7037 = vadd.f32 %v7021, %v2130
  %v7038 = vadd.f32 %v7022, %v2131
  %7039 = vmax.xlane.f32.xlu0 %v7023
  %v7040 = vpop.xlane.xlu0 %7039
  %7041 = vmax.xlane.f32.xlu0 %v7024
  %v7042 = vpop.xlane.xlu0 %7041
  %7043 = vmax.xlane.f32.xlu0 %v7025
  %v7044 = vpop.xlane.xlu0 %7043
  %7045 = vmax.xlane.f32.xlu0 %v7026
  %v7046 = vpop.xlane.xlu0 %7045
  %7047 = vmax.xlane.f32.xlu0 %v7027
  %v7048 = vpop.xlane.xlu0 %7047
  %7049 = vmax.xlane.f32.xlu0 %v7028
  %v7050 = vpop.xlane.xlu0 %7049
  %7051 = vmax.xlane.f32.xlu0 %v7029
  %v7052 = vpop.xlane.xlu0 %7051
  %7053 = vmax.xlane.f32.xlu0 %v7030
  %v7054 = vpop.xlane.xlu0 %7053
  %7055 = vmax.xlane.f32.xlu0 %v7031
  %v7056 = vpop.xlane.xlu0 %7055
  %7057 = vmax.xlane.f32.xlu0 %v7032
  %v7058 = vpop.xlane.xlu0 %7057
  %7059 = vmax.xlane.f32.xlu0 %v7033
  %v7060 = vpop.xlane.xlu0 %7059
  %7061 = vmax.xlane.f32.xlu0 %v7034
  %v7062 = vpop.xlane.xlu0 %7061
  %7063 = vmax.xlane.f32.xlu0 %v7035
  %v7064 = vpop.xlane.xlu0 %7063
  %7065 = vmax.xlane.f32.xlu0 %v7036
  %v7066 = vpop.xlane.xlu0 %7065
  %7067 = vmax.xlane.f32.xlu0 %v7037
  %v7068 = vpop.xlane.xlu0 %7067
  %7069 = vmax.xlane.f32.xlu0 %v7038
  %v7070 = vpop.xlane.xlu0 %7069
  %v7071 = vsub.f32 %v7023, %v7040
  %v7072 = vsub.f32 %v7024, %v7042
  %v7073 = vsub.f32 %v7025, %v7044
  %v7074 = vsub.f32 %v7026, %v7046
  %v7075 = vsub.f32 %v7027, %v7048
  %v7076 = vsub.f32 %v7028, %v7050
  %v7077 = vsub.f32 %v7029, %v7052
  %v7078 = vsub.f32 %v7030, %v7054
  %v7079 = vsub.f32 %v7031, %v7056
  %v7080 = vsub.f32 %v7032, %v7058
  %v7081 = vsub.f32 %v7033, %v7060
  %v7082 = vsub.f32 %v7034, %v7062
  %v7083 = vsub.f32 %v7035, %v7064
  %v7084 = vsub.f32 %v7036, %v7066
  %v7085 = vsub.f32 %v7037, %v7068
  %v7086 = vsub.f32 %v7038, %v7070
  %v7087 = vmul.f32 %v7071, 1.442695
  %v7088 = vpow.pop %v7087
  %v7089 = vmul.f32 %v7072, 1.442695
  %v7090 = vpow.pop %v7089
  %v7091 = vmul.f32 %v7073, 1.442695
  %v7092 = vpow.pop %v7091
  %v7093 = vmul.f32 %v7074, 1.442695
  %v7094 = vpow.pop %v7093
  %v7095 = vmul.f32 %v7075, 1.442695
  %v7096 = vpow.pop %v7095
  %v7097 = vmul.f32 %v7076, 1.442695
  %v7098 = vpow.pop %v7097
  %v7099 = vmul.f32 %v7077, 1.442695
  %v7100 = vpow.pop %v7099
  %v7101 = vmul.f32 %v7078, 1.442695
  %v7102 = vpow.pop %v7101
  %v7103 = vmul.f32 %v7079, 1.442695
  %v7104 = vpow.pop %v7103
  %v7105 = vmul.f32 %v7080, 1.442695
  %v7106 = vpow.pop %v7105
  %v7107 = vmul.f32 %v7081, 1.442695
  %v7108 = vpow.pop %v7107
  %v7109 = vmul.f32 %v7082, 1.442695
  %v7110 = vpow.pop %v7109
  %v7111 = vmul.f32 %v7083, 1.442695
  %v7112 = vpow.pop %v7111
  %v7113 = vmul.f32 %v7084, 1.442695
  %v7114 = vpow.pop %v7113
  %v7115 = vmul.f32 %v7085, 1.442695
  %v7116 = vpow.pop %v7115
  %v7117 = vmul.f32 %v7086, 1.442695
  %v7118 = vpow.pop %v7117
  %7119 = vadd.xlane.f32.xlu0 %v7088
  %v7120 = vpop.xlane.xlu0 %7119
  %7121 = vadd.xlane.f32.xlu0 %v7090
  %v7122 = vpop.xlane.xlu0 %7121
  %7123 = vadd.xlane.f32.xlu0 %v7092
  %v7124 = vpop.xlane.xlu0 %7123
  %7125 = vadd.xlane.f32.xlu0 %v7094
  %v7126 = vpop.xlane.xlu0 %7125
  %7127 = vadd.xlane.f32.xlu0 %v7096
  %v7128 = vpop.xlane.xlu0 %7127
  %7129 = vadd.xlane.f32.xlu0 %v7098
  %v7130 = vpop.xlane.xlu0 %7129
  %7131 = vadd.xlane.f32.xlu0 %v7100
  %v7132 = vpop.xlane.xlu0 %7131
  %7133 = vadd.xlane.f32.xlu0 %v7102
  %v7134 = vpop.xlane.xlu0 %7133
  %7135 = vadd.xlane.f32.xlu0 %v7104
  %v7136 = vpop.xlane.xlu0 %7135
  %7137 = vadd.xlane.f32.xlu0 %v7106
  %v7138 = vpop.xlane.xlu0 %7137
  %7139 = vadd.xlane.f32.xlu0 %v7108
  %v7140 = vpop.xlane.xlu0 %7139
  %7141 = vadd.xlane.f32.xlu0 %v7110
  %v7142 = vpop.xlane.xlu0 %7141
  %7143 = vadd.xlane.f32.xlu0 %v7112
  %v7144 = vpop.xlane.xlu0 %7143
  %7145 = vadd.xlane.f32.xlu0 %v7114
  %v7146 = vpop.xlane.xlu0 %7145
  %7147 = vadd.xlane.f32.xlu0 %v7116
  %v7148 = vpop.xlane.xlu0 %7147
  %7149 = vadd.xlane.f32.xlu0 %v7118
  %v7150 = vpop.xlane.xlu0 %7149
  %v7151 = vrcp.pop %v7120
  %v7152 = vrcp.pop %v7122
  %v7153 = vrcp.pop %v7124
  %v7154 = vrcp.pop %v7126
  %v7155 = vrcp.pop %v7128
  %v7156 = vrcp.pop %v7130
  %v7157 = vrcp.pop %v7132
  %v7158 = vrcp.pop %v7134
  %v7159 = vrcp.pop %v7136
  %v7160 = vrcp.pop %v7138
  %v7161 = vrcp.pop %v7140
  %v7162 = vrcp.pop %v7142
  %v7163 = vrcp.pop %v7144
  %v7164 = vrcp.pop %v7146
  %v7165 = vrcp.pop %v7148
  %v7166 = vrcp.pop %v7150
  %v7167 = vmul.f32 %v7088, %v7151
  %v7168 = vmul.f32 %v7090, %v7152
  %v7169 = vmul.f32 %v7092, %v7153
  %v7170 = vmul.f32 %v7094, %v7154
  %v7171 = vmul.f32 %v7096, %v7155
  %v7172 = vmul.f32 %v7098, %v7156
  %v7173 = vmul.f32 %v7100, %v7157
  %v7174 = vmul.f32 %v7102, %v7158
  %v7175 = vmul.f32 %v7104, %v7159
  %v7176 = vmul.f32 %v7106, %v7160
  %v7177 = vmul.f32 %v7108, %v7161
  %v7178 = vmul.f32 %v7110, %v7162
  %v7179 = vmul.f32 %v7112, %v7163
  %v7180 = vmul.f32 %v7114, %v7164
  %v7181 = vmul.f32 %v7116, %v7165
  %v7182 = vmul.f32 %v7118, %v7166
  %v7183 = vpack.c.bf16 %v7168, %v7167
  %v7184 = vpack.c.bf16 %v7170, %v7169
  %v7185 = vpack.c.bf16 %v7172, %v7171
  %v7186 = vpack.c.bf16 %v7174, %v7173
  %v7187 = vpack.c.bf16 %v7176, %v7175
  %v7188 = vpack.c.bf16 %v7178, %v7177
  %v7189 = vpack.c.bf16 %v7180, %v7179
  %v7190 = vpack.c.bf16 %v7182, %v7181
  %7191 = vrot.lane.b32.xlu0 %v5866, 48
  %v7192 = vpop.permute.xlu0 %7191
  %7193 = vrot.lane.b32.xlu0 %v5867, 48
  %v7194 = vpop.permute.xlu0 %7193
  %7195 = vrot.lane.b32.xlu0 %v5868, 48
  %v7196 = vpop.permute.xlu0 %7195
  %7197 = vrot.lane.b32.xlu0 %v5869, 48
  %v7198 = vpop.permute.xlu0 %7197
  %7199 = vrot.lane.b32.xlu0 %v5870, 48
  %v7200 = vpop.permute.xlu0 %7199
  %7201 = vrot.lane.b32.xlu0 %v5871, 48
  %v7202 = vpop.permute.xlu0 %7201
  %7203 = vrot.lane.b32.xlu0 %v5872, 48
  %v7204 = vpop.permute.xlu0 %7203
  %7205 = vrot.lane.b32.xlu0 %v5873, 48
  %v7206 = vpop.permute.xlu0 %7205
  %7215 = vmatprep.subr.bf16.mxu0 0
  %7216 = vmatpush1.bf16.msra.mxu0 %v7192
  %7217 = vmatprep.subr.bf16.mxu0 0
  %7218 = vmatpush1.bf16.msra.mxu0 %v7194
  %7219 = vmatprep.subr.bf16.mxu0 0
  %7220 = vmatpush1.bf16.msra.mxu0 %v7196
  %7221 = vmatprep.subr.bf16.mxu0 0
  %7222 = vmatpush1.bf16.msra.mxu0 %v7198
  %7223 = vmatprep.subr.bf16.mxu0 0
  %7224 = vmatpush1.bf16.msra.mxu0 %v7200
  %7225 = vmatprep.subr.bf16.mxu0 0
  %7226 = vmatpush1.bf16.msra.mxu0 %v7202
  %7227 = vmatprep.subr.bf16.mxu0 0
  %7228 = vmatpush1.bf16.msra.mxu0 %v7204
  %7229 = vmatprep.subr.bf16.mxu0 0
  %7230 = vmatpush1.bf16.msra.mxu0 %v7206
  %7231 = vmatprep.subr.bf16.mxu0 0
  %7232 = vmatpush1.bf16.msra.mxu0 0
  %7233 = vmatprep.subr.bf16.mxu0 0
  %7234 = vmatpush1.bf16.msra.mxu0 0
  %7235 = vmatprep.subr.bf16.mxu0 0
  %7236 = vmatpush1.bf16.msra.mxu0 0
  %7237 = vmatprep.subr.bf16.mxu0 0
  %7238 = vmatpush1.bf16.msra.mxu0 0
  %7239 = vmatprep.subr.bf16.mxu0 0
  %7240 = vmatpush1.bf16.msra.mxu0 0
  %7241 = vmatprep.subr.bf16.mxu0 0
  %7242 = vmatpush1.bf16.msra.mxu0 0
  %7243 = vmatprep.subr.bf16.mxu0 0
  %7244 = vmatpush1.bf16.msra.mxu0 0
  %7245 = vmatprep.subr.bf16.mxu0 0
  %7246 = vmatpush1.bf16.msra.mxu0 0
  %7247 = vmatprep.mubr.bf16.mxu0 0
  %7248 = vmatmul.mubr.bf16.gmra.mrb[0].mxu0 %v7183
  %v7249 = vpop.f32.mrb[0].mxu0
  %v7250 = vadd.f32 0.0, %v7249
  %v7251 = vpop.f32.mrb[0].mxu0
  %v7252 = vpop.f32.mrb[0].mxu0
  %v7253 = vadd.f32 0.0, %v7252
  %v7254 = vpop.f32.mrb[0].mxu0
  %7255 = vmatprep.mubr.bf16.mxu0 0
  %7256 = vmatmul.mubr.bf16.gmra.mrb[0].mxu0 %v7184
  %v7257 = vpop.f32.mrb[0].mxu0
  %v7258 = vadd.f32 0.0, %v7257
  %v7259 = vpop.f32.mrb[0].mxu0
  %v7260 = vpop.f32.mrb[0].mxu0
  %v7261 = vadd.f32 0.0, %v7260
  %v7262 = vpop.f32.mrb[0].mxu0
  %7263 = vmatprep.mubr.bf16.mxu0 0
  %7264 = vmatmul.mubr.bf16.gmra.mrb[0].mxu0 %v7185
  %v7265 = vpop.f32.mrb[0].mxu0
  %v7266 = vadd.f32 0.0, %v7265
  %v7267 = vpop.f32.mrb[0].mxu0
  %v7268 = vpop.f32.mrb[0].mxu0
  %v7269 = vadd.f32 0.0, %v7268
  %v7270 = vpop.f32.mrb[0].mxu0
  %7271 = vmatprep.mubr.bf16.mxu0 0
  %7272 = vmatmul.mubr.bf16.gmra.mrb[0].mxu0 %v7186
  %v7273 = vpop.f32.mrb[0].mxu0
  %v7274 = vadd.f32 0.0, %v7273
  %v7275 = vpop.f32.mrb[0].mxu0
  %v7276 = vpop.f32.mrb[0].mxu0
  %v7277 = vadd.f32 0.0, %v7276
  %v7278 = vpop.f32.mrb[0].mxu0
  %7279 = vmatprep.mubr.bf16.mxu0 0
  %7280 = vmatmul.mubr.bf16.gmra.mrb[0].mxu0 %v7187
  %v7281 = vpop.f32.mrb[0].mxu0
  %v7282 = vadd.f32 0.0, %v7281
  %v7283 = vpop.f32.mrb[0].mxu0
  %v7284 = vpop.f32.mrb[0].mxu0
  %v7285 = vadd.f32 0.0, %v7284
  %v7286 = vpop.f32.mrb[0].mxu0
  %7287 = vmatprep.mubr.bf16.mxu0 0
  %7288 = vmatmul.mubr.bf16.gmra.mrb[0].mxu0 %v7188
  %v7289 = vpop.f32.mrb[0].mxu0
  %v7290 = vadd.f32 0.0, %v7289
  %v7291 = vpop.f32.mrb[0].mxu0
  %v7292 = vpop.f32.mrb[0].mxu0
  %v7293 = vadd.f32 0.0, %v7292
  %v7294 = vpop.f32.mrb[0].mxu0
  %7295 = vmatprep.mubr.bf16.mxu0 0
  %7296 = vmatmul.mubr.bf16.gmra.mrb[0].mxu0 %v7189
  %v7297 = vpop.f32.mrb[0].mxu0
  %v7298 = vadd.f32 0.0, %v7297
  %v7299 = vpop.f32.mrb[0].mxu0
  %v7300 = vpop.f32.mrb[0].mxu0
  %v7301 = vadd.f32 0.0, %v7300
  %v7302 = vpop.f32.mrb[0].mxu0
  %7303 = vmatprep.mubr.bf16.mxu0 0
  %7304 = vmatmul.mubr.bf16.gmra.mrb[0].mxu0 %v7190
  %v7305 = vpop.f32.mrb[0].mxu0
  %v7306 = vadd.f32 0.0, %v7305
  %v7307 = vpop.f32.mrb[0].mxu0
  %v7308 = vpop.f32.mrb[0].mxu0
  %v7309 = vadd.f32 0.0, %v7308
  %v7310 = vpop.f32.mrb[0].mxu0
  %7311 = vdwg.mxu0
  %7312 = vrot.lane.b32.xlu0 %v5866, 104
  %v7313 = vpop.permute.xlu0 %7312
  %7314 = vrot.lane.b32.xlu0 %v5867, 104
  %v7315 = vpop.permute.xlu0 %7314
  %7316 = vrot.lane.b32.xlu0 %v5868, 104
  %v7317 = vpop.permute.xlu0 %7316
  %7318 = vrot.lane.b32.xlu0 %v5869, 104
  %v7319 = vpop.permute.xlu0 %7318
  %7320 = vrot.lane.b32.xlu0 %v5870, 104
  %v7321 = vpop.permute.xlu0 %7320
  %7322 = vrot.lane.b32.xlu0 %v5871, 104
  %v7323 = vpop.permute.xlu0 %7322
  %7324 = vrot.lane.b32.xlu0 %v5872, 104
  %v7325 = vpop.permute.xlu0 %7324
  %7326 = vrot.lane.b32.xlu0 %v5873, 104
  %v7327 = vpop.permute.xlu0 %7326
  %7328 = vrot.lane.b32.xlu0 %v5866, 72
  %v7329 = vpop.permute.xlu0 %7328
  %7330 = vrot.lane.b32.xlu0 %v5867, 72
  %v7331 = vpop.permute.xlu0 %7330
  %7332 = vrot.lane.b32.xlu0 %v5868, 72
  %v7333 = vpop.permute.xlu0 %7332
  %7334 = vrot.lane.b32.xlu0 %v5869, 72
  %v7335 = vpop.permute.xlu0 %7334
  %7336 = vrot.lane.b32.xlu0 %v5870, 72
  %v7337 = vpop.permute.xlu0 %7336
  %7338 = vrot.lane.b32.xlu0 %v5871, 72
  %v7339 = vpop.permute.xlu0 %7338
  %7340 = vrot.lane.b32.xlu0 %v5872, 72
  %v7341 = vpop.permute.xlu0 %7340
  %7342 = vrot.lane.b32.xlu0 %v5873, 72
  %v7343 = vpop.permute.xlu0 %7342
  %v7345 = vsel %vm2362, %v7313, 0
  %v7348 = vsel %vm2362, %v7315, 0
  %v7351 = vsel %vm2362, %v7317, 0
  %v7354 = vsel %vm2362, %v7319, 0
  %v7357 = vsel %vm2362, %v7321, 0
  %v7360 = vsel %vm2362, %v7323, 0
  %v7363 = vsel %vm2362, %v7325, 0
  %v7366 = vsel %vm2362, %v7327, 0
  %v7369 = vsel %vm2362, %v7329, 0
  %v7372 = vsel %vm2362, %v7331, 0
  %v7375 = vsel %vm2362, %v7333, 0
  %v7378 = vsel %vm2362, %v7335, 0
  %v7381 = vsel %vm2362, %v7337, 0
  %v7384 = vsel %vm2362, %v7339, 0
  %v7387 = vsel %vm2362, %v7341, 0
  %v7390 = vsel %vm2362, %v7343, 0
  %7392 = vmatprep.subr.bf16.mxu0 0
  %7393 = vmatpush1.bf16.xpose.msra.mxu0 %v7369
  %7394 = vmatprep.subr.bf16.mxu0 0
  %7395 = vmatpush1.bf16.xpose.msra.mxu0 %v7372
  %7396 = vmatprep.subr.bf16.mxu0 0
  %7397 = vmatpush1.bf16.xpose.msra.mxu0 %v7375
  %7398 = vmatprep.subr.bf16.mxu0 0
  %7399 = vmatpush1.bf16.xpose.msra.mxu0 %v7378
  %7400 = vmatprep.subr.bf16.mxu0 0
  %7401 = vmatpush1.bf16.xpose.msra.mxu0 %v7381
  %7402 = vmatprep.subr.bf16.mxu0 0
  %7403 = vmatpush1.bf16.xpose.msra.mxu0 %v7384
  %7404 = vmatprep.subr.bf16.mxu0 0
  %7405 = vmatpush1.bf16.xpose.msra.mxu0 %v7387
  %7406 = vmatprep.subr.bf16.mxu0 0
  %7407 = vmatpush1.bf16.xpose.msra.mxu0 %v7390
  %7408 = vmatprep.subr.bf16.mxu0 0
  %7409 = vmatpush1.bf16.xpose.msra.mxu0 0
  %7410 = vmatprep.subr.bf16.mxu0 0
  %7411 = vmatpush1.bf16.xpose.msra.mxu0 0
  %7412 = vmatprep.subr.bf16.mxu0 0
  %7413 = vmatpush1.bf16.xpose.msra.mxu0 0
  %7414 = vmatprep.subr.bf16.mxu0 0
  %7415 = vmatpush1.bf16.xpose.msra.mxu0 0
  %7416 = vmatprep.subr.bf16.mxu0 0
  %7417 = vmatpush1.bf16.xpose.msra.mxu0 0
  %7418 = vmatprep.subr.bf16.mxu0 0
  %7419 = vmatpush1.bf16.xpose.msra.mxu0 0
  %7420 = vmatprep.subr.bf16.mxu0 0
  %7421 = vmatpush1.bf16.xpose.msra.mxu0 0
  %7422 = vmatprep.subr.bf16.mxu0 0
  %7423 = vmatpush1.bf16.xpose.msra.mxu0 0
  %7424 = vmatprep.mubr.bf16.mxu0 0
  %7425 = vmatmul.mubr.bf16.gmra.mrb[0].mxu0 %v7345
  %v7426 = vpop.f32.mrb[0].mxu0
  %v7427 = vadd.f32 0.0, %v7426
  %v7428 = vpop.f32.mrb[0].mxu0
  %v7429 = vpop.f32.mrb[0].mxu0
  %v7430 = vadd.f32 0.0, %v7429
  %v7431 = vpop.f32.mrb[0].mxu0
  %7432 = vmatprep.mubr.bf16.mxu0 0
  %7433 = vmatmul.mubr.bf16.gmra.mrb[0].mxu0 %v7348
  %v7434 = vpop.f32.mrb[0].mxu0
  %v7435 = vadd.f32 0.0, %v7434
  %v7436 = vpop.f32.mrb[0].mxu0
  %v7437 = vpop.f32.mrb[0].mxu0
  %v7438 = vadd.f32 0.0, %v7437
  %v7439 = vpop.f32.mrb[0].mxu0
  %7440 = vmatprep.mubr.bf16.mxu0 0
  %7441 = vmatmul.mubr.bf16.gmra.mrb[0].mxu0 %v7351
  %v7442 = vpop.f32.mrb[0].mxu0
  %v7443 = vadd.f32 0.0, %v7442
  %v7444 = vpop.f32.mrb[0].mxu0
  %v7445 = vpop.f32.mrb[0].mxu0
  %v7446 = vadd.f32 0.0, %v7445
  %v7447 = vpop.f32.mrb[0].mxu0
  %7448 = vmatprep.mubr.bf16.mxu0 0
  %7449 = vmatmul.mubr.bf16.gmra.mrb[0].mxu0 %v7354
  %v7450 = vpop.f32.mrb[0].mxu0
  %v7451 = vadd.f32 0.0, %v7450
  %v7452 = vpop.f32.mrb[0].mxu0
  %v7453 = vpop.f32.mrb[0].mxu0
  %v7454 = vadd.f32 0.0, %v7453
  %v7455 = vpop.f32.mrb[0].mxu0
  %7456 = vmatprep.mubr.bf16.mxu0 0
  %7457 = vmatmul.mubr.bf16.gmra.mrb[0].mxu0 %v7357
  %v7458 = vpop.f32.mrb[0].mxu0
  %v7459 = vadd.f32 0.0, %v7458
  %v7460 = vpop.f32.mrb[0].mxu0
  %v7461 = vpop.f32.mrb[0].mxu0
  %v7462 = vadd.f32 0.0, %v7461
  %v7463 = vpop.f32.mrb[0].mxu0
  %7464 = vmatprep.mubr.bf16.mxu0 0
  %7465 = vmatmul.mubr.bf16.gmra.mrb[0].mxu0 %v7360
  %v7466 = vpop.f32.mrb[0].mxu0
  %v7467 = vadd.f32 0.0, %v7466
  %v7468 = vpop.f32.mrb[0].mxu0
  %v7469 = vpop.f32.mrb[0].mxu0
  %v7470 = vadd.f32 0.0, %v7469
  %v7471 = vpop.f32.mrb[0].mxu0
  %7472 = vmatprep.mubr.bf16.mxu0 0
  %7473 = vmatmul.mubr.bf16.gmra.mrb[0].mxu0 %v7363
  %v7474 = vpop.f32.mrb[0].mxu0
  %v7475 = vadd.f32 0.0, %v7474
  %v7476 = vpop.f32.mrb[0].mxu0
  %v7477 = vpop.f32.mrb[0].mxu0
  %v7478 = vadd.f32 0.0, %v7477
  %v7479 = vpop.f32.mrb[0].mxu0
  %7480 = vmatprep.mubr.bf16.mxu0 0
  %7481 = vmatmul.mubr.bf16.gmra.mrb[0].mxu0 %v7366
  %v7482 = vpop.f32.mrb[0].mxu0
  %v7483 = vadd.f32 0.0, %v7482
  %v7484 = vpop.f32.mrb[0].mxu0
  %v7485 = vpop.f32.mrb[0].mxu0
  %v7486 = vadd.f32 0.0, %v7485
  %v7487 = vpop.f32.mrb[0].mxu0
  %7488 = vdwg.mxu0
  %v7489 = vmul.f32 %v7427, 0.35355338
  %v7490 = vmul.f32 %v7430, 0.35355338
  %v7491 = vmul.f32 %v7435, 0.35355338
  %v7492 = vmul.f32 %v7438, 0.35355338
  %v7493 = vmul.f32 %v7443, 0.35355338
  %v7494 = vmul.f32 %v7446, 0.35355338
  %v7495 = vmul.f32 %v7451, 0.35355338
  %v7496 = vmul.f32 %v7454, 0.35355338
  %v7497 = vmul.f32 %v7459, 0.35355338
  %v7498 = vmul.f32 %v7462, 0.35355338
  %v7499 = vmul.f32 %v7467, 0.35355338
  %v7500 = vmul.f32 %v7470, 0.35355338
  %v7501 = vmul.f32 %v7475, 0.35355338
  %v7502 = vmul.f32 %v7478, 0.35355338
  %v7503 = vmul.f32 %v7483, 0.35355338
  %v7504 = vmul.f32 %v7486, 0.35355338
  %v7505 = vadd.f32 %v7489, %v2116
  %v7506 = vadd.f32 %v7490, %v2117
  %v7507 = vadd.f32 %v7491, %v2118
  %v7508 = vadd.f32 %v7492, %v2119
  %v7509 = vadd.f32 %v7493, %v2120
  %v7510 = vadd.f32 %v7494, %v2121
  %v7511 = vadd.f32 %v7495, %v2122
  %v7512 = vadd.f32 %v7496, %v2123
  %v7513 = vadd.f32 %v7497, %v2124
  %v7514 = vadd.f32 %v7498, %v2125
  %v7515 = vadd.f32 %v7499, %v2126
  %v7516 = vadd.f32 %v7500, %v2127
  %v7517 = vadd.f32 %v7501, %v2128
  %v7518 = vadd.f32 %v7502, %v2129
  %v7519 = vadd.f32 %v7503, %v2130
  %v7520 = vadd.f32 %v7504, %v2131
  %7521 = vmax.xlane.f32.xlu0 %v7505
  %v7522 = vpop.xlane.xlu0 %7521
  %7523 = vmax.xlane.f32.xlu0 %v7506
  %v7524 = vpop.xlane.xlu0 %7523
  %7525 = vmax.xlane.f32.xlu0 %v7507
  %v7526 = vpop.xlane.xlu0 %7525
  %7527 = vmax.xlane.f32.xlu0 %v7508
  %v7528 = vpop.xlane.xlu0 %7527
  %7529 = vmax.xlane.f32.xlu0 %v7509
  %v7530 = vpop.xlane.xlu0 %7529
  %7531 = vmax.xlane.f32.xlu0 %v7510
  %v7532 = vpop.xlane.xlu0 %7531
  %7533 = vmax.xlane.f32.xlu0 %v7511
  %v7534 = vpop.xlane.xlu0 %7533
  %7535 = vmax.xlane.f32.xlu0 %v7512
  %v7536 = vpop.xlane.xlu0 %7535
  %7537 = vmax.xlane.f32.xlu0 %v7513
  %v7538 = vpop.xlane.xlu0 %7537
  %7539 = vmax.xlane.f32.xlu0 %v7514
  %v7540 = vpop.xlane.xlu0 %7539
  %7541 = vmax.xlane.f32.xlu0 %v7515
  %v7542 = vpop.xlane.xlu0 %7541
  %7543 = vmax.xlane.f32.xlu0 %v7516
  %v7544 = vpop.xlane.xlu0 %7543
  %7545 = vmax.xlane.f32.xlu0 %v7517
  %v7546 = vpop.xlane.xlu0 %7545
  %7547 = vmax.xlane.f32.xlu0 %v7518
  %v7548 = vpop.xlane.xlu0 %7547
  %7549 = vmax.xlane.f32.xlu0 %v7519
  %v7550 = vpop.xlane.xlu0 %7549
  %7551 = vmax.xlane.f32.xlu0 %v7520
  %v7552 = vpop.xlane.xlu0 %7551
  %v7553 = vsub.f32 %v7505, %v7522
  %v7554 = vsub.f32 %v7506, %v7524
  %v7555 = vsub.f32 %v7507, %v7526
  %v7556 = vsub.f32 %v7508, %v7528
  %v7557 = vsub.f32 %v7509, %v7530
  %v7558 = vsub.f32 %v7510, %v7532
  %v7559 = vsub.f32 %v7511, %v7534
  %v7560 = vsub.f32 %v7512, %v7536
  %v7561 = vsub.f32 %v7513, %v7538
  %v7562 = vsub.f32 %v7514, %v7540
  %v7563 = vsub.f32 %v7515, %v7542
  %v7564 = vsub.f32 %v7516, %v7544
  %v7565 = vsub.f32 %v7517, %v7546
  %v7566 = vsub.f32 %v7518, %v7548
  %v7567 = vsub.f32 %v7519, %v7550
  %v7568 = vsub.f32 %v7520, %v7552
  %v7569 = vmul.f32 %v7553, 1.442695
  %v7570 = vpow.pop %v7569
  %v7571 = vmul.f32 %v7554, 1.442695
  %v7572 = vpow.pop %v7571
  %v7573 = vmul.f32 %v7555, 1.442695
  %v7574 = vpow.pop %v7573
  %v7575 = vmul.f32 %v7556, 1.442695
  %v7576 = vpow.pop %v7575
  %v7577 = vmul.f32 %v7557, 1.442695
  %v7578 = vpow.pop %v7577
  %v7579 = vmul.f32 %v7558, 1.442695
  %v7580 = vpow.pop %v7579
  %v7581 = vmul.f32 %v7559, 1.442695
  %v7582 = vpow.pop %v7581
  %v7583 = vmul.f32 %v7560, 1.442695
  %v7584 = vpow.pop %v7583
  %v7585 = vmul.f32 %v7561, 1.442695
  %v7586 = vpow.pop %v7585
  %v7587 = vmul.f32 %v7562, 1.442695
  %v7588 = vpow.pop %v7587
  %v7589 = vmul.f32 %v7563, 1.442695
  %v7590 = vpow.pop %v7589
  %v7591 = vmul.f32 %v7564, 1.442695
  %v7592 = vpow.pop %v7591
  %v7593 = vmul.f32 %v7565, 1.442695
  %v7594 = vpow.pop %v7593
  %v7595 = vmul.f32 %v7566, 1.442695
  %v7596 = vpow.pop %v7595
  %v7597 = vmul.f32 %v7567, 1.442695
  %v7598 = vpow.pop %v7597
  %v7599 = vmul.f32 %v7568, 1.442695
  %v7600 = vpow.pop %v7599
  %7601 = vadd.xlane.f32.xlu0 %v7570
  %v7602 = vpop.xlane.xlu0 %7601
  %7603 = vadd.xlane.f32.xlu0 %v7572
  %v7604 = vpop.xlane.xlu0 %7603
  %7605 = vadd.xlane.f32.xlu0 %v7574
  %v7606 = vpop.xlane.xlu0 %7605
  %7607 = vadd.xlane.f32.xlu0 %v7576
  %v7608 = vpop.xlane.xlu0 %7607
  %7609 = vadd.xlane.f32.xlu0 %v7578
  %v7610 = vpop.xlane.xlu0 %7609
  %7611 = vadd.xlane.f32.xlu0 %v7580
  %v7612 = vpop.xlane.xlu0 %7611
  %7613 = vadd.xlane.f32.xlu0 %v7582
  %v7614 = vpop.xlane.xlu0 %7613
  %7615 = vadd.xlane.f32.xlu0 %v7584
  %v7616 = vpop.xlane.xlu0 %7615
  %7617 = vadd.xlane.f32.xlu0 %v7586
  %v7618 = vpop.xlane.xlu0 %7617
  %7619 = vadd.xlane.f32.xlu0 %v7588
  %v7620 = vpop.xlane.xlu0 %7619
  %7621 = vadd.xlane.f32.xlu0 %v7590
  %v7622 = vpop.xlane.xlu0 %7621
  %7623 = vadd.xlane.f32.xlu0 %v7592
  %v7624 = vpop.xlane.xlu0 %7623
  %7625 = vadd.xlane.f32.xlu0 %v7594
  %v7626 = vpop.xlane.xlu0 %7625
  %7627 = vadd.xlane.f32.xlu0 %v7596
  %v7628 = vpop.xlane.xlu0 %7627
  %7629 = vadd.xlane.f32.xlu0 %v7598
  %v7630 = vpop.xlane.xlu0 %7629
  %7631 = vadd.xlane.f32.xlu0 %v7600
  %v7632 = vpop.xlane.xlu0 %7631
  %v7633 = vrcp.pop %v7602
  %v7634 = vrcp.pop %v7604
  %v7635 = vrcp.pop %v7606
  %v7636 = vrcp.pop %v7608
  %v7637 = vrcp.pop %v7610
  %v7638 = vrcp.pop %v7612
  %v7639 = vrcp.pop %v7614
  %v7640 = vrcp.pop %v7616
  %v7641 = vrcp.pop %v7618
  %v7642 = vrcp.pop %v7620
  %v7643 = vrcp.pop %v7622
  %v7644 = vrcp.pop %v7624
  %v7645 = vrcp.pop %v7626
  %v7646 = vrcp.pop %v7628
  %v7647 = vrcp.pop %v7630
  %v7648 = vrcp.pop %v7632
  %v7649 = vmul.f32 %v7570, %v7633
  %v7650 = vmul.f32 %v7572, %v7634
  %v7651 = vmul.f32 %v7574, %v7635
  %v7652 = vmul.f32 %v7576, %v7636
  %v7653 = vmul.f32 %v7578, %v7637
  %v7654 = vmul.f32 %v7580, %v7638
  %v7655 = vmul.f32 %v7582, %v7639
  %v7656 = vmul.f32 %v7584, %v7640
  %v7657 = vmul.f32 %v7586, %v7641
  %v7658 = vmul.f32 %v7588, %v7642
  %v7659 = vmul.f32 %v7590, %v7643
  %v7660 = vmul.f32 %v7592, %v7644
  %v7661 = vmul.f32 %v7594, %v7645
  %v7662 = vmul.f32 %v7596, %v7646
  %v7663 = vmul.f32 %v7598, %v7647
  %v7664 = vmul.f32 %v7600, %v7648
  %v7665 = vpack.c.bf16 %v7650, %v7649
  %v7666 = vpack.c.bf16 %v7652, %v7651
  %v7667 = vpack.c.bf16 %v7654, %v7653
  %v7668 = vpack.c.bf16 %v7656, %v7655
  %v7669 = vpack.c.bf16 %v7658, %v7657
  %v7670 = vpack.c.bf16 %v7660, %v7659
  %v7671 = vpack.c.bf16 %v7662, %v7661
  %v7672 = vpack.c.bf16 %v7664, %v7663
  %7673 = vrot.lane.b32.xlu0 %v5866, 40
  %v7674 = vpop.permute.xlu0 %7673
  %7675 = vrot.lane.b32.xlu0 %v5867, 40
  %v7676 = vpop.permute.xlu0 %7675
  %7677 = vrot.lane.b32.xlu0 %v5868, 40
  %v7678 = vpop.permute.xlu0 %7677
  %7679 = vrot.lane.b32.xlu0 %v5869, 40
  %v7680 = vpop.permute.xlu0 %7679
  %7681 = vrot.lane.b32.xlu0 %v5870, 40
  %v7682 = vpop.permute.xlu0 %7681
  %7683 = vrot.lane.b32.xlu0 %v5871, 40
  %v7684 = vpop.permute.xlu0 %7683
  %7685 = vrot.lane.b32.xlu0 %v5872, 40
  %v7686 = vpop.permute.xlu0 %7685
  %7687 = vrot.lane.b32.xlu0 %v5873, 40
  %v7688 = vpop.permute.xlu0 %7687
  %7697 = vmatprep.subr.bf16.mxu0 0
  %7698 = vmatpush1.bf16.msra.mxu0 %v7674
  %7699 = vmatprep.subr.bf16.mxu0 0
  %7700 = vmatpush1.bf16.msra.mxu0 %v7676
  %7701 = vmatprep.subr.bf16.mxu0 0
  %7702 = vmatpush1.bf16.msra.mxu0 %v7678
  %7703 = vmatprep.subr.bf16.mxu0 0
  %7704 = vmatpush1.bf16.msra.mxu0 %v7680
  %7705 = vmatprep.subr.bf16.mxu0 0
  %7706 = vmatpush1.bf16.msra.mxu0 %v7682
  %7707 = vmatprep.subr.bf16.mxu0 0
  %7708 = vmatpush1.bf16.msra.mxu0 %v7684
  %7709 = vmatprep.subr.bf16.mxu0 0
  %7710 = vmatpush1.bf16.msra.mxu0 %v7686
  %7711 = vmatprep.subr.bf16.mxu0 0
  %7712 = vmatpush1.bf16.msra.mxu0 %v7688
  %7713 = vmatprep.subr.bf16.mxu0 0
  %7714 = vmatpush1.bf16.msra.mxu0 0
  %7715 = vmatprep.subr.bf16.mxu0 0
  %7716 = vmatpush1.bf16.msra.mxu0 0
  %7717 = vmatprep.subr.bf16.mxu0 0
  %7718 = vmatpush1.bf16.msra.mxu0 0
  %7719 = vmatprep.subr.bf16.mxu0 0
  %7720 = vmatpush1.bf16.msra.mxu0 0
  %7721 = vmatprep.subr.bf16.mxu0 0
  %7722 = vmatpush1.bf16.msra.mxu0 0
  %7723 = vmatprep.subr.bf16.mxu0 0
  %7724 = vmatpush1.bf16.msra.mxu0 0
  %7725 = vmatprep.subr.bf16.mxu0 0
  %7726 = vmatpush1.bf16.msra.mxu0 0
  %7727 = vmatprep.subr.bf16.mxu0 0
  %7728 = vmatpush1.bf16.msra.mxu0 0
  %7729 = vmatprep.mubr.bf16.mxu0 0
  %7730 = vmatmul.mubr.bf16.gmra.mrb[0].mxu0 %v7665
  %v7731 = vpop.f32.mrb[0].mxu0
  %v7732 = vadd.f32 0.0, %v7731
  %v7733 = vpop.f32.mrb[0].mxu0
  %v7734 = vpop.f32.mrb[0].mxu0
  %v7735 = vadd.f32 0.0, %v7734
  %v7736 = vpop.f32.mrb[0].mxu0
  %7737 = vmatprep.mubr.bf16.mxu0 0
  %7738 = vmatmul.mubr.bf16.gmra.mrb[0].mxu0 %v7666
  %v7739 = vpop.f32.mrb[0].mxu0
  %v7740 = vadd.f32 0.0, %v7739
  %v7741 = vpop.f32.mrb[0].mxu0
  %v7742 = vpop.f32.mrb[0].mxu0
  %v7743 = vadd.f32 0.0, %v7742
  %v7744 = vpop.f32.mrb[0].mxu0
  %7745 = vmatprep.mubr.bf16.mxu0 0
  %7746 = vmatmul.mubr.bf16.gmra.mrb[0].mxu0 %v7667
  %v7747 = vpop.f32.mrb[0].mxu0
  %v7748 = vadd.f32 0.0, %v7747
  %v7749 = vpop.f32.mrb[0].mxu0
  %v7750 = vpop.f32.mrb[0].mxu0
  %v7751 = vadd.f32 0.0, %v7750
  %v7752 = vpop.f32.mrb[0].mxu0
  %7753 = vmatprep.mubr.bf16.mxu0 0
  %7754 = vmatmul.mubr.bf16.gmra.mrb[0].mxu0 %v7668
  %v7755 = vpop.f32.mrb[0].mxu0
  %v7756 = vadd.f32 0.0, %v7755
  %v7757 = vpop.f32.mrb[0].mxu0
  %v7758 = vpop.f32.mrb[0].mxu0
  %v7759 = vadd.f32 0.0, %v7758
  %v7760 = vpop.f32.mrb[0].mxu0
  %7761 = vmatprep.mubr.bf16.mxu0 0
  %7762 = vmatmul.mubr.bf16.gmra.mrb[0].mxu0 %v7669
  %v7763 = vpop.f32.mrb[0].mxu0
  %v7764 = vadd.f32 0.0, %v7763
  %v7765 = vpop.f32.mrb[0].mxu0
  %v7766 = vpop.f32.mrb[0].mxu0
  %v7767 = vadd.f32 0.0, %v7766
  %v7768 = vpop.f32.mrb[0].mxu0
  %7769 = vmatprep.mubr.bf16.mxu0 0
  %7770 = vmatmul.mubr.bf16.gmra.mrb[0].mxu0 %v7670
  %v7771 = vpop.f32.mrb[0].mxu0
  %v7772 = vadd.f32 0.0, %v7771
  %v7773 = vpop.f32.mrb[0].mxu0
  %v7774 = vpop.f32.mrb[0].mxu0
  %v7775 = vadd.f32 0.0, %v7774
  %v7776 = vpop.f32.mrb[0].mxu0
  %7777 = vmatprep.mubr.bf16.mxu0 0
  %7778 = vmatmul.mubr.bf16.gmra.mrb[0].mxu0 %v7671
  %v7779 = vpop.f32.mrb[0].mxu0
  %v7780 = vadd.f32 0.0, %v7779
  %v7781 = vpop.f32.mrb[0].mxu0
  %v7782 = vpop.f32.mrb[0].mxu0
  %v7783 = vadd.f32 0.0, %v7782
  %v7784 = vpop.f32.mrb[0].mxu0
  %7785 = vmatprep.mubr.bf16.mxu0 0
  %7786 = vmatmul.mubr.bf16.gmra.mrb[0].mxu0 %v7672
  %v7787 = vpop.f32.mrb[0].mxu0
  %v7788 = vadd.f32 0.0, %v7787
  %v7789 = vpop.f32.mrb[0].mxu0
  %v7790 = vpop.f32.mrb[0].mxu0
  %v7791 = vadd.f32 0.0, %v7790
  %v7792 = vpop.f32.mrb[0].mxu0
  %7793 = vdwg.mxu0
  %7810 = vrot.lane.b32.xlu0 %v6768, 8
  %v7811 = vpop.permute.xlu0 %7810
  %7812 = vrot.lane.b32.xlu0 %v6771, 8
  %v7813 = vpop.permute.xlu0 %7812
  %7814 = vrot.lane.b32.xlu0 %v6776, 8
  %v7815 = vpop.permute.xlu0 %7814
  %7816 = vrot.lane.b32.xlu0 %v6779, 8
  %v7817 = vpop.permute.xlu0 %7816
  %7818 = vrot.lane.b32.xlu0 %v6784, 8
  %v7819 = vpop.permute.xlu0 %7818
  %7820 = vrot.lane.b32.xlu0 %v6787, 8
  %v7821 = vpop.permute.xlu0 %7820
  %7822 = vrot.lane.b32.xlu0 %v6792, 8
  %v7823 = vpop.permute.xlu0 %7822
  %7824 = vrot.lane.b32.xlu0 %v6795, 8
  %v7825 = vpop.permute.xlu0 %7824
  %7826 = vrot.lane.b32.xlu0 %v6800, 8
  %v7827 = vpop.permute.xlu0 %7826
  %7828 = vrot.lane.b32.xlu0 %v6803, 8
  %v7829 = vpop.permute.xlu0 %7828
  %7830 = vrot.lane.b32.xlu0 %v6808, 8
  %v7831 = vpop.permute.xlu0 %7830
  %7832 = vrot.lane.b32.xlu0 %v6811, 8
  %v7833 = vpop.permute.xlu0 %7832
  %7834 = vrot.lane.b32.xlu0 %v6816, 8
  %v7835 = vpop.permute.xlu0 %7834
  %7836 = vrot.lane.b32.xlu0 %v6819, 8
  %v7837 = vpop.permute.xlu0 %7836
  %7838 = vrot.lane.b32.xlu0 %v6824, 8
  %v7839 = vpop.permute.xlu0 %7838
  %7840 = vrot.lane.b32.xlu0 %v6827, 8
  %v7841 = vpop.permute.xlu0 %7840
  %7874 = vrot.lane.b32.xlu0 %v7250, 16
  %v7875 = vpop.permute.xlu0 %7874
  %7876 = vrot.lane.b32.xlu0 %v7253, 16
  %v7877 = vpop.permute.xlu0 %7876
  %7878 = vrot.lane.b32.xlu0 %v7258, 16
  %v7879 = vpop.permute.xlu0 %7878
  %7880 = vrot.lane.b32.xlu0 %v7261, 16
  %v7881 = vpop.permute.xlu0 %7880
  %7882 = vrot.lane.b32.xlu0 %v7266, 16
  %v7883 = vpop.permute.xlu0 %7882
  %7884 = vrot.lane.b32.xlu0 %v7269, 16
  %v7885 = vpop.permute.xlu0 %7884
  %7886 = vrot.lane.b32.xlu0 %v7274, 16
  %v7887 = vpop.permute.xlu0 %7886
  %7888 = vrot.lane.b32.xlu0 %v7277, 16
  %v7889 = vpop.permute.xlu0 %7888
  %7890 = vrot.lane.b32.xlu0 %v7282, 16
  %v7891 = vpop.permute.xlu0 %7890
  %7892 = vrot.lane.b32.xlu0 %v7285, 16
  %v7893 = vpop.permute.xlu0 %7892
  %7894 = vrot.lane.b32.xlu0 %v7290, 16
  %v7895 = vpop.permute.xlu0 %7894
  %7896 = vrot.lane.b32.xlu0 %v7293, 16
  %v7897 = vpop.permute.xlu0 %7896
  %7898 = vrot.lane.b32.xlu0 %v7298, 16
  %v7899 = vpop.permute.xlu0 %7898
  %7900 = vrot.lane.b32.xlu0 %v7301, 16
  %v7901 = vpop.permute.xlu0 %7900
  %7902 = vrot.lane.b32.xlu0 %v7306, 16
  %v7903 = vpop.permute.xlu0 %7902
  %7904 = vrot.lane.b32.xlu0 %v7309, 16
  %v7905 = vpop.permute.xlu0 %7904
  %7938 = vrot.lane.b32.xlu0 %v7732, 24
  %v7939 = vpop.permute.xlu0 %7938
  %7940 = vrot.lane.b32.xlu0 %v7735, 24
  %v7941 = vpop.permute.xlu0 %7940
  %7942 = vrot.lane.b32.xlu0 %v7740, 24
  %v7943 = vpop.permute.xlu0 %7942
  %7944 = vrot.lane.b32.xlu0 %v7743, 24
  %v7945 = vpop.permute.xlu0 %7944
  %7946 = vrot.lane.b32.xlu0 %v7748, 24
  %v7947 = vpop.permute.xlu0 %7946
  %7948 = vrot.lane.b32.xlu0 %v7751, 24
  %v7949 = vpop.permute.xlu0 %7948
  %7950 = vrot.lane.b32.xlu0 %v7756, 24
  %v7951 = vpop.permute.xlu0 %7950
  %7952 = vrot.lane.b32.xlu0 %v7759, 24
  %v7953 = vpop.permute.xlu0 %7952
  %7954 = vrot.lane.b32.xlu0 %v7764, 24
  %v7955 = vpop.permute.xlu0 %7954
  %7956 = vrot.lane.b32.xlu0 %v7767, 24
  %v7957 = vpop.permute.xlu0 %7956
  %7958 = vrot.lane.b32.xlu0 %v7772, 24
  %v7959 = vpop.permute.xlu0 %7958
  %7960 = vrot.lane.b32.xlu0 %v7775, 24
  %v7961 = vpop.permute.xlu0 %7960
  %7962 = vrot.lane.b32.xlu0 %v7780, 24
  %v7963 = vpop.permute.xlu0 %7962
  %7964 = vrot.lane.b32.xlu0 %v7783, 24
  %v7965 = vpop.permute.xlu0 %7964
  %7966 = vrot.lane.b32.xlu0 %v7788, 24
  %v7967 = vpop.permute.xlu0 %7966
  %7968 = vrot.lane.b32.xlu0 %v7791, 24
  %v7969 = vpop.permute.xlu0 %7968
  %v7986 = vsel %vm2362, %v6286, %v7811
  %v7987 = vsel %vm2362, %v6289, %v7813
  %v7988 = vsel %vm2362, %v6294, %v7815
  %v7989 = vsel %vm2362, %v6297, %v7817
  %v7990 = vsel %vm2362, %v6302, %v7819
  %v7991 = vsel %vm2362, %v6305, %v7821
  %v7992 = vsel %vm2362, %v6310, %v7823
  %v7993 = vsel %vm2362, %v6313, %v7825
  %v7994 = vsel %vm2362, %v6318, %v7827
  %v7995 = vsel %vm2362, %v6321, %v7829
  %v7996 = vsel %vm2362, %v6326, %v7831
  %v7997 = vsel %vm2362, %v6329, %v7833
  %v7998 = vsel %vm2362, %v6334, %v7835
  %v7999 = vsel %vm2362, %v6337, %v7837
  %v8000 = vsel %vm2362, %v6342, %v7839
  %v8001 = vsel %vm2362, %v6345, %v7841
  %v8002 = vsel %vm4467, %v7986, %v7875
  %v8003 = vsel %vm4467, %v7987, %v7877
  %v8004 = vsel %vm4467, %v7988, %v7879
  %v8005 = vsel %vm4467, %v7989, %v7881
  %v8006 = vsel %vm4467, %v7990, %v7883
  %v8007 = vsel %vm4467, %v7991, %v7885
  %v8008 = vsel %vm4467, %v7992, %v7887
  %v8009 = vsel %vm4467, %v7993, %v7889
  %v8010 = vsel %vm4467, %v7994, %v7891
  %v8011 = vsel %vm4467, %v7995, %v7893
  %v8012 = vsel %vm4467, %v7996, %v7895
  %v8013 = vsel %vm4467, %v7997, %v7897
  %v8014 = vsel %vm4467, %v7998, %v7899
  %v8015 = vsel %vm4467, %v7999, %v7901
  %v8016 = vsel %vm4467, %v8000, %v7903
  %v8017 = vsel %vm4467, %v8001, %v7905
  %v8018 = vsel %vm4484, %v8002, %v7939
  %v8019 = vsel %vm4484, %v8003, %v7941
  %v8020 = vsel %vm4484, %v8004, %v7943
  %v8021 = vsel %vm4484, %v8005, %v7945
  %v8022 = vsel %vm4484, %v8006, %v7947
  %v8023 = vsel %vm4484, %v8007, %v7949
  %v8024 = vsel %vm4484, %v8008, %v7951
  %v8025 = vsel %vm4484, %v8009, %v7953
  %v8026 = vsel %vm4484, %v8010, %v7955
  %v8027 = vsel %vm4484, %v8011, %v7957
  %v8028 = vsel %vm4484, %v8012, %v7959
  %v8029 = vsel %vm4484, %v8013, %v7961
  %v8030 = vsel %vm4484, %v8014, %v7963
  %v8031 = vsel %vm4484, %v8015, %v7965
  %v8032 = vsel %vm4484, %v8016, %v7967
  %v8033 = vsel %vm4484, %v8017, %v7969
  %v8034 = vld [vmem:[%s2 + $0x90] sm:$0xf]
  %v8035 = vld [vmem:[%s2 + $0x94] sm:$0xf]
  %v8036 = vld [vmem:[%s2 + $0x98] sm:$0xf]
  %v8037 = vld [vmem:[%s2 + $0x9c] sm:$0xf]
  %v8038 = vpack.c.bf16 %v8019, %v8018
  %v8039 = vpack.c.bf16 %v8021, %v8020
  %v8040 = vpack.c.bf16 %v8023, %v8022
  %v8041 = vpack.c.bf16 %v8025, %v8024
  %v8042 = vpack.c.bf16 %v8027, %v8026
  %v8043 = vpack.c.bf16 %v8029, %v8028
  %v8044 = vpack.c.bf16 %v8031, %v8030
  %v8045 = vpack.c.bf16 %v8033, %v8032
  %v8046 = vld [vmem:[%s3 + $0x17] sm:$0x1]
  %v8047 = vlaneseq
  %v8048 = vshrl.u32 %v8047, 7
  %v8049 = vsub.s32 0, %v8048
  %v8050 = vrot.slane %v8046, %v8049
  %v8055 = vunpack.c.l.b16 %v8034
  %v8056 = vunpack.c.l.b16 %v8035
  %v8057 = vunpack.c.l.b16 %v8036
  %v8058 = vunpack.c.l.b16 %v8037
  %v8059 = vpack.c.b16 %v8056, %v8055
  %v8060 = vpack.c.b16 %v8058, %v8057
  %v8064 = vsel %vm1641, %v8038, 0
  %v8067 = vsel %vm1641, %v8039, 0
  %v8070 = vsel %vm1641, %v8040, 0
  %v8073 = vsel %vm1641, %v8041, 0
  %v8076 = vsel %vm1641, %v8042, 0
  %v8079 = vsel %vm1641, %v8043, 0
  %v8082 = vsel %vm1641, %v8044, 0
  %v8085 = vsel %vm1641, %v8045, 0
  %8087 = vmatprep.subr.bf16.mxu0 0
  %8088 = vmatpush1.bf16.msra.mxu0 %v8059
  %8089 = vmatprep.subr.bf16.mxu0 0
  %8090 = vmatpush1.bf16.msra.mxu0 %v8060
  %8091 = vmatprep.subr.bf16.mxu0 0
  %8092 = vmatpush1.bf16.msra.mxu0 0
  %8093 = vmatprep.subr.bf16.mxu0 0
  %8094 = vmatpush1.bf16.msra.mxu0 0
  %8095 = vmatprep.subr.bf16.mxu0 0
  %8096 = vmatpush1.bf16.msra.mxu0 0
  %8097 = vmatprep.subr.bf16.mxu0 0
  %8098 = vmatpush1.bf16.msra.mxu0 0
  %8099 = vmatprep.subr.bf16.mxu0 0
  %8100 = vmatpush1.bf16.msra.mxu0 0
  %8101 = vmatprep.subr.bf16.mxu0 0
  %8102 = vmatpush1.bf16.msra.mxu0 0
  %8103 = vmatprep.subr.bf16.mxu0 0
  %8104 = vmatpush1.bf16.msra.mxu0 0
  %8105 = vmatprep.subr.bf16.mxu0 0
  %8106 = vmatpush1.bf16.msra.mxu0 0
  %8107 = vmatprep.subr.bf16.mxu0 0
  %8108 = vmatpush1.bf16.msra.mxu0 0
  %8109 = vmatprep.subr.bf16.mxu0 0
  %8110 = vmatpush1.bf16.msra.mxu0 0
  %8111 = vmatprep.subr.bf16.mxu0 0
  %8112 = vmatpush1.bf16.msra.mxu0 0
  %8113 = vmatprep.subr.bf16.mxu0 0
  %8114 = vmatpush1.bf16.msra.mxu0 0
  %8115 = vmatprep.subr.bf16.mxu0 0
  %8116 = vmatpush1.bf16.msra.mxu0 0
  %8117 = vmatprep.subr.bf16.mxu0 0
  %8118 = vmatpush1.bf16.msra.mxu0 0
  %8119 = vmatprep.mubr.bf16.mxu0 0
  %8120 = vmatmul.mubr.bf16.gmra.mrb[0].mxu0 %v8064
  %v8121 = vpop.f32.mrb[0].mxu0
  %v8122 = vadd.f32 %v8050, %v8121
  %v8123 = vpop.f32.mrb[0].mxu0
  %v8124 = vpop.f32.mrb[0].mxu0
  %v8125 = vadd.f32 %v8050, %v8124
  %v8126 = vpop.f32.mrb[0].mxu0
  %8127 = vmatprep.mubr.bf16.mxu0 0
  %8128 = vmatmul.mubr.bf16.gmra.mrb[0].mxu0 %v8067
  %v8129 = vpop.f32.mrb[0].mxu0
  %v8130 = vadd.f32 %v8050, %v8129
  %v8131 = vpop.f32.mrb[0].mxu0
  %v8132 = vpop.f32.mrb[0].mxu0
  %v8133 = vadd.f32 %v8050, %v8132
  %v8134 = vpop.f32.mrb[0].mxu0
  %8135 = vmatprep.mubr.bf16.mxu0 0
  %8136 = vmatmul.mubr.bf16.gmra.mrb[0].mxu0 %v8070
  %v8137 = vpop.f32.mrb[0].mxu0
  %v8138 = vadd.f32 %v8050, %v8137
  %v8139 = vpop.f32.mrb[0].mxu0
  %v8140 = vpop.f32.mrb[0].mxu0
  %v8141 = vadd.f32 %v8050, %v8140
  %v8142 = vpop.f32.mrb[0].mxu0
  %8143 = vmatprep.mubr.bf16.mxu0 0
  %8144 = vmatmul.mubr.bf16.gmra.mrb[0].mxu0 %v8073
  %v8145 = vpop.f32.mrb[0].mxu0
  %v8146 = vadd.f32 %v8050, %v8145
  %v8147 = vpop.f32.mrb[0].mxu0
  %v8148 = vpop.f32.mrb[0].mxu0
  %v8149 = vadd.f32 %v8050, %v8148
  %v8150 = vpop.f32.mrb[0].mxu0
  %8151 = vmatprep.mubr.bf16.mxu0 0
  %8152 = vmatmul.mubr.bf16.gmra.mrb[0].mxu0 %v8076
  %v8153 = vpop.f32.mrb[0].mxu0
  %v8154 = vadd.f32 %v8050, %v8153
  %v8155 = vpop.f32.mrb[0].mxu0
  %v8156 = vpop.f32.mrb[0].mxu0
  %v8157 = vadd.f32 %v8050, %v8156
  %v8158 = vpop.f32.mrb[0].mxu0
  %8159 = vmatprep.mubr.bf16.mxu0 0
  %8160 = vmatmul.mubr.bf16.gmra.mrb[0].mxu0 %v8079
  %v8161 = vpop.f32.mrb[0].mxu0
  %v8162 = vadd.f32 %v8050, %v8161
  %v8163 = vpop.f32.mrb[0].mxu0
  %v8164 = vpop.f32.mrb[0].mxu0
  %v8165 = vadd.f32 %v8050, %v8164
  %v8166 = vpop.f32.mrb[0].mxu0
  %8167 = vmatprep.mubr.bf16.mxu0 0
  %8168 = vmatmul.mubr.bf16.gmra.mrb[0].mxu0 %v8082
  %v8169 = vpop.f32.mrb[0].mxu0
  %v8170 = vadd.f32 %v8050, %v8169
  %v8171 = vpop.f32.mrb[0].mxu0
  %v8172 = vpop.f32.mrb[0].mxu0
  %v8173 = vadd.f32 %v8050, %v8172
  %v8174 = vpop.f32.mrb[0].mxu0
  %8175 = vmatprep.mubr.bf16.mxu0 0
  %8176 = vmatmul.mubr.bf16.gmra.mrb[0].mxu0 %v8085
  %v8177 = vpop.f32.mrb[0].mxu0
  %v8178 = vadd.f32 %v8050, %v8177
  %v8179 = vpop.f32.mrb[0].mxu0
  %v8180 = vpop.f32.mrb[0].mxu0
  %v8181 = vadd.f32 %v8050, %v8180
  %v8182 = vpop.f32.mrb[0].mxu0
  %8183 = vdwg.mxu0
  %v8184 = vadd.f32 %v5651, %v8122
  %v8185 = vadd.f32 %v5652, %v8125
  %v8186 = vadd.f32 %v5653, %v8130
  %v8187 = vadd.f32 %v5654, %v8133
  %v8188 = vadd.f32 %v5655, %v8138
  %v8189 = vadd.f32 %v5656, %v8141
  %v8190 = vadd.f32 %v5657, %v8146
  %v8191 = vadd.f32 %v5658, %v8149
  %v8192 = vadd.f32 %v5659, %v8154
  %v8193 = vadd.f32 %v5660, %v8157
  %v8194 = vadd.f32 %v5661, %v8162
  %v8195 = vadd.f32 %v5662, %v8165
  %v8196 = vadd.f32 %v5663, %v8170
  %v8197 = vadd.f32 %v5664, %v8173
  %v8198 = vadd.f32 %v5665, %v8178
  %v8199 = vadd.f32 %v5666, %v8181
  %v8200 = vld [vmem:[%s3 + $0x18] sm:$0x1]
  %v8201 = vld [vmem:[%s3 + $0x19] sm:$0x1]
  %v8202 = vsel %vm1641, %v8184, 0.0
  %8203 = vadd.xlane.f32.xlu0 %v8202
  %v8204 = vpop.xlane.xlu0 %8203
  %v8205 = vsel %vm1641, %v8185, 0.0
  %8206 = vadd.xlane.f32.xlu0 %v8205
  %v8207 = vpop.xlane.xlu0 %8206
  %v8208 = vsel %vm1641, %v8186, 0.0
  %8209 = vadd.xlane.f32.xlu0 %v8208
  %v8210 = vpop.xlane.xlu0 %8209
  %v8211 = vsel %vm1641, %v8187, 0.0
  %8212 = vadd.xlane.f32.xlu0 %v8211
  %v8213 = vpop.xlane.xlu0 %8212
  %v8214 = vsel %vm1641, %v8188, 0.0
  %8215 = vadd.xlane.f32.xlu0 %v8214
  %v8216 = vpop.xlane.xlu0 %8215
  %v8217 = vsel %vm1641, %v8189, 0.0
  %8218 = vadd.xlane.f32.xlu0 %v8217
  %v8219 = vpop.xlane.xlu0 %8218
  %v8220 = vsel %vm1641, %v8190, 0.0
  %8221 = vadd.xlane.f32.xlu0 %v8220
  %v8222 = vpop.xlane.xlu0 %8221
  %v8223 = vsel %vm1641, %v8191, 0.0
  %8224 = vadd.xlane.f32.xlu0 %v8223
  %v8225 = vpop.xlane.xlu0 %8224
  %v8226 = vsel %vm1641, %v8192, 0.0
  %8227 = vadd.xlane.f32.xlu0 %v8226
  %v8228 = vpop.xlane.xlu0 %8227
  %v8229 = vsel %vm1641, %v8193, 0.0
  %8230 = vadd.xlane.f32.xlu0 %v8229
  %v8231 = vpop.xlane.xlu0 %8230
  %v8232 = vsel %vm1641, %v8194, 0.0
  %8233 = vadd.xlane.f32.xlu0 %v8232
  %v8234 = vpop.xlane.xlu0 %8233
  %v8235 = vsel %vm1641, %v8195, 0.0
  %8236 = vadd.xlane.f32.xlu0 %v8235
  %v8237 = vpop.xlane.xlu0 %8236
  %v8238 = vsel %vm1641, %v8196, 0.0
  %8239 = vadd.xlane.f32.xlu0 %v8238
  %v8240 = vpop.xlane.xlu0 %8239
  %v8241 = vsel %vm1641, %v8197, 0.0
  %8242 = vadd.xlane.f32.xlu0 %v8241
  %v8243 = vpop.xlane.xlu0 %8242
  %v8244 = vsel %vm1641, %v8198, 0.0
  %8245 = vadd.xlane.f32.xlu0 %v8244
  %v8246 = vpop.xlane.xlu0 %8245
  %v8247 = vsel %vm1641, %v8199, 0.0
  %8248 = vadd.xlane.f32.xlu0 %v8247
  %v8249 = vpop.xlane.xlu0 %8248
  %v8250 = vmul.f32 %v8204, %v1813
  %v8251 = vmul.f32 %v8207, %v1813
  %v8252 = vmul.f32 %v8210, %v1813
  %v8253 = vmul.f32 %v8213, %v1813
  %v8254 = vmul.f32 %v8216, %v1813
  %v8255 = vmul.f32 %v8219, %v1813
  %v8256 = vmul.f32 %v8222, %v1813
  %v8257 = vmul.f32 %v8225, %v1813
  %v8258 = vmul.f32 %v8228, %v1813
  %v8259 = vmul.f32 %v8231, %v1813
  %v8260 = vmul.f32 %v8234, %v1813
  %v8261 = vmul.f32 %v8237, %v1813
  %v8262 = vmul.f32 %v8240, %v1813
  %v8263 = vmul.f32 %v8243, %v1813
  %v8264 = vmul.f32 %v8246, %v1813
  %v8265 = vmul.f32 %v8249, %v1813
  %v8266 = vsub.f32 %v8184, %v8250
  %v8267 = vsub.f32 %v8185, %v8251
  %v8268 = vsub.f32 %v8186, %v8252
  %v8269 = vsub.f32 %v8187, %v8253
  %v8270 = vsub.f32 %v8188, %v8254
  %v8271 = vsub.f32 %v8189, %v8255
  %v8272 = vsub.f32 %v8190, %v8256
  %v8273 = vsub.f32 %v8191, %v8257
  %v8274 = vsub.f32 %v8192, %v8258
  %v8275 = vsub.f32 %v8193, %v8259
  %v8276 = vsub.f32 %v8194, %v8260
  %v8277 = vsub.f32 %v8195, %v8261
  %v8278 = vsub.f32 %v8196, %v8262
  %v8279 = vsub.f32 %v8197, %v8263
  %v8280 = vsub.f32 %v8198, %v8264
  %v8281 = vsub.f32 %v8199, %v8265
  %v8282 = vmul.f32 %v8266, %v8266
  %v8283 = vmul.f32 %v8267, %v8267
  %v8284 = vmul.f32 %v8268, %v8268
  %v8285 = vmul.f32 %v8269, %v8269
  %v8286 = vmul.f32 %v8270, %v8270
  %v8287 = vmul.f32 %v8271, %v8271
  %v8288 = vmul.f32 %v8272, %v8272
  %v8289 = vmul.f32 %v8273, %v8273
  %v8290 = vmul.f32 %v8274, %v8274
  %v8291 = vmul.f32 %v8275, %v8275
  %v8292 = vmul.f32 %v8276, %v8276
  %v8293 = vmul.f32 %v8277, %v8277
  %v8294 = vmul.f32 %v8278, %v8278
  %v8295 = vmul.f32 %v8279, %v8279
  %v8296 = vmul.f32 %v8280, %v8280
  %v8297 = vmul.f32 %v8281, %v8281
  %v8298 = vsel %vm1641, %v8282, 0.0
  %8299 = vadd.xlane.f32.xlu0 %v8298
  %v8300 = vpop.xlane.xlu0 %8299
  %v8301 = vsel %vm1641, %v8283, 0.0
  %8302 = vadd.xlane.f32.xlu0 %v8301
  %v8303 = vpop.xlane.xlu0 %8302
  %v8304 = vsel %vm1641, %v8284, 0.0
  %8305 = vadd.xlane.f32.xlu0 %v8304
  %v8306 = vpop.xlane.xlu0 %8305
  %v8307 = vsel %vm1641, %v8285, 0.0
  %8308 = vadd.xlane.f32.xlu0 %v8307
  %v8309 = vpop.xlane.xlu0 %8308
  %v8310 = vsel %vm1641, %v8286, 0.0
  %8311 = vadd.xlane.f32.xlu0 %v8310
  %v8312 = vpop.xlane.xlu0 %8311
  %v8313 = vsel %vm1641, %v8287, 0.0
  %8314 = vadd.xlane.f32.xlu0 %v8313
  %v8315 = vpop.xlane.xlu0 %8314
  %v8316 = vsel %vm1641, %v8288, 0.0
  %8317 = vadd.xlane.f32.xlu0 %v8316
  %v8318 = vpop.xlane.xlu0 %8317
  %v8319 = vsel %vm1641, %v8289, 0.0
  %8320 = vadd.xlane.f32.xlu0 %v8319
  %v8321 = vpop.xlane.xlu0 %8320
  %v8322 = vsel %vm1641, %v8290, 0.0
  %8323 = vadd.xlane.f32.xlu0 %v8322
  %v8324 = vpop.xlane.xlu0 %8323
  %v8325 = vsel %vm1641, %v8291, 0.0
  %8326 = vadd.xlane.f32.xlu0 %v8325
  %v8327 = vpop.xlane.xlu0 %8326
  %v8328 = vsel %vm1641, %v8292, 0.0
  %8329 = vadd.xlane.f32.xlu0 %v8328
  %v8330 = vpop.xlane.xlu0 %8329
  %v8331 = vsel %vm1641, %v8293, 0.0
  %8332 = vadd.xlane.f32.xlu0 %v8331
  %v8333 = vpop.xlane.xlu0 %8332
  %v8334 = vsel %vm1641, %v8294, 0.0
  %8335 = vadd.xlane.f32.xlu0 %v8334
  %v8336 = vpop.xlane.xlu0 %8335
  %v8337 = vsel %vm1641, %v8295, 0.0
  %8338 = vadd.xlane.f32.xlu0 %v8337
  %v8339 = vpop.xlane.xlu0 %8338
  %v8340 = vsel %vm1641, %v8296, 0.0
  %8341 = vadd.xlane.f32.xlu0 %v8340
  %v8342 = vpop.xlane.xlu0 %8341
  %v8343 = vsel %vm1641, %v8297, 0.0
  %8344 = vadd.xlane.f32.xlu0 %v8343
  %v8345 = vpop.xlane.xlu0 %8344
  %v8346 = vmul.f32 %v8300, %v1813
  %v8347 = vmul.f32 %v8303, %v1813
  %v8348 = vmul.f32 %v8306, %v1813
  %v8349 = vmul.f32 %v8309, %v1813
  %v8350 = vmul.f32 %v8312, %v1813
  %v8351 = vmul.f32 %v8315, %v1813
  %v8352 = vmul.f32 %v8318, %v1813
  %v8353 = vmul.f32 %v8321, %v1813
  %v8354 = vmul.f32 %v8324, %v1813
  %v8355 = vmul.f32 %v8327, %v1813
  %v8356 = vmul.f32 %v8330, %v1813
  %v8357 = vmul.f32 %v8333, %v1813
  %v8358 = vmul.f32 %v8336, %v1813
  %v8359 = vmul.f32 %v8339, %v1813
  %v8360 = vmul.f32 %v8342, %v1813
  %v8361 = vmul.f32 %v8345, %v1813
  %v8362 = vadd.f32 %v8346, 1e-05
  %v8363 = vadd.f32 %v8347, 1e-05
  %v8364 = vadd.f32 %v8348, 1e-05
  %v8365 = vadd.f32 %v8349, 1e-05
  %v8366 = vadd.f32 %v8350, 1e-05
  %v8367 = vadd.f32 %v8351, 1e-05
  %v8368 = vadd.f32 %v8352, 1e-05
  %v8369 = vadd.f32 %v8353, 1e-05
  %v8370 = vadd.f32 %v8354, 1e-05
  %v8371 = vadd.f32 %v8355, 1e-05
  %v8372 = vadd.f32 %v8356, 1e-05
  %v8373 = vadd.f32 %v8357, 1e-05
  %v8374 = vadd.f32 %v8358, 1e-05
  %v8375 = vadd.f32 %v8359, 1e-05
  %v8376 = vadd.f32 %v8360, 1e-05
  %v8377 = vadd.f32 %v8361, 1e-05
  %v8378 = vrsqrt.pop %v8362
  %v8379 = vrsqrt.pop %v8363
  %v8380 = vrsqrt.pop %v8364
  %v8381 = vrsqrt.pop %v8365
  %v8382 = vrsqrt.pop %v8366
  %v8383 = vrsqrt.pop %v8367
  %v8384 = vrsqrt.pop %v8368
  %v8385 = vrsqrt.pop %v8369
  %v8386 = vrsqrt.pop %v8370
  %v8387 = vrsqrt.pop %v8371
  %v8388 = vrsqrt.pop %v8372
  %v8389 = vrsqrt.pop %v8373
  %v8390 = vrsqrt.pop %v8374
  %v8391 = vrsqrt.pop %v8375
  %v8392 = vrsqrt.pop %v8376
  %v8393 = vrsqrt.pop %v8377
  %v8394 = vmul.f32 %v8266, %v8378
  %v8395 = vmul.f32 %v8267, %v8379
  %v8396 = vmul.f32 %v8268, %v8380
  %v8397 = vmul.f32 %v8269, %v8381
  %v8398 = vmul.f32 %v8270, %v8382
  %v8399 = vmul.f32 %v8271, %v8383
  %v8400 = vmul.f32 %v8272, %v8384
  %v8401 = vmul.f32 %v8273, %v8385
  %v8402 = vmul.f32 %v8274, %v8386
  %v8403 = vmul.f32 %v8275, %v8387
  %v8404 = vmul.f32 %v8276, %v8388
  %v8405 = vmul.f32 %v8277, %v8389
  %v8406 = vmul.f32 %v8278, %v8390
  %v8407 = vmul.f32 %v8279, %v8391
  %v8408 = vmul.f32 %v8280, %v8392
  %v8409 = vmul.f32 %v8281, %v8393
  %v8410 = vlaneseq
  %v8411 = vshrl.u32 %v8410, 7
  %v8412 = vsub.s32 0, %v8411
  %v8413 = vrot.slane %v8200, %v8412
  %v8414 = vmul.f32 %v8394, %v8413
  %v8415 = vmul.f32 %v8395, %v8413
  %v8416 = vmul.f32 %v8396, %v8413
  %v8417 = vmul.f32 %v8397, %v8413
  %v8418 = vmul.f32 %v8398, %v8413
  %v8419 = vmul.f32 %v8399, %v8413
  %v8420 = vmul.f32 %v8400, %v8413
  %v8421 = vmul.f32 %v8401, %v8413
  %v8422 = vmul.f32 %v8402, %v8413
  %v8423 = vmul.f32 %v8403, %v8413
  %v8424 = vmul.f32 %v8404, %v8413
  %v8425 = vmul.f32 %v8405, %v8413
  %v8426 = vmul.f32 %v8406, %v8413
  %v8427 = vmul.f32 %v8407, %v8413
  %v8428 = vmul.f32 %v8408, %v8413
  %v8429 = vmul.f32 %v8409, %v8413
  %v8430 = vlaneseq
  %v8431 = vshrl.u32 %v8430, 7
  %v8432 = vsub.s32 0, %v8431
  %v8433 = vrot.slane %v8201, %v8432
  %v8434 = vadd.f32 %v8414, %v8433
  %v8435 = vadd.f32 %v8415, %v8433
  %v8436 = vadd.f32 %v8416, %v8433
  %v8437 = vadd.f32 %v8417, %v8433
  %v8438 = vadd.f32 %v8418, %v8433
  %v8439 = vadd.f32 %v8419, %v8433
  %v8440 = vadd.f32 %v8420, %v8433
  %v8441 = vadd.f32 %v8421, %v8433
  %v8442 = vadd.f32 %v8422, %v8433
  %v8443 = vadd.f32 %v8423, %v8433
  %v8444 = vadd.f32 %v8424, %v8433
  %v8445 = vadd.f32 %v8425, %v8433
  %v8446 = vadd.f32 %v8426, %v8433
  %v8447 = vadd.f32 %v8427, %v8433
  %v8448 = vadd.f32 %v8428, %v8433
  %v8449 = vadd.f32 %v8429, %v8433
  %v8450 = vld [vmem:[%s2 + $0xa0] sm:$0xf]
  %v8451 = vld [vmem:[%s2 + $0xa4] sm:$0xf]
  %v8452 = vld [vmem:[%s2 + $0xa8] sm:$0xf]
  %v8453 = vld [vmem:[%s2 + $0xac] sm:$0xf]
  %v8454 = vpack.c.bf16 %v8435, %v8434
  %v8455 = vpack.c.bf16 %v8437, %v8436
  %v8456 = vpack.c.bf16 %v8439, %v8438
  %v8457 = vpack.c.bf16 %v8441, %v8440
  %v8458 = vpack.c.bf16 %v8443, %v8442
  %v8459 = vpack.c.bf16 %v8445, %v8444
  %v8460 = vpack.c.bf16 %v8447, %v8446
  %v8461 = vpack.c.bf16 %v8449, %v8448
  %v8462 = vld [vmem:[%s3 + $0x1a] sm:$0x1]
  %v8463 = vlaneseq
  %v8464 = vshrl.u32 %v8463, 7
  %v8465 = vsub.s32 0, %v8464
  %v8466 = vrot.slane %v8462, %v8465
  %v8471 = vunpack.c.l.b16 %v8450
  %v8472 = vunpack.c.l.b16 %v8451
  %v8473 = vunpack.c.l.b16 %v8452
  %v8474 = vunpack.c.l.b16 %v8453
  %v8475 = vpack.c.b16 %v8472, %v8471
  %v8476 = vpack.c.b16 %v8474, %v8473
  %v8480 = vsel %vm1641, %v8454, 0
  %v8483 = vsel %vm1641, %v8455, 0
  %v8486 = vsel %vm1641, %v8456, 0
  %v8489 = vsel %vm1641, %v8457, 0
  %v8492 = vsel %vm1641, %v8458, 0
  %v8495 = vsel %vm1641, %v8459, 0
  %v8498 = vsel %vm1641, %v8460, 0
  %v8501 = vsel %vm1641, %v8461, 0
  %8503 = vmatprep.subr.bf16.mxu0 0
  %8504 = vmatpush1.bf16.msra.mxu0 %v8475
  %8505 = vmatprep.subr.bf16.mxu0 0
  %8506 = vmatpush1.bf16.msra.mxu0 %v8476
  %8507 = vmatprep.subr.bf16.mxu0 0
  %8508 = vmatpush1.bf16.msra.mxu0 0
  %8509 = vmatprep.subr.bf16.mxu0 0
  %8510 = vmatpush1.bf16.msra.mxu0 0
  %8511 = vmatprep.subr.bf16.mxu0 0
  %8512 = vmatpush1.bf16.msra.mxu0 0
  %8513 = vmatprep.subr.bf16.mxu0 0
  %8514 = vmatpush1.bf16.msra.mxu0 0
  %8515 = vmatprep.subr.bf16.mxu0 0
  %8516 = vmatpush1.bf16.msra.mxu0 0
  %8517 = vmatprep.subr.bf16.mxu0 0
  %8518 = vmatpush1.bf16.msra.mxu0 0
  %8519 = vmatprep.subr.bf16.mxu0 0
  %8520 = vmatpush1.bf16.msra.mxu0 0
  %8521 = vmatprep.subr.bf16.mxu0 0
  %8522 = vmatpush1.bf16.msra.mxu0 0
  %8523 = vmatprep.subr.bf16.mxu0 0
  %8524 = vmatpush1.bf16.msra.mxu0 0
  %8525 = vmatprep.subr.bf16.mxu0 0
  %8526 = vmatpush1.bf16.msra.mxu0 0
  %8527 = vmatprep.subr.bf16.mxu0 0
  %8528 = vmatpush1.bf16.msra.mxu0 0
  %8529 = vmatprep.subr.bf16.mxu0 0
  %8530 = vmatpush1.bf16.msra.mxu0 0
  %8531 = vmatprep.subr.bf16.mxu0 0
  %8532 = vmatpush1.bf16.msra.mxu0 0
  %8533 = vmatprep.subr.bf16.mxu0 0
  %8534 = vmatpush1.bf16.msra.mxu0 0
  %8535 = vmatprep.mubr.bf16.mxu0 0
  %8536 = vmatmul.mubr.bf16.gmra.mrb[0].mxu0 %v8480
  %v8537 = vpop.f32.mrb[0].mxu0
  %v8538 = vadd.f32 %v8466, %v8537
  %v8539 = vpop.f32.mrb[0].mxu0
  %v8540 = vpop.f32.mrb[0].mxu0
  %v8541 = vadd.f32 %v8466, %v8540
  %v8542 = vpop.f32.mrb[0].mxu0
  %8543 = vmatprep.mubr.bf16.mxu0 0
  %8544 = vmatmul.mubr.bf16.gmra.mrb[0].mxu0 %v8483
  %v8545 = vpop.f32.mrb[0].mxu0
  %v8546 = vadd.f32 %v8466, %v8545
  %v8547 = vpop.f32.mrb[0].mxu0
  %v8548 = vpop.f32.mrb[0].mxu0
  %v8549 = vadd.f32 %v8466, %v8548
  %v8550 = vpop.f32.mrb[0].mxu0
  %8551 = vmatprep.mubr.bf16.mxu0 0
  %8552 = vmatmul.mubr.bf16.gmra.mrb[0].mxu0 %v8486
  %v8553 = vpop.f32.mrb[0].mxu0
  %v8554 = vadd.f32 %v8466, %v8553
  %v8555 = vpop.f32.mrb[0].mxu0
  %v8556 = vpop.f32.mrb[0].mxu0
  %v8557 = vadd.f32 %v8466, %v8556
  %v8558 = vpop.f32.mrb[0].mxu0
  %8559 = vmatprep.mubr.bf16.mxu0 0
  %8560 = vmatmul.mubr.bf16.gmra.mrb[0].mxu0 %v8489
  %v8561 = vpop.f32.mrb[0].mxu0
  %v8562 = vadd.f32 %v8466, %v8561
  %v8563 = vpop.f32.mrb[0].mxu0
  %v8564 = vpop.f32.mrb[0].mxu0
  %v8565 = vadd.f32 %v8466, %v8564
  %v8566 = vpop.f32.mrb[0].mxu0
  %8567 = vmatprep.mubr.bf16.mxu0 0
  %8568 = vmatmul.mubr.bf16.gmra.mrb[0].mxu0 %v8492
  %v8569 = vpop.f32.mrb[0].mxu0
  %v8570 = vadd.f32 %v8466, %v8569
  %v8571 = vpop.f32.mrb[0].mxu0
  %v8572 = vpop.f32.mrb[0].mxu0
  %v8573 = vadd.f32 %v8466, %v8572
  %v8574 = vpop.f32.mrb[0].mxu0
  %8575 = vmatprep.mubr.bf16.mxu0 0
  %8576 = vmatmul.mubr.bf16.gmra.mrb[0].mxu0 %v8495
  %v8577 = vpop.f32.mrb[0].mxu0
  %v8578 = vadd.f32 %v8466, %v8577
  %v8579 = vpop.f32.mrb[0].mxu0
  %v8580 = vpop.f32.mrb[0].mxu0
  %v8581 = vadd.f32 %v8466, %v8580
  %v8582 = vpop.f32.mrb[0].mxu0
  %8583 = vmatprep.mubr.bf16.mxu0 0
  %8584 = vmatmul.mubr.bf16.gmra.mrb[0].mxu0 %v8498
  %v8585 = vpop.f32.mrb[0].mxu0
  %v8586 = vadd.f32 %v8466, %v8585
  %v8587 = vpop.f32.mrb[0].mxu0
  %v8588 = vpop.f32.mrb[0].mxu0
  %v8589 = vadd.f32 %v8466, %v8588
  %v8590 = vpop.f32.mrb[0].mxu0
  %8591 = vmatprep.mubr.bf16.mxu0 0
  %8592 = vmatmul.mubr.bf16.gmra.mrb[0].mxu0 %v8501
  %v8593 = vpop.f32.mrb[0].mxu0
  %v8594 = vadd.f32 %v8466, %v8593
  %v8595 = vpop.f32.mrb[0].mxu0
  %v8596 = vpop.f32.mrb[0].mxu0
  %v8597 = vadd.f32 %v8466, %v8596
  %v8598 = vpop.f32.mrb[0].mxu0
  %8599 = vdwg.mxu0
  %v8600 = vmul.f32 %v8538, %v8538
  %v8601 = vmul.f32 %v8541, %v8541
  %v8602 = vmul.f32 %v8546, %v8546
  %v8603 = vmul.f32 %v8549, %v8549
  %v8604 = vmul.f32 %v8554, %v8554
  %v8605 = vmul.f32 %v8557, %v8557
  %v8606 = vmul.f32 %v8562, %v8562
  %v8607 = vmul.f32 %v8565, %v8565
  %v8608 = vmul.f32 %v8570, %v8570
  %v8609 = vmul.f32 %v8573, %v8573
  %v8610 = vmul.f32 %v8578, %v8578
  %v8611 = vmul.f32 %v8581, %v8581
  %v8612 = vmul.f32 %v8586, %v8586
  %v8613 = vmul.f32 %v8589, %v8589
  %v8614 = vmul.f32 %v8594, %v8594
  %v8615 = vmul.f32 %v8597, %v8597
  %v8616 = vmul.f32 %v8538, %v8600
  %v8617 = vmul.f32 %v8541, %v8601
  %v8618 = vmul.f32 %v8546, %v8602
  %v8619 = vmul.f32 %v8549, %v8603
  %v8620 = vmul.f32 %v8554, %v8604
  %v8621 = vmul.f32 %v8557, %v8605
  %v8622 = vmul.f32 %v8562, %v8606
  %v8623 = vmul.f32 %v8565, %v8607
  %v8624 = vmul.f32 %v8570, %v8608
  %v8625 = vmul.f32 %v8573, %v8609
  %v8626 = vmul.f32 %v8578, %v8610
  %v8627 = vmul.f32 %v8581, %v8611
  %v8628 = vmul.f32 %v8586, %v8612
  %v8629 = vmul.f32 %v8589, %v8613
  %v8630 = vmul.f32 %v8594, %v8614
  %v8631 = vmul.f32 %v8597, %v8615
  %v8632 = vmul.f32 %v8616, 0.044715
  %v8633 = vmul.f32 %v8617, 0.044715
  %v8634 = vmul.f32 %v8618, 0.044715
  %v8635 = vmul.f32 %v8619, 0.044715
  %v8636 = vmul.f32 %v8620, 0.044715
  %v8637 = vmul.f32 %v8621, 0.044715
  %v8638 = vmul.f32 %v8622, 0.044715
  %v8639 = vmul.f32 %v8623, 0.044715
  %v8640 = vmul.f32 %v8624, 0.044715
  %v8641 = vmul.f32 %v8625, 0.044715
  %v8642 = vmul.f32 %v8626, 0.044715
  %v8643 = vmul.f32 %v8627, 0.044715
  %v8644 = vmul.f32 %v8628, 0.044715
  %v8645 = vmul.f32 %v8629, 0.044715
  %v8646 = vmul.f32 %v8630, 0.044715
  %v8647 = vmul.f32 %v8631, 0.044715
  %v8648 = vadd.f32 %v8538, %v8632
  %v8649 = vadd.f32 %v8541, %v8633
  %v8650 = vadd.f32 %v8546, %v8634
  %v8651 = vadd.f32 %v8549, %v8635
  %v8652 = vadd.f32 %v8554, %v8636
  %v8653 = vadd.f32 %v8557, %v8637
  %v8654 = vadd.f32 %v8562, %v8638
  %v8655 = vadd.f32 %v8565, %v8639
  %v8656 = vadd.f32 %v8570, %v8640
  %v8657 = vadd.f32 %v8573, %v8641
  %v8658 = vadd.f32 %v8578, %v8642
  %v8659 = vadd.f32 %v8581, %v8643
  %v8660 = vadd.f32 %v8586, %v8644
  %v8661 = vadd.f32 %v8589, %v8645
  %v8662 = vadd.f32 %v8594, %v8646
  %v8663 = vadd.f32 %v8597, %v8647
  %v8664 = vmul.f32 %v8648, 0.7978846
  %v8665 = vmul.f32 %v8649, 0.7978846
  %v8666 = vmul.f32 %v8650, 0.7978846
  %v8667 = vmul.f32 %v8651, 0.7978846
  %v8668 = vmul.f32 %v8652, 0.7978846
  %v8669 = vmul.f32 %v8653, 0.7978846
  %v8670 = vmul.f32 %v8654, 0.7978846
  %v8671 = vmul.f32 %v8655, 0.7978846
  %v8672 = vmul.f32 %v8656, 0.7978846
  %v8673 = vmul.f32 %v8657, 0.7978846
  %v8674 = vmul.f32 %v8658, 0.7978846
  %v8675 = vmul.f32 %v8659, 0.7978846
  %v8676 = vmul.f32 %v8660, 0.7978846
  %v8677 = vmul.f32 %v8661, 0.7978846
  %v8678 = vmul.f32 %v8662, 0.7978846
  %v8679 = vmul.f32 %v8663, 0.7978846
  %v8680 = vtanh.pop %v8664
  %v8681 = vtanh.pop %v8665
  %v8682 = vtanh.pop %v8666
  %v8683 = vtanh.pop %v8667
  %v8684 = vtanh.pop %v8668
  %v8685 = vtanh.pop %v8669
  %v8686 = vtanh.pop %v8670
  %v8687 = vtanh.pop %v8671
  %v8688 = vtanh.pop %v8672
  %v8689 = vtanh.pop %v8673
  %v8690 = vtanh.pop %v8674
  %v8691 = vtanh.pop %v8675
  %v8692 = vtanh.pop %v8676
  %v8693 = vtanh.pop %v8677
  %v8694 = vtanh.pop %v8678
  %v8695 = vtanh.pop %v8679
  %v8696 = vadd.f32 %v8680, 1.0
  %v8697 = vadd.f32 %v8681, 1.0
  %v8698 = vadd.f32 %v8682, 1.0
  %v8699 = vadd.f32 %v8683, 1.0
  %v8700 = vadd.f32 %v8684, 1.0
  %v8701 = vadd.f32 %v8685, 1.0
  %v8702 = vadd.f32 %v8686, 1.0
  %v8703 = vadd.f32 %v8687, 1.0
  %v8704 = vadd.f32 %v8688, 1.0
  %v8705 = vadd.f32 %v8689, 1.0
  %v8706 = vadd.f32 %v8690, 1.0
  %v8707 = vadd.f32 %v8691, 1.0
  %v8708 = vadd.f32 %v8692, 1.0
  %v8709 = vadd.f32 %v8693, 1.0
  %v8710 = vadd.f32 %v8694, 1.0
  %v8711 = vadd.f32 %v8695, 1.0
  %v8712 = vmul.f32 %v8696, 0.5
  %v8713 = vmul.f32 %v8697, 0.5
  %v8714 = vmul.f32 %v8698, 0.5
  %v8715 = vmul.f32 %v8699, 0.5
  %v8716 = vmul.f32 %v8700, 0.5
  %v8717 = vmul.f32 %v8701, 0.5
  %v8718 = vmul.f32 %v8702, 0.5
  %v8719 = vmul.f32 %v8703, 0.5
  %v8720 = vmul.f32 %v8704, 0.5
  %v8721 = vmul.f32 %v8705, 0.5
  %v8722 = vmul.f32 %v8706, 0.5
  %v8723 = vmul.f32 %v8707, 0.5
  %v8724 = vmul.f32 %v8708, 0.5
  %v8725 = vmul.f32 %v8709, 0.5
  %v8726 = vmul.f32 %v8710, 0.5
  %v8727 = vmul.f32 %v8711, 0.5
  %v8728 = vmul.f32 %v8538, %v8712
  %v8729 = vmul.f32 %v8541, %v8713
  %v8730 = vmul.f32 %v8546, %v8714
  %v8731 = vmul.f32 %v8549, %v8715
  %v8732 = vmul.f32 %v8554, %v8716
  %v8733 = vmul.f32 %v8557, %v8717
  %v8734 = vmul.f32 %v8562, %v8718
  %v8735 = vmul.f32 %v8565, %v8719
  %v8736 = vmul.f32 %v8570, %v8720
  %v8737 = vmul.f32 %v8573, %v8721
  %v8738 = vmul.f32 %v8578, %v8722
  %v8739 = vmul.f32 %v8581, %v8723
  %v8740 = vmul.f32 %v8586, %v8724
  %v8741 = vmul.f32 %v8589, %v8725
  %v8742 = vmul.f32 %v8594, %v8726
  %v8743 = vmul.f32 %v8597, %v8727
  %v8744 = vld [vmem:[%s2 + $0xb0] sm:$0xf]
  %v8745 = vld [vmem:[%s2 + $0xb4] sm:$0xf]
  %v8746 = vld [vmem:[%s2 + $0xb8] sm:$0xf]
  %v8747 = vld [vmem:[%s2 + $0xbc] sm:$0xf]
  %v8748 = vld [vmem:[%s2 + $0xc0] sm:$0xf]
  %v8749 = vld [vmem:[%s2 + $0xc4] sm:$0xf]
  %v8750 = vld [vmem:[%s2 + $0xc8] sm:$0xf]
  %v8751 = vld [vmem:[%s2 + $0xcc] sm:$0xf]
  %v8752 = vld [vmem:[%s2 + $0xd0] sm:$0xf]
  %v8753 = vld [vmem:[%s2 + $0xd4] sm:$0xf]
  %v8754 = vld [vmem:[%s2 + $0xd8] sm:$0xf]
  %v8755 = vld [vmem:[%s2 + $0xdc] sm:$0xf]
  %v8756 = vld [vmem:[%s2 + $0xe0] sm:$0xf]
  %v8757 = vld [vmem:[%s2 + $0xe4] sm:$0xf]
  %v8758 = vld [vmem:[%s2 + $0xe8] sm:$0xf]
  %v8759 = vld [vmem:[%s2 + $0xec] sm:$0xf]
  %v8760 = vpack.c.bf16 %v8729, %v8728
  %v8761 = vpack.c.bf16 %v8731, %v8730
  %v8762 = vpack.c.bf16 %v8733, %v8732
  %v8763 = vpack.c.bf16 %v8735, %v8734
  %v8764 = vpack.c.bf16 %v8737, %v8736
  %v8765 = vpack.c.bf16 %v8739, %v8738
  %v8766 = vpack.c.bf16 %v8741, %v8740
  %v8767 = vpack.c.bf16 %v8743, %v8742
  %v8784 = vunpack.c.l.b16 %v8744
  %v8785 = vunpack.c.l.b16 %v8745
  %v8786 = vunpack.c.l.b16 %v8746
  %v8787 = vunpack.c.l.b16 %v8747
  %v8788 = vunpack.c.l.b16 %v8748
  %v8789 = vunpack.c.l.b16 %v8749
  %v8790 = vunpack.c.l.b16 %v8750
  %v8791 = vunpack.c.l.b16 %v8751
  %v8792 = vunpack.c.l.b16 %v8752
  %v8793 = vunpack.c.l.b16 %v8753
  %v8794 = vunpack.c.l.b16 %v8754
  %v8795 = vunpack.c.l.b16 %v8755
  %v8796 = vunpack.c.l.b16 %v8756
  %v8797 = vunpack.c.l.b16 %v8757
  %v8798 = vunpack.c.l.b16 %v8758
  %v8799 = vunpack.c.l.b16 %v8759
  %v8800 = vpack.c.b16 %v8785, %v8784
  %v8801 = vpack.c.b16 %v8787, %v8786
  %v8802 = vpack.c.b16 %v8789, %v8788
  %v8803 = vpack.c.b16 %v8791, %v8790
  %v8804 = vpack.c.b16 %v8793, %v8792
  %v8805 = vpack.c.b16 %v8795, %v8794
  %v8806 = vpack.c.b16 %v8797, %v8796
  %v8807 = vpack.c.b16 %v8799, %v8798
  %8816 = vmatprep.subr.bf16.mxu0 0
  %8817 = vmatpush1.bf16.msra.mxu0 %v8800
  %8818 = vmatprep.subr.bf16.mxu0 0
  %8819 = vmatpush1.bf16.msra.mxu0 %v8801
  %8820 = vmatprep.subr.bf16.mxu0 0
  %8821 = vmatpush1.bf16.msra.mxu0 %v8802
  %8822 = vmatprep.subr.bf16.mxu0 0
  %8823 = vmatpush1.bf16.msra.mxu0 %v8803
  %8824 = vmatprep.subr.bf16.mxu0 0
  %8825 = vmatpush1.bf16.msra.mxu0 %v8804
  %8826 = vmatprep.subr.bf16.mxu0 0
  %8827 = vmatpush1.bf16.msra.mxu0 %v8805
  %8828 = vmatprep.subr.bf16.mxu0 0
  %8829 = vmatpush1.bf16.msra.mxu0 %v8806
  %8830 = vmatprep.subr.bf16.mxu0 0
  %8831 = vmatpush1.bf16.msra.mxu0 %v8807
  %8832 = vmatprep.subr.bf16.mxu0 0
  %8833 = vmatpush1.bf16.msra.mxu0 0
  %8834 = vmatprep.subr.bf16.mxu0 0
  %8835 = vmatpush1.bf16.msra.mxu0 0
  %8836 = vmatprep.subr.bf16.mxu0 0
  %8837 = vmatpush1.bf16.msra.mxu0 0
  %8838 = vmatprep.subr.bf16.mxu0 0
  %8839 = vmatpush1.bf16.msra.mxu0 0
  %8840 = vmatprep.subr.bf16.mxu0 0
  %8841 = vmatpush1.bf16.msra.mxu0 0
  %8842 = vmatprep.subr.bf16.mxu0 0
  %8843 = vmatpush1.bf16.msra.mxu0 0
  %8844 = vmatprep.subr.bf16.mxu0 0
  %8845 = vmatpush1.bf16.msra.mxu0 0
  %8846 = vmatprep.subr.bf16.mxu0 0
  %8847 = vmatpush1.bf16.msra.mxu0 0
  %8848 = vmatprep.mubr.bf16.mxu0 0
  %8849 = vmatmul.mubr.bf16.gmra.mrb[0].mxu0 %v8760
  %v8850 = vpop.f32.mrb[0].mxu0
  %v8851 = vadd.f32 0.0, %v8850
  %v8852 = vpop.f32.mrb[0].mxu0
  %v8853 = vpop.f32.mrb[0].mxu0
  %v8854 = vadd.f32 0.0, %v8853
  %v8855 = vpop.f32.mrb[0].mxu0
  %8856 = vmatprep.mubr.bf16.mxu0 0
  %8857 = vmatmul.mubr.bf16.gmra.mrb[0].mxu0 %v8761
  %v8858 = vpop.f32.mrb[0].mxu0
  %v8859 = vadd.f32 0.0, %v8858
  %v8860 = vpop.f32.mrb[0].mxu0
  %v8861 = vpop.f32.mrb[0].mxu0
  %v8862 = vadd.f32 0.0, %v8861
  %v8863 = vpop.f32.mrb[0].mxu0
  %8864 = vmatprep.mubr.bf16.mxu0 0
  %8865 = vmatmul.mubr.bf16.gmra.mrb[0].mxu0 %v8762
  %v8866 = vpop.f32.mrb[0].mxu0
  %v8867 = vadd.f32 0.0, %v8866
  %v8868 = vpop.f32.mrb[0].mxu0
  %v8869 = vpop.f32.mrb[0].mxu0
  %v8870 = vadd.f32 0.0, %v8869
  %v8871 = vpop.f32.mrb[0].mxu0
  %8872 = vmatprep.mubr.bf16.mxu0 0
  %8873 = vmatmul.mubr.bf16.gmra.mrb[0].mxu0 %v8763
  %v8874 = vpop.f32.mrb[0].mxu0
  %v8875 = vadd.f32 0.0, %v8874
  %v8876 = vpop.f32.mrb[0].mxu0
  %v8877 = vpop.f32.mrb[0].mxu0
  %v8878 = vadd.f32 0.0, %v8877
  %v8879 = vpop.f32.mrb[0].mxu0
  %8880 = vmatprep.mubr.bf16.mxu0 0
  %8881 = vmatmul.mubr.bf16.gmra.mrb[0].mxu0 %v8764
  %v8882 = vpop.f32.mrb[0].mxu0
  %v8883 = vadd.f32 0.0, %v8882
  %v8884 = vpop.f32.mrb[0].mxu0
  %v8885 = vpop.f32.mrb[0].mxu0
  %v8886 = vadd.f32 0.0, %v8885
  %v8887 = vpop.f32.mrb[0].mxu0
  %8888 = vmatprep.mubr.bf16.mxu0 0
  %8889 = vmatmul.mubr.bf16.gmra.mrb[0].mxu0 %v8765
  %v8890 = vpop.f32.mrb[0].mxu0
  %v8891 = vadd.f32 0.0, %v8890
  %v8892 = vpop.f32.mrb[0].mxu0
  %v8893 = vpop.f32.mrb[0].mxu0
  %v8894 = vadd.f32 0.0, %v8893
  %v8895 = vpop.f32.mrb[0].mxu0
  %8896 = vmatprep.mubr.bf16.mxu0 0
  %8897 = vmatmul.mubr.bf16.gmra.mrb[0].mxu0 %v8766
  %v8898 = vpop.f32.mrb[0].mxu0
  %v8899 = vadd.f32 0.0, %v8898
  %v8900 = vpop.f32.mrb[0].mxu0
  %v8901 = vpop.f32.mrb[0].mxu0
  %v8902 = vadd.f32 0.0, %v8901
  %v8903 = vpop.f32.mrb[0].mxu0
  %8904 = vmatprep.mubr.bf16.mxu0 0
  %8905 = vmatmul.mubr.bf16.gmra.mrb[0].mxu0 %v8767
  %v8906 = vpop.f32.mrb[0].mxu0
  %v8907 = vadd.f32 0.0, %v8906
  %v8908 = vpop.f32.mrb[0].mxu0
  %v8909 = vpop.f32.mrb[0].mxu0
  %v8910 = vadd.f32 0.0, %v8909
  %v8911 = vpop.f32.mrb[0].mxu0
  %8912 = vdwg.mxu0
  %v8913 = vadd.f32 %v8434, %v8851
  %v8914 = vadd.f32 %v8435, %v8854
  %v8915 = vadd.f32 %v8436, %v8859
  %v8916 = vadd.f32 %v8437, %v8862
  %v8917 = vadd.f32 %v8438, %v8867
  %v8918 = vadd.f32 %v8439, %v8870
  %v8919 = vadd.f32 %v8440, %v8875
  %v8920 = vadd.f32 %v8441, %v8878
  %v8921 = vadd.f32 %v8442, %v8883
  %v8922 = vadd.f32 %v8443, %v8886
  %v8923 = vadd.f32 %v8444, %v8891
  %v8924 = vadd.f32 %v8445, %v8894
  %v8925 = vadd.f32 %v8446, %v8899
  %v8926 = vadd.f32 %v8447, %v8902
  %v8927 = vadd.f32 %v8448, %v8907
  %v8928 = vadd.f32 %v8449, %v8910
  %v8929 = vld [vmem:[%s3 + $0x1b] sm:$0x1]
  %v8930 = vlaneseq
  %v8931 = vshrl.u32 %v8930, 7
  %v8932 = vsub.s32 0, %v8931
  %v8933 = vrot.slane %v8929, %v8932
  %v8934 = vadd.f32 %v8913, %v8933
  %v8935 = vadd.f32 %v8914, %v8933
  %v8936 = vadd.f32 %v8915, %v8933
  %v8937 = vadd.f32 %v8916, %v8933
  %v8938 = vadd.f32 %v8917, %v8933
  %v8939 = vadd.f32 %v8918, %v8933
  %v8940 = vadd.f32 %v8919, %v8933
  %v8941 = vadd.f32 %v8920, %v8933
  %v8942 = vadd.f32 %v8921, %v8933
  %v8943 = vadd.f32 %v8922, %v8933
  %v8944 = vadd.f32 %v8923, %v8933
  %v8945 = vadd.f32 %v8924, %v8933
  %v8946 = vadd.f32 %v8925, %v8933
  %v8947 = vadd.f32 %v8926, %v8933
  %v8948 = vadd.f32 %v8927, %v8933
  %v8949 = vadd.f32 %v8928, %v8933
  %v8950 = vld [vmem:[%s3 + $0x1c] sm:$0x1]
  %v8951 = vld [vmem:[%s3 + $0x1d] sm:$0x1]
  %v8952 = vsel %vm1641, %v8934, 0.0
  %8953 = vadd.xlane.f32.xlu0 %v8952
  %v8954 = vpop.xlane.xlu0 %8953
  %v8955 = vsel %vm1641, %v8935, 0.0
  %8956 = vadd.xlane.f32.xlu0 %v8955
  %v8957 = vpop.xlane.xlu0 %8956
  %v8958 = vsel %vm1641, %v8936, 0.0
  %8959 = vadd.xlane.f32.xlu0 %v8958
  %v8960 = vpop.xlane.xlu0 %8959
  %v8961 = vsel %vm1641, %v8937, 0.0
  %8962 = vadd.xlane.f32.xlu0 %v8961
  %v8963 = vpop.xlane.xlu0 %8962
  %v8964 = vsel %vm1641, %v8938, 0.0
  %8965 = vadd.xlane.f32.xlu0 %v8964
  %v8966 = vpop.xlane.xlu0 %8965
  %v8967 = vsel %vm1641, %v8939, 0.0
  %8968 = vadd.xlane.f32.xlu0 %v8967
  %v8969 = vpop.xlane.xlu0 %8968
  %v8970 = vsel %vm1641, %v8940, 0.0
  %8971 = vadd.xlane.f32.xlu0 %v8970
  %v8972 = vpop.xlane.xlu0 %8971
  %v8973 = vsel %vm1641, %v8941, 0.0
  %8974 = vadd.xlane.f32.xlu0 %v8973
  %v8975 = vpop.xlane.xlu0 %8974
  %v8976 = vsel %vm1641, %v8942, 0.0
  %8977 = vadd.xlane.f32.xlu0 %v8976
  %v8978 = vpop.xlane.xlu0 %8977
  %v8979 = vsel %vm1641, %v8943, 0.0
  %8980 = vadd.xlane.f32.xlu0 %v8979
  %v8981 = vpop.xlane.xlu0 %8980
  %v8982 = vsel %vm1641, %v8944, 0.0
  %8983 = vadd.xlane.f32.xlu0 %v8982
  %v8984 = vpop.xlane.xlu0 %8983
  %v8985 = vsel %vm1641, %v8945, 0.0
  %8986 = vadd.xlane.f32.xlu0 %v8985
  %v8987 = vpop.xlane.xlu0 %8986
  %v8988 = vsel %vm1641, %v8946, 0.0
  %8989 = vadd.xlane.f32.xlu0 %v8988
  %v8990 = vpop.xlane.xlu0 %8989
  %v8991 = vsel %vm1641, %v8947, 0.0
  %8992 = vadd.xlane.f32.xlu0 %v8991
  %v8993 = vpop.xlane.xlu0 %8992
  %v8994 = vsel %vm1641, %v8948, 0.0
  %8995 = vadd.xlane.f32.xlu0 %v8994
  %v8996 = vpop.xlane.xlu0 %8995
  %v8997 = vsel %vm1641, %v8949, 0.0
  %8998 = vadd.xlane.f32.xlu0 %v8997
  %v8999 = vpop.xlane.xlu0 %8998
  %v9000 = vmul.f32 %v8954, %v1813
  %v9001 = vmul.f32 %v8957, %v1813
  %v9002 = vmul.f32 %v8960, %v1813
  %v9003 = vmul.f32 %v8963, %v1813
  %v9004 = vmul.f32 %v8966, %v1813
  %v9005 = vmul.f32 %v8969, %v1813
  %v9006 = vmul.f32 %v8972, %v1813
  %v9007 = vmul.f32 %v8975, %v1813
  %v9008 = vmul.f32 %v8978, %v1813
  %v9009 = vmul.f32 %v8981, %v1813
  %v9010 = vmul.f32 %v8984, %v1813
  %v9011 = vmul.f32 %v8987, %v1813
  %v9012 = vmul.f32 %v8990, %v1813
  %v9013 = vmul.f32 %v8993, %v1813
  %v9014 = vmul.f32 %v8996, %v1813
  %v9015 = vmul.f32 %v8999, %v1813
  %v9016 = vsub.f32 %v8934, %v9000
  %v9017 = vsub.f32 %v8935, %v9001
  %v9018 = vsub.f32 %v8936, %v9002
  %v9019 = vsub.f32 %v8937, %v9003
  %v9020 = vsub.f32 %v8938, %v9004
  %v9021 = vsub.f32 %v8939, %v9005
  %v9022 = vsub.f32 %v8940, %v9006
  %v9023 = vsub.f32 %v8941, %v9007
  %v9024 = vsub.f32 %v8942, %v9008
  %v9025 = vsub.f32 %v8943, %v9009
  %v9026 = vsub.f32 %v8944, %v9010
  %v9027 = vsub.f32 %v8945, %v9011
  %v9028 = vsub.f32 %v8946, %v9012
  %v9029 = vsub.f32 %v8947, %v9013
  %v9030 = vsub.f32 %v8948, %v9014
  %v9031 = vsub.f32 %v8949, %v9015
  %v9032 = vmul.f32 %v9016, %v9016
  %v9033 = vmul.f32 %v9017, %v9017
  %v9034 = vmul.f32 %v9018, %v9018
  %v9035 = vmul.f32 %v9019, %v9019
  %v9036 = vmul.f32 %v9020, %v9020
  %v9037 = vmul.f32 %v9021, %v9021
  %v9038 = vmul.f32 %v9022, %v9022
  %v9039 = vmul.f32 %v9023, %v9023
  %v9040 = vmul.f32 %v9024, %v9024
  %v9041 = vmul.f32 %v9025, %v9025
  %v9042 = vmul.f32 %v9026, %v9026
  %v9043 = vmul.f32 %v9027, %v9027
  %v9044 = vmul.f32 %v9028, %v9028
  %v9045 = vmul.f32 %v9029, %v9029
  %v9046 = vmul.f32 %v9030, %v9030
  %v9047 = vmul.f32 %v9031, %v9031
  %v9048 = vsel %vm1641, %v9032, 0.0
  %9049 = vadd.xlane.f32.xlu0 %v9048
  %v9050 = vpop.xlane.xlu0 %9049
  %v9051 = vsel %vm1641, %v9033, 0.0
  %9052 = vadd.xlane.f32.xlu0 %v9051
  %v9053 = vpop.xlane.xlu0 %9052
  %v9054 = vsel %vm1641, %v9034, 0.0
  %9055 = vadd.xlane.f32.xlu0 %v9054
  %v9056 = vpop.xlane.xlu0 %9055
  %v9057 = vsel %vm1641, %v9035, 0.0
  %9058 = vadd.xlane.f32.xlu0 %v9057
  %v9059 = vpop.xlane.xlu0 %9058
  %v9060 = vsel %vm1641, %v9036, 0.0
  %9061 = vadd.xlane.f32.xlu0 %v9060
  %v9062 = vpop.xlane.xlu0 %9061
  %v9063 = vsel %vm1641, %v9037, 0.0
  %9064 = vadd.xlane.f32.xlu0 %v9063
  %v9065 = vpop.xlane.xlu0 %9064
  %v9066 = vsel %vm1641, %v9038, 0.0
  %9067 = vadd.xlane.f32.xlu0 %v9066
  %v9068 = vpop.xlane.xlu0 %9067
  %v9069 = vsel %vm1641, %v9039, 0.0
  %9070 = vadd.xlane.f32.xlu0 %v9069
  %v9071 = vpop.xlane.xlu0 %9070
  %v9072 = vsel %vm1641, %v9040, 0.0
  %9073 = vadd.xlane.f32.xlu0 %v9072
  %v9074 = vpop.xlane.xlu0 %9073
  %v9075 = vsel %vm1641, %v9041, 0.0
  %9076 = vadd.xlane.f32.xlu0 %v9075
  %v9077 = vpop.xlane.xlu0 %9076
  %v9078 = vsel %vm1641, %v9042, 0.0
  %9079 = vadd.xlane.f32.xlu0 %v9078
  %v9080 = vpop.xlane.xlu0 %9079
  %v9081 = vsel %vm1641, %v9043, 0.0
  %9082 = vadd.xlane.f32.xlu0 %v9081
  %v9083 = vpop.xlane.xlu0 %9082
  %v9084 = vsel %vm1641, %v9044, 0.0
  %9085 = vadd.xlane.f32.xlu0 %v9084
  %v9086 = vpop.xlane.xlu0 %9085
  %v9087 = vsel %vm1641, %v9045, 0.0
  %9088 = vadd.xlane.f32.xlu0 %v9087
  %v9089 = vpop.xlane.xlu0 %9088
  %v9090 = vsel %vm1641, %v9046, 0.0
  %9091 = vadd.xlane.f32.xlu0 %v9090
  %v9092 = vpop.xlane.xlu0 %9091
  %v9093 = vsel %vm1641, %v9047, 0.0
  %9094 = vadd.xlane.f32.xlu0 %v9093
  %v9095 = vpop.xlane.xlu0 %9094
  %v9096 = vmul.f32 %v9050, %v1813
  %v9097 = vmul.f32 %v9053, %v1813
  %v9098 = vmul.f32 %v9056, %v1813
  %v9099 = vmul.f32 %v9059, %v1813
  %v9100 = vmul.f32 %v9062, %v1813
  %v9101 = vmul.f32 %v9065, %v1813
  %v9102 = vmul.f32 %v9068, %v1813
  %v9103 = vmul.f32 %v9071, %v1813
  %v9104 = vmul.f32 %v9074, %v1813
  %v9105 = vmul.f32 %v9077, %v1813
  %v9106 = vmul.f32 %v9080, %v1813
  %v9107 = vmul.f32 %v9083, %v1813
  %v9108 = vmul.f32 %v9086, %v1813
  %v9109 = vmul.f32 %v9089, %v1813
  %v9110 = vmul.f32 %v9092, %v1813
  %v9111 = vmul.f32 %v9095, %v1813
  %v9112 = vadd.f32 %v9096, 1e-05
  %v9113 = vadd.f32 %v9097, 1e-05
  %v9114 = vadd.f32 %v9098, 1e-05
  %v9115 = vadd.f32 %v9099, 1e-05
  %v9116 = vadd.f32 %v9100, 1e-05
  %v9117 = vadd.f32 %v9101, 1e-05
  %v9118 = vadd.f32 %v9102, 1e-05
  %v9119 = vadd.f32 %v9103, 1e-05
  %v9120 = vadd.f32 %v9104, 1e-05
  %v9121 = vadd.f32 %v9105, 1e-05
  %v9122 = vadd.f32 %v9106, 1e-05
  %v9123 = vadd.f32 %v9107, 1e-05
  %v9124 = vadd.f32 %v9108, 1e-05
  %v9125 = vadd.f32 %v9109, 1e-05
  %v9126 = vadd.f32 %v9110, 1e-05
  %v9127 = vadd.f32 %v9111, 1e-05
  %v9128 = vrsqrt.pop %v9112
  %v9129 = vrsqrt.pop %v9113
  %v9130 = vrsqrt.pop %v9114
  %v9131 = vrsqrt.pop %v9115
  %v9132 = vrsqrt.pop %v9116
  %v9133 = vrsqrt.pop %v9117
  %v9134 = vrsqrt.pop %v9118
  %v9135 = vrsqrt.pop %v9119
  %v9136 = vrsqrt.pop %v9120
  %v9137 = vrsqrt.pop %v9121
  %v9138 = vrsqrt.pop %v9122
  %v9139 = vrsqrt.pop %v9123
  %v9140 = vrsqrt.pop %v9124
  %v9141 = vrsqrt.pop %v9125
  %v9142 = vrsqrt.pop %v9126
  %v9143 = vrsqrt.pop %v9127
  %v9144 = vmul.f32 %v9016, %v9128
  %v9145 = vmul.f32 %v9017, %v9129
  %v9146 = vmul.f32 %v9018, %v9130
  %v9147 = vmul.f32 %v9019, %v9131
  %v9148 = vmul.f32 %v9020, %v9132
  %v9149 = vmul.f32 %v9021, %v9133
  %v9150 = vmul.f32 %v9022, %v9134
  %v9151 = vmul.f32 %v9023, %v9135
  %v9152 = vmul.f32 %v9024, %v9136
  %v9153 = vmul.f32 %v9025, %v9137
  %v9154 = vmul.f32 %v9026, %v9138
  %v9155 = vmul.f32 %v9027, %v9139
  %v9156 = vmul.f32 %v9028, %v9140
  %v9157 = vmul.f32 %v9029, %v9141
  %v9158 = vmul.f32 %v9030, %v9142
  %v9159 = vmul.f32 %v9031, %v9143
  %v9160 = vlaneseq
  %v9161 = vshrl.u32 %v9160, 7
  %v9162 = vsub.s32 0, %v9161
  %v9163 = vrot.slane %v8950, %v9162
  %v9164 = vmul.f32 %v9144, %v9163
  %v9165 = vmul.f32 %v9145, %v9163
  %v9166 = vmul.f32 %v9146, %v9163
  %v9167 = vmul.f32 %v9147, %v9163
  %v9168 = vmul.f32 %v9148, %v9163
  %v9169 = vmul.f32 %v9149, %v9163
  %v9170 = vmul.f32 %v9150, %v9163
  %v9171 = vmul.f32 %v9151, %v9163
  %v9172 = vmul.f32 %v9152, %v9163
  %v9173 = vmul.f32 %v9153, %v9163
  %v9174 = vmul.f32 %v9154, %v9163
  %v9175 = vmul.f32 %v9155, %v9163
  %v9176 = vmul.f32 %v9156, %v9163
  %v9177 = vmul.f32 %v9157, %v9163
  %v9178 = vmul.f32 %v9158, %v9163
  %v9179 = vmul.f32 %v9159, %v9163
  %v9180 = vlaneseq
  %v9181 = vshrl.u32 %v9180, 7
  %v9182 = vsub.s32 0, %v9181
  %v9183 = vrot.slane %v8951, %v9182
  %v9184 = vadd.f32 %v9164, %v9183
  %v9185 = vadd.f32 %v9165, %v9183
  %v9186 = vadd.f32 %v9166, %v9183
  %v9187 = vadd.f32 %v9167, %v9183
  %v9188 = vadd.f32 %v9168, %v9183
  %v9189 = vadd.f32 %v9169, %v9183
  %v9190 = vadd.f32 %v9170, %v9183
  %v9191 = vadd.f32 %v9171, %v9183
  %v9192 = vadd.f32 %v9172, %v9183
  %v9193 = vadd.f32 %v9173, %v9183
  %v9194 = vadd.f32 %v9174, %v9183
  %v9195 = vadd.f32 %v9175, %v9183
  %v9196 = vadd.f32 %v9176, %v9183
  %v9197 = vadd.f32 %v9177, %v9183
  %v9198 = vadd.f32 %v9178, %v9183
  %v9199 = vadd.f32 %v9179, %v9183
  %v9200 = vsub.f32 %v9184, %v9192
  %v9201 = vsub.f32 %v9185, %v9193
  %v9202 = vsub.f32 %v9186, %v9194
  %v9203 = vsub.f32 %v9187, %v9195
  %v9204 = vsub.f32 %v9188, %v9196
  %v9205 = vsub.f32 %v9189, %v9197
  %v9206 = vsub.f32 %v9190, %v9198
  %v9207 = vsub.f32 %v9191, %v9199
  %v9208 = vand.u32 2147483647, %v9200
  %v9209 = vand.u32 2147483647, %v9201
  %v9210 = vand.u32 2147483647, %v9202
  %v9211 = vand.u32 2147483647, %v9203
  %v9212 = vand.u32 2147483647, %v9204
  %v9213 = vand.u32 2147483647, %v9205
  %v9214 = vand.u32 2147483647, %v9206
  %v9215 = vand.u32 2147483647, %v9207
  %v9216 = vmul.f32 %v9208, %v2047
  %v9217 = vmul.f32 %v9209, %v2048
  %v9218 = vmul.f32 %v9210, %v2049
  %v9219 = vmul.f32 %v9211, %v2050
  %v9220 = vmul.f32 %v9212, %v2051
  %v9221 = vmul.f32 %v9213, %v2052
  %v9222 = vmul.f32 %v9214, %v2053
  %v9223 = vmul.f32 %v9215, %v2054
  %v9224 = vsel %vm1641, %v9216, 0.0
  %v9225 = vsel %vm1641, %v9217, 0.0
  %v9226 = vadd.f32 %v9224, %v9225
  %v9227 = vsel %vm1641, %v9218, 0.0
  %v9228 = vadd.f32 %v9226, %v9227
  %v9229 = vsel %vm1641, %v9219, 0.0
  %v9230 = vadd.f32 %v9228, %v9229
  %v9231 = vsel %vm1641, %v9220, 0.0
  %v9232 = vadd.f32 %v9230, %v9231
  %v9233 = vsel %vm1641, %v9221, 0.0
  %v9234 = vadd.f32 %v9232, %v9233
  %v9235 = vsel %vm1641, %v9222, 0.0
  %v9236 = vadd.f32 %v9234, %v9235
  %v9237 = vsel %vm1641, %v9223, 0.0
  %v9238 = vadd.f32 %v9236, %v9237
  %9239 = vadd.xlane.f32.xlu0 %v9238
  %v9240 = vpop.xlane.xlu0 %9239
  %v9241 = vrot.slane %v9240, 4
  %v9242 = vadd.f32 %v9240, %v9241
  %v9243 = vrot.slane %v9242, 2
  %v9244 = vadd.f32 %v9242, %v9243
  %v9245 = vrot.slane %v9244, 1
  %v9246 = vadd.f32 %v9244, %v9245
  %s9247 = vtos %v9246
  %s9248 = sadd.f32 %s5715, %s9247
  %v9249 = vrcp.pop 5952.0
  %s9250 = vtos %v9249
  %s9251 = smul.f32 %s9248, %s9250
  %v9252 = vstv %s9251
  %v9253 = vadd.f32 %v9252, 0.0
  %9254 = vst [vmem:[%s4] sm:$0xff] %v9253
  // Predicated region
  $region18: #{wavlm_loss_forward.1} parent=0 // pred_check
    _
  $region19: #{wavlm_loss_forward.1} parent=0 // pred_check_branch
    %9256 = sbr.rel (0) target = $region21
  $region20: #{wavlm_loss_forward.1} parent=0 // pred_region
    _
  $region21: #{wavlm_loss_forward.1} parent=0 // pred_fallthru
    _
  // Predicated region
  $region22: #{wavlm_loss_forward.1} parent=0 // pred_check
    _
  $region23: #{wavlm_loss_forward.1} parent=0 // pred_check_branch
    %9258 = sbr.rel (0) target = $region25
  $region24: #{wavlm_loss_forward.1} parent=0 // pred_region
    _
  $region25: #{wavlm_loss_forward.1} parent=0 // pred_fallthru
    _

</llo_original>
